<compile_context>
chip_gen: v7x
topology: tpu7x:2x2x1
jax: 0.10.0
libtpu: 0.0.40
codegen_flags: <defaults>
</compile_context>

<pallas_src>
import functools

import jax
import jax.numpy as jnp
from jax.experimental import pallas as pl
from jax.experimental.pallas import tpu as pltpu


def _sim_attn_kernel(x_ref, w_ref, out_ref, *, num_heads, dim, seq_q, seq_kv,
                     batch_tile):
    """One batch tile.

    x_ref  : (1, C, Smax*TB)  fused q|k|v|ones|pad channels, lane = s*TB + b
    w_ref  : (3E, C)          block-diagonal wq|wk|wv with biases folded in
    out_ref: (1, E, Lq*TB)    lane = l*TB + b   (lane-dense, unmasked stores)
    """
    e, h, tb = dim, num_heads, batch_tile
    dh = e // h

    x = x_ref[0]                                    # (C, Smax*TB)
    w = w_ref[...]                                  # (3E, C)

    # One wide MXU matmul covers all three projections at every sequence
    # position; the ones channel supplies the biases.  f32 accumulation.
    proj = jnp.dot(w, x, preferred_element_type=jnp.float32,
                   precision=jax.lax.Precision.HIGHEST)      # (3E, Smax*TB) f32

    q3 = proj[0 * e:1 * e].reshape(h, dh, -1)       # (H, Dh, Smax*TB)
    k3 = proj[1 * e:2 * e].reshape(h, dh, -1)
    v3 = proj[2 * e:3 * e].reshape(h, dh, -1)

    # F.normalize(p=2, dim=-1, eps=1e-12) == x * rsqrt(max(sum(x^2), eps^2))
    def l2norm(t):
        ss = jnp.sum(t * t, axis=1, keepdims=True)           # (H, 1, .)
        return t * jax.lax.rsqrt(jnp.maximum(ss, 1e-24))

    kn = l2norm(k3)
    vn = l2norm(v3)

    # Pre-slice per-kv-position lane blocks once (128-aligned -> cheap views,
    # reused for every query position).
    kn_s = [kn[:, :, s * tb:(s + 1) * tb] for s in range(seq_kv)]
    vn_s = [vn[:, :, s * tb:(s + 1) * tb] for s in range(seq_kv)]

    # VPU attention core: accumulate over s, small live set, no giant
    # broadcast intermediates.
    for l in range(seq_q):
        ql = q3[:, :, l * tb:(l + 1) * tb]                   # (H, Dh, TB)
        qk = jnp.sum(ql * kn_s[0], axis=1, keepdims=True)    # (H, 1, TB)
        acc = qk * vn_s[0]
        for s in range(1, seq_kv):
            qk = jnp.sum(ql * kn_s[s], axis=1, keepdims=True)
            acc = acc + qk * vn_s[s]
        out_ref[0, :, l * tb:(l + 1) * tb] = (
            acc.reshape(e, tb).astype(out_ref.dtype))


def sim_attn(q, k, v, params, *, num_heads, batch_tile=128,
             io_dtype=jnp.float32):
    """SimAttn.forward.  q: (B, Lq, Dq), k: (B, S, Dk), v: (B, S, Dv) -> (B, Lq, dim).

    batch_tile: lanes per grid step (multiple of 128). 128 keeps >=2 steps/TC
      on v7x for small B; 512-1024 is better on v5e/v6e for large B.
    io_dtype: HBM dtype for the kernel's input/output streams. bfloat16 halves
      DMA bytes (recommended on v6e/v7x); compute stays f32.
    """
    wq, wk, wv = params['wq'], params['wk'], params['wv']
    bq, bk, bv = params['bq'], params['bk'], params['bv']
    e = wq.shape[0]
    assert e % num_heads == 0
    B, seq_q, dq = q.shape
    _, seq_kv, dk = k.shape
    dv = v.shape[2]
    assert k.shape[0] == B and v.shape[0] == B and v.shape[1] == seq_kv
    assert batch_tile % 128 == 0, "batch (lane) tile must be a multiple of 128"

    smax = max(seq_q, seq_kv)
    bp = ((B + batch_tile - 1) // batch_tile) * batch_tile
    n_tiles = bp // batch_tile
    c_raw = dq + dk + dv + 1                       # + ones channel for biases
    c = ((c_raw + 15) // 16) * 16                  # sublane-aligned channel dim

    # ---- single fused input relayout: concat q|k|v|1|pad, batch -> lanes ----
    qf = q.astype(io_dtype)
    kf = k.astype(io_dtype)
    vf = v.astype(io_dtype)
    if seq_q < smax:
        qf = jnp.pad(qf, ((0, 0), (0, smax - seq_q), (0, 0)))
    if seq_kv < smax:
        kf = jnp.pad(kf, ((0, 0), (0, smax - seq_kv), (0, 0)))
        vf = jnp.pad(vf, ((0, 0), (0, smax - seq_kv), (0, 0)))
    parts = [qf, kf, vf, jnp.ones((B, smax, 1), io_dtype)]
    if c > c_raw:
        parts.append(jnp.zeros((B, smax, c - c_raw), io_dtype))
    xf = jnp.concatenate(parts, axis=-1)                       # (B, Smax, C)
    if bp != B:
        xf = jnp.pad(xf, ((0, bp - B), (0, 0), (0, 0)))
    # (bp, Smax, C) -> (n_tiles, C, Smax*TB); lane index = s*TB + b (seq-major,
    # batch-minor) so per-s lane slices inside the kernel are 128-aligned.
    x2d = xf.reshape(n_tiles, batch_tile, smax, c)
    x2d = jnp.transpose(x2d, (0, 3, 2, 1)).reshape(n_tiles, c,
                                                   smax * batch_tile)

    # ---- block-diagonal projection weight with the biases folded in --------
    f32 = jnp.float32
    w = jnp.zeros((3 * e, c), f32)
    w = w.at[0 * e:1 * e, 0:dq].set(wq.astype(f32))
    w = w.at[1 * e:2 * e, dq:dq + dk].set(wk.astype(f32))
    w = w.at[2 * e:3 * e, dq + dk:dq + dk + dv].set(wv.astype(f32))
    w = w.at[0 * e:1 * e, dq + dk + dv].set(bq.astype(f32))
    w = w.at[1 * e:2 * e, dq + dk + dv].set(bk.astype(f32))
    w = w.at[2 * e:3 * e, dq + dk + dv].set(bv.astype(f32))
    w = w.astype(io_dtype)

    kernel = functools.partial(_sim_attn_kernel, num_heads=num_heads, dim=e,
                               seq_q=seq_q, seq_kv=seq_kv,
                               batch_tile=batch_tile)

    out = pl.pallas_call(
        kernel,
        grid=(n_tiles,),
        in_specs=[
            pl.BlockSpec((1, c, smax * batch_tile), lambda i: (i, 0, 0)),
            pl.BlockSpec((3 * e, c), lambda i: (0, 0)),
        ],
        out_specs=pl.BlockSpec((1, e, seq_q * batch_tile), lambda i: (i, 0, 0)),
        out_shape=jax.ShapeDtypeStruct((n_tiles, e, seq_q * batch_tile),
                                       io_dtype),
        compiler_params=pltpu.CompilerParams(
            dimension_semantics=("parallel",),
            vmem_limit_bytes=32 * 1024 * 1024,
        ),
    )(x2d, w)

    # (n_tiles, E, Lq*TB) -> (B, Lq, E): single output relayout pass.
    out = out.reshape(n_tiles, e, seq_q, batch_tile)
    out = jnp.transpose(out, (0, 3, 2, 1)).reshape(bp, seq_q, e)[:B]
    return out.astype(jnp.float32)


def init_params(key, dim=32, q_dim=None, k_dim=None, v_dim=None):
    """nn.Linear-style params in torch layout: weight (out, in), bias (out,)."""
    q_dim = q_dim or dim
    k_dim = k_dim or dim
    v_dim = v_dim or dim
    ks = jax.random.split(key, 6)

    def linear(kw, kb, fan_in, fan_out):
        bound = fan_in ** -0.5
        wgt = jax.random.uniform(kw, (fan_out, fan_in), jnp.float32, -bound, bound)
        b = jax.random.uniform(kb, (fan_out,), jnp.float32, -bound, bound)
        return wgt, b

    wq, bq = linear(ks[0], ks[1], q_dim, dim)
    wk, bk = linear(ks[2], ks[3], k_dim, dim)
    wv, bv = linear(ks[4], ks[5], v_dim, dim)
    return dict(wq=wq, bq=bq, wk=wk, bk=bk, wv=wv, bv=bv)


def sim_attn_reference(q, k, v, params, *, num_heads):
    """Pure-JAX transcription of the PyTorch SimAttn.forward."""
    hp = jax.lax.Precision.HIGHEST
    qp = jnp.einsum('bld,ed->ble', q, params['wq'], precision=hp) + params['bq']
    kp = jnp.einsum('bsd,ed->bse', k, params['wk'], precision=hp) + params['bk']
    vp = jnp.einsum('bsd,ed->bse', v, params['wv'], precision=hp) + params['bv']
    B, L, E = qp.shape
    S = kp.shape[1]
    dh = E // num_heads
    qh = qp.reshape(B, L, num_heads, dh).transpose(0, 2, 1, 3)
    kh = kp.reshape(B, S, num_heads, dh).transpose(0, 2, 1, 3)
    vh = vp.reshape(B, S, num_heads, dh).transpose(0, 2, 1, 3)

    def normalize(x, eps=1e-12):
        n = jnp.sqrt(jnp.sum(x * x, axis=-1, keepdims=True))
        return x / jnp.maximum(n, eps)

    kh = normalize(kh)
    vh = normalize(vh)
    qk = jnp.einsum('bhli,bhsi->bhls', qh, kh, precision=hp)
    x = jnp.einsum('bhls,bhsi->bhli', qk, vh, precision=hp)
    return x.transpose(0, 2, 1, 3).reshape(B, L, E)


if __name__ == "__main__":
    # Tic-tac-toe-sized SimAttn: seq=9, dim=32, 4 heads; batch fills the lanes.
    # B=500 (not a multiple of 128) also exercises the batch-padding path.
    B, SEQ, DIM, HEADS = 500, 9, 32, 4
    key = jax.random.PRNGKey(0)
    kq, kk, kv_, kp = jax.random.split(key, 4)
    q = jax.random.normal(kq, (B, SEQ, DIM), jnp.float32)
    k = jax.random.normal(kk, (B, SEQ, DIM), jnp.float32)
    v = jax.random.normal(kv_, (B, SEQ, DIM), jnp.float32)
    params = init_params(kp, dim=DIM)

    ref = sim_attn_reference(q, k, v, params, num_heads=HEADS)

    # f32 HBM I/O path (bit-close to the reference via precision=HIGHEST).
    fn32 = jax.jit(functools.partial(sim_attn, num_heads=HEADS,
                                     batch_tile=128, io_dtype=jnp.float32))
    out32 = jax.block_until_ready(fn32(q, k, v, params))
    assert out32.shape == (B, SEQ, DIM)
    err32 = float(jnp.max(jnp.abs(out32 - ref)))
    assert err32 < 1e-3, f"f32 kernel/reference mismatch: max abs err = {err32}"

    # bf16 HBM I/O path (halves DMA bytes on the mem-bound kernel; v6e/v7x).
    fn16 = jax.jit(functools.partial(sim_attn, num_heads=HEADS,
                                     batch_tile=128, io_dtype=jnp.bfloat16))
    out16 = jax.block_until_ready(fn16(q, k, v, params))
    rel16 = float(jnp.max(jnp.abs(out16 - ref)) / jnp.max(jnp.abs(ref)))
    assert rel16 < 5e-2, f"bf16 kernel/reference mismatch: rel err = {rel16}"

    print("KERNEL_OK")
</pallas_src>

<mosaic_0001>
module attributes {stable_mosaic.version = 11 : i64} {
  func.func @_sim_attn_kernel(%arg0: i32, %arg1: memref<1x112x1152xf32, #tpu.memory_space<vmem>>, %arg2: memref<96x112xf32, #tpu.memory_space<vmem>>, %arg3: memref<1x32x1152xf32, #tpu.memory_space<vmem>>) attributes {dimension_semantics = [#tpu.dimension_semantics<parallel>], iteration_bounds = array<i64: 4>, scalar_prefetch = 0 : i64, scratch_operands = 0 : i64, tpu.core_type = #tpu.core_type<tc>, window_params = [{transform_indices = @transform_0, window_bounds = array<i64: 1, 112, 1152>}, {pipeline_mode = #tpu.pipeline_mode<synchronous>, transform_indices = @transform_1, window_bounds = array<i64: 96, 112>}, {transform_indices = @transform_2, window_bounds = array<i64: 1, 32, 1152>}]} {
    %c0 = arith.constant 0 : index
    %c0_0 = arith.constant 0 : index
    %c0_1 = arith.constant 0 : index
    %0 = vector.load %arg1[%c0, %c0_0, %c0_1] : memref<1x112x1152xf32, #tpu.memory_space<vmem>>, vector<1x112x1152xf32>
    %1 = vector.shape_cast %0 : vector<1x112x1152xf32> to vector<112x1152xf32>
    %c0_2 = arith.constant 0 : index
    %c0_3 = arith.constant 0 : index
    %2 = vector.load %arg2[%c0_2, %c0_3] : memref<96x112xf32, #tpu.memory_space<vmem>>, vector<96x112xf32>
    %cst = arith.constant dense<0.000000e+00> : vector<96x1152xf32>
    %3 = tpu.matmul %2, %1, %cst {dimension_numbers = #tpu.dot_dimension_numbers<[1], [0], [0], [1], [0, 0, 1, 1], [], []>, precision = #tpu.contract_precision<fp32>} : vector<96x112xf32>, vector<112x1152xf32>, vector<96x1152xf32> -> vector<96x1152xf32>
    %4 = vector.extract_strided_slice %3 {offsets = [0, 0], sizes = [32, 1152], strides = [1, 1]} : vector<96x1152xf32> to vector<32x1152xf32>
    %5 = vector.shape_cast %4 : vector<32x1152xf32> to vector<4x8x1152xf32>
    %6 = vector.extract_strided_slice %3 {offsets = [32, 0], sizes = [32, 1152], strides = [1, 1]} : vector<96x1152xf32> to vector<32x1152xf32>
    %7 = vector.shape_cast %6 : vector<32x1152xf32> to vector<4x8x1152xf32>
    %8 = vector.extract_strided_slice %3 {offsets = [64, 0], sizes = [32, 1152], strides = [1, 1]} : vector<96x1152xf32> to vector<32x1152xf32>
    %9 = vector.shape_cast %8 : vector<32x1152xf32> to vector<4x8x1152xf32>
    %10 = arith.mulf %7, %7 : vector<4x8x1152xf32>
    %cst_4 = arith.constant dense<0.000000e+00> : vector<4x1152xf32>
    %11 = vector.multi_reduction <add>, %10, %cst_4 [1] : vector<4x8x1152xf32> to vector<4x1152xf32>
    %12 = vector.shape_cast %11 : vector<4x1152xf32> to vector<4x1x1152xf32>
    %cst_5 = arith.constant 1.000000e-24 : f32
    %13 = vector.broadcast %cst_5 : f32 to vector<4x1x1152xf32>
    %14 = arith.maximumf %12, %13 : vector<4x1x1152xf32>
    %15 = math.rsqrt %14 : vector<4x1x1152xf32>
    %16 = vector.broadcast %15 : vector<4x1x1152xf32> to vector<4x8x1152xf32>
    %17 = arith.mulf %7, %16 : vector<4x8x1152xf32>
    %18 = arith.mulf %9, %9 : vector<4x8x1152xf32>
    %cst_6 = arith.constant dense<0.000000e+00> : vector<4x1152xf32>
    %19 = vector.multi_reduction <add>, %18, %cst_6 [1] : vector<4x8x1152xf32> to vector<4x1152xf32>
    %20 = vector.shape_cast %19 : vector<4x1152xf32> to vector<4x1x1152xf32>
    %cst_7 = arith.constant 1.000000e-24 : f32
    %21 = vector.broadcast %cst_7 : f32 to vector<4x1x1152xf32>
    %22 = arith.maximumf %20, %21 : vector<4x1x1152xf32>
    %23 = math.rsqrt %22 : vector<4x1x1152xf32>
    %24 = vector.broadcast %23 : vector<4x1x1152xf32> to vector<4x8x1152xf32>
    %25 = arith.mulf %9, %24 : vector<4x8x1152xf32>
    %26 = vector.extract_strided_slice %17 {offsets = [0, 0, 0], sizes = [4, 8, 128], strides = [1, 1, 1]} : vector<4x8x1152xf32> to vector<4x8x128xf32>
    %27 = vector.extract_strided_slice %17 {offsets = [0, 0, 128], sizes = [4, 8, 128], strides = [1, 1, 1]} : vector<4x8x1152xf32> to vector<4x8x128xf32>
    %28 = vector.extract_strided_slice %17 {offsets = [0, 0, 256], sizes = [4, 8, 128], strides = [1, 1, 1]} : vector<4x8x1152xf32> to vector<4x8x128xf32>
    %29 = vector.extract_strided_slice %17 {offsets = [0, 0, 384], sizes = [4, 8, 128], strides = [1, 1, 1]} : vector<4x8x1152xf32> to vector<4x8x128xf32>
    %30 = vector.extract_strided_slice %17 {offsets = [0, 0, 512], sizes = [4, 8, 128], strides = [1, 1, 1]} : vector<4x8x1152xf32> to vector<4x8x128xf32>
    %31 = vector.extract_strided_slice %17 {offsets = [0, 0, 640], sizes = [4, 8, 128], strides = [1, 1, 1]} : vector<4x8x1152xf32> to vector<4x8x128xf32>
    %32 = vector.extract_strided_slice %17 {offsets = [0, 0, 768], sizes = [4, 8, 128], strides = [1, 1, 1]} : vector<4x8x1152xf32> to vector<4x8x128xf32>
    %33 = vector.extract_strided_slice %17 {offsets = [0, 0, 896], sizes = [4, 8, 128], strides = [1, 1, 1]} : vector<4x8x1152xf32> to vector<4x8x128xf32>
    %34 = vector.extract_strided_slice %17 {offsets = [0, 0, 1024], sizes = [4, 8, 128], strides = [1, 1, 1]} : vector<4x8x1152xf32> to vector<4x8x128xf32>
    %35 = vector.extract_strided_slice %25 {offsets = [0, 0, 0], sizes = [4, 8, 128], strides = [1, 1, 1]} : vector<4x8x1152xf32> to vector<4x8x128xf32>
    %36 = vector.extract_strided_slice %25 {offsets = [0, 0, 128], sizes = [4, 8, 128], strides = [1, 1, 1]} : vector<4x8x1152xf32> to vector<4x8x128xf32>
    %37 = vector.extract_strided_slice %25 {offsets = [0, 0, 256], sizes = [4, 8, 128], strides = [1, 1, 1]} : vector<4x8x1152xf32> to vector<4x8x128xf32>
    %38 = vector.extract_strided_slice %25 {offsets = [0, 0, 384], sizes = [4, 8, 128], strides = [1, 1, 1]} : vector<4x8x1152xf32> to vector<4x8x128xf32>
    %39 = vector.extract_strided_slice %25 {offsets = [0, 0, 512], sizes = [4, 8, 128], strides = [1, 1, 1]} : vector<4x8x1152xf32> to vector<4x8x128xf32>
    %40 = vector.extract_strided_slice %25 {offsets = [0, 0, 640], sizes = [4, 8, 128], strides = [1, 1, 1]} : vector<4x8x1152xf32> to vector<4x8x128xf32>
    %41 = vector.extract_strided_slice %25 {offsets = [0, 0, 768], sizes = [4, 8, 128], strides = [1, 1, 1]} : vector<4x8x1152xf32> to vector<4x8x128xf32>
    %42 = vector.extract_strided_slice %25 {offsets = [0, 0, 896], sizes = [4, 8, 128], strides = [1, 1, 1]} : vector<4x8x1152xf32> to vector<4x8x128xf32>
    %43 = vector.extract_strided_slice %25 {offsets = [0, 0, 1024], sizes = [4, 8, 128], strides = [1, 1, 1]} : vector<4x8x1152xf32> to vector<4x8x128xf32>
    %44 = vector.extract_strided_slice %5 {offsets = [0, 0, 0], sizes = [4, 8, 128], strides = [1, 1, 1]} : vector<4x8x1152xf32> to vector<4x8x128xf32>
    %45 = arith.mulf %44, %26 : vector<4x8x128xf32>
    %cst_8 = arith.constant dense<0.000000e+00> : vector<4x128xf32>
    %46 = vector.multi_reduction <add>, %45, %cst_8 [1] : vector<4x8x128xf32> to vector<4x128xf32>
    %47 = vector.shape_cast %46 : vector<4x128xf32> to vector<4x1x128xf32>
    %48 = vector.broadcast %47 : vector<4x1x128xf32> to vector<4x8x128xf32>
    %49 = arith.mulf %48, %35 : vector<4x8x128xf32>
    %50 = arith.mulf %44, %27 : vector<4x8x128xf32>
    %cst_9 = arith.constant dense<0.000000e+00> : vector<4x128xf32>
    %51 = vector.multi_reduction <add>, %50, %cst_9 [1] : vector<4x8x128xf32> to vector<4x128xf32>
    %52 = vector.shape_cast %51 : vector<4x128xf32> to vector<4x1x128xf32>
    %53 = vector.broadcast %52 : vector<4x1x128xf32> to vector<4x8x128xf32>
    %54 = arith.mulf %53, %36 : vector<4x8x128xf32>
    %55 = arith.addf %49, %54 : vector<4x8x128xf32>
    %56 = arith.mulf %44, %28 : vector<4x8x128xf32>
    %cst_10 = arith.constant dense<0.000000e+00> : vector<4x128xf32>
    %57 = vector.multi_reduction <add>, %56, %cst_10 [1] : vector<4x8x128xf32> to vector<4x128xf32>
    %58 = vector.shape_cast %57 : vector<4x128xf32> to vector<4x1x128xf32>
    %59 = vector.broadcast %58 : vector<4x1x128xf32> to vector<4x8x128xf32>
    %60 = arith.mulf %59, %37 : vector<4x8x128xf32>
    %61 = arith.addf %55, %60 : vector<4x8x128xf32>
    %62 = arith.mulf %44, %29 : vector<4x8x128xf32>
    %cst_11 = arith.constant dense<0.000000e+00> : vector<4x128xf32>
    %63 = vector.multi_reduction <add>, %62, %cst_11 [1] : vector<4x8x128xf32> to vector<4x128xf32>
    %64 = vector.shape_cast %63 : vector<4x128xf32> to vector<4x1x128xf32>
    %65 = vector.broadcast %64 : vector<4x1x128xf32> to vector<4x8x128xf32>
    %66 = arith.mulf %65, %38 : vector<4x8x128xf32>
    %67 = arith.addf %61, %66 : vector<4x8x128xf32>
    %68 = arith.mulf %44, %30 : vector<4x8x128xf32>
    %cst_12 = arith.constant dense<0.000000e+00> : vector<4x128xf32>
    %69 = vector.multi_reduction <add>, %68, %cst_12 [1] : vector<4x8x128xf32> to vector<4x128xf32>
    %70 = vector.shape_cast %69 : vector<4x128xf32> to vector<4x1x128xf32>
    %71 = vector.broadcast %70 : vector<4x1x128xf32> to vector<4x8x128xf32>
    %72 = arith.mulf %71, %39 : vector<4x8x128xf32>
    %73 = arith.addf %67, %72 : vector<4x8x128xf32>
    %74 = arith.mulf %44, %31 : vector<4x8x128xf32>
    %cst_13 = arith.constant dense<0.000000e+00> : vector<4x128xf32>
    %75 = vector.multi_reduction <add>, %74, %cst_13 [1] : vector<4x8x128xf32> to vector<4x128xf32>
    %76 = vector.shape_cast %75 : vector<4x128xf32> to vector<4x1x128xf32>
    %77 = vector.broadcast %76 : vector<4x1x128xf32> to vector<4x8x128xf32>
    %78 = arith.mulf %77, %40 : vector<4x8x128xf32>
    %79 = arith.addf %73, %78 : vector<4x8x128xf32>
    %80 = arith.mulf %44, %32 : vector<4x8x128xf32>
    %cst_14 = arith.constant dense<0.000000e+00> : vector<4x128xf32>
    %81 = vector.multi_reduction <add>, %80, %cst_14 [1] : vector<4x8x128xf32> to vector<4x128xf32>
    %82 = vector.shape_cast %81 : vector<4x128xf32> to vector<4x1x128xf32>
    %83 = vector.broadcast %82 : vector<4x1x128xf32> to vector<4x8x128xf32>
    %84 = arith.mulf %83, %41 : vector<4x8x128xf32>
    %85 = arith.addf %79, %84 : vector<4x8x128xf32>
    %86 = arith.mulf %44, %33 : vector<4x8x128xf32>
    %cst_15 = arith.constant dense<0.000000e+00> : vector<4x128xf32>
    %87 = vector.multi_reduction <add>, %86, %cst_15 [1] : vector<4x8x128xf32> to vector<4x128xf32>
    %88 = vector.shape_cast %87 : vector<4x128xf32> to vector<4x1x128xf32>
    %89 = vector.broadcast %88 : vector<4x1x128xf32> to vector<4x8x128xf32>
    %90 = arith.mulf %89, %42 : vector<4x8x128xf32>
    %91 = arith.addf %85, %90 : vector<4x8x128xf32>
    %92 = arith.mulf %44, %34 : vector<4x8x128xf32>
    %cst_16 = arith.constant dense<0.000000e+00> : vector<4x128xf32>
    %93 = vector.multi_reduction <add>, %92, %cst_16 [1] : vector<4x8x128xf32> to vector<4x128xf32>
    %94 = vector.shape_cast %93 : vector<4x128xf32> to vector<4x1x128xf32>
    %95 = vector.broadcast %94 : vector<4x1x128xf32> to vector<4x8x128xf32>
    %96 = arith.mulf %95, %43 : vector<4x8x128xf32>
    %97 = arith.addf %91, %96 : vector<4x8x128xf32>
    %98 = vector.shape_cast %97 : vector<4x8x128xf32> to vector<32x128xf32>
    %c0_17 = arith.constant 0 : index
    %c0_18 = arith.constant 0 : index
    %c0_19 = arith.constant 0 : index
    %99 = vector.load %arg3[%c0_17, %c0_18, %c0_19] : memref<1x32x1152xf32, #tpu.memory_space<vmem>>, vector<1x32x128xf32>
    %100 = vector.shape_cast %99 : vector<1x32x128xf32> to vector<32x128xf32>
    %101 = vector.shape_cast %98 : vector<32x128xf32> to vector<1x32x128xf32>
    tpu.vector_store %arg3[%c0_17, %c0_18, %c0_19], %101 {strides = array<i32>} : memref<1x32x1152xf32, #tpu.memory_space<vmem>>, vector<1x32x128xf32>,
    %102 = vector.extract_strided_slice %5 {offsets = [0, 0, 128], sizes = [4, 8, 128], strides = [1, 1, 1]} : vector<4x8x1152xf32> to vector<4x8x128xf32>
    %103 = arith.mulf %102, %26 : vector<4x8x128xf32>
    %cst_20 = arith.constant dense<0.000000e+00> : vector<4x128xf32>
    %104 = vector.multi_reduction <add>, %103, %cst_20 [1] : vector<4x8x128xf32> to vector<4x128xf32>
    %105 = vector.shape_cast %104 : vector<4x128xf32> to vector<4x1x128xf32>
    %106 = vector.broadcast %105 : vector<4x1x128xf32> to vector<4x8x128xf32>
    %107 = arith.mulf %106, %35 : vector<4x8x128xf32>
    %108 = arith.mulf %102, %27 : vector<4x8x128xf32>
    %cst_21 = arith.constant dense<0.000000e+00> : vector<4x128xf32>
    %109 = vector.multi_reduction <add>, %108, %cst_21 [1] : vector<4x8x128xf32> to vector<4x128xf32>
    %110 = vector.shape_cast %109 : vector<4x128xf32> to vector<4x1x128xf32>
    %111 = vector.broadcast %110 : vector<4x1x128xf32> to vector<4x8x128xf32>
    %112 = arith.mulf %111, %36 : vector<4x8x128xf32>
    %113 = arith.addf %107, %112 : vector<4x8x128xf32>
    %114 = arith.mulf %102, %28 : vector<4x8x128xf32>
    %cst_22 = arith.constant dense<0.000000e+00> : vector<4x128xf32>
    %115 = vector.multi_reduction <add>, %114, %cst_22 [1] : vector<4x8x128xf32> to vector<4x128xf32>
    %116 = vector.shape_cast %115 : vector<4x128xf32> to vector<4x1x128xf32>
    %117 = vector.broadcast %116 : vector<4x1x128xf32> to vector<4x8x128xf32>
    %118 = arith.mulf %117, %37 : vector<4x8x128xf32>
    %119 = arith.addf %113, %118 : vector<4x8x128xf32>
    %120 = arith.mulf %102, %29 : vector<4x8x128xf32>
    %cst_23 = arith.constant dense<0.000000e+00> : vector<4x128xf32>
    %121 = vector.multi_reduction <add>, %120, %cst_23 [1] : vector<4x8x128xf32> to vector<4x128xf32>
    %122 = vector.shape_cast %121 : vector<4x128xf32> to vector<4x1x128xf32>
    %123 = vector.broadcast %122 : vector<4x1x128xf32> to vector<4x8x128xf32>
    %124 = arith.mulf %123, %38 : vector<4x8x128xf32>
    %125 = arith.addf %119, %124 : vector<4x8x128xf32>
    %126 = arith.mulf %102, %30 : vector<4x8x128xf32>
    %cst_24 = arith.constant dense<0.000000e+00> : vector<4x128xf32>
    %127 = vector.multi_reduction <add>, %126, %cst_24 [1] : vector<4x8x128xf32> to vector<4x128xf32>
    %128 = vector.shape_cast %127 : vector<4x128xf32> to vector<4x1x128xf32>
    %129 = vector.broadcast %128 : vector<4x1x128xf32> to vector<4x8x128xf32>
    %130 = arith.mulf %129, %39 : vector<4x8x128xf32>
    %131 = arith.addf %125, %130 : vector<4x8x128xf32>
    %132 = arith.mulf %102, %31 : vector<4x8x128xf32>
    %cst_25 = arith.constant dense<0.000000e+00> : vector<4x128xf32>
    %133 = vector.multi_reduction <add>, %132, %cst_25 [1] : vector<4x8x128xf32> to vector<4x128xf32>
    %134 = vector.shape_cast %133 : vector<4x128xf32> to vector<4x1x128xf32>
    %135 = vector.broadcast %134 : vector<4x1x128xf32> to vector<4x8x128xf32>
    %136 = arith.mulf %135, %40 : vector<4x8x128xf32>
    %137 = arith.addf %131, %136 : vector<4x8x128xf32>
    %138 = arith.mulf %102, %32 : vector<4x8x128xf32>
    %cst_26 = arith.constant dense<0.000000e+00> : vector<4x128xf32>
    %139 = vector.multi_reduction <add>, %138, %cst_26 [1] : vector<4x8x128xf32> to vector<4x128xf32>
    %140 = vector.shape_cast %139 : vector<4x128xf32> to vector<4x1x128xf32>
    %141 = vector.broadcast %140 : vector<4x1x128xf32> to vector<4x8x128xf32>
    %142 = arith.mulf %141, %41 : vector<4x8x128xf32>
    %143 = arith.addf %137, %142 : vector<4x8x128xf32>
    %144 = arith.mulf %102, %33 : vector<4x8x128xf32>
    %cst_27 = arith.constant dense<0.000000e+00> : vector<4x128xf32>
    %145 = vector.multi_reduction <add>, %144, %cst_27 [1] : vector<4x8x128xf32> to vector<4x128xf32>
    %146 = vector.shape_cast %145 : vector<4x128xf32> to vector<4x1x128xf32>
    %147 = vector.broadcast %146 : vector<4x1x128xf32> to vector<4x8x128xf32>
    %148 = arith.mulf %147, %42 : vector<4x8x128xf32>
    %149 = arith.addf %143, %148 : vector<4x8x128xf32>
    %150 = arith.mulf %102, %34 : vector<4x8x128xf32>
    %cst_28 = arith.constant dense<0.000000e+00> : vector<4x128xf32>
    %151 = vector.multi_reduction <add>, %150, %cst_28 [1] : vector<4x8x128xf32> to vector<4x128xf32>
    %152 = vector.shape_cast %151 : vector<4x128xf32> to vector<4x1x128xf32>
    %153 = vector.broadcast %152 : vector<4x1x128xf32> to vector<4x8x128xf32>
    %154 = arith.mulf %153, %43 : vector<4x8x128xf32>
    %155 = arith.addf %149, %154 : vector<4x8x128xf32>
    %156 = vector.shape_cast %155 : vector<4x8x128xf32> to vector<32x128xf32>
    %c0_29 = arith.constant 0 : index
    %c0_30 = arith.constant 0 : index
    %c128 = arith.constant 128 : index
    %157 = vector.load %arg3[%c0_29, %c0_30, %c128] : memref<1x32x1152xf32, #tpu.memory_space<vmem>>, vector<1x32x128xf32>
    %158 = vector.shape_cast %157 : vector<1x32x128xf32> to vector<32x128xf32>
    %159 = vector.shape_cast %156 : vector<32x128xf32> to vector<1x32x128xf32>
    tpu.vector_store %arg3[%c0_29, %c0_30, %c128], %159 {strides = array<i32>} : memref<1x32x1152xf32, #tpu.memory_space<vmem>>, vector<1x32x128xf32>,
    %160 = vector.extract_strided_slice %5 {offsets = [0, 0, 256], sizes = [4, 8, 128], strides = [1, 1, 1]} : vector<4x8x1152xf32> to vector<4x8x128xf32>
    %161 = arith.mulf %160, %26 : vector<4x8x128xf32>
    %cst_31 = arith.constant dense<0.000000e+00> : vector<4x128xf32>
    %162 = vector.multi_reduction <add>, %161, %cst_31 [1] : vector<4x8x128xf32> to vector<4x128xf32>
    %163 = vector.shape_cast %162 : vector<4x128xf32> to vector<4x1x128xf32>
    %164 = vector.broadcast %163 : vector<4x1x128xf32> to vector<4x8x128xf32>
    %165 = arith.mulf %164, %35 : vector<4x8x128xf32>
    %166 = arith.mulf %160, %27 : vector<4x8x128xf32>
    %cst_32 = arith.constant dense<0.000000e+00> : vector<4x128xf32>
    %167 = vector.multi_reduction <add>, %166, %cst_32 [1] : vector<4x8x128xf32> to vector<4x128xf32>
    %168 = vector.shape_cast %167 : vector<4x128xf32> to vector<4x1x128xf32>
    %169 = vector.broadcast %168 : vector<4x1x128xf32> to vector<4x8x128xf32>
    %170 = arith.mulf %169, %36 : vector<4x8x128xf32>
    %171 = arith.addf %165, %170 : vector<4x8x128xf32>
    %172 = arith.mulf %160, %28 : vector<4x8x128xf32>
    %cst_33 = arith.constant dense<0.000000e+00> : vector<4x128xf32>
    %173 = vector.multi_reduction <add>, %172, %cst_33 [1] : vector<4x8x128xf32> to vector<4x128xf32>
    %174 = vector.shape_cast %173 : vector<4x128xf32> to vector<4x1x128xf32>
    %175 = vector.broadcast %174 : vector<4x1x128xf32> to vector<4x8x128xf32>
    %176 = arith.mulf %175, %37 : vector<4x8x128xf32>
    %177 = arith.addf %171, %176 : vector<4x8x128xf32>
    %178 = arith.mulf %160, %29 : vector<4x8x128xf32>
    %cst_34 = arith.constant dense<0.000000e+00> : vector<4x128xf32>
    %179 = vector.multi_reduction <add>, %178, %cst_34 [1] : vector<4x8x128xf32> to vector<4x128xf32>
    %180 = vector.shape_cast %179 : vector<4x128xf32> to vector<4x1x128xf32>
    %181 = vector.broadcast %180 : vector<4x1x128xf32> to vector<4x8x128xf32>
    %182 = arith.mulf %181, %38 : vector<4x8x128xf32>
    %183 = arith.addf %177, %182 : vector<4x8x128xf32>
    %184 = arith.mulf %160, %30 : vector<4x8x128xf32>
    %cst_35 = arith.constant dense<0.000000e+00> : vector<4x128xf32>
    %185 = vector.multi_reduction <add>, %184, %cst_35 [1] : vector<4x8x128xf32> to vector<4x128xf32>
    %186 = vector.shape_cast %185 : vector<4x128xf32> to vector<4x1x128xf32>
    %187 = vector.broadcast %186 : vector<4x1x128xf32> to vector<4x8x128xf32>
    %188 = arith.mulf %187, %39 : vector<4x8x128xf32>
    %189 = arith.addf %183, %188 : vector<4x8x128xf32>
    %190 = arith.mulf %160, %31 : vector<4x8x128xf32>
    %cst_36 = arith.constant dense<0.000000e+00> : vector<4x128xf32>
    %191 = vector.multi_reduction <add>, %190, %cst_36 [1] : vector<4x8x128xf32> to vector<4x128xf32>
    %192 = vector.shape_cast %191 : vector<4x128xf32> to vector<4x1x128xf32>
    %193 = vector.broadcast %192 : vector<4x1x128xf32> to vector<4x8x128xf32>
    %194 = arith.mulf %193, %40 : vector<4x8x128xf32>
    %195 = arith.addf %189, %194 : vector<4x8x128xf32>
    %196 = arith.mulf %160, %32 : vector<4x8x128xf32>
    %cst_37 = arith.constant dense<0.000000e+00> : vector<4x128xf32>
    %197 = vector.multi_reduction <add>, %196, %cst_37 [1] : vector<4x8x128xf32> to vector<4x128xf32>
    %198 = vector.shape_cast %197 : vector<4x128xf32> to vector<4x1x128xf32>
    %199 = vector.broadcast %198 : vector<4x1x128xf32> to vector<4x8x128xf32>
    %200 = arith.mulf %199, %41 : vector<4x8x128xf32>
    %201 = arith.addf %195, %200 : vector<4x8x128xf32>
    %202 = arith.mulf %160, %33 : vector<4x8x128xf32>
    %cst_38 = arith.constant dense<0.000000e+00> : vector<4x128xf32>
    %203 = vector.multi_reduction <add>, %202, %cst_38 [1] : vector<4x8x128xf32> to vector<4x128xf32>
    %204 = vector.shape_cast %203 : vector<4x128xf32> to vector<4x1x128xf32>
    %205 = vector.broadcast %204 : vector<4x1x128xf32> to vector<4x8x128xf32>
    %206 = arith.mulf %205, %42 : vector<4x8x128xf32>
    %207 = arith.addf %201, %206 : vector<4x8x128xf32>
    %208 = arith.mulf %160, %34 : vector<4x8x128xf32>
    %cst_39 = arith.constant dense<0.000000e+00> : vector<4x128xf32>
    %209 = vector.multi_reduction <add>, %208, %cst_39 [1] : vector<4x8x128xf32> to vector<4x128xf32>
    %210 = vector.shape_cast %209 : vector<4x128xf32> to vector<4x1x128xf32>
    %211 = vector.broadcast %210 : vector<4x1x128xf32> to vector<4x8x128xf32>
    %212 = arith.mulf %211, %43 : vector<4x8x128xf32>
    %213 = arith.addf %207, %212 : vector<4x8x128xf32>
    %214 = vector.shape_cast %213 : vector<4x8x128xf32> to vector<32x128xf32>
    %c0_40 = arith.constant 0 : index
    %c0_41 = arith.constant 0 : index
    %c256 = arith.constant 256 : index
    %215 = vector.load %arg3[%c0_40, %c0_41, %c256] : memref<1x32x1152xf32, #tpu.memory_space<vmem>>, vector<1x32x128xf32>
    %216 = vector.shape_cast %215 : vector<1x32x128xf32> to vector<32x128xf32>
    %217 = vector.shape_cast %214 : vector<32x128xf32> to vector<1x32x128xf32>
    tpu.vector_store %arg3[%c0_40, %c0_41, %c256], %217 {strides = array<i32>} : memref<1x32x1152xf32, #tpu.memory_space<vmem>>, vector<1x32x128xf32>,
    %218 = vector.extract_strided_slice %5 {offsets = [0, 0, 384], sizes = [4, 8, 128], strides = [1, 1, 1]} : vector<4x8x1152xf32> to vector<4x8x128xf32>
    %219 = arith.mulf %218, %26 : vector<4x8x128xf32>
    %cst_42 = arith.constant dense<0.000000e+00> : vector<4x128xf32>
    %220 = vector.multi_reduction <add>, %219, %cst_42 [1] : vector<4x8x128xf32> to vector<4x128xf32>
    %221 = vector.shape_cast %220 : vector<4x128xf32> to vector<4x1x128xf32>
    %222 = vector.broadcast %221 : vector<4x1x128xf32> to vector<4x8x128xf32>
    %223 = arith.mulf %222, %35 : vector<4x8x128xf32>
    %224 = arith.mulf %218, %27 : vector<4x8x128xf32>
    %cst_43 = arith.constant dense<0.000000e+00> : vector<4x128xf32>
    %225 = vector.multi_reduction <add>, %224, %cst_43 [1] : vector<4x8x128xf32> to vector<4x128xf32>
    %226 = vector.shape_cast %225 : vector<4x128xf32> to vector<4x1x128xf32>
    %227 = vector.broadcast %226 : vector<4x1x128xf32> to vector<4x8x128xf32>
    %228 = arith.mulf %227, %36 : vector<4x8x128xf32>
    %229 = arith.addf %223, %228 : vector<4x8x128xf32>
    %230 = arith.mulf %218, %28 : vector<4x8x128xf32>
    %cst_44 = arith.constant dense<0.000000e+00> : vector<4x128xf32>
    %231 = vector.multi_reduction <add>, %230, %cst_44 [1] : vector<4x8x128xf32> to vector<4x128xf32>
    %232 = vector.shape_cast %231 : vector<4x128xf32> to vector<4x1x128xf32>
    %233 = vector.broadcast %232 : vector<4x1x128xf32> to vector<4x8x128xf32>
    %234 = arith.mulf %233, %37 : vector<4x8x128xf32>
    %235 = arith.addf %229, %234 : vector<4x8x128xf32>
    %236 = arith.mulf %218, %29 : vector<4x8x128xf32>
    %cst_45 = arith.constant dense<0.000000e+00> : vector<4x128xf32>
    %237 = vector.multi_reduction <add>, %236, %cst_45 [1] : vector<4x8x128xf32> to vector<4x128xf32>
    %238 = vector.shape_cast %237 : vector<4x128xf32> to vector<4x1x128xf32>
    %239 = vector.broadcast %238 : vector<4x1x128xf32> to vector<4x8x128xf32>
    %240 = arith.mulf %239, %38 : vector<4x8x128xf32>
    %241 = arith.addf %235, %240 : vector<4x8x128xf32>
    %242 = arith.mulf %218, %30 : vector<4x8x128xf32>
    %cst_46 = arith.constant dense<0.000000e+00> : vector<4x128xf32>
    %243 = vector.multi_reduction <add>, %242, %cst_46 [1] : vector<4x8x128xf32> to vector<4x128xf32>
    %244 = vector.shape_cast %243 : vector<4x128xf32> to vector<4x1x128xf32>
    %245 = vector.broadcast %244 : vector<4x1x128xf32> to vector<4x8x128xf32>
    %246 = arith.mulf %245, %39 : vector<4x8x128xf32>
    %247 = arith.addf %241, %246 : vector<4x8x128xf32>
    %248 = arith.mulf %218, %31 : vector<4x8x128xf32>
    %cst_47 = arith.constant dense<0.000000e+00> : vector<4x128xf32>
    %249 = vector.multi_reduction <add>, %248, %cst_47 [1] : vector<4x8x128xf32> to vector<4x128xf32>
    %250 = vector.shape_cast %249 : vector<4x128xf32> to vector<4x1x128xf32>
    %251 = vector.broadcast %250 : vector<4x1x128xf32> to vector<4x8x128xf32>
    %252 = arith.mulf %251, %40 : vector<4x8x128xf32>
    %253 = arith.addf %247, %252 : vector<4x8x128xf32>
    %254 = arith.mulf %218, %32 : vector<4x8x128xf32>
    %cst_48 = arith.constant dense<0.000000e+00> : vector<4x128xf32>
    %255 = vector.multi_reduction <add>, %254, %cst_48 [1] : vector<4x8x128xf32> to vector<4x128xf32>
    %256 = vector.shape_cast %255 : vector<4x128xf32> to vector<4x1x128xf32>
    %257 = vector.broadcast %256 : vector<4x1x128xf32> to vector<4x8x128xf32>
    %258 = arith.mulf %257, %41 : vector<4x8x128xf32>
    %259 = arith.addf %253, %258 : vector<4x8x128xf32>
    %260 = arith.mulf %218, %33 : vector<4x8x128xf32>
    %cst_49 = arith.constant dense<0.000000e+00> : vector<4x128xf32>
    %261 = vector.multi_reduction <add>, %260, %cst_49 [1] : vector<4x8x128xf32> to vector<4x128xf32>
    %262 = vector.shape_cast %261 : vector<4x128xf32> to vector<4x1x128xf32>
    %263 = vector.broadcast %262 : vector<4x1x128xf32> to vector<4x8x128xf32>
    %264 = arith.mulf %263, %42 : vector<4x8x128xf32>
    %265 = arith.addf %259, %264 : vector<4x8x128xf32>
    %266 = arith.mulf %218, %34 : vector<4x8x128xf32>
    %cst_50 = arith.constant dense<0.000000e+00> : vector<4x128xf32>
    %267 = vector.multi_reduction <add>, %266, %cst_50 [1] : vector<4x8x128xf32> to vector<4x128xf32>
    %268 = vector.shape_cast %267 : vector<4x128xf32> to vector<4x1x128xf32>
    %269 = vector.broadcast %268 : vector<4x1x128xf32> to vector<4x8x128xf32>
    %270 = arith.mulf %269, %43 : vector<4x8x128xf32>
    %271 = arith.addf %265, %270 : vector<4x8x128xf32>
    %272 = vector.shape_cast %271 : vector<4x8x128xf32> to vector<32x128xf32>
    %c0_51 = arith.constant 0 : index
    %c0_52 = arith.constant 0 : index
    %c384 = arith.constant 384 : index
    %273 = vector.load %arg3[%c0_51, %c0_52, %c384] : memref<1x32x1152xf32, #tpu.memory_space<vmem>>, vector<1x32x128xf32>
    %274 = vector.shape_cast %273 : vector<1x32x128xf32> to vector<32x128xf32>
    %275 = vector.shape_cast %272 : vector<32x128xf32> to vector<1x32x128xf32>
    tpu.vector_store %arg3[%c0_51, %c0_52, %c384], %275 {strides = array<i32>} : memref<1x32x1152xf32, #tpu.memory_space<vmem>>, vector<1x32x128xf32>,
    %276 = vector.extract_strided_slice %5 {offsets = [0, 0, 512], sizes = [4, 8, 128], strides = [1, 1, 1]} : vector<4x8x1152xf32> to vector<4x8x128xf32>
    %277 = arith.mulf %276, %26 : vector<4x8x128xf32>
    %cst_53 = arith.constant dense<0.000000e+00> : vector<4x128xf32>
    %278 = vector.multi_reduction <add>, %277, %cst_53 [1] : vector<4x8x128xf32> to vector<4x128xf32>
    %279 = vector.shape_cast %278 : vector<4x128xf32> to vector<4x1x128xf32>
    %280 = vector.broadcast %279 : vector<4x1x128xf32> to vector<4x8x128xf32>
    %281 = arith.mulf %280, %35 : vector<4x8x128xf32>
    %282 = arith.mulf %276, %27 : vector<4x8x128xf32>
    %cst_54 = arith.constant dense<0.000000e+00> : vector<4x128xf32>
    %283 = vector.multi_reduction <add>, %282, %cst_54 [1] : vector<4x8x128xf32> to vector<4x128xf32>
    %284 = vector.shape_cast %283 : vector<4x128xf32> to vector<4x1x128xf32>
    %285 = vector.broadcast %284 : vector<4x1x128xf32> to vector<4x8x128xf32>
    %286 = arith.mulf %285, %36 : vector<4x8x128xf32>
    %287 = arith.addf %281, %286 : vector<4x8x128xf32>
    %288 = arith.mulf %276, %28 : vector<4x8x128xf32>
    %cst_55 = arith.constant dense<0.000000e+00> : vector<4x128xf32>
    %289 = vector.multi_reduction <add>, %288, %cst_55 [1] : vector<4x8x128xf32> to vector<4x128xf32>
    %290 = vector.shape_cast %289 : vector<4x128xf32> to vector<4x1x128xf32>
    %291 = vector.broadcast %290 : vector<4x1x128xf32> to vector<4x8x128xf32>
    %292 = arith.mulf %291, %37 : vector<4x8x128xf32>
    %293 = arith.addf %287, %292 : vector<4x8x128xf32>
    %294 = arith.mulf %276, %29 : vector<4x8x128xf32>
    %cst_56 = arith.constant dense<0.000000e+00> : vector<4x128xf32>
    %295 = vector.multi_reduction <add>, %294, %cst_56 [1] : vector<4x8x128xf32> to vector<4x128xf32>
    %296 = vector.shape_cast %295 : vector<4x128xf32> to vector<4x1x128xf32>
    %297 = vector.broadcast %296 : vector<4x1x128xf32> to vector<4x8x128xf32>
    %298 = arith.mulf %297, %38 : vector<4x8x128xf32>
    %299 = arith.addf %293, %298 : vector<4x8x128xf32>
    %300 = arith.mulf %276, %30 : vector<4x8x128xf32>
    %cst_57 = arith.constant dense<0.000000e+00> : vector<4x128xf32>
    %301 = vector.multi_reduction <add>, %300, %cst_57 [1] : vector<4x8x128xf32> to vector<4x128xf32>
    %302 = vector.shape_cast %301 : vector<4x128xf32> to vector<4x1x128xf32>
    %303 = vector.broadcast %302 : vector<4x1x128xf32> to vector<4x8x128xf32>
    %304 = arith.mulf %303, %39 : vector<4x8x128xf32>
    %305 = arith.addf %299, %304 : vector<4x8x128xf32>
    %306 = arith.mulf %276, %31 : vector<4x8x128xf32>
    %cst_58 = arith.constant dense<0.000000e+00> : vector<4x128xf32>
    %307 = vector.multi_reduction <add>, %306, %cst_58 [1] : vector<4x8x128xf32> to vector<4x128xf32>
    %308 = vector.shape_cast %307 : vector<4x128xf32> to vector<4x1x128xf32>
    %309 = vector.broadcast %308 : vector<4x1x128xf32> to vector<4x8x128xf32>
    %310 = arith.mulf %309, %40 : vector<4x8x128xf32>
    %311 = arith.addf %305, %310 : vector<4x8x128xf32>
    %312 = arith.mulf %276, %32 : vector<4x8x128xf32>
    %cst_59 = arith.constant dense<0.000000e+00> : vector<4x128xf32>
    %313 = vector.multi_reduction <add>, %312, %cst_59 [1] : vector<4x8x128xf32> to vector<4x128xf32>
    %314 = vector.shape_cast %313 : vector<4x128xf32> to vector<4x1x128xf32>
    %315 = vector.broadcast %314 : vector<4x1x128xf32> to vector<4x8x128xf32>
    %316 = arith.mulf %315, %41 : vector<4x8x128xf32>
    %317 = arith.addf %311, %316 : vector<4x8x128xf32>
    %318 = arith.mulf %276, %33 : vector<4x8x128xf32>
    %cst_60 = arith.constant dense<0.000000e+00> : vector<4x128xf32>
    %319 = vector.multi_reduction <add>, %318, %cst_60 [1] : vector<4x8x128xf32> to vector<4x128xf32>
    %320 = vector.shape_cast %319 : vector<4x128xf32> to vector<4x1x128xf32>
    %321 = vector.broadcast %320 : vector<4x1x128xf32> to vector<4x8x128xf32>
    %322 = arith.mulf %321, %42 : vector<4x8x128xf32>
    %323 = arith.addf %317, %322 : vector<4x8x128xf32>
    %324 = arith.mulf %276, %34 : vector<4x8x128xf32>
    %cst_61 = arith.constant dense<0.000000e+00> : vector<4x128xf32>
    %325 = vector.multi_reduction <add>, %324, %cst_61 [1] : vector<4x8x128xf32> to vector<4x128xf32>
    %326 = vector.shape_cast %325 : vector<4x128xf32> to vector<4x1x128xf32>
    %327 = vector.broadcast %326 : vector<4x1x128xf32> to vector<4x8x128xf32>
    %328 = arith.mulf %327, %43 : vector<4x8x128xf32>
    %329 = arith.addf %323, %328 : vector<4x8x128xf32>
    %330 = vector.shape_cast %329 : vector<4x8x128xf32> to vector<32x128xf32>
    %c0_62 = arith.constant 0 : index
    %c0_63 = arith.constant 0 : index
    %c512 = arith.constant 512 : index
    %331 = vector.load %arg3[%c0_62, %c0_63, %c512] : memref<1x32x1152xf32, #tpu.memory_space<vmem>>, vector<1x32x128xf32>
    %332 = vector.shape_cast %331 : vector<1x32x128xf32> to vector<32x128xf32>
    %333 = vector.shape_cast %330 : vector<32x128xf32> to vector<1x32x128xf32>
    tpu.vector_store %arg3[%c0_62, %c0_63, %c512], %333 {strides = array<i32>} : memref<1x32x1152xf32, #tpu.memory_space<vmem>>, vector<1x32x128xf32>,
    %334 = vector.extract_strided_slice %5 {offsets = [0, 0, 640], sizes = [4, 8, 128], strides = [1, 1, 1]} : vector<4x8x1152xf32> to vector<4x8x128xf32>
    %335 = arith.mulf %334, %26 : vector<4x8x128xf32>
    %cst_64 = arith.constant dense<0.000000e+00> : vector<4x128xf32>
    %336 = vector.multi_reduction <add>, %335, %cst_64 [1] : vector<4x8x128xf32> to vector<4x128xf32>
    %337 = vector.shape_cast %336 : vector<4x128xf32> to vector<4x1x128xf32>
    %338 = vector.broadcast %337 : vector<4x1x128xf32> to vector<4x8x128xf32>
    %339 = arith.mulf %338, %35 : vector<4x8x128xf32>
    %340 = arith.mulf %334, %27 : vector<4x8x128xf32>
    %cst_65 = arith.constant dense<0.000000e+00> : vector<4x128xf32>
    %341 = vector.multi_reduction <add>, %340, %cst_65 [1] : vector<4x8x128xf32> to vector<4x128xf32>
    %342 = vector.shape_cast %341 : vector<4x128xf32> to vector<4x1x128xf32>
    %343 = vector.broadcast %342 : vector<4x1x128xf32> to vector<4x8x128xf32>
    %344 = arith.mulf %343, %36 : vector<4x8x128xf32>
    %345 = arith.addf %339, %344 : vector<4x8x128xf32>
    %346 = arith.mulf %334, %28 : vector<4x8x128xf32>
    %cst_66 = arith.constant dense<0.000000e+00> : vector<4x128xf32>
    %347 = vector.multi_reduction <add>, %346, %cst_66 [1] : vector<4x8x128xf32> to vector<4x128xf32>
    %348 = vector.shape_cast %347 : vector<4x128xf32> to vector<4x1x128xf32>
    %349 = vector.broadcast %348 : vector<4x1x128xf32> to vector<4x8x128xf32>
    %350 = arith.mulf %349, %37 : vector<4x8x128xf32>
    %351 = arith.addf %345, %350 : vector<4x8x128xf32>
    %352 = arith.mulf %334, %29 : vector<4x8x128xf32>
    %cst_67 = arith.constant dense<0.000000e+00> : vector<4x128xf32>
    %353 = vector.multi_reduction <add>, %352, %cst_67 [1] : vector<4x8x128xf32> to vector<4x128xf32>
    %354 = vector.shape_cast %353 : vector<4x128xf32> to vector<4x1x128xf32>
    %355 = vector.broadcast %354 : vector<4x1x128xf32> to vector<4x8x128xf32>
    %356 = arith.mulf %355, %38 : vector<4x8x128xf32>
    %357 = arith.addf %351, %356 : vector<4x8x128xf32>
    %358 = arith.mulf %334, %30 : vector<4x8x128xf32>
    %cst_68 = arith.constant dense<0.000000e+00> : vector<4x128xf32>
    %359 = vector.multi_reduction <add>, %358, %cst_68 [1] : vector<4x8x128xf32> to vector<4x128xf32>
    %360 = vector.shape_cast %359 : vector<4x128xf32> to vector<4x1x128xf32>
    %361 = vector.broadcast %360 : vector<4x1x128xf32> to vector<4x8x128xf32>
    %362 = arith.mulf %361, %39 : vector<4x8x128xf32>
    %363 = arith.addf %357, %362 : vector<4x8x128xf32>
    %364 = arith.mulf %334, %31 : vector<4x8x128xf32>
    %cst_69 = arith.constant dense<0.000000e+00> : vector<4x128xf32>
    %365 = vector.multi_reduction <add>, %364, %cst_69 [1] : vector<4x8x128xf32> to vector<4x128xf32>
    %366 = vector.shape_cast %365 : vector<4x128xf32> to vector<4x1x128xf32>
    %367 = vector.broadcast %366 : vector<4x1x128xf32> to vector<4x8x128xf32>
    %368 = arith.mulf %367, %40 : vector<4x8x128xf32>
    %369 = arith.addf %363, %368 : vector<4x8x128xf32>
    %370 = arith.mulf %334, %32 : vector<4x8x128xf32>
    %cst_70 = arith.constant dense<0.000000e+00> : vector<4x128xf32>
    %371 = vector.multi_reduction <add>, %370, %cst_70 [1] : vector<4x8x128xf32> to vector<4x128xf32>
    %372 = vector.shape_cast %371 : vector<4x128xf32> to vector<4x1x128xf32>
    %373 = vector.broadcast %372 : vector<4x1x128xf32> to vector<4x8x128xf32>
    %374 = arith.mulf %373, %41 : vector<4x8x128xf32>
    %375 = arith.addf %369, %374 : vector<4x8x128xf32>
    %376 = arith.mulf %334, %33 : vector<4x8x128xf32>
    %cst_71 = arith.constant dense<0.000000e+00> : vector<4x128xf32>
    %377 = vector.multi_reduction <add>, %376, %cst_71 [1] : vector<4x8x128xf32> to vector<4x128xf32>
    %378 = vector.shape_cast %377 : vector<4x128xf32> to vector<4x1x128xf32>
    %379 = vector.broadcast %378 : vector<4x1x128xf32> to vector<4x8x128xf32>
    %380 = arith.mulf %379, %42 : vector<4x8x128xf32>
    %381 = arith.addf %375, %380 : vector<4x8x128xf32>
    %382 = arith.mulf %334, %34 : vector<4x8x128xf32>
    %cst_72 = arith.constant dense<0.000000e+00> : vector<4x128xf32>
    %383 = vector.multi_reduction <add>, %382, %cst_72 [1] : vector<4x8x128xf32> to vector<4x128xf32>
    %384 = vector.shape_cast %383 : vector<4x128xf32> to vector<4x1x128xf32>
    %385 = vector.broadcast %384 : vector<4x1x128xf32> to vector<4x8x128xf32>
    %386 = arith.mulf %385, %43 : vector<4x8x128xf32>
    %387 = arith.addf %381, %386 : vector<4x8x128xf32>
    %388 = vector.shape_cast %387 : vector<4x8x128xf32> to vector<32x128xf32>
    %c0_73 = arith.constant 0 : index
    %c0_74 = arith.constant 0 : index
    %c640 = arith.constant 640 : index
    %389 = vector.load %arg3[%c0_73, %c0_74, %c640] : memref<1x32x1152xf32, #tpu.memory_space<vmem>>, vector<1x32x128xf32>
    %390 = vector.shape_cast %389 : vector<1x32x128xf32> to vector<32x128xf32>
    %391 = vector.shape_cast %388 : vector<32x128xf32> to vector<1x32x128xf32>
    tpu.vector_store %arg3[%c0_73, %c0_74, %c640], %391 {strides = array<i32>} : memref<1x32x1152xf32, #tpu.memory_space<vmem>>, vector<1x32x128xf32>,
    %392 = vector.extract_strided_slice %5 {offsets = [0, 0, 768], sizes = [4, 8, 128], strides = [1, 1, 1]} : vector<4x8x1152xf32> to vector<4x8x128xf32>
    %393 = arith.mulf %392, %26 : vector<4x8x128xf32>
    %cst_75 = arith.constant dense<0.000000e+00> : vector<4x128xf32>
    %394 = vector.multi_reduction <add>, %393, %cst_75 [1] : vector<4x8x128xf32> to vector<4x128xf32>
    %395 = vector.shape_cast %394 : vector<4x128xf32> to vector<4x1x128xf32>
    %396 = vector.broadcast %395 : vector<4x1x128xf32> to vector<4x8x128xf32>
    %397 = arith.mulf %396, %35 : vector<4x8x128xf32>
    %398 = arith.mulf %392, %27 : vector<4x8x128xf32>
    %cst_76 = arith.constant dense<0.000000e+00> : vector<4x128xf32>
    %399 = vector.multi_reduction <add>, %398, %cst_76 [1] : vector<4x8x128xf32> to vector<4x128xf32>
    %400 = vector.shape_cast %399 : vector<4x128xf32> to vector<4x1x128xf32>
    %401 = vector.broadcast %400 : vector<4x1x128xf32> to vector<4x8x128xf32>
    %402 = arith.mulf %401, %36 : vector<4x8x128xf32>
    %403 = arith.addf %397, %402 : vector<4x8x128xf32>
    %404 = arith.mulf %392, %28 : vector<4x8x128xf32>
    %cst_77 = arith.constant dense<0.000000e+00> : vector<4x128xf32>
    %405 = vector.multi_reduction <add>, %404, %cst_77 [1] : vector<4x8x128xf32> to vector<4x128xf32>
    %406 = vector.shape_cast %405 : vector<4x128xf32> to vector<4x1x128xf32>
    %407 = vector.broadcast %406 : vector<4x1x128xf32> to vector<4x8x128xf32>
    %408 = arith.mulf %407, %37 : vector<4x8x128xf32>
    %409 = arith.addf %403, %408 : vector<4x8x128xf32>
    %410 = arith.mulf %392, %29 : vector<4x8x128xf32>
    %cst_78 = arith.constant dense<0.000000e+00> : vector<4x128xf32>
    %411 = vector.multi_reduction <add>, %410, %cst_78 [1] : vector<4x8x128xf32> to vector<4x128xf32>
    %412 = vector.shape_cast %411 : vector<4x128xf32> to vector<4x1x128xf32>
    %413 = vector.broadcast %412 : vector<4x1x128xf32> to vector<4x8x128xf32>
    %414 = arith.mulf %413, %38 : vector<4x8x128xf32>
    %415 = arith.addf %409, %414 : vector<4x8x128xf32>
    %416 = arith.mulf %392, %30 : vector<4x8x128xf32>
    %cst_79 = arith.constant dense<0.000000e+00> : vector<4x128xf32>
    %417 = vector.multi_reduction <add>, %416, %cst_79 [1] : vector<4x8x128xf32> to vector<4x128xf32>
    %418 = vector.shape_cast %417 : vector<4x128xf32> to vector<4x1x128xf32>
    %419 = vector.broadcast %418 : vector<4x1x128xf32> to vector<4x8x128xf32>
    %420 = arith.mulf %419, %39 : vector<4x8x128xf32>
    %421 = arith.addf %415, %420 : vector<4x8x128xf32>
    %422 = arith.mulf %392, %31 : vector<4x8x128xf32>
    %cst_80 = arith.constant dense<0.000000e+00> : vector<4x128xf32>
    %423 = vector.multi_reduction <add>, %422, %cst_80 [1] : vector<4x8x128xf32> to vector<4x128xf32>
    %424 = vector.shape_cast %423 : vector<4x128xf32> to vector<4x1x128xf32>
    %425 = vector.broadcast %424 : vector<4x1x128xf32> to vector<4x8x128xf32>
    %426 = arith.mulf %425, %40 : vector<4x8x128xf32>
    %427 = arith.addf %421, %426 : vector<4x8x128xf32>
    %428 = arith.mulf %392, %32 : vector<4x8x128xf32>
    %cst_81 = arith.constant dense<0.000000e+00> : vector<4x128xf32>
    %429 = vector.multi_reduction <add>, %428, %cst_81 [1] : vector<4x8x128xf32> to vector<4x128xf32>
    %430 = vector.shape_cast %429 : vector<4x128xf32> to vector<4x1x128xf32>
    %431 = vector.broadcast %430 : vector<4x1x128xf32> to vector<4x8x128xf32>
    %432 = arith.mulf %431, %41 : vector<4x8x128xf32>
    %433 = arith.addf %427, %432 : vector<4x8x128xf32>
    %434 = arith.mulf %392, %33 : vector<4x8x128xf32>
    %cst_82 = arith.constant dense<0.000000e+00> : vector<4x128xf32>
    %435 = vector.multi_reduction <add>, %434, %cst_82 [1] : vector<4x8x128xf32> to vector<4x128xf32>
    %436 = vector.shape_cast %435 : vector<4x128xf32> to vector<4x1x128xf32>
    %437 = vector.broadcast %436 : vector<4x1x128xf32> to vector<4x8x128xf32>
    %438 = arith.mulf %437, %42 : vector<4x8x128xf32>
    %439 = arith.addf %433, %438 : vector<4x8x128xf32>
    %440 = arith.mulf %392, %34 : vector<4x8x128xf32>
    %cst_83 = arith.constant dense<0.000000e+00> : vector<4x128xf32>
    %441 = vector.multi_reduction <add>, %440, %cst_83 [1] : vector<4x8x128xf32> to vector<4x128xf32>
    %442 = vector.shape_cast %441 : vector<4x128xf32> to vector<4x1x128xf32>
    %443 = vector.broadcast %442 : vector<4x1x128xf32> to vector<4x8x128xf32>
    %444 = arith.mulf %443, %43 : vector<4x8x128xf32>
    %445 = arith.addf %439, %444 : vector<4x8x128xf32>
    %446 = vector.shape_cast %445 : vector<4x8x128xf32> to vector<32x128xf32>
    %c0_84 = arith.constant 0 : index
    %c0_85 = arith.constant 0 : index
    %c768 = arith.constant 768 : index
    %447 = vector.load %arg3[%c0_84, %c0_85, %c768] : memref<1x32x1152xf32, #tpu.memory_space<vmem>>, vector<1x32x128xf32>
    %448 = vector.shape_cast %447 : vector<1x32x128xf32> to vector<32x128xf32>
    %449 = vector.shape_cast %446 : vector<32x128xf32> to vector<1x32x128xf32>
    tpu.vector_store %arg3[%c0_84, %c0_85, %c768], %449 {strides = array<i32>} : memref<1x32x1152xf32, #tpu.memory_space<vmem>>, vector<1x32x128xf32>,
    %450 = vector.extract_strided_slice %5 {offsets = [0, 0, 896], sizes = [4, 8, 128], strides = [1, 1, 1]} : vector<4x8x1152xf32> to vector<4x8x128xf32>
    %451 = arith.mulf %450, %26 : vector<4x8x128xf32>
    %cst_86 = arith.constant dense<0.000000e+00> : vector<4x128xf32>
    %452 = vector.multi_reduction <add>, %451, %cst_86 [1] : vector<4x8x128xf32> to vector<4x128xf32>
    %453 = vector.shape_cast %452 : vector<4x128xf32> to vector<4x1x128xf32>
    %454 = vector.broadcast %453 : vector<4x1x128xf32> to vector<4x8x128xf32>
    %455 = arith.mulf %454, %35 : vector<4x8x128xf32>
    %456 = arith.mulf %450, %27 : vector<4x8x128xf32>
    %cst_87 = arith.constant dense<0.000000e+00> : vector<4x128xf32>
    %457 = vector.multi_reduction <add>, %456, %cst_87 [1] : vector<4x8x128xf32> to vector<4x128xf32>
    %458 = vector.shape_cast %457 : vector<4x128xf32> to vector<4x1x128xf32>
    %459 = vector.broadcast %458 : vector<4x1x128xf32> to vector<4x8x128xf32>
    %460 = arith.mulf %459, %36 : vector<4x8x128xf32>
    %461 = arith.addf %455, %460 : vector<4x8x128xf32>
    %462 = arith.mulf %450, %28 : vector<4x8x128xf32>
    %cst_88 = arith.constant dense<0.000000e+00> : vector<4x128xf32>
    %463 = vector.multi_reduction <add>, %462, %cst_88 [1] : vector<4x8x128xf32> to vector<4x128xf32>
    %464 = vector.shape_cast %463 : vector<4x128xf32> to vector<4x1x128xf32>
    %465 = vector.broadcast %464 : vector<4x1x128xf32> to vector<4x8x128xf32>
    %466 = arith.mulf %465, %37 : vector<4x8x128xf32>
    %467 = arith.addf %461, %466 : vector<4x8x128xf32>
    %468 = arith.mulf %450, %29 : vector<4x8x128xf32>
    %cst_89 = arith.constant dense<0.000000e+00> : vector<4x128xf32>
    %469 = vector.multi_reduction <add>, %468, %cst_89 [1] : vector<4x8x128xf32> to vector<4x128xf32>
    %470 = vector.shape_cast %469 : vector<4x128xf32> to vector<4x1x128xf32>
    %471 = vector.broadcast %470 : vector<4x1x128xf32> to vector<4x8x128xf32>
    %472 = arith.mulf %471, %38 : vector<4x8x128xf32>
    %473 = arith.addf %467, %472 : vector<4x8x128xf32>
    %474 = arith.mulf %450, %30 : vector<4x8x128xf32>
    %cst_90 = arith.constant dense<0.000000e+00> : vector<4x128xf32>
    %475 = vector.multi_reduction <add>, %474, %cst_90 [1] : vector<4x8x128xf32> to vector<4x128xf32>
    %476 = vector.shape_cast %475 : vector<4x128xf32> to vector<4x1x128xf32>
    %477 = vector.broadcast %476 : vector<4x1x128xf32> to vector<4x8x128xf32>
    %478 = arith.mulf %477, %39 : vector<4x8x128xf32>
    %479 = arith.addf %473, %478 : vector<4x8x128xf32>
    %480 = arith.mulf %450, %31 : vector<4x8x128xf32>
    %cst_91 = arith.constant dense<0.000000e+00> : vector<4x128xf32>
    %481 = vector.multi_reduction <add>, %480, %cst_91 [1] : vector<4x8x128xf32> to vector<4x128xf32>
    %482 = vector.shape_cast %481 : vector<4x128xf32> to vector<4x1x128xf32>
    %483 = vector.broadcast %482 : vector<4x1x128xf32> to vector<4x8x128xf32>
    %484 = arith.mulf %483, %40 : vector<4x8x128xf32>
    %485 = arith.addf %479, %484 : vector<4x8x128xf32>
    %486 = arith.mulf %450, %32 : vector<4x8x128xf32>
    %cst_92 = arith.constant dense<0.000000e+00> : vector<4x128xf32>
    %487 = vector.multi_reduction <add>, %486, %cst_92 [1] : vector<4x8x128xf32> to vector<4x128xf32>
    %488 = vector.shape_cast %487 : vector<4x128xf32> to vector<4x1x128xf32>
    %489 = vector.broadcast %488 : vector<4x1x128xf32> to vector<4x8x128xf32>
    %490 = arith.mulf %489, %41 : vector<4x8x128xf32>
    %491 = arith.addf %485, %490 : vector<4x8x128xf32>
    %492 = arith.mulf %450, %33 : vector<4x8x128xf32>
    %cst_93 = arith.constant dense<0.000000e+00> : vector<4x128xf32>
    %493 = vector.multi_reduction <add>, %492, %cst_93 [1] : vector<4x8x128xf32> to vector<4x128xf32>
    %494 = vector.shape_cast %493 : vector<4x128xf32> to vector<4x1x128xf32>
    %495 = vector.broadcast %494 : vector<4x1x128xf32> to vector<4x8x128xf32>
    %496 = arith.mulf %495, %42 : vector<4x8x128xf32>
    %497 = arith.addf %491, %496 : vector<4x8x128xf32>
    %498 = arith.mulf %450, %34 : vector<4x8x128xf32>
    %cst_94 = arith.constant dense<0.000000e+00> : vector<4x128xf32>
    %499 = vector.multi_reduction <add>, %498, %cst_94 [1] : vector<4x8x128xf32> to vector<4x128xf32>
    %500 = vector.shape_cast %499 : vector<4x128xf32> to vector<4x1x128xf32>
    %501 = vector.broadcast %500 : vector<4x1x128xf32> to vector<4x8x128xf32>
    %502 = arith.mulf %501, %43 : vector<4x8x128xf32>
    %503 = arith.addf %497, %502 : vector<4x8x128xf32>
    %504 = vector.shape_cast %503 : vector<4x8x128xf32> to vector<32x128xf32>
    %c0_95 = arith.constant 0 : index
    %c0_96 = arith.constant 0 : index
    %c896 = arith.constant 896 : index
    %505 = vector.load %arg3[%c0_95, %c0_96, %c896] : memref<1x32x1152xf32, #tpu.memory_space<vmem>>, vector<1x32x128xf32>
    %506 = vector.shape_cast %505 : vector<1x32x128xf32> to vector<32x128xf32>
    %507 = vector.shape_cast %504 : vector<32x128xf32> to vector<1x32x128xf32>
    tpu.vector_store %arg3[%c0_95, %c0_96, %c896], %507 {strides = array<i32>} : memref<1x32x1152xf32, #tpu.memory_space<vmem>>, vector<1x32x128xf32>,
    %508 = vector.extract_strided_slice %5 {offsets = [0, 0, 1024], sizes = [4, 8, 128], strides = [1, 1, 1]} : vector<4x8x1152xf32> to vector<4x8x128xf32>
    %509 = arith.mulf %508, %26 : vector<4x8x128xf32>
    %cst_97 = arith.constant dense<0.000000e+00> : vector<4x128xf32>
    %510 = vector.multi_reduction <add>, %509, %cst_97 [1] : vector<4x8x128xf32> to vector<4x128xf32>
    %511 = vector.shape_cast %510 : vector<4x128xf32> to vector<4x1x128xf32>
    %512 = vector.broadcast %511 : vector<4x1x128xf32> to vector<4x8x128xf32>
    %513 = arith.mulf %512, %35 : vector<4x8x128xf32>
    %514 = arith.mulf %508, %27 : vector<4x8x128xf32>
    %cst_98 = arith.constant dense<0.000000e+00> : vector<4x128xf32>
    %515 = vector.multi_reduction <add>, %514, %cst_98 [1] : vector<4x8x128xf32> to vector<4x128xf32>
    %516 = vector.shape_cast %515 : vector<4x128xf32> to vector<4x1x128xf32>
    %517 = vector.broadcast %516 : vector<4x1x128xf32> to vector<4x8x128xf32>
    %518 = arith.mulf %517, %36 : vector<4x8x128xf32>
    %519 = arith.addf %513, %518 : vector<4x8x128xf32>
    %520 = arith.mulf %508, %28 : vector<4x8x128xf32>
    %cst_99 = arith.constant dense<0.000000e+00> : vector<4x128xf32>
    %521 = vector.multi_reduction <add>, %520, %cst_99 [1] : vector<4x8x128xf32> to vector<4x128xf32>
    %522 = vector.shape_cast %521 : vector<4x128xf32> to vector<4x1x128xf32>
    %523 = vector.broadcast %522 : vector<4x1x128xf32> to vector<4x8x128xf32>
    %524 = arith.mulf %523, %37 : vector<4x8x128xf32>
    %525 = arith.addf %519, %524 : vector<4x8x128xf32>
    %526 = arith.mulf %508, %29 : vector<4x8x128xf32>
    %cst_100 = arith.constant dense<0.000000e+00> : vector<4x128xf32>
    %527 = vector.multi_reduction <add>, %526, %cst_100 [1] : vector<4x8x128xf32> to vector<4x128xf32>
    %528 = vector.shape_cast %527 : vector<4x128xf32> to vector<4x1x128xf32>
    %529 = vector.broadcast %528 : vector<4x1x128xf32> to vector<4x8x128xf32>
    %530 = arith.mulf %529, %38 : vector<4x8x128xf32>
    %531 = arith.addf %525, %530 : vector<4x8x128xf32>
    %532 = arith.mulf %508, %30 : vector<4x8x128xf32>
    %cst_101 = arith.constant dense<0.000000e+00> : vector<4x128xf32>
    %533 = vector.multi_reduction <add>, %532, %cst_101 [1] : vector<4x8x128xf32> to vector<4x128xf32>
    %534 = vector.shape_cast %533 : vector<4x128xf32> to vector<4x1x128xf32>
    %535 = vector.broadcast %534 : vector<4x1x128xf32> to vector<4x8x128xf32>
    %536 = arith.mulf %535, %39 : vector<4x8x128xf32>
    %537 = arith.addf %531, %536 : vector<4x8x128xf32>
    %538 = arith.mulf %508, %31 : vector<4x8x128xf32>
    %cst_102 = arith.constant dense<0.000000e+00> : vector<4x128xf32>
    %539 = vector.multi_reduction <add>, %538, %cst_102 [1] : vector<4x8x128xf32> to vector<4x128xf32>
    %540 = vector.shape_cast %539 : vector<4x128xf32> to vector<4x1x128xf32>
    %541 = vector.broadcast %540 : vector<4x1x128xf32> to vector<4x8x128xf32>
    %542 = arith.mulf %541, %40 : vector<4x8x128xf32>
    %543 = arith.addf %537, %542 : vector<4x8x128xf32>
    %544 = arith.mulf %508, %32 : vector<4x8x128xf32>
    %cst_103 = arith.constant dense<0.000000e+00> : vector<4x128xf32>
    %545 = vector.multi_reduction <add>, %544, %cst_103 [1] : vector<4x8x128xf32> to vector<4x128xf32>
    %546 = vector.shape_cast %545 : vector<4x128xf32> to vector<4x1x128xf32>
    %547 = vector.broadcast %546 : vector<4x1x128xf32> to vector<4x8x128xf32>
    %548 = arith.mulf %547, %41 : vector<4x8x128xf32>
    %549 = arith.addf %543, %548 : vector<4x8x128xf32>
    %550 = arith.mulf %508, %33 : vector<4x8x128xf32>
    %cst_104 = arith.constant dense<0.000000e+00> : vector<4x128xf32>
    %551 = vector.multi_reduction <add>, %550, %cst_104 [1] : vector<4x8x128xf32> to vector<4x128xf32>
    %552 = vector.shape_cast %551 : vector<4x128xf32> to vector<4x1x128xf32>
    %553 = vector.broadcast %552 : vector<4x1x128xf32> to vector<4x8x128xf32>
    %554 = arith.mulf %553, %42 : vector<4x8x128xf32>
    %555 = arith.addf %549, %554 : vector<4x8x128xf32>
    %556 = arith.mulf %508, %34 : vector<4x8x128xf32>
    %cst_105 = arith.constant dense<0.000000e+00> : vector<4x128xf32>
    %557 = vector.multi_reduction <add>, %556, %cst_105 [1] : vector<4x8x128xf32> to vector<4x128xf32>
    %558 = vector.shape_cast %557 : vector<4x128xf32> to vector<4x1x128xf32>
    %559 = vector.broadcast %558 : vector<4x1x128xf32> to vector<4x8x128xf32>
    %560 = arith.mulf %559, %43 : vector<4x8x128xf32>
    %561 = arith.addf %555, %560 : vector<4x8x128xf32>
    %562 = vector.shape_cast %561 : vector<4x8x128xf32> to vector<32x128xf32>
    %c0_106 = arith.constant 0 : index
    %c0_107 = arith.constant 0 : index
    %c1024 = arith.constant 1024 : index
    %563 = vector.load %arg3[%c0_106, %c0_107, %c1024] : memref<1x32x1152xf32, #tpu.memory_space<vmem>>, vector<1x32x128xf32>
    %564 = vector.shape_cast %563 : vector<1x32x128xf32> to vector<32x128xf32>
    %565 = vector.shape_cast %562 : vector<32x128xf32> to vector<1x32x128xf32>
    tpu.vector_store %arg3[%c0_106, %c0_107, %c1024], %565 {strides = array<i32>} : memref<1x32x1152xf32, #tpu.memory_space<vmem>>, vector<1x32x128xf32>,
    return
  }
  func.func @transform_0(%arg0: i32) -> (i32, i32, i32) {
    %c0_i32 = arith.constant 0 : i32
    %c0_i32_0 = arith.constant 0 : i32
    %c0_i32_1 = arith.constant 0 : i32
    return %arg0, %c0_i32, %c0_i32_0 : i32, i32, i32
  }
  func.func @transform_1(%arg0: i32) -> (i32, i32) {
    %c0_i32 = arith.constant 0 : i32
    %c0_i32_0 = arith.constant 0 : i32
    %c0_i32_1 = arith.constant 0 : i32
    return %c0_i32, %c0_i32_0 : i32, i32
  }
  func.func @transform_2(%arg0: i32) -> (i32, i32, i32) {
    %c0_i32 = arith.constant 0 : i32
    %c0_i32_0 = arith.constant 0 : i32
    %c0_i32_1 = arith.constant 0 : i32
    return %arg0, %c0_i32, %c0_i32_0 : i32, i32, i32
  }
}

</mosaic_0001>

<llo_original>
// kernel: sim_attn.1
$region0: #{sim_attn.1}
  #allocation0 [shape = 'u32[]', space=smem, size = 0x4, offset = 0x4, fixed_abs, tag = 'smem constant byte address 0x4 - core index']
  #allocation1 [shape = 'u32[144,128]{1,0:T(1,128)}', space=vmem, size = 0x12000, scoped, tag = 'internal scratch']
  %s0 = inlined_call_operand.vmem [shape: f32[4,112,1152], index: 0, kind: input, shape index: {}]
  %s1 = inlined_call_operand.vmem [shape: f32[96,112], index: 1, kind: input, shape index: {}]
  %s2 = inlined_call_operand.vmem [shape: f32[4,32,1152], index: 2, kind: output, shape index: {}]
  %s3 = sld [smem:[#allocation0]]
  $region41: #{sim_attn.1} parent=0
    _
  %s5 = ssub.s32 1, %s3
  %s6 = scalar_select 0, %s5, %s3
  loop: start=0, step=1, limit=6
  $region2: #{sim_attn.1} parent=0 // loop_pre_header
    _
  $region3: #{sim_attn.1} parent=0 // loop_header
    %s8 = sphi 0, %s12
    %p9 = scmp.ge.s32.totalorder %s8, 6
    %s18 = sphi 0, %s20
    %s21 = sphi 0, %s18
    %s22 = sphi 0, %s21
    %s38 = sphi 0, %s22
    %s42 = sphi 0, %s42
    %s44 = sphi 0, %s42
    %s45 = sphi 0, %s44
    %s59 = sphi 0, %s45
    %s65 = sphi 0, %s67
    %s68 = sphi 0, %s65
    %s69 = sphi 0, %s68
    %s85 = sphi 0, %s69
  $region4: #{sim_attn.1} parent=0 // loop_header_branch
    %11 = sbr.rel (%p9) target = $region8
  $region5: #{sim_attn.1} parent=0 // loop_body
    %s13 = ssub.s32 %s8, 1
    %s14 = ssub.s32 %s8, 2
    %s15 = sadd.s32 %s8, 1
    %s16 = ssub.s32 %s8, %s15
    %p17 = scmp.eq.s32.totalorder %s16, 0
    %s19 = sadd.s32 %s18, 1
    %s20 = scalar_select %p17, %s18, %s19
    %p23 = pneg %p17
    %p24 = scmp.eq.s32.totalorder %s8, 3
    %p25 = por %p23, %p24
    %p26 = scmp.ne.s32.totalorder %s18, %s21
    %p27 = scmp.eq.s32.totalorder %s8, 0
    %p28 = por %p26, %p27
    %p29 = scmp.ne.s32.totalorder %s18, %s21
    %p30 = scmp.eq.s32.totalorder %s13, 3
    %p31 = por %p29, %p30
    %p32 = scmp.ne.s32.totalorder %s21, %s22
    %p33 = scmp.eq.s32.totalorder %s13, 0
    %p34 = por %p32, %p33
    %p35 = scmp.ne.s32.totalorder %s21, %s22
    %p36 = scmp.eq.s32.totalorder %s14, 3
    %p37 = por %p35, %p36
    %p39 = scmp.ne.s32.totalorder %s22, %s38
    %p40 = scmp.eq.s32.totalorder %s14, 0
    %p41 = por %p39, %p40
    %s43 = sadd.s32 %s42, 1
    %p46 = scmp.eq.s32.totalorder %s8, 3
    %p47 = scmp.ne.s32.totalorder %s42, %s44
    %p48 = scmp.eq.s32.totalorder %s8, 0
    %p49 = por %p47, %p48
    %p50 = scmp.ne.s32.totalorder %s42, %s44
    %p51 = scmp.eq.s32.totalorder %s13, 3
    %p52 = por %p50, %p51
    %p53 = scmp.ne.s32.totalorder %s44, %s45
    %p54 = scmp.eq.s32.totalorder %s13, 0
    %p55 = por %p53, %p54
    %p56 = scmp.ne.s32.totalorder %s44, %s45
    %p57 = scmp.eq.s32.totalorder %s14, 3
    %p58 = por %p56, %p57
    %p60 = scmp.ne.s32.totalorder %s45, %s59
    %p61 = scmp.eq.s32.totalorder %s14, 0
    %p62 = por %p60, %p61
    %s63 = ssub.s32 %s8, %s15
    %p64 = scmp.eq.s32.totalorder %s63, 0
    %s66 = sadd.s32 %s65, 1
    %s67 = scalar_select %p64, %s65, %s66
    %p70 = pneg %p64
    %p71 = scmp.eq.s32.totalorder %s8, 3
    %p72 = por %p70, %p71
    %p73 = scmp.ne.s32.totalorder %s65, %s68
    %p74 = scmp.eq.s32.totalorder %s8, 0
    %p75 = por %p73, %p74
    %p76 = scmp.ne.s32.totalorder %s65, %s68
    %p77 = scmp.eq.s32.totalorder %s13, 3
    %p78 = por %p76, %p77
    %p79 = scmp.ne.s32.totalorder %s68, %s69
    %p80 = scmp.eq.s32.totalorder %s13, 0
    %p81 = por %p79, %p80
    %p82 = scmp.ne.s32.totalorder %s68, %s69
    %p83 = scmp.eq.s32.totalorder %s14, 3
    %p84 = por %p82, %p83
    %p86 = scmp.ne.s32.totalorder %s69, %s85
    %p87 = scmp.eq.s32.totalorder %s14, 0
    %p88 = por %p86, %p87
    %p89 = scmp.le.s32.totalorder 1, %s8
    %p90 = scmp.lt.s32.totalorder %s8, 5
    %p91 = pnand %p89, %p90
    %p92 = pneg %p91
    // Predicated region
    $region9: #{sim_attn.1} parent=5 // pred_check
      _
    $region10: #{sim_attn.1} parent=5 // pred_check_branch
      %94 = sbr.rel (%p91) target = $region12
    $region11: #{sim_attn.1} parent=5 // pred_region
      %s95 = ssub.s32 %s8, 1
      // Predicated region
      $region13: #{sim_attn.1} parent=11 // pred_check
        %p96 = pneg %p55
      $region14: #{sim_attn.1} parent=11 // pred_check_branch
        %98 = sbr.rel (%p96) target = $region16
      $region15: #{sim_attn.1} parent=11 // pred_region
        _
      $region16: #{sim_attn.1} parent=11 // pred_fallthru
        _
    $region12: #{sim_attn.1} parent=5 // pred_fallthru
      _
    %p99 = scmp.lt.s32.totalorder %s8, 4
    // Predicated region
    $region17: #{sim_attn.1} parent=5 // pred_check
      %p100 = pneg %p99
    $region18: #{sim_attn.1} parent=5 // pred_check_branch
      %102 = sbr.rel (%p100) target = $region20
    $region19: #{sim_attn.1} parent=5 // pred_region
      // Predicated region
      $region21: #{sim_attn.1} parent=19 // pred_check
        %p103 = pneg %p28
      $region22: #{sim_attn.1} parent=19 // pred_check_branch
        %105 = sbr.rel (%p103) target = $region24
      $region23: #{sim_attn.1} parent=19 // pred_region
        %p106 = scmp.lt.s32.totalorder %s8, 3
        %s107 = scalar_select %p106, %s8, 3
        %s108 = smul.addr %s107, 126
        %s109 = smul.addr %s108, 8
        %s110 = scalar_lea.vmem %s0, %s109
      $region24: #{sim_attn.1} parent=19 // pred_fallthru
        _
    $region20: #{sim_attn.1} parent=5 // pred_fallthru
      _
    %p111 = scmp.le.s32.totalorder 1, %s8
    %p112 = scmp.lt.s32.totalorder %s8, 5
    %p113 = pnand %p111, %p112
    %p114 = pneg %p113
    // Predicated region
    $region25: #{sim_attn.1} parent=5 // pred_check
      _
    $region26: #{sim_attn.1} parent=5 // pred_check_branch
      %116 = sbr.rel (%p113) target = $region28
    $region27: #{sim_attn.1} parent=5 // pred_region
      %s117 = ssub.s32 %s8, 1
      %p118 = scmp.lt.s32.totalorder %s13, 3
      %s119 = scalar_select %p118, %s13, 3
      %s120 = smul.addr %s119, 126
      %s121 = smul.addr %s120, 8
      %s122 = scalar_lea.vmem %s0, %s121
      %p123 = pneg %p34
      %p124 = pneg %p31
      %p125 = pneg %p55
      %p126 = pneg %p52
      %p127 = pneg %p81
      %p128 = pneg %p78
      %p129 = scmp.lt.s32.totalorder %s13, 3
      %s130 = scalar_select %p129, %s13, 3
      %s131 = smul.addr %s130, 36
      %s132 = smul.addr %s131, 8
      %s133 = scalar_lea.vmem %s2, %s132
      %p134 = scmp.lt.s32.totalorder %s13, 3
      %s135 = scalar_select %p134, %s13, 3
      %s136 = smul.addr %s135, 126
      %s137 = smul.addr %s136, 8
      %s138 = scalar_lea.vmem %s0, %s137
      %p139 = scmp.lt.s32.totalorder %s13, 3
      %s140 = scalar_select %p139, %s13, 3
      %s141 = smul.addr %s140, 36
      %s142 = smul.addr %s141, 8
      %s143 = scalar_lea.vmem %s2, %s142
      %v144 = vld [vmem:[%s138] sm:$0xff]
      %v145 = vld [vmem:[%s138 + $0x8] sm:$0xff]
      %v146 = vld [vmem:[%s138 + $0x10] sm:$0xff]
      %v147 = vld [vmem:[%s138 + $0x18] sm:$0xff]
      %v148 = vld [vmem:[%s138 + $0x20] sm:$0xff]
      %v149 = vld [vmem:[%s138 + $0x28] sm:$0xff]
      %v150 = vld [vmem:[%s138 + $0x30] sm:$0xff]
      %v151 = vld [vmem:[%s138 + $0x38] sm:$0xff]
      %v152 = vld [vmem:[%s138 + $0x40] sm:$0xff]
      %v153 = vld [vmem:[%s138 + $0x48] sm:$0xff]
      %v154 = vld [vmem:[%s138 + $0x50] sm:$0xff]
      %v155 = vld [vmem:[%s138 + $0x58] sm:$0xff]
      %v156 = vld [vmem:[%s138 + $0x60] sm:$0xff]
      %v157 = vld [vmem:[%s138 + $0x68] sm:$0xff]
      %v158 = vld [vmem:[%s138 + $0x70] sm:$0xff]
      %v159 = vld [vmem:[%s138 + $0x78] sm:$0xff]
      %v160 = vld [vmem:[%s138 + $0x80] sm:$0xff]
      %v161 = vld [vmem:[%s138 + $0x88] sm:$0xff]
      %v162 = vld [vmem:[%s138 + $0x90] sm:$0xff]
      %v163 = vld [vmem:[%s138 + $0x98] sm:$0xff]
      %v164 = vld [vmem:[%s138 + $0xa0] sm:$0xff]
      %v165 = vld [vmem:[%s138 + $0xa8] sm:$0xff]
      %v166 = vld [vmem:[%s138 + $0xb0] sm:$0xff]
      %v167 = vld [vmem:[%s138 + $0xb8] sm:$0xff]
      %v168 = vld [vmem:[%s138 + $0xc0] sm:$0xff]
      %v169 = vld [vmem:[%s138 + $0xc8] sm:$0xff]
      %v170 = vld [vmem:[%s138 + $0xd0] sm:$0xff]
      %v171 = vld [vmem:[%s138 + $0xd8] sm:$0xff]
      %v172 = vld [vmem:[%s138 + $0xe0] sm:$0xff]
      %v173 = vld [vmem:[%s138 + $0xe8] sm:$0xff]
      %v174 = vld [vmem:[%s138 + $0xf0] sm:$0xff]
      %v175 = vld [vmem:[%s138 + $0xf8] sm:$0xff]
      %v176 = vld [vmem:[%s138 + $0x100] sm:$0xff]
      %v177 = vld [vmem:[%s138 + $0x108] sm:$0xff]
      %v178 = vld [vmem:[%s138 + $0x110] sm:$0xff]
      %v179 = vld [vmem:[%s138 + $0x118] sm:$0xff]
      %v180 = vld [vmem:[%s138 + $0x120] sm:$0xff]
      %v181 = vld [vmem:[%s138 + $0x128] sm:$0xff]
      %v182 = vld [vmem:[%s138 + $0x130] sm:$0xff]
      %v183 = vld [vmem:[%s138 + $0x138] sm:$0xff]
      %v184 = vld [vmem:[%s138 + $0x140] sm:$0xff]
      %v185 = vld [vmem:[%s138 + $0x148] sm:$0xff]
      %v186 = vld [vmem:[%s138 + $0x150] sm:$0xff]
      %v187 = vld [vmem:[%s138 + $0x158] sm:$0xff]
      %v188 = vld [vmem:[%s138 + $0x160] sm:$0xff]
      %v189 = vld [vmem:[%s138 + $0x168] sm:$0xff]
      %v190 = vld [vmem:[%s138 + $0x170] sm:$0xff]
      %v191 = vld [vmem:[%s138 + $0x178] sm:$0xff]
      %v192 = vld [vmem:[%s138 + $0x180] sm:$0xff]
      %v193 = vld [vmem:[%s138 + $0x188] sm:$0xff]
      %v194 = vld [vmem:[%s138 + $0x190] sm:$0xff]
      %v195 = vld [vmem:[%s138 + $0x198] sm:$0xff]
      %v196 = vld [vmem:[%s138 + $0x1a0] sm:$0xff]
      %v197 = vld [vmem:[%s138 + $0x1a8] sm:$0xff]
      %v198 = vld [vmem:[%s138 + $0x1b0] sm:$0xff]
      %v199 = vld [vmem:[%s138 + $0x1b8] sm:$0xff]
      %v200 = vld [vmem:[%s138 + $0x1c0] sm:$0xff]
      %v201 = vld [vmem:[%s138 + $0x1c8] sm:$0xff]
      %v202 = vld [vmem:[%s138 + $0x1d0] sm:$0xff]
      %v203 = vld [vmem:[%s138 + $0x1d8] sm:$0xff]
      %v204 = vld [vmem:[%s138 + $0x1e0] sm:$0xff]
      %v205 = vld [vmem:[%s138 + $0x1e8] sm:$0xff]
      %v206 = vld [vmem:[%s138 + $0x1f0] sm:$0xff]
      %v207 = vld [vmem:[%s138 + $0x1f8] sm:$0xff]
      %v208 = vld [vmem:[%s138 + $0x200] sm:$0xff]
      %v209 = vld [vmem:[%s138 + $0x208] sm:$0xff]
      %v210 = vld [vmem:[%s138 + $0x210] sm:$0xff]
      %v211 = vld [vmem:[%s138 + $0x218] sm:$0xff]
      %v212 = vld [vmem:[%s138 + $0x220] sm:$0xff]
      %v213 = vld [vmem:[%s138 + $0x228] sm:$0xff]
      %v214 = vld [vmem:[%s138 + $0x230] sm:$0xff]
      %v215 = vld [vmem:[%s138 + $0x238] sm:$0xff]
      %v216 = vld [vmem:[%s138 + $0x240] sm:$0xff]
      %v217 = vld [vmem:[%s138 + $0x248] sm:$0xff]
      %v218 = vld [vmem:[%s138 + $0x250] sm:$0xff]
      %v219 = vld [vmem:[%s138 + $0x258] sm:$0xff]
      %v220 = vld [vmem:[%s138 + $0x260] sm:$0xff]
      %v221 = vld [vmem:[%s138 + $0x268] sm:$0xff]
      %v222 = vld [vmem:[%s138 + $0x270] sm:$0xff]
      %v223 = vld [vmem:[%s138 + $0x278] sm:$0xff]
      %v224 = vld [vmem:[%s138 + $0x280] sm:$0xff]
      %v225 = vld [vmem:[%s138 + $0x288] sm:$0xff]
      %v226 = vld [vmem:[%s138 + $0x290] sm:$0xff]
      %v227 = vld [vmem:[%s138 + $0x298] sm:$0xff]
      %v228 = vld [vmem:[%s138 + $0x2a0] sm:$0xff]
      %v229 = vld [vmem:[%s138 + $0x2a8] sm:$0xff]
      %v230 = vld [vmem:[%s138 + $0x2b0] sm:$0xff]
      %v231 = vld [vmem:[%s138 + $0x2b8] sm:$0xff]
      %v232 = vld [vmem:[%s138 + $0x2c0] sm:$0xff]
      %v233 = vld [vmem:[%s138 + $0x2c8] sm:$0xff]
      %v234 = vld [vmem:[%s138 + $0x2d0] sm:$0xff]
      %v235 = vld [vmem:[%s138 + $0x2d8] sm:$0xff]
      %v236 = vld [vmem:[%s138 + $0x2e0] sm:$0xff]
      %v237 = vld [vmem:[%s138 + $0x2e8] sm:$0xff]
      %v238 = vld [vmem:[%s138 + $0x2f0] sm:$0xff]
      %v239 = vld [vmem:[%s138 + $0x2f8] sm:$0xff]
      %v240 = vld [vmem:[%s138 + $0x300] sm:$0xff]
      %v241 = vld [vmem:[%s138 + $0x308] sm:$0xff]
      %v242 = vld [vmem:[%s138 + $0x310] sm:$0xff]
      %v243 = vld [vmem:[%s138 + $0x318] sm:$0xff]
      %v244 = vld [vmem:[%s138 + $0x320] sm:$0xff]
      %v245 = vld [vmem:[%s138 + $0x328] sm:$0xff]
      %v246 = vld [vmem:[%s138 + $0x330] sm:$0xff]
      %v247 = vld [vmem:[%s138 + $0x338] sm:$0xff]
      %v248 = vld [vmem:[%s138 + $0x340] sm:$0xff]
      %v249 = vld [vmem:[%s138 + $0x348] sm:$0xff]
      %v250 = vld [vmem:[%s138 + $0x350] sm:$0xff]
      %v251 = vld [vmem:[%s138 + $0x358] sm:$0xff]
      %v252 = vld [vmem:[%s138 + $0x360] sm:$0xff]
      %v253 = vld [vmem:[%s138 + $0x368] sm:$0xff]
      %v254 = vld [vmem:[%s138 + $0x370] sm:$0xff]
      %v255 = vld [vmem:[%s138 + $0x378] sm:$0xff]
      %v256 = vld [vmem:[%s138 + $0x380] sm:$0xff]
      %v257 = vld [vmem:[%s138 + $0x388] sm:$0xff]
      %v258 = vld [vmem:[%s138 + $0x390] sm:$0xff]
      %v259 = vld [vmem:[%s138 + $0x398] sm:$0xff]
      %v260 = vld [vmem:[%s138 + $0x3a0] sm:$0xff]
      %v261 = vld [vmem:[%s138 + $0x3a8] sm:$0xff]
      %v262 = vld [vmem:[%s138 + $0x3b0] sm:$0xff]
      %v263 = vld [vmem:[%s138 + $0x3b8] sm:$0xff]
      %v264 = vld [vmem:[%s138 + $0x3c0] sm:$0xff]
      %v265 = vld [vmem:[%s138 + $0x3c8] sm:$0xff]
      %v266 = vld [vmem:[%s138 + $0x3d0] sm:$0xff]
      %v267 = vld [vmem:[%s138 + $0x3d8] sm:$0xff]
      %v268 = vld [vmem:[%s138 + $0x3e0] sm:$0xff]
      %v269 = vld [vmem:[%s138 + $0x3e8] sm:$0xff]
      %v270 = vld [vmem:[%s1] sm:$0xff]
      %v271 = vld [vmem:[%s1 + $0x8] sm:$0xff]
      %v272 = vld [vmem:[%s1 + $0x10] sm:$0xff]
      %v273 = vld [vmem:[%s1 + $0x18] sm:$0xff]
      %v274 = vld [vmem:[%s1 + $0x20] sm:$0xff]
      %v275 = vld [vmem:[%s1 + $0x28] sm:$0xff]
      %v276 = vld [vmem:[%s1 + $0x30] sm:$0xff]
      %v277 = vld [vmem:[%s1 + $0x38] sm:$0xff]
      %v278 = vld [vmem:[%s1 + $0x40] sm:$0xff]
      %v279 = vld [vmem:[%s1 + $0x48] sm:$0xff]
      %v280 = vld [vmem:[%s1 + $0x50] sm:$0xff]
      %v281 = vld [vmem:[%s1 + $0x58] sm:$0xff]
      %vm282 = vcmask 916480
      %v284 = vsel %vm282, %v270, 0
      %v287 = vsel %vm282, %v271, 0
      %v290 = vsel %vm282, %v272, 0
      %v293 = vsel %vm282, %v273, 0
      %v296 = vsel %vm282, %v274, 0
      %v299 = vsel %vm282, %v275, 0
      %v302 = vsel %vm282, %v276, 0
      %v305 = vsel %vm282, %v277, 0
      %v308 = vsel %vm282, %v278, 0
      %v311 = vsel %vm282, %v279, 0
      %v314 = vsel %vm282, %v280, 0
      %v317 = vsel %vm282, %v281, 0
      %v319 = vand.u32 %v145, 4294901760
      %320 = vmatprep.subr.mxu0 %v319
      %v321 = vand.u32 %v144, 4294901760
      %322 = vmatpush1.msra.mxu0 %v321
      %v323 = vand.u32 %v154, 4294901760
      %324 = vmatprep.subr.mxu0 %v323
      %v325 = vand.u32 %v153, 4294901760
      %326 = vmatpush1.msra.mxu0 %v325
      %v327 = vand.u32 %v163, 4294901760
      %328 = vmatprep.subr.mxu0 %v327
      %v329 = vand.u32 %v162, 4294901760
      %330 = vmatpush1.msra.mxu0 %v329
      %v331 = vand.u32 %v172, 4294901760
      %332 = vmatprep.subr.mxu0 %v331
      %v333 = vand.u32 %v171, 4294901760
      %334 = vmatpush1.msra.mxu0 %v333
      %v335 = vand.u32 %v181, 4294901760
      %336 = vmatprep.subr.mxu0 %v335
      %v337 = vand.u32 %v180, 4294901760
      %338 = vmatpush1.msra.mxu0 %v337
      %v339 = vand.u32 %v190, 4294901760
      %340 = vmatprep.subr.mxu0 %v339
      %v341 = vand.u32 %v189, 4294901760
      %342 = vmatpush1.msra.mxu0 %v341
      %v343 = vand.u32 %v199, 4294901760
      %344 = vmatprep.subr.mxu0 %v343
      %v345 = vand.u32 %v198, 4294901760
      %346 = vmatpush1.msra.mxu0 %v345
      %v347 = vand.u32 %v208, 4294901760
      %348 = vmatprep.subr.mxu0 %v347
      %v349 = vand.u32 %v207, 4294901760
      %350 = vmatpush1.msra.mxu0 %v349
      %v351 = vand.u32 %v217, 4294901760
      %352 = vmatprep.subr.mxu0 %v351
      %v353 = vand.u32 %v216, 4294901760
      %354 = vmatpush1.msra.mxu0 %v353
      %v355 = vand.u32 %v226, 4294901760
      %356 = vmatprep.subr.mxu0 %v355
      %v357 = vand.u32 %v225, 4294901760
      %358 = vmatpush1.msra.mxu0 %v357
      %v359 = vand.u32 %v235, 4294901760
      %360 = vmatprep.subr.mxu0 %v359
      %v361 = vand.u32 %v234, 4294901760
      %362 = vmatpush1.msra.mxu0 %v361
      %v363 = vand.u32 %v244, 4294901760
      %364 = vmatprep.subr.mxu0 %v363
      %v365 = vand.u32 %v243, 4294901760
      %366 = vmatpush1.msra.mxu0 %v365
      %v367 = vand.u32 %v253, 4294901760
      %368 = vmatprep.subr.mxu0 %v367
      %v369 = vand.u32 %v252, 4294901760
      %370 = vmatpush1.msra.mxu0 %v369
      %v371 = vand.u32 %v262, 4294901760
      %372 = vmatprep.subr.mxu0 %v371
      %v373 = vand.u32 %v261, 4294901760
      %374 = vmatpush1.msra.mxu0 %v373
      %375 = vmatprep.subr.mxu0 0.0
      %376 = vmatpush1.msra.mxu0 0.0
      %377 = vmatprep.subr.mxu0 0.0
      %378 = vmatpush1.msra.mxu0 0.0
      %379 = vmatprep.subr.mxu0 0.0
      %380 = vmatpush1.msra.mxu0 0.0
      %381 = vmatprep.subr.mxu0 0.0
      %382 = vmatpush1.msra.mxu0 0.0
      %383 = vmatprep.subr.mxu0 0.0
      %384 = vmatpush1.msra.mxu0 0.0
      %385 = vmatprep.subr.mxu0 0.0
      %386 = vmatpush1.msra.mxu0 0.0
      %387 = vmatprep.subr.mxu0 0.0
      %388 = vmatpush1.msra.mxu0 0.0
      %389 = vmatprep.subr.mxu0 0.0
      %390 = vmatpush1.msra.mxu0 0.0
      %391 = vmatprep.subr.mxu0 0.0
      %392 = vmatpush1.msra.mxu0 0.0
      %393 = vmatprep.subr.mxu0 0.0
      %394 = vmatpush1.msra.mxu0 0.0
      %395 = vmatprep.subr.mxu0 0.0
      %396 = vmatpush1.msra.mxu0 0.0
      %397 = vmatprep.subr.mxu0 0.0
      %398 = vmatpush1.msra.mxu0 0.0
      %399 = vmatprep.subr.mxu0 0.0
      %400 = vmatpush1.msra.mxu0 0.0
      %401 = vmatprep.subr.mxu0 0.0
      %402 = vmatpush1.msra.mxu0 0.0
      %403 = vmatprep.subr.mxu0 0.0
      %404 = vmatpush1.msra.mxu0 0.0
      %405 = vmatprep.subr.mxu0 0.0
      %406 = vmatpush1.msra.mxu0 0.0
      %407 = vmatprep.subr.mxu0 0.0
      %408 = vmatpush1.msra.mxu0 0.0
      %409 = vmatprep.subr.mxu0 0.0
      %410 = vmatpush1.msra.mxu0 0.0
      %411 = vmatprep.mubr.f32.mxu0 0.0
      %v412 = vand.u32 %v284, 4294901760
      %v413 = vsub.f32 %v284, %v412
      %v414 = vand.u32 %v413, 4294901760
      %v415 = vsub.f32 %v413, %v414
      %v416 = vand.u32 %v415, 4294901760
      %417 = vmatmul.mubr.f32.gmra.mrb[0].mxu0 %v416
      %v418 = vpop.f32.mrb[0].mxu0
      %v419 = vadd.f32 0.0, %v418
      %v420 = vpop.f32.mrb[0].mxu0
      %v421 = vadd.f32 0.0, %v420
      %422 = vmatprep.mubr.f32.mxu0 0.0
      %v423 = vand.u32 %v287, 4294901760
      %v424 = vsub.f32 %v287, %v423
      %v425 = vand.u32 %v424, 4294901760
      %v426 = vsub.f32 %v424, %v425
      %v427 = vand.u32 %v426, 4294901760
      %428 = vmatmul.mubr.f32.gmra.mrb[0].mxu0 %v427
      %v429 = vpop.f32.mrb[0].mxu0
      %v430 = vadd.f32 0.0, %v429
      %v431 = vpop.f32.mrb[0].mxu0
      %v432 = vadd.f32 0.0, %v431
      %433 = vmatprep.mubr.f32.mxu0 0.0
      %v434 = vand.u32 %v290, 4294901760
      %v435 = vsub.f32 %v290, %v434
      %v436 = vand.u32 %v435, 4294901760
      %v437 = vsub.f32 %v435, %v436
      %v438 = vand.u32 %v437, 4294901760
      %439 = vmatmul.mubr.f32.gmra.mrb[0].mxu0 %v438
      %v440 = vpop.f32.mrb[0].mxu0
      %v441 = vadd.f32 0.0, %v440
      %v442 = vpop.f32.mrb[0].mxu0
      %v443 = vadd.f32 0.0, %v442
      %444 = vmatprep.mubr.f32.mxu0 0.0
      %v445 = vand.u32 %v293, 4294901760
      %v446 = vsub.f32 %v293, %v445
      %v447 = vand.u32 %v446, 4294901760
      %v448 = vsub.f32 %v446, %v447
      %v449 = vand.u32 %v448, 4294901760
      %450 = vmatmul.mubr.f32.gmra.mrb[0].mxu0 %v449
      %v451 = vpop.f32.mrb[0].mxu0
      %v452 = vadd.f32 0.0, %v451
      %v453 = vpop.f32.mrb[0].mxu0
      %v454 = vadd.f32 0.0, %v453
      %455 = vmatprep.mubr.f32.mxu0 0.0
      %v456 = vand.u32 %v296, 4294901760
      %v457 = vsub.f32 %v296, %v456
      %v458 = vand.u32 %v457, 4294901760
      %v459 = vsub.f32 %v457, %v458
      %v460 = vand.u32 %v459, 4294901760
      %461 = vmatmul.mubr.f32.gmra.mrb[0].mxu0 %v460
      %v462 = vpop.f32.mrb[0].mxu0
      %v463 = vadd.f32 0.0, %v462
      %v464 = vpop.f32.mrb[0].mxu0
      %v465 = vadd.f32 0.0, %v464
      %466 = vmatprep.mubr.f32.mxu0 0.0
      %v467 = vand.u32 %v299, 4294901760
      %v468 = vsub.f32 %v299, %v467
      %v469 = vand.u32 %v468, 4294901760
      %v470 = vsub.f32 %v468, %v469
      %v471 = vand.u32 %v470, 4294901760
      %472 = vmatmul.mubr.f32.gmra.mrb[0].mxu0 %v471
      %v473 = vpop.f32.mrb[0].mxu0
      %v474 = vadd.f32 0.0, %v473
      %v475 = vpop.f32.mrb[0].mxu0
      %v476 = vadd.f32 0.0, %v475
      %477 = vmatprep.mubr.f32.mxu0 0.0
      %v478 = vand.u32 %v302, 4294901760
      %v479 = vsub.f32 %v302, %v478
      %v480 = vand.u32 %v479, 4294901760
      %v481 = vsub.f32 %v479, %v480
      %v482 = vand.u32 %v481, 4294901760
      %483 = vmatmul.mubr.f32.gmra.mrb[0].mxu0 %v482
      %v484 = vpop.f32.mrb[0].mxu0
      %v485 = vadd.f32 0.0, %v484
      %v486 = vpop.f32.mrb[0].mxu0
      %v487 = vadd.f32 0.0, %v486
      %488 = vmatprep.mubr.f32.mxu0 0.0
      %v489 = vand.u32 %v305, 4294901760
      %v490 = vsub.f32 %v305, %v489
      %v491 = vand.u32 %v490, 4294901760
      %v492 = vsub.f32 %v490, %v491
      %v493 = vand.u32 %v492, 4294901760
      %494 = vmatmul.mubr.f32.gmra.mrb[0].mxu0 %v493
      %v495 = vpop.f32.mrb[0].mxu0
      %v496 = vadd.f32 0.0, %v495
      %v497 = vpop.f32.mrb[0].mxu0
      %v498 = vadd.f32 0.0, %v497
      %499 = vmatprep.mubr.f32.mxu0 0.0
      %v500 = vand.u32 %v308, 4294901760
      %v501 = vsub.f32 %v308, %v500
      %v502 = vand.u32 %v501, 4294901760
      %v503 = vsub.f32 %v501, %v502
      %v504 = vand.u32 %v503, 4294901760
      %505 = vmatmul.mubr.f32.gmra.mrb[0].mxu0 %v504
      %v506 = vpop.f32.mrb[0].mxu0
      %v507 = vadd.f32 0.0, %v506
      %v508 = vpop.f32.mrb[0].mxu0
      %v509 = vadd.f32 0.0, %v508
      %510 = vmatprep.mubr.f32.mxu0 0.0
      %v511 = vand.u32 %v311, 4294901760
      %v512 = vsub.f32 %v311, %v511
      %v513 = vand.u32 %v512, 4294901760
      %v514 = vsub.f32 %v512, %v513
      %v515 = vand.u32 %v514, 4294901760
      %516 = vmatmul.mubr.f32.gmra.mrb[0].mxu0 %v515
      %v517 = vpop.f32.mrb[0].mxu0
      %v518 = vadd.f32 0.0, %v517
      %v519 = vpop.f32.mrb[0].mxu0
      %v520 = vadd.f32 0.0, %v519
      %521 = vmatprep.mubr.f32.mxu0 0.0
      %v522 = vand.u32 %v314, 4294901760
      %v523 = vsub.f32 %v314, %v522
      %v524 = vand.u32 %v523, 4294901760
      %v525 = vsub.f32 %v523, %v524
      %v526 = vand.u32 %v525, 4294901760
      %527 = vmatmul.mubr.f32.gmra.mrb[0].mxu0 %v526
      %v528 = vpop.f32.mrb[0].mxu0
      %v529 = vadd.f32 0.0, %v528
      %v530 = vpop.f32.mrb[0].mxu0
      %v531 = vadd.f32 0.0, %v530
      %532 = vmatprep.mubr.f32.mxu0 0.0
      %v533 = vand.u32 %v317, 4294901760
      %v534 = vsub.f32 %v317, %v533
      %v535 = vand.u32 %v534, 4294901760
      %v536 = vsub.f32 %v534, %v535
      %v537 = vand.u32 %v536, 4294901760
      %538 = vmatmul.mubr.f32.gmra.mrb[0].mxu0 %v537
      %v539 = vpop.f32.mrb[0].mxu0
      %v540 = vadd.f32 0.0, %v539
      %v541 = vpop.f32.mrb[0].mxu0
      %v542 = vadd.f32 0.0, %v541
      %543 = vdwg.mxu0
      %v544 = vand.u32 %v145, 4294901760
      %v545 = vsub.f32 %v145, %v544
      %v546 = vand.u32 %v545, 4294901760
      %v547 = vsub.f32 %v545, %v546
      %v548 = vand.u32 %v547, 4294901760
      %549 = vmatprep.subr.mxu0 %v548
      %v550 = vand.u32 %v144, 4294901760
      %v551 = vsub.f32 %v144, %v550
      %v552 = vand.u32 %v551, 4294901760
      %v553 = vsub.f32 %v551, %v552
      %v554 = vand.u32 %v553, 4294901760
      %555 = vmatpush1.msra.mxu0 %v554
      %v556 = vand.u32 %v154, 4294901760
      %v557 = vsub.f32 %v154, %v556
      %v558 = vand.u32 %v557, 4294901760
      %v559 = vsub.f32 %v557, %v558
      %v560 = vand.u32 %v559, 4294901760
      %561 = vmatprep.subr.mxu0 %v560
      %v562 = vand.u32 %v153, 4294901760
      %v563 = vsub.f32 %v153, %v562
      %v564 = vand.u32 %v563, 4294901760
      %v565 = vsub.f32 %v563, %v564
      %v566 = vand.u32 %v565, 4294901760
      %567 = vmatpush1.msra.mxu0 %v566
      %v568 = vand.u32 %v163, 4294901760
      %v569 = vsub.f32 %v163, %v568
      %v570 = vand.u32 %v569, 4294901760
      %v571 = vsub.f32 %v569, %v570
      %v572 = vand.u32 %v571, 4294901760
      %573 = vmatprep.subr.mxu0 %v572
      %v574 = vand.u32 %v162, 4294901760
      %v575 = vsub.f32 %v162, %v574
      %v576 = vand.u32 %v575, 4294901760
      %v577 = vsub.f32 %v575, %v576
      %v578 = vand.u32 %v577, 4294901760
      %579 = vmatpush1.msra.mxu0 %v578
      %v580 = vand.u32 %v172, 4294901760
      %v581 = vsub.f32 %v172, %v580
      %v582 = vand.u32 %v581, 4294901760
      %v583 = vsub.f32 %v581, %v582
      %v584 = vand.u32 %v583, 4294901760
      %585 = vmatprep.subr.mxu0 %v584
      %v586 = vand.u32 %v171, 4294901760
      %v587 = vsub.f32 %v171, %v586
      %v588 = vand.u32 %v587, 4294901760
      %v589 = vsub.f32 %v587, %v588
      %v590 = vand.u32 %v589, 4294901760
      %591 = vmatpush1.msra.mxu0 %v590
      %v592 = vand.u32 %v181, 4294901760
      %v593 = vsub.f32 %v181, %v592
      %v594 = vand.u32 %v593, 4294901760
      %v595 = vsub.f32 %v593, %v594
      %v596 = vand.u32 %v595, 4294901760
      %597 = vmatprep.subr.mxu0 %v596
      %v598 = vand.u32 %v180, 4294901760
      %v599 = vsub.f32 %v180, %v598
      %v600 = vand.u32 %v599, 4294901760
      %v601 = vsub.f32 %v599, %v600
      %v602 = vand.u32 %v601, 4294901760
      %603 = vmatpush1.msra.mxu0 %v602
      %v604 = vand.u32 %v190, 4294901760
      %v605 = vsub.f32 %v190, %v604
      %v606 = vand.u32 %v605, 4294901760
      %v607 = vsub.f32 %v605, %v606
      %v608 = vand.u32 %v607, 4294901760
      %609 = vmatprep.subr.mxu0 %v608
      %v610 = vand.u32 %v189, 4294901760
      %v611 = vsub.f32 %v189, %v610
      %v612 = vand.u32 %v611, 4294901760
      %v613 = vsub.f32 %v611, %v612
      %v614 = vand.u32 %v613, 4294901760
      %615 = vmatpush1.msra.mxu0 %v614
      %v616 = vand.u32 %v199, 4294901760
      %v617 = vsub.f32 %v199, %v616
      %v618 = vand.u32 %v617, 4294901760
      %v619 = vsub.f32 %v617, %v618
      %v620 = vand.u32 %v619, 4294901760
      %621 = vmatprep.subr.mxu0 %v620
      %v622 = vand.u32 %v198, 4294901760
      %v623 = vsub.f32 %v198, %v622
      %v624 = vand.u32 %v623, 4294901760
      %v625 = vsub.f32 %v623, %v624
      %v626 = vand.u32 %v625, 4294901760
      %627 = vmatpush1.msra.mxu0 %v626
      %v628 = vand.u32 %v208, 4294901760
      %v629 = vsub.f32 %v208, %v628
      %v630 = vand.u32 %v629, 4294901760
      %v631 = vsub.f32 %v629, %v630
      %v632 = vand.u32 %v631, 4294901760
      %633 = vmatprep.subr.mxu0 %v632
      %v634 = vand.u32 %v207, 4294901760
      %v635 = vsub.f32 %v207, %v634
      %v636 = vand.u32 %v635, 4294901760
      %v637 = vsub.f32 %v635, %v636
      %v638 = vand.u32 %v637, 4294901760
      %639 = vmatpush1.msra.mxu0 %v638
      %v640 = vand.u32 %v217, 4294901760
      %v641 = vsub.f32 %v217, %v640
      %v642 = vand.u32 %v641, 4294901760
      %v643 = vsub.f32 %v641, %v642
      %v644 = vand.u32 %v643, 4294901760
      %645 = vmatprep.subr.mxu0 %v644
      %v646 = vand.u32 %v216, 4294901760
      %v647 = vsub.f32 %v216, %v646
      %v648 = vand.u32 %v647, 4294901760
      %v649 = vsub.f32 %v647, %v648
      %v650 = vand.u32 %v649, 4294901760
      %651 = vmatpush1.msra.mxu0 %v650
      %v652 = vand.u32 %v226, 4294901760
      %v653 = vsub.f32 %v226, %v652
      %v654 = vand.u32 %v653, 4294901760
      %v655 = vsub.f32 %v653, %v654
      %v656 = vand.u32 %v655, 4294901760
      %657 = vmatprep.subr.mxu0 %v656
      %v658 = vand.u32 %v225, 4294901760
      %v659 = vsub.f32 %v225, %v658
      %v660 = vand.u32 %v659, 4294901760
      %v661 = vsub.f32 %v659, %v660
      %v662 = vand.u32 %v661, 4294901760
      %663 = vmatpush1.msra.mxu0 %v662
      %v664 = vand.u32 %v235, 4294901760
      %v665 = vsub.f32 %v235, %v664
      %v666 = vand.u32 %v665, 4294901760
      %v667 = vsub.f32 %v665, %v666
      %v668 = vand.u32 %v667, 4294901760
      %669 = vmatprep.subr.mxu0 %v668
      %v670 = vand.u32 %v234, 4294901760
      %v671 = vsub.f32 %v234, %v670
      %v672 = vand.u32 %v671, 4294901760
      %v673 = vsub.f32 %v671, %v672
      %v674 = vand.u32 %v673, 4294901760
      %675 = vmatpush1.msra.mxu0 %v674
      %v676 = vand.u32 %v244, 4294901760
      %v677 = vsub.f32 %v244, %v676
      %v678 = vand.u32 %v677, 4294901760
      %v679 = vsub.f32 %v677, %v678
      %v680 = vand.u32 %v679, 4294901760
      %681 = vmatprep.subr.mxu0 %v680
      %v682 = vand.u32 %v243, 4294901760
      %v683 = vsub.f32 %v243, %v682
      %v684 = vand.u32 %v683, 4294901760
      %v685 = vsub.f32 %v683, %v684
      %v686 = vand.u32 %v685, 4294901760
      %687 = vmatpush1.msra.mxu0 %v686
      %v688 = vand.u32 %v253, 4294901760
      %v689 = vsub.f32 %v253, %v688
      %v690 = vand.u32 %v689, 4294901760
      %v691 = vsub.f32 %v689, %v690
      %v692 = vand.u32 %v691, 4294901760
      %693 = vmatprep.subr.mxu0 %v692
      %v694 = vand.u32 %v252, 4294901760
      %v695 = vsub.f32 %v252, %v694
      %v696 = vand.u32 %v695, 4294901760
      %v697 = vsub.f32 %v695, %v696
      %v698 = vand.u32 %v697, 4294901760
      %699 = vmatpush1.msra.mxu0 %v698
      %v700 = vand.u32 %v262, 4294901760
      %v701 = vsub.f32 %v262, %v700
      %v702 = vand.u32 %v701, 4294901760
      %v703 = vsub.f32 %v701, %v702
      %v704 = vand.u32 %v703, 4294901760
      %705 = vmatprep.subr.mxu0 %v704
      %v706 = vand.u32 %v261, 4294901760
      %v707 = vsub.f32 %v261, %v706
      %v708 = vand.u32 %v707, 4294901760
      %v709 = vsub.f32 %v707, %v708
      %v710 = vand.u32 %v709, 4294901760
      %711 = vmatpush1.msra.mxu0 %v710
      %712 = vmatprep.subr.mxu0 0.0
      %713 = vmatpush1.msra.mxu0 0.0
      %714 = vmatprep.subr.mxu0 0.0
      %715 = vmatpush1.msra.mxu0 0.0
      %716 = vmatprep.subr.mxu0 0.0
      %717 = vmatpush1.msra.mxu0 0.0
      %718 = vmatprep.subr.mxu0 0.0
      %719 = vmatpush1.msra.mxu0 0.0
      %720 = vmatprep.subr.mxu0 0.0
      %721 = vmatpush1.msra.mxu0 0.0
      %722 = vmatprep.subr.mxu0 0.0
      %723 = vmatpush1.msra.mxu0 0.0
      %724 = vmatprep.subr.mxu0 0.0
      %725 = vmatpush1.msra.mxu0 0.0
      %726 = vmatprep.subr.mxu0 0.0
      %727 = vmatpush1.msra.mxu0 0.0
      %728 = vmatprep.subr.mxu0 0.0
      %729 = vmatpush1.msra.mxu0 0.0
      %730 = vmatprep.subr.mxu0 0.0
      %731 = vmatpush1.msra.mxu0 0.0
      %732 = vmatprep.subr.mxu0 0.0
      %733 = vmatpush1.msra.mxu0 0.0
      %734 = vmatprep.subr.mxu0 0.0
      %735 = vmatpush1.msra.mxu0 0.0
      %736 = vmatprep.subr.mxu0 0.0
      %737 = vmatpush1.msra.mxu0 0.0
      %738 = vmatprep.subr.mxu0 0.0
      %739 = vmatpush1.msra.mxu0 0.0
      %740 = vmatprep.subr.mxu0 0.0
      %741 = vmatpush1.msra.mxu0 0.0
      %742 = vmatprep.subr.mxu0 0.0
      %743 = vmatpush1.msra.mxu0 0.0
      %744 = vmatprep.subr.mxu0 0.0
      %745 = vmatpush1.msra.mxu0 0.0
      %746 = vmatprep.subr.mxu0 0.0
      %747 = vmatpush1.msra.mxu0 0.0
      %748 = vmatprep.mubr.f32.mxu0 0.0
      %v749 = vand.u32 %v284, 4294901760
      %750 = vmatmul.mubr.f32.gmra.mrb[0].mxu0 %v749
      %v751 = vpop.f32.mrb[0].mxu0
      %v752 = vadd.f32 %v419, %v751
      %v753 = vpop.f32.mrb[0].mxu0
      %v754 = vadd.f32 %v421, %v753
      %755 = vmatprep.mubr.f32.mxu0 0.0
      %v756 = vand.u32 %v287, 4294901760
      %757 = vmatmul.mubr.f32.gmra.mrb[0].mxu0 %v756
      %v758 = vpop.f32.mrb[0].mxu0
      %v759 = vadd.f32 %v430, %v758
      %v760 = vpop.f32.mrb[0].mxu0
      %v761 = vadd.f32 %v432, %v760
      %762 = vmatprep.mubr.f32.mxu0 0.0
      %v763 = vand.u32 %v290, 4294901760
      %764 = vmatmul.mubr.f32.gmra.mrb[0].mxu0 %v763
      %v765 = vpop.f32.mrb[0].mxu0
      %v766 = vadd.f32 %v441, %v765
      %v767 = vpop.f32.mrb[0].mxu0
      %v768 = vadd.f32 %v443, %v767
      %769 = vmatprep.mubr.f32.mxu0 0.0
      %v770 = vand.u32 %v293, 4294901760
      %771 = vmatmul.mubr.f32.gmra.mrb[0].mxu0 %v770
      %v772 = vpop.f32.mrb[0].mxu0
      %v773 = vadd.f32 %v452, %v772
      %v774 = vpop.f32.mrb[0].mxu0
      %v775 = vadd.f32 %v454, %v774
      %776 = vmatprep.mubr.f32.mxu0 0.0
      %v777 = vand.u32 %v296, 4294901760
      %778 = vmatmul.mubr.f32.gmra.mrb[0].mxu0 %v777
      %v779 = vpop.f32.mrb[0].mxu0
      %v780 = vadd.f32 %v463, %v779
      %v781 = vpop.f32.mrb[0].mxu0
      %v782 = vadd.f32 %v465, %v781
      %783 = vmatprep.mubr.f32.mxu0 0.0
      %v784 = vand.u32 %v299, 4294901760
      %785 = vmatmul.mubr.f32.gmra.mrb[0].mxu0 %v784
      %v786 = vpop.f32.mrb[0].mxu0
      %v787 = vadd.f32 %v474, %v786
      %v788 = vpop.f32.mrb[0].mxu0
      %v789 = vadd.f32 %v476, %v788
      %790 = vmatprep.mubr.f32.mxu0 0.0
      %v791 = vand.u32 %v302, 4294901760
      %792 = vmatmul.mubr.f32.gmra.mrb[0].mxu0 %v791
      %v793 = vpop.f32.mrb[0].mxu0
      %v794 = vadd.f32 %v485, %v793
      %v795 = vpop.f32.mrb[0].mxu0
      %v796 = vadd.f32 %v487, %v795
      %797 = vmatprep.mubr.f32.mxu0 0.0
      %v798 = vand.u32 %v305, 4294901760
      %799 = vmatmul.mubr.f32.gmra.mrb[0].mxu0 %v798
      %v800 = vpop.f32.mrb[0].mxu0
      %v801 = vadd.f32 %v496, %v800
      %v802 = vpop.f32.mrb[0].mxu0
      %v803 = vadd.f32 %v498, %v802
      %804 = vmatprep.mubr.f32.mxu0 0.0
      %v805 = vand.u32 %v308, 4294901760
      %806 = vmatmul.mubr.f32.gmra.mrb[0].mxu0 %v805
      %v807 = vpop.f32.mrb[0].mxu0
      %v808 = vadd.f32 %v507, %v807
      %v809 = vpop.f32.mrb[0].mxu0
      %v810 = vadd.f32 %v509, %v809
      %811 = vmatprep.mubr.f32.mxu0 0.0
      %v812 = vand.u32 %v311, 4294901760
      %813 = vmatmul.mubr.f32.gmra.mrb[0].mxu0 %v812
      %v814 = vpop.f32.mrb[0].mxu0
      %v815 = vadd.f32 %v518, %v814
      %v816 = vpop.f32.mrb[0].mxu0
      %v817 = vadd.f32 %v520, %v816
      %818 = vmatprep.mubr.f32.mxu0 0.0
      %v819 = vand.u32 %v314, 4294901760
      %820 = vmatmul.mubr.f32.gmra.mrb[0].mxu0 %v819
      %v821 = vpop.f32.mrb[0].mxu0
      %v822 = vadd.f32 %v529, %v821
      %v823 = vpop.f32.mrb[0].mxu0
      %v824 = vadd.f32 %v531, %v823
      %825 = vmatprep.mubr.f32.mxu0 0.0
      %v826 = vand.u32 %v317, 4294901760
      %827 = vmatmul.mubr.f32.gmra.mrb[0].mxu0 %v826
      %v828 = vpop.f32.mrb[0].mxu0
      %v829 = vadd.f32 %v540, %v828
      %v830 = vpop.f32.mrb[0].mxu0
      %v831 = vadd.f32 %v542, %v830
      %832 = vdwg.mxu0
      %v833 = vand.u32 %v145, 4294901760
      %v834 = vsub.f32 %v145, %v833
      %835 = vmatprep.subr.mxu0 %v834
      %v836 = vand.u32 %v144, 4294901760
      %v837 = vsub.f32 %v144, %v836
      %838 = vmatpush1.msra.mxu0 %v837
      %v839 = vand.u32 %v154, 4294901760
      %v840 = vsub.f32 %v154, %v839
      %841 = vmatprep.subr.mxu0 %v840
      %v842 = vand.u32 %v153, 4294901760
      %v843 = vsub.f32 %v153, %v842
      %844 = vmatpush1.msra.mxu0 %v843
      %v845 = vand.u32 %v163, 4294901760
      %v846 = vsub.f32 %v163, %v845
      %847 = vmatprep.subr.mxu0 %v846
      %v848 = vand.u32 %v162, 4294901760
      %v849 = vsub.f32 %v162, %v848
      %850 = vmatpush1.msra.mxu0 %v849
      %v851 = vand.u32 %v172, 4294901760
      %v852 = vsub.f32 %v172, %v851
      %853 = vmatprep.subr.mxu0 %v852
      %v854 = vand.u32 %v171, 4294901760
      %v855 = vsub.f32 %v171, %v854
      %856 = vmatpush1.msra.mxu0 %v855
      %v857 = vand.u32 %v181, 4294901760
      %v858 = vsub.f32 %v181, %v857
      %859 = vmatprep.subr.mxu0 %v858
      %v860 = vand.u32 %v180, 4294901760
      %v861 = vsub.f32 %v180, %v860
      %862 = vmatpush1.msra.mxu0 %v861
      %v863 = vand.u32 %v190, 4294901760
      %v864 = vsub.f32 %v190, %v863
      %865 = vmatprep.subr.mxu0 %v864
      %v866 = vand.u32 %v189, 4294901760
      %v867 = vsub.f32 %v189, %v866
      %868 = vmatpush1.msra.mxu0 %v867
      %v869 = vand.u32 %v199, 4294901760
      %v870 = vsub.f32 %v199, %v869
      %871 = vmatprep.subr.mxu0 %v870
      %v872 = vand.u32 %v198, 4294901760
      %v873 = vsub.f32 %v198, %v872
      %874 = vmatpush1.msra.mxu0 %v873
      %v875 = vand.u32 %v208, 4294901760
      %v876 = vsub.f32 %v208, %v875
      %877 = vmatprep.subr.mxu0 %v876
      %v878 = vand.u32 %v207, 4294901760
      %v879 = vsub.f32 %v207, %v878
      %880 = vmatpush1.msra.mxu0 %v879
      %v881 = vand.u32 %v217, 4294901760
      %v882 = vsub.f32 %v217, %v881
      %883 = vmatprep.subr.mxu0 %v882
      %v884 = vand.u32 %v216, 4294901760
      %v885 = vsub.f32 %v216, %v884
      %886 = vmatpush1.msra.mxu0 %v885
      %v887 = vand.u32 %v226, 4294901760
      %v888 = vsub.f32 %v226, %v887
      %889 = vmatprep.subr.mxu0 %v888
      %v890 = vand.u32 %v225, 4294901760
      %v891 = vsub.f32 %v225, %v890
      %892 = vmatpush1.msra.mxu0 %v891
      %v893 = vand.u32 %v235, 4294901760
      %v894 = vsub.f32 %v235, %v893
      %895 = vmatprep.subr.mxu0 %v894
      %v896 = vand.u32 %v234, 4294901760
      %v897 = vsub.f32 %v234, %v896
      %898 = vmatpush1.msra.mxu0 %v897
      %v899 = vand.u32 %v244, 4294901760
      %v900 = vsub.f32 %v244, %v899
      %901 = vmatprep.subr.mxu0 %v900
      %v902 = vand.u32 %v243, 4294901760
      %v903 = vsub.f32 %v243, %v902
      %904 = vmatpush1.msra.mxu0 %v903
      %v905 = vand.u32 %v253, 4294901760
      %v906 = vsub.f32 %v253, %v905
      %907 = vmatprep.subr.mxu0 %v906
      %v908 = vand.u32 %v252, 4294901760
      %v909 = vsub.f32 %v252, %v908
      %910 = vmatpush1.msra.mxu0 %v909
      %v911 = vand.u32 %v262, 4294901760
      %v912 = vsub.f32 %v262, %v911
      %913 = vmatprep.subr.mxu0 %v912
      %v914 = vand.u32 %v261, 4294901760
      %v915 = vsub.f32 %v261, %v914
      %916 = vmatpush1.msra.mxu0 %v915
      %917 = vmatprep.subr.mxu0 0.0
      %918 = vmatpush1.msra.mxu0 0.0
      %919 = vmatprep.subr.mxu0 0.0
      %920 = vmatpush1.msra.mxu0 0.0
      %921 = vmatprep.subr.mxu0 0.0
      %922 = vmatpush1.msra.mxu0 0.0
      %923 = vmatprep.subr.mxu0 0.0
      %924 = vmatpush1.msra.mxu0 0.0
      %925 = vmatprep.subr.mxu0 0.0
      %926 = vmatpush1.msra.mxu0 0.0
      %927 = vmatprep.subr.mxu0 0.0
      %928 = vmatpush1.msra.mxu0 0.0
      %929 = vmatprep.subr.mxu0 0.0
      %930 = vmatpush1.msra.mxu0 0.0
      %931 = vmatprep.subr.mxu0 0.0
      %932 = vmatpush1.msra.mxu0 0.0
      %933 = vmatprep.subr.mxu0 0.0
      %934 = vmatpush1.msra.mxu0 0.0
      %935 = vmatprep.subr.mxu0 0.0
      %936 = vmatpush1.msra.mxu0 0.0
      %937 = vmatprep.subr.mxu0 0.0
      %938 = vmatpush1.msra.mxu0 0.0
      %939 = vmatprep.subr.mxu0 0.0
      %940 = vmatpush1.msra.mxu0 0.0
      %941 = vmatprep.subr.mxu0 0.0
      %942 = vmatpush1.msra.mxu0 0.0
      %943 = vmatprep.subr.mxu0 0.0
      %944 = vmatpush1.msra.mxu0 0.0
      %945 = vmatprep.subr.mxu0 0.0
      %946 = vmatpush1.msra.mxu0 0.0
      %947 = vmatprep.subr.mxu0 0.0
      %948 = vmatpush1.msra.mxu0 0.0
      %949 = vmatprep.subr.mxu0 0.0
      %950 = vmatpush1.msra.mxu0 0.0
      %951 = vmatprep.subr.mxu0 0.0
      %952 = vmatpush1.msra.mxu0 0.0
      %953 = vmatprep.mubr.f32.mxu0 0.0
      %v954 = vand.u32 %v284, 4294901760
      %v955 = vsub.f32 %v284, %v954
      %956 = vmatmul.mubr.f32.gmra.mrb[0].mxu0 %v955
      %v957 = vpop.f32.mrb[0].mxu0
      %v958 = vadd.f32 %v752, %v957
      %v959 = vpop.f32.mrb[0].mxu0
      %v960 = vadd.f32 %v754, %v959
      %961 = vmatprep.mubr.f32.mxu0 0.0
      %v962 = vand.u32 %v287, 4294901760
      %v963 = vsub.f32 %v287, %v962
      %964 = vmatmul.mubr.f32.gmra.mrb[0].mxu0 %v963
      %v965 = vpop.f32.mrb[0].mxu0
      %v966 = vadd.f32 %v759, %v965
      %v967 = vpop.f32.mrb[0].mxu0
      %v968 = vadd.f32 %v761, %v967
      %969 = vmatprep.mubr.f32.mxu0 0.0
      %v970 = vand.u32 %v290, 4294901760
      %v971 = vsub.f32 %v290, %v970
      %972 = vmatmul.mubr.f32.gmra.mrb[0].mxu0 %v971
      %v973 = vpop.f32.mrb[0].mxu0
      %v974 = vadd.f32 %v766, %v973
      %v975 = vpop.f32.mrb[0].mxu0
      %v976 = vadd.f32 %v768, %v975
      %977 = vmatprep.mubr.f32.mxu0 0.0
      %v978 = vand.u32 %v293, 4294901760
      %v979 = vsub.f32 %v293, %v978
      %980 = vmatmul.mubr.f32.gmra.mrb[0].mxu0 %v979
      %v981 = vpop.f32.mrb[0].mxu0
      %v982 = vadd.f32 %v773, %v981
      %v983 = vpop.f32.mrb[0].mxu0
      %v984 = vadd.f32 %v775, %v983
      %985 = vmatprep.mubr.f32.mxu0 0.0
      %v986 = vand.u32 %v296, 4294901760
      %v987 = vsub.f32 %v296, %v986
      %988 = vmatmul.mubr.f32.gmra.mrb[0].mxu0 %v987
      %v989 = vpop.f32.mrb[0].mxu0
      %v990 = vadd.f32 %v780, %v989
      %v991 = vpop.f32.mrb[0].mxu0
      %v992 = vadd.f32 %v782, %v991
      %993 = vmatprep.mubr.f32.mxu0 0.0
      %v994 = vand.u32 %v299, 4294901760
      %v995 = vsub.f32 %v299, %v994
      %996 = vmatmul.mubr.f32.gmra.mrb[0].mxu0 %v995
      %v997 = vpop.f32.mrb[0].mxu0
      %v998 = vadd.f32 %v787, %v997
      %v999 = vpop.f32.mrb[0].mxu0
      %v1000 = vadd.f32 %v789, %v999
      %1001 = vmatprep.mubr.f32.mxu0 0.0
      %v1002 = vand.u32 %v302, 4294901760
      %v1003 = vsub.f32 %v302, %v1002
      %1004 = vmatmul.mubr.f32.gmra.mrb[0].mxu0 %v1003
      %v1005 = vpop.f32.mrb[0].mxu0
      %v1006 = vadd.f32 %v794, %v1005
      %v1007 = vpop.f32.mrb[0].mxu0
      %v1008 = vadd.f32 %v796, %v1007
      %1009 = vmatprep.mubr.f32.mxu0 0.0
      %v1010 = vand.u32 %v305, 4294901760
      %v1011 = vsub.f32 %v305, %v1010
      %1012 = vmatmul.mubr.f32.gmra.mrb[0].mxu0 %v1011
      %v1013 = vpop.f32.mrb[0].mxu0
      %v1014 = vadd.f32 %v801, %v1013
      %v1015 = vpop.f32.mrb[0].mxu0
      %v1016 = vadd.f32 %v803, %v1015
      %1017 = vmatprep.mubr.f32.mxu0 0.0
      %v1018 = vand.u32 %v308, 4294901760
      %v1019 = vsub.f32 %v308, %v1018
      %1020 = vmatmul.mubr.f32.gmra.mrb[0].mxu0 %v1019
      %v1021 = vpop.f32.mrb[0].mxu0
      %v1022 = vadd.f32 %v808, %v1021
      %v1023 = vpop.f32.mrb[0].mxu0
      %v1024 = vadd.f32 %v810, %v1023
      %1025 = vmatprep.mubr.f32.mxu0 0.0
      %v1026 = vand.u32 %v311, 4294901760
      %v1027 = vsub.f32 %v311, %v1026
      %1028 = vmatmul.mubr.f32.gmra.mrb[0].mxu0 %v1027
      %v1029 = vpop.f32.mrb[0].mxu0
      %v1030 = vadd.f32 %v815, %v1029
      %v1031 = vpop.f32.mrb[0].mxu0
      %v1032 = vadd.f32 %v817, %v1031
      %1033 = vmatprep.mubr.f32.mxu0 0.0
      %v1034 = vand.u32 %v314, 4294901760
      %v1035 = vsub.f32 %v314, %v1034
      %1036 = vmatmul.mubr.f32.gmra.mrb[0].mxu0 %v1035
      %v1037 = vpop.f32.mrb[0].mxu0
      %v1038 = vadd.f32 %v822, %v1037
      %v1039 = vpop.f32.mrb[0].mxu0
      %v1040 = vadd.f32 %v824, %v1039
      %1041 = vmatprep.mubr.f32.mxu0 0.0
      %v1042 = vand.u32 %v317, 4294901760
      %v1043 = vsub.f32 %v317, %v1042
      %1044 = vmatmul.mubr.f32.gmra.mrb[0].mxu0 %v1043
      %v1045 = vpop.f32.mrb[0].mxu0
      %v1046 = vadd.f32 %v829, %v1045
      %v1047 = vpop.f32.mrb[0].mxu0
      %v1048 = vadd.f32 %v831, %v1047
      %1049 = vdwg.mxu0
      %v1050 = vand.u32 %v145, 4294901760
      %1051 = vmatprep.subr.mxu0 %v1050
      %v1052 = vand.u32 %v144, 4294901760
      %1053 = vmatpush1.msra.mxu0 %v1052
      %v1054 = vand.u32 %v154, 4294901760
      %1055 = vmatprep.subr.mxu0 %v1054
      %v1056 = vand.u32 %v153, 4294901760
      %1057 = vmatpush1.msra.mxu0 %v1056
      %v1058 = vand.u32 %v163, 4294901760
      %1059 = vmatprep.subr.mxu0 %v1058
      %v1060 = vand.u32 %v162, 4294901760
      %1061 = vmatpush1.msra.mxu0 %v1060
      %v1062 = vand.u32 %v172, 4294901760
      %1063 = vmatprep.subr.mxu0 %v1062
      %v1064 = vand.u32 %v171, 4294901760
      %1065 = vmatpush1.msra.mxu0 %v1064
      %v1066 = vand.u32 %v181, 4294901760
      %1067 = vmatprep.subr.mxu0 %v1066
      %v1068 = vand.u32 %v180, 4294901760
      %1069 = vmatpush1.msra.mxu0 %v1068
      %v1070 = vand.u32 %v190, 4294901760
      %1071 = vmatprep.subr.mxu0 %v1070
      %v1072 = vand.u32 %v189, 4294901760
      %1073 = vmatpush1.msra.mxu0 %v1072
      %v1074 = vand.u32 %v199, 4294901760
      %1075 = vmatprep.subr.mxu0 %v1074
      %v1076 = vand.u32 %v198, 4294901760
      %1077 = vmatpush1.msra.mxu0 %v1076
      %v1078 = vand.u32 %v208, 4294901760
      %1079 = vmatprep.subr.mxu0 %v1078
      %v1080 = vand.u32 %v207, 4294901760
      %1081 = vmatpush1.msra.mxu0 %v1080
      %v1082 = vand.u32 %v217, 4294901760
      %1083 = vmatprep.subr.mxu0 %v1082
      %v1084 = vand.u32 %v216, 4294901760
      %1085 = vmatpush1.msra.mxu0 %v1084
      %v1086 = vand.u32 %v226, 4294901760
      %1087 = vmatprep.subr.mxu0 %v1086
      %v1088 = vand.u32 %v225, 4294901760
      %1089 = vmatpush1.msra.mxu0 %v1088
      %v1090 = vand.u32 %v235, 4294901760
      %1091 = vmatprep.subr.mxu0 %v1090
      %v1092 = vand.u32 %v234, 4294901760
      %1093 = vmatpush1.msra.mxu0 %v1092
      %v1094 = vand.u32 %v244, 4294901760
      %1095 = vmatprep.subr.mxu0 %v1094
      %v1096 = vand.u32 %v243, 4294901760
      %1097 = vmatpush1.msra.mxu0 %v1096
      %v1098 = vand.u32 %v253, 4294901760
      %1099 = vmatprep.subr.mxu0 %v1098
      %v1100 = vand.u32 %v252, 4294901760
      %1101 = vmatpush1.msra.mxu0 %v1100
      %v1102 = vand.u32 %v262, 4294901760
      %1103 = vmatprep.subr.mxu0 %v1102
      %v1104 = vand.u32 %v261, 4294901760
      %1105 = vmatpush1.msra.mxu0 %v1104
      %1106 = vmatprep.subr.mxu0 0.0
      %1107 = vmatpush1.msra.mxu0 0.0
      %1108 = vmatprep.subr.mxu0 0.0
      %1109 = vmatpush1.msra.mxu0 0.0
      %1110 = vmatprep.subr.mxu0 0.0
      %1111 = vmatpush1.msra.mxu0 0.0
      %1112 = vmatprep.subr.mxu0 0.0
      %1113 = vmatpush1.msra.mxu0 0.0
      %1114 = vmatprep.subr.mxu0 0.0
      %1115 = vmatpush1.msra.mxu0 0.0
      %1116 = vmatprep.subr.mxu0 0.0
      %1117 = vmatpush1.msra.mxu0 0.0
      %1118 = vmatprep.subr.mxu0 0.0
      %1119 = vmatpush1.msra.mxu0 0.0
      %1120 = vmatprep.subr.mxu0 0.0
      %1121 = vmatpush1.msra.mxu0 0.0
      %1122 = vmatprep.subr.mxu0 0.0
      %1123 = vmatpush1.msra.mxu0 0.0
      %1124 = vmatprep.subr.mxu0 0.0
      %1125 = vmatpush1.msra.mxu0 0.0
      %1126 = vmatprep.subr.mxu0 0.0
      %1127 = vmatpush1.msra.mxu0 0.0
      %1128 = vmatprep.subr.mxu0 0.0
      %1129 = vmatpush1.msra.mxu0 0.0
      %1130 = vmatprep.subr.mxu0 0.0
      %1131 = vmatpush1.msra.mxu0 0.0
      %1132 = vmatprep.subr.mxu0 0.0
      %1133 = vmatpush1.msra.mxu0 0.0
      %1134 = vmatprep.subr.mxu0 0.0
      %1135 = vmatpush1.msra.mxu0 0.0
      %1136 = vmatprep.subr.mxu0 0.0
      %1137 = vmatpush1.msra.mxu0 0.0
      %1138 = vmatprep.subr.mxu0 0.0
      %1139 = vmatpush1.msra.mxu0 0.0
      %1140 = vmatprep.subr.mxu0 0.0
      %1141 = vmatpush1.msra.mxu0 0.0
      %1142 = vmatprep.mubr.f32.mxu0 0.0
      %v1143 = vand.u32 %v284, 4294901760
      %v1144 = vsub.f32 %v284, %v1143
      %v1145 = vand.u32 %v1144, 4294901760
      %1146 = vmatmul.mubr.f32.gmra.mrb[0].mxu0 %v1145
      %v1147 = vpop.f32.mrb[0].mxu0
      %v1148 = vadd.f32 %v958, %v1147
      %v1149 = vpop.f32.mrb[0].mxu0
      %v1150 = vadd.f32 %v960, %v1149
      %1151 = vmatprep.mubr.f32.mxu0 0.0
      %v1152 = vand.u32 %v287, 4294901760
      %v1153 = vsub.f32 %v287, %v1152
      %v1154 = vand.u32 %v1153, 4294901760
      %1155 = vmatmul.mubr.f32.gmra.mrb[0].mxu0 %v1154
      %v1156 = vpop.f32.mrb[0].mxu0
      %v1157 = vadd.f32 %v966, %v1156
      %v1158 = vpop.f32.mrb[0].mxu0
      %v1159 = vadd.f32 %v968, %v1158
      %1160 = vmatprep.mubr.f32.mxu0 0.0
      %v1161 = vand.u32 %v290, 4294901760
      %v1162 = vsub.f32 %v290, %v1161
      %v1163 = vand.u32 %v1162, 4294901760
      %1164 = vmatmul.mubr.f32.gmra.mrb[0].mxu0 %v1163
      %v1165 = vpop.f32.mrb[0].mxu0
      %v1166 = vadd.f32 %v974, %v1165
      %v1167 = vpop.f32.mrb[0].mxu0
      %v1168 = vadd.f32 %v976, %v1167
      %1169 = vmatprep.mubr.f32.mxu0 0.0
      %v1170 = vand.u32 %v293, 4294901760
      %v1171 = vsub.f32 %v293, %v1170
      %v1172 = vand.u32 %v1171, 4294901760
      %1173 = vmatmul.mubr.f32.gmra.mrb[0].mxu0 %v1172
      %v1174 = vpop.f32.mrb[0].mxu0
      %v1175 = vadd.f32 %v982, %v1174
      %v1176 = vpop.f32.mrb[0].mxu0
      %v1177 = vadd.f32 %v984, %v1176
      %1178 = vmatprep.mubr.f32.mxu0 0.0
      %v1179 = vand.u32 %v296, 4294901760
      %v1180 = vsub.f32 %v296, %v1179
      %v1181 = vand.u32 %v1180, 4294901760
      %1182 = vmatmul.mubr.f32.gmra.mrb[0].mxu0 %v1181
      %v1183 = vpop.f32.mrb[0].mxu0
      %v1184 = vadd.f32 %v990, %v1183
      %v1185 = vpop.f32.mrb[0].mxu0
      %v1186 = vadd.f32 %v992, %v1185
      %1187 = vmatprep.mubr.f32.mxu0 0.0
      %v1188 = vand.u32 %v299, 4294901760
      %v1189 = vsub.f32 %v299, %v1188
      %v1190 = vand.u32 %v1189, 4294901760
      %1191 = vmatmul.mubr.f32.gmra.mrb[0].mxu0 %v1190
      %v1192 = vpop.f32.mrb[0].mxu0
      %v1193 = vadd.f32 %v998, %v1192
      %v1194 = vpop.f32.mrb[0].mxu0
      %v1195 = vadd.f32 %v1000, %v1194
      %1196 = vmatprep.mubr.f32.mxu0 0.0
      %v1197 = vand.u32 %v302, 4294901760
      %v1198 = vsub.f32 %v302, %v1197
      %v1199 = vand.u32 %v1198, 4294901760
      %1200 = vmatmul.mubr.f32.gmra.mrb[0].mxu0 %v1199
      %v1201 = vpop.f32.mrb[0].mxu0
      %v1202 = vadd.f32 %v1006, %v1201
      %v1203 = vpop.f32.mrb[0].mxu0
      %v1204 = vadd.f32 %v1008, %v1203
      %1205 = vmatprep.mubr.f32.mxu0 0.0
      %v1206 = vand.u32 %v305, 4294901760
      %v1207 = vsub.f32 %v305, %v1206
      %v1208 = vand.u32 %v1207, 4294901760
      %1209 = vmatmul.mubr.f32.gmra.mrb[0].mxu0 %v1208
      %v1210 = vpop.f32.mrb[0].mxu0
      %v1211 = vadd.f32 %v1014, %v1210
      %v1212 = vpop.f32.mrb[0].mxu0
      %v1213 = vadd.f32 %v1016, %v1212
      %1214 = vmatprep.mubr.f32.mxu0 0.0
      %v1215 = vand.u32 %v308, 4294901760
      %v1216 = vsub.f32 %v308, %v1215
      %v1217 = vand.u32 %v1216, 4294901760
      %1218 = vmatmul.mubr.f32.gmra.mrb[0].mxu0 %v1217
      %v1219 = vpop.f32.mrb[0].mxu0
      %v1220 = vadd.f32 %v1022, %v1219
      %v1221 = vpop.f32.mrb[0].mxu0
      %v1222 = vadd.f32 %v1024, %v1221
      %1223 = vmatprep.mubr.f32.mxu0 0.0
      %v1224 = vand.u32 %v311, 4294901760
      %v1225 = vsub.f32 %v311, %v1224
      %v1226 = vand.u32 %v1225, 4294901760
      %1227 = vmatmul.mubr.f32.gmra.mrb[0].mxu0 %v1226
      %v1228 = vpop.f32.mrb[0].mxu0
      %v1229 = vadd.f32 %v1030, %v1228
      %v1230 = vpop.f32.mrb[0].mxu0
      %v1231 = vadd.f32 %v1032, %v1230
      %1232 = vmatprep.mubr.f32.mxu0 0.0
      %v1233 = vand.u32 %v314, 4294901760
      %v1234 = vsub.f32 %v314, %v1233
      %v1235 = vand.u32 %v1234, 4294901760
      %1236 = vmatmul.mubr.f32.gmra.mrb[0].mxu0 %v1235
      %v1237 = vpop.f32.mrb[0].mxu0
      %v1238 = vadd.f32 %v1038, %v1237
      %v1239 = vpop.f32.mrb[0].mxu0
      %v1240 = vadd.f32 %v1040, %v1239
      %1241 = vmatprep.mubr.f32.mxu0 0.0
      %v1242 = vand.u32 %v317, 4294901760
      %v1243 = vsub.f32 %v317, %v1242
      %v1244 = vand.u32 %v1243, 4294901760
      %1245 = vmatmul.mubr.f32.gmra.mrb[0].mxu0 %v1244
      %v1246 = vpop.f32.mrb[0].mxu0
      %v1247 = vadd.f32 %v1046, %v1246
      %v1248 = vpop.f32.mrb[0].mxu0
      %v1249 = vadd.f32 %v1048, %v1248
      %1250 = vdwg.mxu0
      %v1251 = vand.u32 %v145, 4294901760
      %v1252 = vsub.f32 %v145, %v1251
      %v1253 = vand.u32 %v1252, 4294901760
      %1254 = vmatprep.subr.mxu0 %v1253
      %v1255 = vand.u32 %v144, 4294901760
      %v1256 = vsub.f32 %v144, %v1255
      %v1257 = vand.u32 %v1256, 4294901760
      %1258 = vmatpush1.msra.mxu0 %v1257
      %v1259 = vand.u32 %v154, 4294901760
      %v1260 = vsub.f32 %v154, %v1259
      %v1261 = vand.u32 %v1260, 4294901760
      %1262 = vmatprep.subr.mxu0 %v1261
      %v1263 = vand.u32 %v153, 4294901760
      %v1264 = vsub.f32 %v153, %v1263
      %v1265 = vand.u32 %v1264, 4294901760
      %1266 = vmatpush1.msra.mxu0 %v1265
      %v1267 = vand.u32 %v163, 4294901760
      %v1268 = vsub.f32 %v163, %v1267
      %v1269 = vand.u32 %v1268, 4294901760
      %1270 = vmatprep.subr.mxu0 %v1269
      %v1271 = vand.u32 %v162, 4294901760
      %v1272 = vsub.f32 %v162, %v1271
      %v1273 = vand.u32 %v1272, 4294901760
      %1274 = vmatpush1.msra.mxu0 %v1273
      %v1275 = vand.u32 %v172, 4294901760
      %v1276 = vsub.f32 %v172, %v1275
      %v1277 = vand.u32 %v1276, 4294901760
      %1278 = vmatprep.subr.mxu0 %v1277
      %v1279 = vand.u32 %v171, 4294901760
      %v1280 = vsub.f32 %v171, %v1279
      %v1281 = vand.u32 %v1280, 4294901760
      %1282 = vmatpush1.msra.mxu0 %v1281
      %v1283 = vand.u32 %v181, 4294901760
      %v1284 = vsub.f32 %v181, %v1283
      %v1285 = vand.u32 %v1284, 4294901760
      %1286 = vmatprep.subr.mxu0 %v1285
      %v1287 = vand.u32 %v180, 4294901760
      %v1288 = vsub.f32 %v180, %v1287
      %v1289 = vand.u32 %v1288, 4294901760
      %1290 = vmatpush1.msra.mxu0 %v1289
      %v1291 = vand.u32 %v190, 4294901760
      %v1292 = vsub.f32 %v190, %v1291
      %v1293 = vand.u32 %v1292, 4294901760
      %1294 = vmatprep.subr.mxu0 %v1293
      %v1295 = vand.u32 %v189, 4294901760
      %v1296 = vsub.f32 %v189, %v1295
      %v1297 = vand.u32 %v1296, 4294901760
      %1298 = vmatpush1.msra.mxu0 %v1297
      %v1299 = vand.u32 %v199, 4294901760
      %v1300 = vsub.f32 %v199, %v1299
      %v1301 = vand.u32 %v1300, 4294901760
      %1302 = vmatprep.subr.mxu0 %v1301
      %v1303 = vand.u32 %v198, 4294901760
      %v1304 = vsub.f32 %v198, %v1303
      %v1305 = vand.u32 %v1304, 4294901760
      %1306 = vmatpush1.msra.mxu0 %v1305
      %v1307 = vand.u32 %v208, 4294901760
      %v1308 = vsub.f32 %v208, %v1307
      %v1309 = vand.u32 %v1308, 4294901760
      %1310 = vmatprep.subr.mxu0 %v1309
      %v1311 = vand.u32 %v207, 4294901760
      %v1312 = vsub.f32 %v207, %v1311
      %v1313 = vand.u32 %v1312, 4294901760
      %1314 = vmatpush1.msra.mxu0 %v1313
      %v1315 = vand.u32 %v217, 4294901760
      %v1316 = vsub.f32 %v217, %v1315
      %v1317 = vand.u32 %v1316, 4294901760
      %1318 = vmatprep.subr.mxu0 %v1317
      %v1319 = vand.u32 %v216, 4294901760
      %v1320 = vsub.f32 %v216, %v1319
      %v1321 = vand.u32 %v1320, 4294901760
      %1322 = vmatpush1.msra.mxu0 %v1321
      %v1323 = vand.u32 %v226, 4294901760
      %v1324 = vsub.f32 %v226, %v1323
      %v1325 = vand.u32 %v1324, 4294901760
      %1326 = vmatprep.subr.mxu0 %v1325
      %v1327 = vand.u32 %v225, 4294901760
      %v1328 = vsub.f32 %v225, %v1327
      %v1329 = vand.u32 %v1328, 4294901760
      %1330 = vmatpush1.msra.mxu0 %v1329
      %v1331 = vand.u32 %v235, 4294901760
      %v1332 = vsub.f32 %v235, %v1331
      %v1333 = vand.u32 %v1332, 4294901760
      %1334 = vmatprep.subr.mxu0 %v1333
      %v1335 = vand.u32 %v234, 4294901760
      %v1336 = vsub.f32 %v234, %v1335
      %v1337 = vand.u32 %v1336, 4294901760
      %1338 = vmatpush1.msra.mxu0 %v1337
      %v1339 = vand.u32 %v244, 4294901760
      %v1340 = vsub.f32 %v244, %v1339
      %v1341 = vand.u32 %v1340, 4294901760
      %1342 = vmatprep.subr.mxu0 %v1341
      %v1343 = vand.u32 %v243, 4294901760
      %v1344 = vsub.f32 %v243, %v1343
      %v1345 = vand.u32 %v1344, 4294901760
      %1346 = vmatpush1.msra.mxu0 %v1345
      %v1347 = vand.u32 %v253, 4294901760
      %v1348 = vsub.f32 %v253, %v1347
      %v1349 = vand.u32 %v1348, 4294901760
      %1350 = vmatprep.subr.mxu0 %v1349
      %v1351 = vand.u32 %v252, 4294901760
      %v1352 = vsub.f32 %v252, %v1351
      %v1353 = vand.u32 %v1352, 4294901760
      %1354 = vmatpush1.msra.mxu0 %v1353
      %v1355 = vand.u32 %v262, 4294901760
      %v1356 = vsub.f32 %v262, %v1355
      %v1357 = vand.u32 %v1356, 4294901760
      %1358 = vmatprep.subr.mxu0 %v1357
      %v1359 = vand.u32 %v261, 4294901760
      %v1360 = vsub.f32 %v261, %v1359
      %v1361 = vand.u32 %v1360, 4294901760
      %1362 = vmatpush1.msra.mxu0 %v1361
      %1363 = vmatprep.subr.mxu0 0.0
      %1364 = vmatpush1.msra.mxu0 0.0
      %1365 = vmatprep.subr.mxu0 0.0
      %1366 = vmatpush1.msra.mxu0 0.0
      %1367 = vmatprep.subr.mxu0 0.0
      %1368 = vmatpush1.msra.mxu0 0.0
      %1369 = vmatprep.subr.mxu0 0.0
      %1370 = vmatpush1.msra.mxu0 0.0
      %1371 = vmatprep.subr.mxu0 0.0
      %1372 = vmatpush1.msra.mxu0 0.0
      %1373 = vmatprep.subr.mxu0 0.0
      %1374 = vmatpush1.msra.mxu0 0.0
      %1375 = vmatprep.subr.mxu0 0.0
      %1376 = vmatpush1.msra.mxu0 0.0
      %1377 = vmatprep.subr.mxu0 0.0
      %1378 = vmatpush1.msra.mxu0 0.0
      %1379 = vmatprep.subr.mxu0 0.0
      %1380 = vmatpush1.msra.mxu0 0.0
      %1381 = vmatprep.subr.mxu0 0.0
      %1382 = vmatpush1.msra.mxu0 0.0
      %1383 = vmatprep.subr.mxu0 0.0
      %1384 = vmatpush1.msra.mxu0 0.0
      %1385 = vmatprep.subr.mxu0 0.0
      %1386 = vmatpush1.msra.mxu0 0.0
      %1387 = vmatprep.subr.mxu0 0.0
      %1388 = vmatpush1.msra.mxu0 0.0
      %1389 = vmatprep.subr.mxu0 0.0
      %1390 = vmatpush1.msra.mxu0 0.0
      %1391 = vmatprep.subr.mxu0 0.0
      %1392 = vmatpush1.msra.mxu0 0.0
      %1393 = vmatprep.subr.mxu0 0.0
      %1394 = vmatpush1.msra.mxu0 0.0
      %1395 = vmatprep.subr.mxu0 0.0
      %1396 = vmatpush1.msra.mxu0 0.0
      %1397 = vmatprep.subr.mxu0 0.0
      %1398 = vmatpush1.msra.mxu0 0.0
      %1399 = vmatprep.mubr.f32.mxu0 0.0
      %v1400 = vand.u32 %v284, 4294901760
      %1401 = vmatmul.mubr.f32.gmra.mrb[0].mxu0 %v1400
      %v1402 = vpop.f32.mrb[0].mxu0
      %v1403 = vadd.f32 %v1148, %v1402
      %v1404 = vpop.f32.mrb[0].mxu0
      %v1405 = vadd.f32 %v1150, %v1404
      %1406 = vmatprep.mubr.f32.mxu0 0.0
      %v1407 = vand.u32 %v287, 4294901760
      %1408 = vmatmul.mubr.f32.gmra.mrb[0].mxu0 %v1407
      %v1409 = vpop.f32.mrb[0].mxu0
      %v1410 = vadd.f32 %v1157, %v1409
      %v1411 = vpop.f32.mrb[0].mxu0
      %v1412 = vadd.f32 %v1159, %v1411
      %1413 = vmatprep.mubr.f32.mxu0 0.0
      %v1414 = vand.u32 %v290, 4294901760
      %1415 = vmatmul.mubr.f32.gmra.mrb[0].mxu0 %v1414
      %v1416 = vpop.f32.mrb[0].mxu0
      %v1417 = vadd.f32 %v1166, %v1416
      %v1418 = vpop.f32.mrb[0].mxu0
      %v1419 = vadd.f32 %v1168, %v1418
      %1420 = vmatprep.mubr.f32.mxu0 0.0
      %v1421 = vand.u32 %v293, 4294901760
      %1422 = vmatmul.mubr.f32.gmra.mrb[0].mxu0 %v1421
      %v1423 = vpop.f32.mrb[0].mxu0
      %v1424 = vadd.f32 %v1175, %v1423
      %v1425 = vpop.f32.mrb[0].mxu0
      %v1426 = vadd.f32 %v1177, %v1425
      %1427 = vmatprep.mubr.f32.mxu0 0.0
      %v1428 = vand.u32 %v296, 4294901760
      %1429 = vmatmul.mubr.f32.gmra.mrb[0].mxu0 %v1428
      %v1430 = vpop.f32.mrb[0].mxu0
      %v1431 = vadd.f32 %v1184, %v1430
      %v1432 = vpop.f32.mrb[0].mxu0
      %v1433 = vadd.f32 %v1186, %v1432
      %1434 = vmatprep.mubr.f32.mxu0 0.0
      %v1435 = vand.u32 %v299, 4294901760
      %1436 = vmatmul.mubr.f32.gmra.mrb[0].mxu0 %v1435
      %v1437 = vpop.f32.mrb[0].mxu0
      %v1438 = vadd.f32 %v1193, %v1437
      %v1439 = vpop.f32.mrb[0].mxu0
      %v1440 = vadd.f32 %v1195, %v1439
      %1441 = vmatprep.mubr.f32.mxu0 0.0
      %v1442 = vand.u32 %v302, 4294901760
      %1443 = vmatmul.mubr.f32.gmra.mrb[0].mxu0 %v1442
      %v1444 = vpop.f32.mrb[0].mxu0
      %v1445 = vadd.f32 %v1202, %v1444
      %v1446 = vpop.f32.mrb[0].mxu0
      %v1447 = vadd.f32 %v1204, %v1446
      %1448 = vmatprep.mubr.f32.mxu0 0.0
      %v1449 = vand.u32 %v305, 4294901760
      %1450 = vmatmul.mubr.f32.gmra.mrb[0].mxu0 %v1449
      %v1451 = vpop.f32.mrb[0].mxu0
      %v1452 = vadd.f32 %v1211, %v1451
      %v1453 = vpop.f32.mrb[0].mxu0
      %v1454 = vadd.f32 %v1213, %v1453
      %1455 = vmatprep.mubr.f32.mxu0 0.0
      %v1456 = vand.u32 %v308, 4294901760
      %1457 = vmatmul.mubr.f32.gmra.mrb[0].mxu0 %v1456
      %v1458 = vpop.f32.mrb[0].mxu0
      %v1459 = vadd.f32 %v1220, %v1458
      %v1460 = vpop.f32.mrb[0].mxu0
      %v1461 = vadd.f32 %v1222, %v1460
      %1462 = vmatprep.mubr.f32.mxu0 0.0
      %v1463 = vand.u32 %v311, 4294901760
      %1464 = vmatmul.mubr.f32.gmra.mrb[0].mxu0 %v1463
      %v1465 = vpop.f32.mrb[0].mxu0
      %v1466 = vadd.f32 %v1229, %v1465
      %v1467 = vpop.f32.mrb[0].mxu0
      %v1468 = vadd.f32 %v1231, %v1467
      %1469 = vmatprep.mubr.f32.mxu0 0.0
      %v1470 = vand.u32 %v314, 4294901760
      %1471 = vmatmul.mubr.f32.gmra.mrb[0].mxu0 %v1470
      %v1472 = vpop.f32.mrb[0].mxu0
      %v1473 = vadd.f32 %v1238, %v1472
      %v1474 = vpop.f32.mrb[0].mxu0
      %v1475 = vadd.f32 %v1240, %v1474
      %1476 = vmatprep.mubr.f32.mxu0 0.0
      %v1477 = vand.u32 %v317, 4294901760
      %1478 = vmatmul.mubr.f32.gmra.mrb[0].mxu0 %v1477
      %v1479 = vpop.f32.mrb[0].mxu0
      %v1480 = vadd.f32 %v1247, %v1479
      %v1481 = vpop.f32.mrb[0].mxu0
      %v1482 = vadd.f32 %v1249, %v1481
      %1483 = vdwg.mxu0
      %v1484 = vand.u32 %v145, 4294901760
      %1485 = vmatprep.subr.mxu0 %v1484
      %v1486 = vand.u32 %v144, 4294901760
      %1487 = vmatpush1.msra.mxu0 %v1486
      %v1488 = vand.u32 %v154, 4294901760
      %1489 = vmatprep.subr.mxu0 %v1488
      %v1490 = vand.u32 %v153, 4294901760
      %1491 = vmatpush1.msra.mxu0 %v1490
      %v1492 = vand.u32 %v163, 4294901760
      %1493 = vmatprep.subr.mxu0 %v1492
      %v1494 = vand.u32 %v162, 4294901760
      %1495 = vmatpush1.msra.mxu0 %v1494
      %v1496 = vand.u32 %v172, 4294901760
      %1497 = vmatprep.subr.mxu0 %v1496
      %v1498 = vand.u32 %v171, 4294901760
      %1499 = vmatpush1.msra.mxu0 %v1498
      %v1500 = vand.u32 %v181, 4294901760
      %1501 = vmatprep.subr.mxu0 %v1500
      %v1502 = vand.u32 %v180, 4294901760
      %1503 = vmatpush1.msra.mxu0 %v1502
      %v1504 = vand.u32 %v190, 4294901760
      %1505 = vmatprep.subr.mxu0 %v1504
      %v1506 = vand.u32 %v189, 4294901760
      %1507 = vmatpush1.msra.mxu0 %v1506
      %v1508 = vand.u32 %v199, 4294901760
      %1509 = vmatprep.subr.mxu0 %v1508
      %v1510 = vand.u32 %v198, 4294901760
      %1511 = vmatpush1.msra.mxu0 %v1510
      %v1512 = vand.u32 %v208, 4294901760
      %1513 = vmatprep.subr.mxu0 %v1512
      %v1514 = vand.u32 %v207, 4294901760
      %1515 = vmatpush1.msra.mxu0 %v1514
      %v1516 = vand.u32 %v217, 4294901760
      %1517 = vmatprep.subr.mxu0 %v1516
      %v1518 = vand.u32 %v216, 4294901760
      %1519 = vmatpush1.msra.mxu0 %v1518
      %v1520 = vand.u32 %v226, 4294901760
      %1521 = vmatprep.subr.mxu0 %v1520
      %v1522 = vand.u32 %v225, 4294901760
      %1523 = vmatpush1.msra.mxu0 %v1522
      %v1524 = vand.u32 %v235, 4294901760
      %1525 = vmatprep.subr.mxu0 %v1524
      %v1526 = vand.u32 %v234, 4294901760
      %1527 = vmatpush1.msra.mxu0 %v1526
      %v1528 = vand.u32 %v244, 4294901760
      %1529 = vmatprep.subr.mxu0 %v1528
      %v1530 = vand.u32 %v243, 4294901760
      %1531 = vmatpush1.msra.mxu0 %v1530
      %v1532 = vand.u32 %v253, 4294901760
      %1533 = vmatprep.subr.mxu0 %v1532
      %v1534 = vand.u32 %v252, 4294901760
      %1535 = vmatpush1.msra.mxu0 %v1534
      %v1536 = vand.u32 %v262, 4294901760
      %1537 = vmatprep.subr.mxu0 %v1536
      %v1538 = vand.u32 %v261, 4294901760
      %1539 = vmatpush1.msra.mxu0 %v1538
      %1540 = vmatprep.subr.mxu0 0.0
      %1541 = vmatpush1.msra.mxu0 0.0
      %1542 = vmatprep.subr.mxu0 0.0
      %1543 = vmatpush1.msra.mxu0 0.0
      %1544 = vmatprep.subr.mxu0 0.0
      %1545 = vmatpush1.msra.mxu0 0.0
      %1546 = vmatprep.subr.mxu0 0.0
      %1547 = vmatpush1.msra.mxu0 0.0
      %1548 = vmatprep.subr.mxu0 0.0
      %1549 = vmatpush1.msra.mxu0 0.0
      %1550 = vmatprep.subr.mxu0 0.0
      %1551 = vmatpush1.msra.mxu0 0.0
      %1552 = vmatprep.subr.mxu0 0.0
      %1553 = vmatpush1.msra.mxu0 0.0
      %1554 = vmatprep.subr.mxu0 0.0
      %1555 = vmatpush1.msra.mxu0 0.0
      %1556 = vmatprep.subr.mxu0 0.0
      %1557 = vmatpush1.msra.mxu0 0.0
      %1558 = vmatprep.subr.mxu0 0.0
      %1559 = vmatpush1.msra.mxu0 0.0
      %1560 = vmatprep.subr.mxu0 0.0
      %1561 = vmatpush1.msra.mxu0 0.0
      %1562 = vmatprep.subr.mxu0 0.0
      %1563 = vmatpush1.msra.mxu0 0.0
      %1564 = vmatprep.subr.mxu0 0.0
      %1565 = vmatpush1.msra.mxu0 0.0
      %1566 = vmatprep.subr.mxu0 0.0
      %1567 = vmatpush1.msra.mxu0 0.0
      %1568 = vmatprep.subr.mxu0 0.0
      %1569 = vmatpush1.msra.mxu0 0.0
      %1570 = vmatprep.subr.mxu0 0.0
      %1571 = vmatpush1.msra.mxu0 0.0
      %1572 = vmatprep.subr.mxu0 0.0
      %1573 = vmatpush1.msra.mxu0 0.0
      %1574 = vmatprep.subr.mxu0 0.0
      %1575 = vmatpush1.msra.mxu0 0.0
      %1576 = vmatprep.mubr.f32.mxu0 0.0
      %v1577 = vand.u32 %v284, 4294901760
      %1578 = vmatmul.mubr.f32.gmra.mrb[0].mxu0 %v1577
      %v1579 = vpop.f32.mrb[0].mxu0
      %v1580 = vadd.f32 %v1403, %v1579
      %v1581 = vpop.f32.mrb[0].mxu0
      %v1582 = vadd.f32 %v1405, %v1581
      %1583 = vmatprep.mubr.f32.mxu0 0.0
      %v1584 = vand.u32 %v287, 4294901760
      %1585 = vmatmul.mubr.f32.gmra.mrb[0].mxu0 %v1584
      %v1586 = vpop.f32.mrb[0].mxu0
      %v1587 = vadd.f32 %v1410, %v1586
      %v1588 = vpop.f32.mrb[0].mxu0
      %v1589 = vadd.f32 %v1412, %v1588
      %1590 = vmatprep.mubr.f32.mxu0 0.0
      %v1591 = vand.u32 %v290, 4294901760
      %1592 = vmatmul.mubr.f32.gmra.mrb[0].mxu0 %v1591
      %v1593 = vpop.f32.mrb[0].mxu0
      %v1594 = vadd.f32 %v1417, %v1593
      %v1595 = vpop.f32.mrb[0].mxu0
      %v1596 = vadd.f32 %v1419, %v1595
      %1597 = vmatprep.mubr.f32.mxu0 0.0
      %v1598 = vand.u32 %v293, 4294901760
      %1599 = vmatmul.mubr.f32.gmra.mrb[0].mxu0 %v1598
      %v1600 = vpop.f32.mrb[0].mxu0
      %v1601 = vadd.f32 %v1424, %v1600
      %v1602 = vpop.f32.mrb[0].mxu0
      %v1603 = vadd.f32 %v1426, %v1602
      %1604 = vmatprep.mubr.f32.mxu0 0.0
      %v1605 = vand.u32 %v296, 4294901760
      %1606 = vmatmul.mubr.f32.gmra.mrb[0].mxu0 %v1605
      %v1607 = vpop.f32.mrb[0].mxu0
      %v1608 = vadd.f32 %v1431, %v1607
      %v1609 = vpop.f32.mrb[0].mxu0
      %v1610 = vadd.f32 %v1433, %v1609
      %1611 = vmatprep.mubr.f32.mxu0 0.0
      %v1612 = vand.u32 %v299, 4294901760
      %1613 = vmatmul.mubr.f32.gmra.mrb[0].mxu0 %v1612
      %v1614 = vpop.f32.mrb[0].mxu0
      %v1615 = vadd.f32 %v1438, %v1614
      %v1616 = vpop.f32.mrb[0].mxu0
      %v1617 = vadd.f32 %v1440, %v1616
      %1618 = vmatprep.mubr.f32.mxu0 0.0
      %v1619 = vand.u32 %v302, 4294901760
      %1620 = vmatmul.mubr.f32.gmra.mrb[0].mxu0 %v1619
      %v1621 = vpop.f32.mrb[0].mxu0
      %v1622 = vadd.f32 %v1445, %v1621
      %v1623 = vpop.f32.mrb[0].mxu0
      %v1624 = vadd.f32 %v1447, %v1623
      %1625 = vmatprep.mubr.f32.mxu0 0.0
      %v1626 = vand.u32 %v305, 4294901760
      %1627 = vmatmul.mubr.f32.gmra.mrb[0].mxu0 %v1626
      %v1628 = vpop.f32.mrb[0].mxu0
      %v1629 = vadd.f32 %v1452, %v1628
      %v1630 = vpop.f32.mrb[0].mxu0
      %v1631 = vadd.f32 %v1454, %v1630
      %1632 = vmatprep.mubr.f32.mxu0 0.0
      %v1633 = vand.u32 %v308, 4294901760
      %1634 = vmatmul.mubr.f32.gmra.mrb[0].mxu0 %v1633
      %v1635 = vpop.f32.mrb[0].mxu0
      %v1636 = vadd.f32 %v1459, %v1635
      %v1637 = vpop.f32.mrb[0].mxu0
      %v1638 = vadd.f32 %v1461, %v1637
      %1639 = vmatprep.mubr.f32.mxu0 0.0
      %v1640 = vand.u32 %v311, 4294901760
      %1641 = vmatmul.mubr.f32.gmra.mrb[0].mxu0 %v1640
      %v1642 = vpop.f32.mrb[0].mxu0
      %v1643 = vadd.f32 %v1466, %v1642
      %v1644 = vpop.f32.mrb[0].mxu0
      %v1645 = vadd.f32 %v1468, %v1644
      %1646 = vmatprep.mubr.f32.mxu0 0.0
      %v1647 = vand.u32 %v314, 4294901760
      %1648 = vmatmul.mubr.f32.gmra.mrb[0].mxu0 %v1647
      %v1649 = vpop.f32.mrb[0].mxu0
      %v1650 = vadd.f32 %v1473, %v1649
      %v1651 = vpop.f32.mrb[0].mxu0
      %v1652 = vadd.f32 %v1475, %v1651
      %1653 = vmatprep.mubr.f32.mxu0 0.0
      %v1654 = vand.u32 %v317, 4294901760
      %1655 = vmatmul.mubr.f32.gmra.mrb[0].mxu0 %v1654
      %v1656 = vpop.f32.mrb[0].mxu0
      %v1657 = vadd.f32 %v1480, %v1656
      %v1658 = vpop.f32.mrb[0].mxu0
      %v1659 = vadd.f32 %v1482, %v1658
      %1660 = vdwg.mxu0
      %v1661 = vand.u32 %v147, 4294901760
      %1662 = vmatprep.subr.mxu0 %v1661
      %v1663 = vand.u32 %v146, 4294901760
      %1664 = vmatpush1.msra.mxu0 %v1663
      %v1665 = vand.u32 %v156, 4294901760
      %1666 = vmatprep.subr.mxu0 %v1665
      %v1667 = vand.u32 %v155, 4294901760
      %1668 = vmatpush1.msra.mxu0 %v1667
      %v1669 = vand.u32 %v165, 4294901760
      %1670 = vmatprep.subr.mxu0 %v1669
      %v1671 = vand.u32 %v164, 4294901760
      %1672 = vmatpush1.msra.mxu0 %v1671
      %v1673 = vand.u32 %v174, 4294901760
      %1674 = vmatprep.subr.mxu0 %v1673
      %v1675 = vand.u32 %v173, 4294901760
      %1676 = vmatpush1.msra.mxu0 %v1675
      %v1677 = vand.u32 %v183, 4294901760
      %1678 = vmatprep.subr.mxu0 %v1677
      %v1679 = vand.u32 %v182, 4294901760
      %1680 = vmatpush1.msra.mxu0 %v1679
      %v1681 = vand.u32 %v192, 4294901760
      %1682 = vmatprep.subr.mxu0 %v1681
      %v1683 = vand.u32 %v191, 4294901760
      %1684 = vmatpush1.msra.mxu0 %v1683
      %v1685 = vand.u32 %v201, 4294901760
      %1686 = vmatprep.subr.mxu0 %v1685
      %v1687 = vand.u32 %v200, 4294901760
      %1688 = vmatpush1.msra.mxu0 %v1687
      %v1689 = vand.u32 %v210, 4294901760
      %1690 = vmatprep.subr.mxu0 %v1689
      %v1691 = vand.u32 %v209, 4294901760
      %1692 = vmatpush1.msra.mxu0 %v1691
      %v1693 = vand.u32 %v219, 4294901760
      %1694 = vmatprep.subr.mxu0 %v1693
      %v1695 = vand.u32 %v218, 4294901760
      %1696 = vmatpush1.msra.mxu0 %v1695
      %v1697 = vand.u32 %v228, 4294901760
      %1698 = vmatprep.subr.mxu0 %v1697
      %v1699 = vand.u32 %v227, 4294901760
      %1700 = vmatpush1.msra.mxu0 %v1699
      %v1701 = vand.u32 %v237, 4294901760
      %1702 = vmatprep.subr.mxu0 %v1701
      %v1703 = vand.u32 %v236, 4294901760
      %1704 = vmatpush1.msra.mxu0 %v1703
      %v1705 = vand.u32 %v246, 4294901760
      %1706 = vmatprep.subr.mxu0 %v1705
      %v1707 = vand.u32 %v245, 4294901760
      %1708 = vmatpush1.msra.mxu0 %v1707
      %v1709 = vand.u32 %v255, 4294901760
      %1710 = vmatprep.subr.mxu0 %v1709
      %v1711 = vand.u32 %v254, 4294901760
      %1712 = vmatpush1.msra.mxu0 %v1711
      %v1713 = vand.u32 %v264, 4294901760
      %1714 = vmatprep.subr.mxu0 %v1713
      %v1715 = vand.u32 %v263, 4294901760
      %1716 = vmatpush1.msra.mxu0 %v1715
      %1717 = vmatprep.subr.mxu0 0.0
      %1718 = vmatpush1.msra.mxu0 0.0
      %1719 = vmatprep.subr.mxu0 0.0
      %1720 = vmatpush1.msra.mxu0 0.0
      %1721 = vmatprep.subr.mxu0 0.0
      %1722 = vmatpush1.msra.mxu0 0.0
      %1723 = vmatprep.subr.mxu0 0.0
      %1724 = vmatpush1.msra.mxu0 0.0
      %1725 = vmatprep.subr.mxu0 0.0
      %1726 = vmatpush1.msra.mxu0 0.0
      %1727 = vmatprep.subr.mxu0 0.0
      %1728 = vmatpush1.msra.mxu0 0.0
      %1729 = vmatprep.subr.mxu0 0.0
      %1730 = vmatpush1.msra.mxu0 0.0
      %1731 = vmatprep.subr.mxu0 0.0
      %1732 = vmatpush1.msra.mxu0 0.0
      %1733 = vmatprep.subr.mxu0 0.0
      %1734 = vmatpush1.msra.mxu0 0.0
      %1735 = vmatprep.subr.mxu0 0.0
      %1736 = vmatpush1.msra.mxu0 0.0
      %1737 = vmatprep.subr.mxu0 0.0
      %1738 = vmatpush1.msra.mxu0 0.0
      %1739 = vmatprep.subr.mxu0 0.0
      %1740 = vmatpush1.msra.mxu0 0.0
      %1741 = vmatprep.subr.mxu0 0.0
      %1742 = vmatpush1.msra.mxu0 0.0
      %1743 = vmatprep.subr.mxu0 0.0
      %1744 = vmatpush1.msra.mxu0 0.0
      %1745 = vmatprep.subr.mxu0 0.0
      %1746 = vmatpush1.msra.mxu0 0.0
      %1747 = vmatprep.subr.mxu0 0.0
      %1748 = vmatpush1.msra.mxu0 0.0
      %1749 = vmatprep.subr.mxu0 0.0
      %1750 = vmatpush1.msra.mxu0 0.0
      %1751 = vmatprep.subr.mxu0 0.0
      %1752 = vmatpush1.msra.mxu0 0.0
      %1753 = vmatprep.mubr.f32.mxu0 0.0
      %v1754 = vand.u32 %v284, 4294901760
      %v1755 = vsub.f32 %v284, %v1754
      %v1756 = vand.u32 %v1755, 4294901760
      %v1757 = vsub.f32 %v1755, %v1756
      %v1758 = vand.u32 %v1757, 4294901760
      %1759 = vmatmul.mubr.f32.gmra.mrb[0].mxu0 %v1758
      %v1760 = vpop.f32.mrb[0].mxu0
      %v1761 = vadd.f32 0.0, %v1760
      %v1762 = vpop.f32.mrb[0].mxu0
      %v1763 = vadd.f32 0.0, %v1762
      %1764 = vmatprep.mubr.f32.mxu0 0.0
      %v1765 = vand.u32 %v287, 4294901760
      %v1766 = vsub.f32 %v287, %v1765
      %v1767 = vand.u32 %v1766, 4294901760
      %v1768 = vsub.f32 %v1766, %v1767
      %v1769 = vand.u32 %v1768, 4294901760
      %1770 = vmatmul.mubr.f32.gmra.mrb[0].mxu0 %v1769
      %v1771 = vpop.f32.mrb[0].mxu0
      %v1772 = vadd.f32 0.0, %v1771
      %v1773 = vpop.f32.mrb[0].mxu0
      %v1774 = vadd.f32 0.0, %v1773
      %1775 = vmatprep.mubr.f32.mxu0 0.0
      %v1776 = vand.u32 %v290, 4294901760
      %v1777 = vsub.f32 %v290, %v1776
      %v1778 = vand.u32 %v1777, 4294901760
      %v1779 = vsub.f32 %v1777, %v1778
      %v1780 = vand.u32 %v1779, 4294901760
      %1781 = vmatmul.mubr.f32.gmra.mrb[0].mxu0 %v1780
      %v1782 = vpop.f32.mrb[0].mxu0
      %v1783 = vadd.f32 0.0, %v1782
      %v1784 = vpop.f32.mrb[0].mxu0
      %v1785 = vadd.f32 0.0, %v1784
      %1786 = vmatprep.mubr.f32.mxu0 0.0
      %v1787 = vand.u32 %v293, 4294901760
      %v1788 = vsub.f32 %v293, %v1787
      %v1789 = vand.u32 %v1788, 4294901760
      %v1790 = vsub.f32 %v1788, %v1789
      %v1791 = vand.u32 %v1790, 4294901760
      %1792 = vmatmul.mubr.f32.gmra.mrb[0].mxu0 %v1791
      %v1793 = vpop.f32.mrb[0].mxu0
      %v1794 = vadd.f32 0.0, %v1793
      %v1795 = vpop.f32.mrb[0].mxu0
      %v1796 = vadd.f32 0.0, %v1795
      %1797 = vmatprep.mubr.f32.mxu0 0.0
      %v1798 = vand.u32 %v296, 4294901760
      %v1799 = vsub.f32 %v296, %v1798
      %v1800 = vand.u32 %v1799, 4294901760
      %v1801 = vsub.f32 %v1799, %v1800
      %v1802 = vand.u32 %v1801, 4294901760
      %1803 = vmatmul.mubr.f32.gmra.mrb[0].mxu0 %v1802
      %v1804 = vpop.f32.mrb[0].mxu0
      %v1805 = vadd.f32 0.0, %v1804
      %v1806 = vpop.f32.mrb[0].mxu0
      %v1807 = vadd.f32 0.0, %v1806
      %1808 = vmatprep.mubr.f32.mxu0 0.0
      %v1809 = vand.u32 %v299, 4294901760
      %v1810 = vsub.f32 %v299, %v1809
      %v1811 = vand.u32 %v1810, 4294901760
      %v1812 = vsub.f32 %v1810, %v1811
      %v1813 = vand.u32 %v1812, 4294901760
      %1814 = vmatmul.mubr.f32.gmra.mrb[0].mxu0 %v1813
      %v1815 = vpop.f32.mrb[0].mxu0
      %v1816 = vadd.f32 0.0, %v1815
      %v1817 = vpop.f32.mrb[0].mxu0
      %v1818 = vadd.f32 0.0, %v1817
      %1819 = vmatprep.mubr.f32.mxu0 0.0
      %v1820 = vand.u32 %v302, 4294901760
      %v1821 = vsub.f32 %v302, %v1820
      %v1822 = vand.u32 %v1821, 4294901760
      %v1823 = vsub.f32 %v1821, %v1822
      %v1824 = vand.u32 %v1823, 4294901760
      %1825 = vmatmul.mubr.f32.gmra.mrb[0].mxu0 %v1824
      %v1826 = vpop.f32.mrb[0].mxu0
      %v1827 = vadd.f32 0.0, %v1826
      %v1828 = vpop.f32.mrb[0].mxu0
      %v1829 = vadd.f32 0.0, %v1828
      %1830 = vmatprep.mubr.f32.mxu0 0.0
      %v1831 = vand.u32 %v305, 4294901760
      %v1832 = vsub.f32 %v305, %v1831
      %v1833 = vand.u32 %v1832, 4294901760
      %v1834 = vsub.f32 %v1832, %v1833
      %v1835 = vand.u32 %v1834, 4294901760
      %1836 = vmatmul.mubr.f32.gmra.mrb[0].mxu0 %v1835
      %v1837 = vpop.f32.mrb[0].mxu0
      %v1838 = vadd.f32 0.0, %v1837
      %v1839 = vpop.f32.mrb[0].mxu0
      %v1840 = vadd.f32 0.0, %v1839
      %1841 = vmatprep.mubr.f32.mxu0 0.0
      %v1842 = vand.u32 %v308, 4294901760
      %v1843 = vsub.f32 %v308, %v1842
      %v1844 = vand.u32 %v1843, 4294901760
      %v1845 = vsub.f32 %v1843, %v1844
      %v1846 = vand.u32 %v1845, 4294901760
      %1847 = vmatmul.mubr.f32.gmra.mrb[0].mxu0 %v1846
      %v1848 = vpop.f32.mrb[0].mxu0
      %v1849 = vadd.f32 0.0, %v1848
      %v1850 = vpop.f32.mrb[0].mxu0
      %v1851 = vadd.f32 0.0, %v1850
      %1852 = vmatprep.mubr.f32.mxu0 0.0
      %v1853 = vand.u32 %v311, 4294901760
      %v1854 = vsub.f32 %v311, %v1853
      %v1855 = vand.u32 %v1854, 4294901760
      %v1856 = vsub.f32 %v1854, %v1855
      %v1857 = vand.u32 %v1856, 4294901760
      %1858 = vmatmul.mubr.f32.gmra.mrb[0].mxu0 %v1857
      %v1859 = vpop.f32.mrb[0].mxu0
      %v1860 = vadd.f32 0.0, %v1859
      %v1861 = vpop.f32.mrb[0].mxu0
      %v1862 = vadd.f32 0.0, %v1861
      %1863 = vmatprep.mubr.f32.mxu0 0.0
      %v1864 = vand.u32 %v314, 4294901760
      %v1865 = vsub.f32 %v314, %v1864
      %v1866 = vand.u32 %v1865, 4294901760
      %v1867 = vsub.f32 %v1865, %v1866
      %v1868 = vand.u32 %v1867, 4294901760
      %1869 = vmatmul.mubr.f32.gmra.mrb[0].mxu0 %v1868
      %v1870 = vpop.f32.mrb[0].mxu0
      %v1871 = vadd.f32 0.0, %v1870
      %v1872 = vpop.f32.mrb[0].mxu0
      %v1873 = vadd.f32 0.0, %v1872
      %1874 = vmatprep.mubr.f32.mxu0 0.0
      %v1875 = vand.u32 %v317, 4294901760
      %v1876 = vsub.f32 %v317, %v1875
      %v1877 = vand.u32 %v1876, 4294901760
      %v1878 = vsub.f32 %v1876, %v1877
      %v1879 = vand.u32 %v1878, 4294901760
      %1880 = vmatmul.mubr.f32.gmra.mrb[0].mxu0 %v1879
      %v1881 = vpop.f32.mrb[0].mxu0
      %v1882 = vadd.f32 0.0, %v1881
      %v1883 = vpop.f32.mrb[0].mxu0
      %v1884 = vadd.f32 0.0, %v1883
      %1885 = vdwg.mxu0
      %v1886 = vand.u32 %v147, 4294901760
      %v1887 = vsub.f32 %v147, %v1886
      %v1888 = vand.u32 %v1887, 4294901760
      %v1889 = vsub.f32 %v1887, %v1888
      %v1890 = vand.u32 %v1889, 4294901760
      %1891 = vmatprep.subr.mxu0 %v1890
      %v1892 = vand.u32 %v146, 4294901760
      %v1893 = vsub.f32 %v146, %v1892
      %v1894 = vand.u32 %v1893, 4294901760
      %v1895 = vsub.f32 %v1893, %v1894
      %v1896 = vand.u32 %v1895, 4294901760
      %1897 = vmatpush1.msra.mxu0 %v1896
      %v1898 = vand.u32 %v156, 4294901760
      %v1899 = vsub.f32 %v156, %v1898
      %v1900 = vand.u32 %v1899, 4294901760
      %v1901 = vsub.f32 %v1899, %v1900
      %v1902 = vand.u32 %v1901, 4294901760
      %1903 = vmatprep.subr.mxu0 %v1902
      %v1904 = vand.u32 %v155, 4294901760
      %v1905 = vsub.f32 %v155, %v1904
      %v1906 = vand.u32 %v1905, 4294901760
      %v1907 = vsub.f32 %v1905, %v1906
      %v1908 = vand.u32 %v1907, 4294901760
      %1909 = vmatpush1.msra.mxu0 %v1908
      %v1910 = vand.u32 %v165, 4294901760
      %v1911 = vsub.f32 %v165, %v1910
      %v1912 = vand.u32 %v1911, 4294901760
      %v1913 = vsub.f32 %v1911, %v1912
      %v1914 = vand.u32 %v1913, 4294901760
      %1915 = vmatprep.subr.mxu0 %v1914
      %v1916 = vand.u32 %v164, 4294901760
      %v1917 = vsub.f32 %v164, %v1916
      %v1918 = vand.u32 %v1917, 4294901760
      %v1919 = vsub.f32 %v1917, %v1918
      %v1920 = vand.u32 %v1919, 4294901760
      %1921 = vmatpush1.msra.mxu0 %v1920
      %v1922 = vand.u32 %v174, 4294901760
      %v1923 = vsub.f32 %v174, %v1922
      %v1924 = vand.u32 %v1923, 4294901760
      %v1925 = vsub.f32 %v1923, %v1924
      %v1926 = vand.u32 %v1925, 4294901760
      %1927 = vmatprep.subr.mxu0 %v1926
      %v1928 = vand.u32 %v173, 4294901760
      %v1929 = vsub.f32 %v173, %v1928
      %v1930 = vand.u32 %v1929, 4294901760
      %v1931 = vsub.f32 %v1929, %v1930
      %v1932 = vand.u32 %v1931, 4294901760
      %1933 = vmatpush1.msra.mxu0 %v1932
      %v1934 = vand.u32 %v183, 4294901760
      %v1935 = vsub.f32 %v183, %v1934
      %v1936 = vand.u32 %v1935, 4294901760
      %v1937 = vsub.f32 %v1935, %v1936
      %v1938 = vand.u32 %v1937, 4294901760
      %1939 = vmatprep.subr.mxu0 %v1938
      %v1940 = vand.u32 %v182, 4294901760
      %v1941 = vsub.f32 %v182, %v1940
      %v1942 = vand.u32 %v1941, 4294901760
      %v1943 = vsub.f32 %v1941, %v1942
      %v1944 = vand.u32 %v1943, 4294901760
      %1945 = vmatpush1.msra.mxu0 %v1944
      %v1946 = vand.u32 %v192, 4294901760
      %v1947 = vsub.f32 %v192, %v1946
      %v1948 = vand.u32 %v1947, 4294901760
      %v1949 = vsub.f32 %v1947, %v1948
      %v1950 = vand.u32 %v1949, 4294901760
      %1951 = vmatprep.subr.mxu0 %v1950
      %v1952 = vand.u32 %v191, 4294901760
      %v1953 = vsub.f32 %v191, %v1952
      %v1954 = vand.u32 %v1953, 4294901760
      %v1955 = vsub.f32 %v1953, %v1954
      %v1956 = vand.u32 %v1955, 4294901760
      %1957 = vmatpush1.msra.mxu0 %v1956
      %v1958 = vand.u32 %v201, 4294901760
      %v1959 = vsub.f32 %v201, %v1958
      %v1960 = vand.u32 %v1959, 4294901760
      %v1961 = vsub.f32 %v1959, %v1960
      %v1962 = vand.u32 %v1961, 4294901760
      %1963 = vmatprep.subr.mxu0 %v1962
      %v1964 = vand.u32 %v200, 4294901760
      %v1965 = vsub.f32 %v200, %v1964
      %v1966 = vand.u32 %v1965, 4294901760
      %v1967 = vsub.f32 %v1965, %v1966
      %v1968 = vand.u32 %v1967, 4294901760
      %1969 = vmatpush1.msra.mxu0 %v1968
      %v1970 = vand.u32 %v210, 4294901760
      %v1971 = vsub.f32 %v210, %v1970
      %v1972 = vand.u32 %v1971, 4294901760
      %v1973 = vsub.f32 %v1971, %v1972
      %v1974 = vand.u32 %v1973, 4294901760
      %1975 = vmatprep.subr.mxu0 %v1974
      %v1976 = vand.u32 %v209, 4294901760
      %v1977 = vsub.f32 %v209, %v1976
      %v1978 = vand.u32 %v1977, 4294901760
      %v1979 = vsub.f32 %v1977, %v1978
      %v1980 = vand.u32 %v1979, 4294901760
      %1981 = vmatpush1.msra.mxu0 %v1980
      %v1982 = vand.u32 %v219, 4294901760
      %v1983 = vsub.f32 %v219, %v1982
      %v1984 = vand.u32 %v1983, 4294901760
      %v1985 = vsub.f32 %v1983, %v1984
      %v1986 = vand.u32 %v1985, 4294901760
      %1987 = vmatprep.subr.mxu0 %v1986
      %v1988 = vand.u32 %v218, 4294901760
      %v1989 = vsub.f32 %v218, %v1988
      %v1990 = vand.u32 %v1989, 4294901760
      %v1991 = vsub.f32 %v1989, %v1990
      %v1992 = vand.u32 %v1991, 4294901760
      %1993 = vmatpush1.msra.mxu0 %v1992
      %v1994 = vand.u32 %v228, 4294901760
      %v1995 = vsub.f32 %v228, %v1994
      %v1996 = vand.u32 %v1995, 4294901760
      %v1997 = vsub.f32 %v1995, %v1996
      %v1998 = vand.u32 %v1997, 4294901760
      %1999 = vmatprep.subr.mxu0 %v1998
      %v2000 = vand.u32 %v227, 4294901760
      %v2001 = vsub.f32 %v227, %v2000
      %v2002 = vand.u32 %v2001, 4294901760
      %v2003 = vsub.f32 %v2001, %v2002
      %v2004 = vand.u32 %v2003, 4294901760
      %2005 = vmatpush1.msra.mxu0 %v2004
      %v2006 = vand.u32 %v237, 4294901760
      %v2007 = vsub.f32 %v237, %v2006
      %v2008 = vand.u32 %v2007, 4294901760
      %v2009 = vsub.f32 %v2007, %v2008
      %v2010 = vand.u32 %v2009, 4294901760
      %2011 = vmatprep.subr.mxu0 %v2010
      %v2012 = vand.u32 %v236, 4294901760
      %v2013 = vsub.f32 %v236, %v2012
      %v2014 = vand.u32 %v2013, 4294901760
      %v2015 = vsub.f32 %v2013, %v2014
      %v2016 = vand.u32 %v2015, 4294901760
      %2017 = vmatpush1.msra.mxu0 %v2016
      %v2018 = vand.u32 %v246, 4294901760
      %v2019 = vsub.f32 %v246, %v2018
      %v2020 = vand.u32 %v2019, 4294901760
      %v2021 = vsub.f32 %v2019, %v2020
      %v2022 = vand.u32 %v2021, 4294901760
      %2023 = vmatprep.subr.mxu0 %v2022
      %v2024 = vand.u32 %v245, 4294901760
      %v2025 = vsub.f32 %v245, %v2024
      %v2026 = vand.u32 %v2025, 4294901760
      %v2027 = vsub.f32 %v2025, %v2026
      %v2028 = vand.u32 %v2027, 4294901760
      %2029 = vmatpush1.msra.mxu0 %v2028
      %v2030 = vand.u32 %v255, 4294901760
      %v2031 = vsub.f32 %v255, %v2030
      %v2032 = vand.u32 %v2031, 4294901760
      %v2033 = vsub.f32 %v2031, %v2032
      %v2034 = vand.u32 %v2033, 4294901760
      %2035 = vmatprep.subr.mxu0 %v2034
      %v2036 = vand.u32 %v254, 4294901760
      %v2037 = vsub.f32 %v254, %v2036
      %v2038 = vand.u32 %v2037, 4294901760
      %v2039 = vsub.f32 %v2037, %v2038
      %v2040 = vand.u32 %v2039, 4294901760
      %2041 = vmatpush1.msra.mxu0 %v2040
      %v2042 = vand.u32 %v264, 4294901760
      %v2043 = vsub.f32 %v264, %v2042
      %v2044 = vand.u32 %v2043, 4294901760
      %v2045 = vsub.f32 %v2043, %v2044
      %v2046 = vand.u32 %v2045, 4294901760
      %2047 = vmatprep.subr.mxu0 %v2046
      %v2048 = vand.u32 %v263, 4294901760
      %v2049 = vsub.f32 %v263, %v2048
      %v2050 = vand.u32 %v2049, 4294901760
      %v2051 = vsub.f32 %v2049, %v2050
      %v2052 = vand.u32 %v2051, 4294901760
      %2053 = vmatpush1.msra.mxu0 %v2052
      %2054 = vmatprep.subr.mxu0 0.0
      %2055 = vmatpush1.msra.mxu0 0.0
      %2056 = vmatprep.subr.mxu0 0.0
      %2057 = vmatpush1.msra.mxu0 0.0
      %2058 = vmatprep.subr.mxu0 0.0
      %2059 = vmatpush1.msra.mxu0 0.0
      %2060 = vmatprep.subr.mxu0 0.0
      %2061 = vmatpush1.msra.mxu0 0.0
      %2062 = vmatprep.subr.mxu0 0.0
      %2063 = vmatpush1.msra.mxu0 0.0
      %2064 = vmatprep.subr.mxu0 0.0
      %2065 = vmatpush1.msra.mxu0 0.0
      %2066 = vmatprep.subr.mxu0 0.0
      %2067 = vmatpush1.msra.mxu0 0.0
      %2068 = vmatprep.subr.mxu0 0.0
      %2069 = vmatpush1.msra.mxu0 0.0
      %2070 = vmatprep.subr.mxu0 0.0
      %2071 = vmatpush1.msra.mxu0 0.0
      %2072 = vmatprep.subr.mxu0 0.0
      %2073 = vmatpush1.msra.mxu0 0.0
      %2074 = vmatprep.subr.mxu0 0.0
      %2075 = vmatpush1.msra.mxu0 0.0
      %2076 = vmatprep.subr.mxu0 0.0
      %2077 = vmatpush1.msra.mxu0 0.0
      %2078 = vmatprep.subr.mxu0 0.0
      %2079 = vmatpush1.msra.mxu0 0.0
      %2080 = vmatprep.subr.mxu0 0.0
      %2081 = vmatpush1.msra.mxu0 0.0
      %2082 = vmatprep.subr.mxu0 0.0
      %2083 = vmatpush1.msra.mxu0 0.0
      %2084 = vmatprep.subr.mxu0 0.0
      %2085 = vmatpush1.msra.mxu0 0.0
      %2086 = vmatprep.subr.mxu0 0.0
      %2087 = vmatpush1.msra.mxu0 0.0
      %2088 = vmatprep.subr.mxu0 0.0
      %2089 = vmatpush1.msra.mxu0 0.0
      %2090 = vmatprep.mubr.f32.mxu0 0.0
      %v2091 = vand.u32 %v284, 4294901760
      %2092 = vmatmul.mubr.f32.gmra.mrb[0].mxu0 %v2091
      %v2093 = vpop.f32.mrb[0].mxu0
      %v2094 = vadd.f32 %v1761, %v2093
      %v2095 = vpop.f32.mrb[0].mxu0
      %v2096 = vadd.f32 %v1763, %v2095
      %2097 = vmatprep.mubr.f32.mxu0 0.0
      %v2098 = vand.u32 %v287, 4294901760
      %2099 = vmatmul.mubr.f32.gmra.mrb[0].mxu0 %v2098
      %v2100 = vpop.f32.mrb[0].mxu0
      %v2101 = vadd.f32 %v1772, %v2100
      %v2102 = vpop.f32.mrb[0].mxu0
      %v2103 = vadd.f32 %v1774, %v2102
      %2104 = vmatprep.mubr.f32.mxu0 0.0
      %v2105 = vand.u32 %v290, 4294901760
      %2106 = vmatmul.mubr.f32.gmra.mrb[0].mxu0 %v2105
      %v2107 = vpop.f32.mrb[0].mxu0
      %v2108 = vadd.f32 %v1783, %v2107
      %v2109 = vpop.f32.mrb[0].mxu0
      %v2110 = vadd.f32 %v1785, %v2109
      %2111 = vmatprep.mubr.f32.mxu0 0.0
      %v2112 = vand.u32 %v293, 4294901760
      %2113 = vmatmul.mubr.f32.gmra.mrb[0].mxu0 %v2112
      %v2114 = vpop.f32.mrb[0].mxu0
      %v2115 = vadd.f32 %v1794, %v2114
      %v2116 = vpop.f32.mrb[0].mxu0
      %v2117 = vadd.f32 %v1796, %v2116
      %2118 = vmatprep.mubr.f32.mxu0 0.0
      %v2119 = vand.u32 %v296, 4294901760
      %2120 = vmatmul.mubr.f32.gmra.mrb[0].mxu0 %v2119
      %v2121 = vpop.f32.mrb[0].mxu0
      %v2122 = vadd.f32 %v1805, %v2121
      %v2123 = vpop.f32.mrb[0].mxu0
      %v2124 = vadd.f32 %v1807, %v2123
      %2125 = vmatprep.mubr.f32.mxu0 0.0
      %v2126 = vand.u32 %v299, 4294901760
      %2127 = vmatmul.mubr.f32.gmra.mrb[0].mxu0 %v2126
      %v2128 = vpop.f32.mrb[0].mxu0
      %v2129 = vadd.f32 %v1816, %v2128
      %v2130 = vpop.f32.mrb[0].mxu0
      %v2131 = vadd.f32 %v1818, %v2130
      %2132 = vmatprep.mubr.f32.mxu0 0.0
      %v2133 = vand.u32 %v302, 4294901760
      %2134 = vmatmul.mubr.f32.gmra.mrb[0].mxu0 %v2133
      %v2135 = vpop.f32.mrb[0].mxu0
      %v2136 = vadd.f32 %v1827, %v2135
      %v2137 = vpop.f32.mrb[0].mxu0
      %v2138 = vadd.f32 %v1829, %v2137
      %2139 = vmatprep.mubr.f32.mxu0 0.0
      %v2140 = vand.u32 %v305, 4294901760
      %2141 = vmatmul.mubr.f32.gmra.mrb[0].mxu0 %v2140
      %v2142 = vpop.f32.mrb[0].mxu0
      %v2143 = vadd.f32 %v1838, %v2142
      %v2144 = vpop.f32.mrb[0].mxu0
      %v2145 = vadd.f32 %v1840, %v2144
      %2146 = vmatprep.mubr.f32.mxu0 0.0
      %v2147 = vand.u32 %v308, 4294901760
      %2148 = vmatmul.mubr.f32.gmra.mrb[0].mxu0 %v2147
      %v2149 = vpop.f32.mrb[0].mxu0
      %v2150 = vadd.f32 %v1849, %v2149
      %v2151 = vpop.f32.mrb[0].mxu0
      %v2152 = vadd.f32 %v1851, %v2151
      %2153 = vmatprep.mubr.f32.mxu0 0.0
      %v2154 = vand.u32 %v311, 4294901760
      %2155 = vmatmul.mubr.f32.gmra.mrb[0].mxu0 %v2154
      %v2156 = vpop.f32.mrb[0].mxu0
      %v2157 = vadd.f32 %v1860, %v2156
      %v2158 = vpop.f32.mrb[0].mxu0
      %v2159 = vadd.f32 %v1862, %v2158
      %2160 = vmatprep.mubr.f32.mxu0 0.0
      %v2161 = vand.u32 %v314, 4294901760
      %2162 = vmatmul.mubr.f32.gmra.mrb[0].mxu0 %v2161
      %v2163 = vpop.f32.mrb[0].mxu0
      %v2164 = vadd.f32 %v1871, %v2163
      %v2165 = vpop.f32.mrb[0].mxu0
      %v2166 = vadd.f32 %v1873, %v2165
      %2167 = vmatprep.mubr.f32.mxu0 0.0
      %v2168 = vand.u32 %v317, 4294901760
      %2169 = vmatmul.mubr.f32.gmra.mrb[0].mxu0 %v2168
      %v2170 = vpop.f32.mrb[0].mxu0
      %v2171 = vadd.f32 %v1882, %v2170
      %v2172 = vpop.f32.mrb[0].mxu0
      %v2173 = vadd.f32 %v1884, %v2172
      %2174 = vdwg.mxu0
      %v2175 = vand.u32 %v147, 4294901760
      %v2176 = vsub.f32 %v147, %v2175
      %2177 = vmatprep.subr.mxu0 %v2176
      %v2178 = vand.u32 %v146, 4294901760
      %v2179 = vsub.f32 %v146, %v2178
      %2180 = vmatpush1.msra.mxu0 %v2179
      %v2181 = vand.u32 %v156, 4294901760
      %v2182 = vsub.f32 %v156, %v2181
      %2183 = vmatprep.subr.mxu0 %v2182
      %v2184 = vand.u32 %v155, 4294901760
      %v2185 = vsub.f32 %v155, %v2184
      %2186 = vmatpush1.msra.mxu0 %v2185
      %v2187 = vand.u32 %v165, 4294901760
      %v2188 = vsub.f32 %v165, %v2187
      %2189 = vmatprep.subr.mxu0 %v2188
      %v2190 = vand.u32 %v164, 4294901760
      %v2191 = vsub.f32 %v164, %v2190
      %2192 = vmatpush1.msra.mxu0 %v2191
      %v2193 = vand.u32 %v174, 4294901760
      %v2194 = vsub.f32 %v174, %v2193
      %2195 = vmatprep.subr.mxu0 %v2194
      %v2196 = vand.u32 %v173, 4294901760
      %v2197 = vsub.f32 %v173, %v2196
      %2198 = vmatpush1.msra.mxu0 %v2197
      %v2199 = vand.u32 %v183, 4294901760
      %v2200 = vsub.f32 %v183, %v2199
      %2201 = vmatprep.subr.mxu0 %v2200
      %v2202 = vand.u32 %v182, 4294901760
      %v2203 = vsub.f32 %v182, %v2202
      %2204 = vmatpush1.msra.mxu0 %v2203
      %v2205 = vand.u32 %v192, 4294901760
      %v2206 = vsub.f32 %v192, %v2205
      %2207 = vmatprep.subr.mxu0 %v2206
      %v2208 = vand.u32 %v191, 4294901760
      %v2209 = vsub.f32 %v191, %v2208
      %2210 = vmatpush1.msra.mxu0 %v2209
      %v2211 = vand.u32 %v201, 4294901760
      %v2212 = vsub.f32 %v201, %v2211
      %2213 = vmatprep.subr.mxu0 %v2212
      %v2214 = vand.u32 %v200, 4294901760
      %v2215 = vsub.f32 %v200, %v2214
      %2216 = vmatpush1.msra.mxu0 %v2215
      %v2217 = vand.u32 %v210, 4294901760
      %v2218 = vsub.f32 %v210, %v2217
      %2219 = vmatprep.subr.mxu0 %v2218
      %v2220 = vand.u32 %v209, 4294901760
      %v2221 = vsub.f32 %v209, %v2220
      %2222 = vmatpush1.msra.mxu0 %v2221
      %v2223 = vand.u32 %v219, 4294901760
      %v2224 = vsub.f32 %v219, %v2223
      %2225 = vmatprep.subr.mxu0 %v2224
      %v2226 = vand.u32 %v218, 4294901760
      %v2227 = vsub.f32 %v218, %v2226
      %2228 = vmatpush1.msra.mxu0 %v2227
      %v2229 = vand.u32 %v228, 4294901760
      %v2230 = vsub.f32 %v228, %v2229
      %2231 = vmatprep.subr.mxu0 %v2230
      %v2232 = vand.u32 %v227, 4294901760
      %v2233 = vsub.f32 %v227, %v2232
      %2234 = vmatpush1.msra.mxu0 %v2233
      %v2235 = vand.u32 %v237, 4294901760
      %v2236 = vsub.f32 %v237, %v2235
      %2237 = vmatprep.subr.mxu0 %v2236
      %v2238 = vand.u32 %v236, 4294901760
      %v2239 = vsub.f32 %v236, %v2238
      %2240 = vmatpush1.msra.mxu0 %v2239
      %v2241 = vand.u32 %v246, 4294901760
      %v2242 = vsub.f32 %v246, %v2241
      %2243 = vmatprep.subr.mxu0 %v2242
      %v2244 = vand.u32 %v245, 4294901760
      %v2245 = vsub.f32 %v245, %v2244
      %2246 = vmatpush1.msra.mxu0 %v2245
      %v2247 = vand.u32 %v255, 4294901760
      %v2248 = vsub.f32 %v255, %v2247
      %2249 = vmatprep.subr.mxu0 %v2248
      %v2250 = vand.u32 %v254, 4294901760
      %v2251 = vsub.f32 %v254, %v2250
      %2252 = vmatpush1.msra.mxu0 %v2251
      %v2253 = vand.u32 %v264, 4294901760
      %v2254 = vsub.f32 %v264, %v2253
      %2255 = vmatprep.subr.mxu0 %v2254
      %v2256 = vand.u32 %v263, 4294901760
      %v2257 = vsub.f32 %v263, %v2256
      %2258 = vmatpush1.msra.mxu0 %v2257
      %2259 = vmatprep.subr.mxu0 0.0
      %2260 = vmatpush1.msra.mxu0 0.0
      %2261 = vmatprep.subr.mxu0 0.0
      %2262 = vmatpush1.msra.mxu0 0.0
      %2263 = vmatprep.subr.mxu0 0.0
      %2264 = vmatpush1.msra.mxu0 0.0
      %2265 = vmatprep.subr.mxu0 0.0
      %2266 = vmatpush1.msra.mxu0 0.0
      %2267 = vmatprep.subr.mxu0 0.0
      %2268 = vmatpush1.msra.mxu0 0.0
      %2269 = vmatprep.subr.mxu0 0.0
      %2270 = vmatpush1.msra.mxu0 0.0
      %2271 = vmatprep.subr.mxu0 0.0
      %2272 = vmatpush1.msra.mxu0 0.0
      %2273 = vmatprep.subr.mxu0 0.0
      %2274 = vmatpush1.msra.mxu0 0.0
      %2275 = vmatprep.subr.mxu0 0.0
      %2276 = vmatpush1.msra.mxu0 0.0
      %2277 = vmatprep.subr.mxu0 0.0
      %2278 = vmatpush1.msra.mxu0 0.0
      %2279 = vmatprep.subr.mxu0 0.0
      %2280 = vmatpush1.msra.mxu0 0.0
      %2281 = vmatprep.subr.mxu0 0.0
      %2282 = vmatpush1.msra.mxu0 0.0
      %2283 = vmatprep.subr.mxu0 0.0
      %2284 = vmatpush1.msra.mxu0 0.0
      %2285 = vmatprep.subr.mxu0 0.0
      %2286 = vmatpush1.msra.mxu0 0.0
      %2287 = vmatprep.subr.mxu0 0.0
      %2288 = vmatpush1.msra.mxu0 0.0
      %2289 = vmatprep.subr.mxu0 0.0
      %2290 = vmatpush1.msra.mxu0 0.0
      %2291 = vmatprep.subr.mxu0 0.0
      %2292 = vmatpush1.msra.mxu0 0.0
      %2293 = vmatprep.subr.mxu0 0.0
      %2294 = vmatpush1.msra.mxu0 0.0
      %2295 = vmatprep.mubr.f32.mxu0 0.0
      %v2296 = vand.u32 %v284, 4294901760
      %v2297 = vsub.f32 %v284, %v2296
      %2298 = vmatmul.mubr.f32.gmra.mrb[0].mxu0 %v2297
      %v2299 = vpop.f32.mrb[0].mxu0
      %v2300 = vadd.f32 %v2094, %v2299
      %v2301 = vpop.f32.mrb[0].mxu0
      %v2302 = vadd.f32 %v2096, %v2301
      %2303 = vmatprep.mubr.f32.mxu0 0.0
      %v2304 = vand.u32 %v287, 4294901760
      %v2305 = vsub.f32 %v287, %v2304
      %2306 = vmatmul.mubr.f32.gmra.mrb[0].mxu0 %v2305
      %v2307 = vpop.f32.mrb[0].mxu0
      %v2308 = vadd.f32 %v2101, %v2307
      %v2309 = vpop.f32.mrb[0].mxu0
      %v2310 = vadd.f32 %v2103, %v2309
      %2311 = vmatprep.mubr.f32.mxu0 0.0
      %v2312 = vand.u32 %v290, 4294901760
      %v2313 = vsub.f32 %v290, %v2312
      %2314 = vmatmul.mubr.f32.gmra.mrb[0].mxu0 %v2313
      %v2315 = vpop.f32.mrb[0].mxu0
      %v2316 = vadd.f32 %v2108, %v2315
      %v2317 = vpop.f32.mrb[0].mxu0
      %v2318 = vadd.f32 %v2110, %v2317
      %2319 = vmatprep.mubr.f32.mxu0 0.0
      %v2320 = vand.u32 %v293, 4294901760
      %v2321 = vsub.f32 %v293, %v2320
      %2322 = vmatmul.mubr.f32.gmra.mrb[0].mxu0 %v2321
      %v2323 = vpop.f32.mrb[0].mxu0
      %v2324 = vadd.f32 %v2115, %v2323
      %v2325 = vpop.f32.mrb[0].mxu0
      %v2326 = vadd.f32 %v2117, %v2325
      %2327 = vmatprep.mubr.f32.mxu0 0.0
      %v2328 = vand.u32 %v296, 4294901760
      %v2329 = vsub.f32 %v296, %v2328
      %2330 = vmatmul.mubr.f32.gmra.mrb[0].mxu0 %v2329
      %v2331 = vpop.f32.mrb[0].mxu0
      %v2332 = vadd.f32 %v2122, %v2331
      %v2333 = vpop.f32.mrb[0].mxu0
      %v2334 = vadd.f32 %v2124, %v2333
      %2335 = vmatprep.mubr.f32.mxu0 0.0
      %v2336 = vand.u32 %v299, 4294901760
      %v2337 = vsub.f32 %v299, %v2336
      %2338 = vmatmul.mubr.f32.gmra.mrb[0].mxu0 %v2337
      %v2339 = vpop.f32.mrb[0].mxu0
      %v2340 = vadd.f32 %v2129, %v2339
      %v2341 = vpop.f32.mrb[0].mxu0
      %v2342 = vadd.f32 %v2131, %v2341
      %2343 = vmatprep.mubr.f32.mxu0 0.0
      %v2344 = vand.u32 %v302, 4294901760
      %v2345 = vsub.f32 %v302, %v2344
      %2346 = vmatmul.mubr.f32.gmra.mrb[0].mxu0 %v2345
      %v2347 = vpop.f32.mrb[0].mxu0
      %v2348 = vadd.f32 %v2136, %v2347
      %v2349 = vpop.f32.mrb[0].mxu0
      %v2350 = vadd.f32 %v2138, %v2349
      %2351 = vmatprep.mubr.f32.mxu0 0.0
      %v2352 = vand.u32 %v305, 4294901760
      %v2353 = vsub.f32 %v305, %v2352
      %2354 = vmatmul.mubr.f32.gmra.mrb[0].mxu0 %v2353
      %v2355 = vpop.f32.mrb[0].mxu0
      %v2356 = vadd.f32 %v2143, %v2355
      %v2357 = vpop.f32.mrb[0].mxu0
      %v2358 = vadd.f32 %v2145, %v2357
      %2359 = vmatprep.mubr.f32.mxu0 0.0
      %v2360 = vand.u32 %v308, 4294901760
      %v2361 = vsub.f32 %v308, %v2360
      %2362 = vmatmul.mubr.f32.gmra.mrb[0].mxu0 %v2361
      %v2363 = vpop.f32.mrb[0].mxu0
      %v2364 = vadd.f32 %v2150, %v2363
      %v2365 = vpop.f32.mrb[0].mxu0
      %v2366 = vadd.f32 %v2152, %v2365
      %2367 = vmatprep.mubr.f32.mxu0 0.0
      %v2368 = vand.u32 %v311, 4294901760
      %v2369 = vsub.f32 %v311, %v2368
      %2370 = vmatmul.mubr.f32.gmra.mrb[0].mxu0 %v2369
      %v2371 = vpop.f32.mrb[0].mxu0
      %v2372 = vadd.f32 %v2157, %v2371
      %v2373 = vpop.f32.mrb[0].mxu0
      %v2374 = vadd.f32 %v2159, %v2373
      %2375 = vmatprep.mubr.f32.mxu0 0.0
      %v2376 = vand.u32 %v314, 4294901760
      %v2377 = vsub.f32 %v314, %v2376
      %2378 = vmatmul.mubr.f32.gmra.mrb[0].mxu0 %v2377
      %v2379 = vpop.f32.mrb[0].mxu0
      %v2380 = vadd.f32 %v2164, %v2379
      %v2381 = vpop.f32.mrb[0].mxu0
      %v2382 = vadd.f32 %v2166, %v2381
      %2383 = vmatprep.mubr.f32.mxu0 0.0
      %v2384 = vand.u32 %v317, 4294901760
      %v2385 = vsub.f32 %v317, %v2384
      %2386 = vmatmul.mubr.f32.gmra.mrb[0].mxu0 %v2385
      %v2387 = vpop.f32.mrb[0].mxu0
      %v2388 = vadd.f32 %v2171, %v2387
      %v2389 = vpop.f32.mrb[0].mxu0
      %v2390 = vadd.f32 %v2173, %v2389
      %2391 = vdwg.mxu0
      %v2392 = vand.u32 %v147, 4294901760
      %2393 = vmatprep.subr.mxu0 %v2392
      %v2394 = vand.u32 %v146, 4294901760
      %2395 = vmatpush1.msra.mxu0 %v2394
      %v2396 = vand.u32 %v156, 4294901760
      %2397 = vmatprep.subr.mxu0 %v2396
      %v2398 = vand.u32 %v155, 4294901760
      %2399 = vmatpush1.msra.mxu0 %v2398
      %v2400 = vand.u32 %v165, 4294901760
      %2401 = vmatprep.subr.mxu0 %v2400
      %v2402 = vand.u32 %v164, 4294901760
      %2403 = vmatpush1.msra.mxu0 %v2402
      %v2404 = vand.u32 %v174, 4294901760
      %2405 = vmatprep.subr.mxu0 %v2404
      %v2406 = vand.u32 %v173, 4294901760
      %2407 = vmatpush1.msra.mxu0 %v2406
      %v2408 = vand.u32 %v183, 4294901760
      %2409 = vmatprep.subr.mxu0 %v2408
      %v2410 = vand.u32 %v182, 4294901760
      %2411 = vmatpush1.msra.mxu0 %v2410
      %v2412 = vand.u32 %v192, 4294901760
      %2413 = vmatprep.subr.mxu0 %v2412
      %v2414 = vand.u32 %v191, 4294901760
      %2415 = vmatpush1.msra.mxu0 %v2414
      %v2416 = vand.u32 %v201, 4294901760
      %2417 = vmatprep.subr.mxu0 %v2416
      %v2418 = vand.u32 %v200, 4294901760
      %2419 = vmatpush1.msra.mxu0 %v2418
      %v2420 = vand.u32 %v210, 4294901760
      %2421 = vmatprep.subr.mxu0 %v2420
      %v2422 = vand.u32 %v209, 4294901760
      %2423 = vmatpush1.msra.mxu0 %v2422
      %v2424 = vand.u32 %v219, 4294901760
      %2425 = vmatprep.subr.mxu0 %v2424
      %v2426 = vand.u32 %v218, 4294901760
      %2427 = vmatpush1.msra.mxu0 %v2426
      %v2428 = vand.u32 %v228, 4294901760
      %2429 = vmatprep.subr.mxu0 %v2428
      %v2430 = vand.u32 %v227, 4294901760
      %2431 = vmatpush1.msra.mxu0 %v2430
      %v2432 = vand.u32 %v237, 4294901760
      %2433 = vmatprep.subr.mxu0 %v2432
      %v2434 = vand.u32 %v236, 4294901760
      %2435 = vmatpush1.msra.mxu0 %v2434
      %v2436 = vand.u32 %v246, 4294901760
      %2437 = vmatprep.subr.mxu0 %v2436
      %v2438 = vand.u32 %v245, 4294901760
      %2439 = vmatpush1.msra.mxu0 %v2438
      %v2440 = vand.u32 %v255, 4294901760
      %2441 = vmatprep.subr.mxu0 %v2440
      %v2442 = vand.u32 %v254, 4294901760
      %2443 = vmatpush1.msra.mxu0 %v2442
      %v2444 = vand.u32 %v264, 4294901760
      %2445 = vmatprep.subr.mxu0 %v2444
      %v2446 = vand.u32 %v263, 4294901760
      %2447 = vmatpush1.msra.mxu0 %v2446
      %2448 = vmatprep.subr.mxu0 0.0
      %2449 = vmatpush1.msra.mxu0 0.0
      %2450 = vmatprep.subr.mxu0 0.0
      %2451 = vmatpush1.msra.mxu0 0.0
      %2452 = vmatprep.subr.mxu0 0.0
      %2453 = vmatpush1.msra.mxu0 0.0
      %2454 = vmatprep.subr.mxu0 0.0
      %2455 = vmatpush1.msra.mxu0 0.0
      %2456 = vmatprep.subr.mxu0 0.0
      %2457 = vmatpush1.msra.mxu0 0.0
      %2458 = vmatprep.subr.mxu0 0.0
      %2459 = vmatpush1.msra.mxu0 0.0
      %2460 = vmatprep.subr.mxu0 0.0
      %2461 = vmatpush1.msra.mxu0 0.0
      %2462 = vmatprep.subr.mxu0 0.0
      %2463 = vmatpush1.msra.mxu0 0.0
      %2464 = vmatprep.subr.mxu0 0.0
      %2465 = vmatpush1.msra.mxu0 0.0
      %2466 = vmatprep.subr.mxu0 0.0
      %2467 = vmatpush1.msra.mxu0 0.0
      %2468 = vmatprep.subr.mxu0 0.0
      %2469 = vmatpush1.msra.mxu0 0.0
      %2470 = vmatprep.subr.mxu0 0.0
      %2471 = vmatpush1.msra.mxu0 0.0
      %2472 = vmatprep.subr.mxu0 0.0
      %2473 = vmatpush1.msra.mxu0 0.0
      %2474 = vmatprep.subr.mxu0 0.0
      %2475 = vmatpush1.msra.mxu0 0.0
      %2476 = vmatprep.subr.mxu0 0.0
      %2477 = vmatpush1.msra.mxu0 0.0
      %2478 = vmatprep.subr.mxu0 0.0
      %2479 = vmatpush1.msra.mxu0 0.0
      %2480 = vmatprep.subr.mxu0 0.0
      %2481 = vmatpush1.msra.mxu0 0.0
      %2482 = vmatprep.subr.mxu0 0.0
      %2483 = vmatpush1.msra.mxu0 0.0
      %2484 = vmatprep.mubr.f32.mxu0 0.0
      %v2485 = vand.u32 %v284, 4294901760
      %v2486 = vsub.f32 %v284, %v2485
      %v2487 = vand.u32 %v2486, 4294901760
      %2488 = vmatmul.mubr.f32.gmra.mrb[0].mxu0 %v2487
      %v2489 = vpop.f32.mrb[0].mxu0
      %v2490 = vadd.f32 %v2300, %v2489
      %v2491 = vpop.f32.mrb[0].mxu0
      %v2492 = vadd.f32 %v2302, %v2491
      %2493 = vmatprep.mubr.f32.mxu0 0.0
      %v2494 = vand.u32 %v287, 4294901760
      %v2495 = vsub.f32 %v287, %v2494
      %v2496 = vand.u32 %v2495, 4294901760
      %2497 = vmatmul.mubr.f32.gmra.mrb[0].mxu0 %v2496
      %v2498 = vpop.f32.mrb[0].mxu0
      %v2499 = vadd.f32 %v2308, %v2498
      %v2500 = vpop.f32.mrb[0].mxu0
      %v2501 = vadd.f32 %v2310, %v2500
      %2502 = vmatprep.mubr.f32.mxu0 0.0
      %v2503 = vand.u32 %v290, 4294901760
      %v2504 = vsub.f32 %v290, %v2503
      %v2505 = vand.u32 %v2504, 4294901760
      %2506 = vmatmul.mubr.f32.gmra.mrb[0].mxu0 %v2505
      %v2507 = vpop.f32.mrb[0].mxu0
      %v2508 = vadd.f32 %v2316, %v2507
      %v2509 = vpop.f32.mrb[0].mxu0
      %v2510 = vadd.f32 %v2318, %v2509
      %2511 = vmatprep.mubr.f32.mxu0 0.0
      %v2512 = vand.u32 %v293, 4294901760
      %v2513 = vsub.f32 %v293, %v2512
      %v2514 = vand.u32 %v2513, 4294901760
      %2515 = vmatmul.mubr.f32.gmra.mrb[0].mxu0 %v2514
      %v2516 = vpop.f32.mrb[0].mxu0
      %v2517 = vadd.f32 %v2324, %v2516
      %v2518 = vpop.f32.mrb[0].mxu0
      %v2519 = vadd.f32 %v2326, %v2518
      %2520 = vmatprep.mubr.f32.mxu0 0.0
      %v2521 = vand.u32 %v296, 4294901760
      %v2522 = vsub.f32 %v296, %v2521
      %v2523 = vand.u32 %v2522, 4294901760
      %2524 = vmatmul.mubr.f32.gmra.mrb[0].mxu0 %v2523
      %v2525 = vpop.f32.mrb[0].mxu0
      %v2526 = vadd.f32 %v2332, %v2525
      %v2527 = vpop.f32.mrb[0].mxu0
      %v2528 = vadd.f32 %v2334, %v2527
      %2529 = vmatprep.mubr.f32.mxu0 0.0
      %v2530 = vand.u32 %v299, 4294901760
      %v2531 = vsub.f32 %v299, %v2530
      %v2532 = vand.u32 %v2531, 4294901760
      %2533 = vmatmul.mubr.f32.gmra.mrb[0].mxu0 %v2532
      %v2534 = vpop.f32.mrb[0].mxu0
      %v2535 = vadd.f32 %v2340, %v2534
      %v2536 = vpop.f32.mrb[0].mxu0
      %v2537 = vadd.f32 %v2342, %v2536
      %2538 = vmatprep.mubr.f32.mxu0 0.0
      %v2539 = vand.u32 %v302, 4294901760
      %v2540 = vsub.f32 %v302, %v2539
      %v2541 = vand.u32 %v2540, 4294901760
      %2542 = vmatmul.mubr.f32.gmra.mrb[0].mxu0 %v2541
      %v2543 = vpop.f32.mrb[0].mxu0
      %v2544 = vadd.f32 %v2348, %v2543
      %v2545 = vpop.f32.mrb[0].mxu0
      %v2546 = vadd.f32 %v2350, %v2545
      %2547 = vmatprep.mubr.f32.mxu0 0.0
      %v2548 = vand.u32 %v305, 4294901760
      %v2549 = vsub.f32 %v305, %v2548
      %v2550 = vand.u32 %v2549, 4294901760
      %2551 = vmatmul.mubr.f32.gmra.mrb[0].mxu0 %v2550
      %v2552 = vpop.f32.mrb[0].mxu0
      %v2553 = vadd.f32 %v2356, %v2552
      %v2554 = vpop.f32.mrb[0].mxu0
      %v2555 = vadd.f32 %v2358, %v2554
      %2556 = vmatprep.mubr.f32.mxu0 0.0
      %v2557 = vand.u32 %v308, 4294901760
      %v2558 = vsub.f32 %v308, %v2557
      %v2559 = vand.u32 %v2558, 4294901760
      %2560 = vmatmul.mubr.f32.gmra.mrb[0].mxu0 %v2559
      %v2561 = vpop.f32.mrb[0].mxu0
      %v2562 = vadd.f32 %v2364, %v2561
      %v2563 = vpop.f32.mrb[0].mxu0
      %v2564 = vadd.f32 %v2366, %v2563
      %2565 = vmatprep.mubr.f32.mxu0 0.0
      %v2566 = vand.u32 %v311, 4294901760
      %v2567 = vsub.f32 %v311, %v2566
      %v2568 = vand.u32 %v2567, 4294901760
      %2569 = vmatmul.mubr.f32.gmra.mrb[0].mxu0 %v2568
      %v2570 = vpop.f32.mrb[0].mxu0
      %v2571 = vadd.f32 %v2372, %v2570
      %v2572 = vpop.f32.mrb[0].mxu0
      %v2573 = vadd.f32 %v2374, %v2572
      %2574 = vmatprep.mubr.f32.mxu0 0.0
      %v2575 = vand.u32 %v314, 4294901760
      %v2576 = vsub.f32 %v314, %v2575
      %v2577 = vand.u32 %v2576, 4294901760
      %2578 = vmatmul.mubr.f32.gmra.mrb[0].mxu0 %v2577
      %v2579 = vpop.f32.mrb[0].mxu0
      %v2580 = vadd.f32 %v2380, %v2579
      %v2581 = vpop.f32.mrb[0].mxu0
      %v2582 = vadd.f32 %v2382, %v2581
      %2583 = vmatprep.mubr.f32.mxu0 0.0
      %v2584 = vand.u32 %v317, 4294901760
      %v2585 = vsub.f32 %v317, %v2584
      %v2586 = vand.u32 %v2585, 4294901760
      %2587 = vmatmul.mubr.f32.gmra.mrb[0].mxu0 %v2586
      %v2588 = vpop.f32.mrb[0].mxu0
      %v2589 = vadd.f32 %v2388, %v2588
      %v2590 = vpop.f32.mrb[0].mxu0
      %v2591 = vadd.f32 %v2390, %v2590
      %2592 = vdwg.mxu0
      %v2593 = vand.u32 %v147, 4294901760
      %v2594 = vsub.f32 %v147, %v2593
      %v2595 = vand.u32 %v2594, 4294901760
      %2596 = vmatprep.subr.mxu0 %v2595
      %v2597 = vand.u32 %v146, 4294901760
      %v2598 = vsub.f32 %v146, %v2597
      %v2599 = vand.u32 %v2598, 4294901760
      %2600 = vmatpush1.msra.mxu0 %v2599
      %v2601 = vand.u32 %v156, 4294901760
      %v2602 = vsub.f32 %v156, %v2601
      %v2603 = vand.u32 %v2602, 4294901760
      %2604 = vmatprep.subr.mxu0 %v2603
      %v2605 = vand.u32 %v155, 4294901760
      %v2606 = vsub.f32 %v155, %v2605
      %v2607 = vand.u32 %v2606, 4294901760
      %2608 = vmatpush1.msra.mxu0 %v2607
      %v2609 = vand.u32 %v165, 4294901760
      %v2610 = vsub.f32 %v165, %v2609
      %v2611 = vand.u32 %v2610, 4294901760
      %2612 = vmatprep.subr.mxu0 %v2611
      %v2613 = vand.u32 %v164, 4294901760
      %v2614 = vsub.f32 %v164, %v2613
      %v2615 = vand.u32 %v2614, 4294901760
      %2616 = vmatpush1.msra.mxu0 %v2615
      %v2617 = vand.u32 %v174, 4294901760
      %v2618 = vsub.f32 %v174, %v2617
      %v2619 = vand.u32 %v2618, 4294901760
      %2620 = vmatprep.subr.mxu0 %v2619
      %v2621 = vand.u32 %v173, 4294901760
      %v2622 = vsub.f32 %v173, %v2621
      %v2623 = vand.u32 %v2622, 4294901760
      %2624 = vmatpush1.msra.mxu0 %v2623
      %v2625 = vand.u32 %v183, 4294901760
      %v2626 = vsub.f32 %v183, %v2625
      %v2627 = vand.u32 %v2626, 4294901760
      %2628 = vmatprep.subr.mxu0 %v2627
      %v2629 = vand.u32 %v182, 4294901760
      %v2630 = vsub.f32 %v182, %v2629
      %v2631 = vand.u32 %v2630, 4294901760
      %2632 = vmatpush1.msra.mxu0 %v2631
      %v2633 = vand.u32 %v192, 4294901760
      %v2634 = vsub.f32 %v192, %v2633
      %v2635 = vand.u32 %v2634, 4294901760
      %2636 = vmatprep.subr.mxu0 %v2635
      %v2637 = vand.u32 %v191, 4294901760
      %v2638 = vsub.f32 %v191, %v2637
      %v2639 = vand.u32 %v2638, 4294901760
      %2640 = vmatpush1.msra.mxu0 %v2639
      %v2641 = vand.u32 %v201, 4294901760
      %v2642 = vsub.f32 %v201, %v2641
      %v2643 = vand.u32 %v2642, 4294901760
      %2644 = vmatprep.subr.mxu0 %v2643
      %v2645 = vand.u32 %v200, 4294901760
      %v2646 = vsub.f32 %v200, %v2645
      %v2647 = vand.u32 %v2646, 4294901760
      %2648 = vmatpush1.msra.mxu0 %v2647
      %v2649 = vand.u32 %v210, 4294901760
      %v2650 = vsub.f32 %v210, %v2649
      %v2651 = vand.u32 %v2650, 4294901760
      %2652 = vmatprep.subr.mxu0 %v2651
      %v2653 = vand.u32 %v209, 4294901760
      %v2654 = vsub.f32 %v209, %v2653
      %v2655 = vand.u32 %v2654, 4294901760
      %2656 = vmatpush1.msra.mxu0 %v2655
      %v2657 = vand.u32 %v219, 4294901760
      %v2658 = vsub.f32 %v219, %v2657
      %v2659 = vand.u32 %v2658, 4294901760
      %2660 = vmatprep.subr.mxu0 %v2659
      %v2661 = vand.u32 %v218, 4294901760
      %v2662 = vsub.f32 %v218, %v2661
      %v2663 = vand.u32 %v2662, 4294901760
      %2664 = vmatpush1.msra.mxu0 %v2663
      %v2665 = vand.u32 %v228, 4294901760
      %v2666 = vsub.f32 %v228, %v2665
      %v2667 = vand.u32 %v2666, 4294901760
      %2668 = vmatprep.subr.mxu0 %v2667
      %v2669 = vand.u32 %v227, 4294901760
      %v2670 = vsub.f32 %v227, %v2669
      %v2671 = vand.u32 %v2670, 4294901760
      %2672 = vmatpush1.msra.mxu0 %v2671
      %v2673 = vand.u32 %v237, 4294901760
      %v2674 = vsub.f32 %v237, %v2673
      %v2675 = vand.u32 %v2674, 4294901760
      %2676 = vmatprep.subr.mxu0 %v2675
      %v2677 = vand.u32 %v236, 4294901760
      %v2678 = vsub.f32 %v236, %v2677
      %v2679 = vand.u32 %v2678, 4294901760
      %2680 = vmatpush1.msra.mxu0 %v2679
      %v2681 = vand.u32 %v246, 4294901760
      %v2682 = vsub.f32 %v246, %v2681
      %v2683 = vand.u32 %v2682, 4294901760
      %2684 = vmatprep.subr.mxu0 %v2683
      %v2685 = vand.u32 %v245, 4294901760
      %v2686 = vsub.f32 %v245, %v2685
      %v2687 = vand.u32 %v2686, 4294901760
      %2688 = vmatpush1.msra.mxu0 %v2687
      %v2689 = vand.u32 %v255, 4294901760
      %v2690 = vsub.f32 %v255, %v2689
      %v2691 = vand.u32 %v2690, 4294901760
      %2692 = vmatprep.subr.mxu0 %v2691
      %v2693 = vand.u32 %v254, 4294901760
      %v2694 = vsub.f32 %v254, %v2693
      %v2695 = vand.u32 %v2694, 4294901760
      %2696 = vmatpush1.msra.mxu0 %v2695
      %v2697 = vand.u32 %v264, 4294901760
      %v2698 = vsub.f32 %v264, %v2697
      %v2699 = vand.u32 %v2698, 4294901760
      %2700 = vmatprep.subr.mxu0 %v2699
      %v2701 = vand.u32 %v263, 4294901760
      %v2702 = vsub.f32 %v263, %v2701
      %v2703 = vand.u32 %v2702, 4294901760
      %2704 = vmatpush1.msra.mxu0 %v2703
      %2705 = vmatprep.subr.mxu0 0.0
      %2706 = vmatpush1.msra.mxu0 0.0
      %2707 = vmatprep.subr.mxu0 0.0
      %2708 = vmatpush1.msra.mxu0 0.0
      %2709 = vmatprep.subr.mxu0 0.0
      %2710 = vmatpush1.msra.mxu0 0.0
      %2711 = vmatprep.subr.mxu0 0.0
      %2712 = vmatpush1.msra.mxu0 0.0
      %2713 = vmatprep.subr.mxu0 0.0
      %2714 = vmatpush1.msra.mxu0 0.0
      %2715 = vmatprep.subr.mxu0 0.0
      %2716 = vmatpush1.msra.mxu0 0.0
      %2717 = vmatprep.subr.mxu0 0.0
      %2718 = vmatpush1.msra.mxu0 0.0
      %2719 = vmatprep.subr.mxu0 0.0
      %2720 = vmatpush1.msra.mxu0 0.0
      %2721 = vmatprep.subr.mxu0 0.0
      %2722 = vmatpush1.msra.mxu0 0.0
      %2723 = vmatprep.subr.mxu0 0.0
      %2724 = vmatpush1.msra.mxu0 0.0
      %2725 = vmatprep.subr.mxu0 0.0
      %2726 = vmatpush1.msra.mxu0 0.0
      %2727 = vmatprep.subr.mxu0 0.0
      %2728 = vmatpush1.msra.mxu0 0.0
      %2729 = vmatprep.subr.mxu0 0.0
      %2730 = vmatpush1.msra.mxu0 0.0
      %2731 = vmatprep.subr.mxu0 0.0
      %2732 = vmatpush1.msra.mxu0 0.0
      %2733 = vmatprep.subr.mxu0 0.0
      %2734 = vmatpush1.msra.mxu0 0.0
      %2735 = vmatprep.subr.mxu0 0.0
      %2736 = vmatpush1.msra.mxu0 0.0
      %2737 = vmatprep.subr.mxu0 0.0
      %2738 = vmatpush1.msra.mxu0 0.0
      %2739 = vmatprep.subr.mxu0 0.0
      %2740 = vmatpush1.msra.mxu0 0.0
      %2741 = vmatprep.mubr.f32.mxu0 0.0
      %v2742 = vand.u32 %v284, 4294901760
      %2743 = vmatmul.mubr.f32.gmra.mrb[0].mxu0 %v2742
      %v2744 = vpop.f32.mrb[0].mxu0
      %v2745 = vadd.f32 %v2490, %v2744
      %v2746 = vpop.f32.mrb[0].mxu0
      %v2747 = vadd.f32 %v2492, %v2746
      %2748 = vmatprep.mubr.f32.mxu0 0.0
      %v2749 = vand.u32 %v287, 4294901760
      %2750 = vmatmul.mubr.f32.gmra.mrb[0].mxu0 %v2749
      %v2751 = vpop.f32.mrb[0].mxu0
      %v2752 = vadd.f32 %v2499, %v2751
      %v2753 = vpop.f32.mrb[0].mxu0
      %v2754 = vadd.f32 %v2501, %v2753
      %2755 = vmatprep.mubr.f32.mxu0 0.0
      %v2756 = vand.u32 %v290, 4294901760
      %2757 = vmatmul.mubr.f32.gmra.mrb[0].mxu0 %v2756
      %v2758 = vpop.f32.mrb[0].mxu0
      %v2759 = vadd.f32 %v2508, %v2758
      %v2760 = vpop.f32.mrb[0].mxu0
      %v2761 = vadd.f32 %v2510, %v2760
      %2762 = vmatprep.mubr.f32.mxu0 0.0
      %v2763 = vand.u32 %v293, 4294901760
      %2764 = vmatmul.mubr.f32.gmra.mrb[0].mxu0 %v2763
      %v2765 = vpop.f32.mrb[0].mxu0
      %v2766 = vadd.f32 %v2517, %v2765
      %v2767 = vpop.f32.mrb[0].mxu0
      %v2768 = vadd.f32 %v2519, %v2767
      %2769 = vmatprep.mubr.f32.mxu0 0.0
      %v2770 = vand.u32 %v296, 4294901760
      %2771 = vmatmul.mubr.f32.gmra.mrb[0].mxu0 %v2770
      %v2772 = vpop.f32.mrb[0].mxu0
      %v2773 = vadd.f32 %v2526, %v2772
      %v2774 = vpop.f32.mrb[0].mxu0
      %v2775 = vadd.f32 %v2528, %v2774
      %2776 = vmatprep.mubr.f32.mxu0 0.0
      %v2777 = vand.u32 %v299, 4294901760
      %2778 = vmatmul.mubr.f32.gmra.mrb[0].mxu0 %v2777
      %v2779 = vpop.f32.mrb[0].mxu0
      %v2780 = vadd.f32 %v2535, %v2779
      %v2781 = vpop.f32.mrb[0].mxu0
      %v2782 = vadd.f32 %v2537, %v2781
      %2783 = vmatprep.mubr.f32.mxu0 0.0
      %v2784 = vand.u32 %v302, 4294901760
      %2785 = vmatmul.mubr.f32.gmra.mrb[0].mxu0 %v2784
      %v2786 = vpop.f32.mrb[0].mxu0
      %v2787 = vadd.f32 %v2544, %v2786
      %v2788 = vpop.f32.mrb[0].mxu0
      %v2789 = vadd.f32 %v2546, %v2788
      %2790 = vmatprep.mubr.f32.mxu0 0.0
      %v2791 = vand.u32 %v305, 4294901760
      %2792 = vmatmul.mubr.f32.gmra.mrb[0].mxu0 %v2791
      %v2793 = vpop.f32.mrb[0].mxu0
      %v2794 = vadd.f32 %v2553, %v2793
      %v2795 = vpop.f32.mrb[0].mxu0
      %v2796 = vadd.f32 %v2555, %v2795
      %2797 = vmatprep.mubr.f32.mxu0 0.0
      %v2798 = vand.u32 %v308, 4294901760
      %2799 = vmatmul.mubr.f32.gmra.mrb[0].mxu0 %v2798
      %v2800 = vpop.f32.mrb[0].mxu0
      %v2801 = vadd.f32 %v2562, %v2800
      %v2802 = vpop.f32.mrb[0].mxu0
      %v2803 = vadd.f32 %v2564, %v2802
      %2804 = vmatprep.mubr.f32.mxu0 0.0
      %v2805 = vand.u32 %v311, 4294901760
      %2806 = vmatmul.mubr.f32.gmra.mrb[0].mxu0 %v2805
      %v2807 = vpop.f32.mrb[0].mxu0
      %v2808 = vadd.f32 %v2571, %v2807
      %v2809 = vpop.f32.mrb[0].mxu0
      %v2810 = vadd.f32 %v2573, %v2809
      %2811 = vmatprep.mubr.f32.mxu0 0.0
      %v2812 = vand.u32 %v314, 4294901760
      %2813 = vmatmul.mubr.f32.gmra.mrb[0].mxu0 %v2812
      %v2814 = vpop.f32.mrb[0].mxu0
      %v2815 = vadd.f32 %v2580, %v2814
      %v2816 = vpop.f32.mrb[0].mxu0
      %v2817 = vadd.f32 %v2582, %v2816
      %2818 = vmatprep.mubr.f32.mxu0 0.0
      %v2819 = vand.u32 %v317, 4294901760
      %2820 = vmatmul.mubr.f32.gmra.mrb[0].mxu0 %v2819
      %v2821 = vpop.f32.mrb[0].mxu0
      %v2822 = vadd.f32 %v2589, %v2821
      %v2823 = vpop.f32.mrb[0].mxu0
      %v2824 = vadd.f32 %v2591, %v2823
      %2825 = vdwg.mxu0
      %v2826 = vand.u32 %v147, 4294901760
      %2827 = vmatprep.subr.mxu0 %v2826
      %v2828 = vand.u32 %v146, 4294901760
      %2829 = vmatpush1.msra.mxu0 %v2828
      %v2830 = vand.u32 %v156, 4294901760
      %2831 = vmatprep.subr.mxu0 %v2830
      %v2832 = vand.u32 %v155, 4294901760
      %2833 = vmatpush1.msra.mxu0 %v2832
      %v2834 = vand.u32 %v165, 4294901760
      %2835 = vmatprep.subr.mxu0 %v2834
      %v2836 = vand.u32 %v164, 4294901760
      %2837 = vmatpush1.msra.mxu0 %v2836
      %v2838 = vand.u32 %v174, 4294901760
      %2839 = vmatprep.subr.mxu0 %v2838
      %v2840 = vand.u32 %v173, 4294901760
      %2841 = vmatpush1.msra.mxu0 %v2840
      %v2842 = vand.u32 %v183, 4294901760
      %2843 = vmatprep.subr.mxu0 %v2842
      %v2844 = vand.u32 %v182, 4294901760
      %2845 = vmatpush1.msra.mxu0 %v2844
      %v2846 = vand.u32 %v192, 4294901760
      %2847 = vmatprep.subr.mxu0 %v2846
      %v2848 = vand.u32 %v191, 4294901760
      %2849 = vmatpush1.msra.mxu0 %v2848
      %v2850 = vand.u32 %v201, 4294901760
      %2851 = vmatprep.subr.mxu0 %v2850
      %v2852 = vand.u32 %v200, 4294901760
      %2853 = vmatpush1.msra.mxu0 %v2852
      %v2854 = vand.u32 %v210, 4294901760
      %2855 = vmatprep.subr.mxu0 %v2854
      %v2856 = vand.u32 %v209, 4294901760
      %2857 = vmatpush1.msra.mxu0 %v2856
      %v2858 = vand.u32 %v219, 4294901760
      %2859 = vmatprep.subr.mxu0 %v2858
      %v2860 = vand.u32 %v218, 4294901760
      %2861 = vmatpush1.msra.mxu0 %v2860
      %v2862 = vand.u32 %v228, 4294901760
      %2863 = vmatprep.subr.mxu0 %v2862
      %v2864 = vand.u32 %v227, 4294901760
      %2865 = vmatpush1.msra.mxu0 %v2864
      %v2866 = vand.u32 %v237, 4294901760
      %2867 = vmatprep.subr.mxu0 %v2866
      %v2868 = vand.u32 %v236, 4294901760
      %2869 = vmatpush1.msra.mxu0 %v2868
      %v2870 = vand.u32 %v246, 4294901760
      %2871 = vmatprep.subr.mxu0 %v2870
      %v2872 = vand.u32 %v245, 4294901760
      %2873 = vmatpush1.msra.mxu0 %v2872
      %v2874 = vand.u32 %v255, 4294901760
      %2875 = vmatprep.subr.mxu0 %v2874
      %v2876 = vand.u32 %v254, 4294901760
      %2877 = vmatpush1.msra.mxu0 %v2876
      %v2878 = vand.u32 %v264, 4294901760
      %2879 = vmatprep.subr.mxu0 %v2878
      %v2880 = vand.u32 %v263, 4294901760
      %2881 = vmatpush1.msra.mxu0 %v2880
      %2882 = vmatprep.subr.mxu0 0.0
      %2883 = vmatpush1.msra.mxu0 0.0
      %2884 = vmatprep.subr.mxu0 0.0
      %2885 = vmatpush1.msra.mxu0 0.0
      %2886 = vmatprep.subr.mxu0 0.0
      %2887 = vmatpush1.msra.mxu0 0.0
      %2888 = vmatprep.subr.mxu0 0.0
      %2889 = vmatpush1.msra.mxu0 0.0
      %2890 = vmatprep.subr.mxu0 0.0
      %2891 = vmatpush1.msra.mxu0 0.0
      %2892 = vmatprep.subr.mxu0 0.0
      %2893 = vmatpush1.msra.mxu0 0.0
      %2894 = vmatprep.subr.mxu0 0.0
      %2895 = vmatpush1.msra.mxu0 0.0
      %2896 = vmatprep.subr.mxu0 0.0
      %2897 = vmatpush1.msra.mxu0 0.0
      %2898 = vmatprep.subr.mxu0 0.0
      %2899 = vmatpush1.msra.mxu0 0.0
      %2900 = vmatprep.subr.mxu0 0.0
      %2901 = vmatpush1.msra.mxu0 0.0
      %2902 = vmatprep.subr.mxu0 0.0
      %2903 = vmatpush1.msra.mxu0 0.0
      %2904 = vmatprep.subr.mxu0 0.0
      %2905 = vmatpush1.msra.mxu0 0.0
      %2906 = vmatprep.subr.mxu0 0.0
      %2907 = vmatpush1.msra.mxu0 0.0
      %2908 = vmatprep.subr.mxu0 0.0
      %2909 = vmatpush1.msra.mxu0 0.0
      %2910 = vmatprep.subr.mxu0 0.0
      %2911 = vmatpush1.msra.mxu0 0.0
      %2912 = vmatprep.subr.mxu0 0.0
      %2913 = vmatpush1.msra.mxu0 0.0
      %2914 = vmatprep.subr.mxu0 0.0
      %2915 = vmatpush1.msra.mxu0 0.0
      %2916 = vmatprep.subr.mxu0 0.0
      %2917 = vmatpush1.msra.mxu0 0.0
      %2918 = vmatprep.mubr.f32.mxu0 0.0
      %v2919 = vand.u32 %v284, 4294901760
      %2920 = vmatmul.mubr.f32.gmra.mrb[0].mxu0 %v2919
      %v2921 = vpop.f32.mrb[0].mxu0
      %v2922 = vadd.f32 %v2745, %v2921
      %v2923 = vpop.f32.mrb[0].mxu0
      %v2924 = vadd.f32 %v2747, %v2923
      %2925 = vmatprep.mubr.f32.mxu0 0.0
      %v2926 = vand.u32 %v287, 4294901760
      %2927 = vmatmul.mubr.f32.gmra.mrb[0].mxu0 %v2926
      %v2928 = vpop.f32.mrb[0].mxu0
      %v2929 = vadd.f32 %v2752, %v2928
      %v2930 = vpop.f32.mrb[0].mxu0
      %v2931 = vadd.f32 %v2754, %v2930
      %2932 = vmatprep.mubr.f32.mxu0 0.0
      %v2933 = vand.u32 %v290, 4294901760
      %2934 = vmatmul.mubr.f32.gmra.mrb[0].mxu0 %v2933
      %v2935 = vpop.f32.mrb[0].mxu0
      %v2936 = vadd.f32 %v2759, %v2935
      %v2937 = vpop.f32.mrb[0].mxu0
      %v2938 = vadd.f32 %v2761, %v2937
      %2939 = vmatprep.mubr.f32.mxu0 0.0
      %v2940 = vand.u32 %v293, 4294901760
      %2941 = vmatmul.mubr.f32.gmra.mrb[0].mxu0 %v2940
      %v2942 = vpop.f32.mrb[0].mxu0
      %v2943 = vadd.f32 %v2766, %v2942
      %v2944 = vpop.f32.mrb[0].mxu0
      %v2945 = vadd.f32 %v2768, %v2944
      %2946 = vmatprep.mubr.f32.mxu0 0.0
      %v2947 = vand.u32 %v296, 4294901760
      %2948 = vmatmul.mubr.f32.gmra.mrb[0].mxu0 %v2947
      %v2949 = vpop.f32.mrb[0].mxu0
      %v2950 = vadd.f32 %v2773, %v2949
      %v2951 = vpop.f32.mrb[0].mxu0
      %v2952 = vadd.f32 %v2775, %v2951
      %2953 = vmatprep.mubr.f32.mxu0 0.0
      %v2954 = vand.u32 %v299, 4294901760
      %2955 = vmatmul.mubr.f32.gmra.mrb[0].mxu0 %v2954
      %v2956 = vpop.f32.mrb[0].mxu0
      %v2957 = vadd.f32 %v2780, %v2956
      %v2958 = vpop.f32.mrb[0].mxu0
      %v2959 = vadd.f32 %v2782, %v2958
      %2960 = vmatprep.mubr.f32.mxu0 0.0
      %v2961 = vand.u32 %v302, 4294901760
      %2962 = vmatmul.mubr.f32.gmra.mrb[0].mxu0 %v2961
      %v2963 = vpop.f32.mrb[0].mxu0
      %v2964 = vadd.f32 %v2787, %v2963
      %v2965 = vpop.f32.mrb[0].mxu0
      %v2966 = vadd.f32 %v2789, %v2965
      %2967 = vmatprep.mubr.f32.mxu0 0.0
      %v2968 = vand.u32 %v305, 4294901760
      %2969 = vmatmul.mubr.f32.gmra.mrb[0].mxu0 %v2968
      %v2970 = vpop.f32.mrb[0].mxu0
      %v2971 = vadd.f32 %v2794, %v2970
      %v2972 = vpop.f32.mrb[0].mxu0
      %v2973 = vadd.f32 %v2796, %v2972
      %2974 = vmatprep.mubr.f32.mxu0 0.0
      %v2975 = vand.u32 %v308, 4294901760
      %2976 = vmatmul.mubr.f32.gmra.mrb[0].mxu0 %v2975
      %v2977 = vpop.f32.mrb[0].mxu0
      %v2978 = vadd.f32 %v2801, %v2977
      %v2979 = vpop.f32.mrb[0].mxu0
      %v2980 = vadd.f32 %v2803, %v2979
      %2981 = vmatprep.mubr.f32.mxu0 0.0
      %v2982 = vand.u32 %v311, 4294901760
      %2983 = vmatmul.mubr.f32.gmra.mrb[0].mxu0 %v2982
      %v2984 = vpop.f32.mrb[0].mxu0
      %v2985 = vadd.f32 %v2808, %v2984
      %v2986 = vpop.f32.mrb[0].mxu0
      %v2987 = vadd.f32 %v2810, %v2986
      %2988 = vmatprep.mubr.f32.mxu0 0.0
      %v2989 = vand.u32 %v314, 4294901760
      %2990 = vmatmul.mubr.f32.gmra.mrb[0].mxu0 %v2989
      %v2991 = vpop.f32.mrb[0].mxu0
      %v2992 = vadd.f32 %v2815, %v2991
      %v2993 = vpop.f32.mrb[0].mxu0
      %v2994 = vadd.f32 %v2817, %v2993
      %2995 = vmatprep.mubr.f32.mxu0 0.0
      %v2996 = vand.u32 %v317, 4294901760
      %2997 = vmatmul.mubr.f32.gmra.mrb[0].mxu0 %v2996
      %v2998 = vpop.f32.mrb[0].mxu0
      %v2999 = vadd.f32 %v2822, %v2998
      %v3000 = vpop.f32.mrb[0].mxu0
      %v3001 = vadd.f32 %v2824, %v3000
      %3002 = vdwg.mxu0
      %v3003 = vand.u32 %v149, 4294901760
      %3004 = vmatprep.subr.mxu0 %v3003
      %v3005 = vand.u32 %v148, 4294901760
      %3006 = vmatpush1.msra.mxu0 %v3005
      %v3007 = vand.u32 %v158, 4294901760
      %3008 = vmatprep.subr.mxu0 %v3007
      %v3009 = vand.u32 %v157, 4294901760
      %3010 = vmatpush1.msra.mxu0 %v3009
      %v3011 = vand.u32 %v167, 4294901760
      %3012 = vmatprep.subr.mxu0 %v3011
      %v3013 = vand.u32 %v166, 4294901760
      %3014 = vmatpush1.msra.mxu0 %v3013
      %v3015 = vand.u32 %v176, 4294901760
      %3016 = vmatprep.subr.mxu0 %v3015
      %v3017 = vand.u32 %v175, 4294901760
      %3018 = vmatpush1.msra.mxu0 %v3017
      %v3019 = vand.u32 %v185, 4294901760
      %3020 = vmatprep.subr.mxu0 %v3019
      %v3021 = vand.u32 %v184, 4294901760
      %3022 = vmatpush1.msra.mxu0 %v3021
      %v3023 = vand.u32 %v194, 4294901760
      %3024 = vmatprep.subr.mxu0 %v3023
      %v3025 = vand.u32 %v193, 4294901760
      %3026 = vmatpush1.msra.mxu0 %v3025
      %v3027 = vand.u32 %v203, 4294901760
      %3028 = vmatprep.subr.mxu0 %v3027
      %v3029 = vand.u32 %v202, 4294901760
      %3030 = vmatpush1.msra.mxu0 %v3029
      %v3031 = vand.u32 %v212, 4294901760
      %3032 = vmatprep.subr.mxu0 %v3031
      %v3033 = vand.u32 %v211, 4294901760
      %3034 = vmatpush1.msra.mxu0 %v3033
      %v3035 = vand.u32 %v221, 4294901760
      %3036 = vmatprep.subr.mxu0 %v3035
      %v3037 = vand.u32 %v220, 4294901760
      %3038 = vmatpush1.msra.mxu0 %v3037
      %v3039 = vand.u32 %v230, 4294901760
      %3040 = vmatprep.subr.mxu0 %v3039
      %v3041 = vand.u32 %v229, 4294901760
      %3042 = vmatpush1.msra.mxu0 %v3041
      %v3043 = vand.u32 %v239, 4294901760
      %3044 = vmatprep.subr.mxu0 %v3043
      %v3045 = vand.u32 %v238, 4294901760
      %3046 = vmatpush1.msra.mxu0 %v3045
      %v3047 = vand.u32 %v248, 4294901760
      %3048 = vmatprep.subr.mxu0 %v3047
      %v3049 = vand.u32 %v247, 4294901760
      %3050 = vmatpush1.msra.mxu0 %v3049
      %v3051 = vand.u32 %v257, 4294901760
      %3052 = vmatprep.subr.mxu0 %v3051
      %v3053 = vand.u32 %v256, 4294901760
      %3054 = vmatpush1.msra.mxu0 %v3053
      %v3055 = vand.u32 %v266, 4294901760
      %3056 = vmatprep.subr.mxu0 %v3055
      %v3057 = vand.u32 %v265, 4294901760
      %3058 = vmatpush1.msra.mxu0 %v3057
      %3059 = vmatprep.subr.mxu0 0.0
      %3060 = vmatpush1.msra.mxu0 0.0
      %3061 = vmatprep.subr.mxu0 0.0
      %3062 = vmatpush1.msra.mxu0 0.0
      %3063 = vmatprep.subr.mxu0 0.0
      %3064 = vmatpush1.msra.mxu0 0.0
      %3065 = vmatprep.subr.mxu0 0.0
      %3066 = vmatpush1.msra.mxu0 0.0
      %3067 = vmatprep.subr.mxu0 0.0
      %3068 = vmatpush1.msra.mxu0 0.0
      %3069 = vmatprep.subr.mxu0 0.0
      %3070 = vmatpush1.msra.mxu0 0.0
      %3071 = vmatprep.subr.mxu0 0.0
      %3072 = vmatpush1.msra.mxu0 0.0
      %3073 = vmatprep.subr.mxu0 0.0
      %3074 = vmatpush1.msra.mxu0 0.0
      %3075 = vmatprep.subr.mxu0 0.0
      %3076 = vmatpush1.msra.mxu0 0.0
      %3077 = vmatprep.subr.mxu0 0.0
      %3078 = vmatpush1.msra.mxu0 0.0
      %3079 = vmatprep.subr.mxu0 0.0
      %3080 = vmatpush1.msra.mxu0 0.0
      %3081 = vmatprep.subr.mxu0 0.0
      %3082 = vmatpush1.msra.mxu0 0.0
      %3083 = vmatprep.subr.mxu0 0.0
      %3084 = vmatpush1.msra.mxu0 0.0
      %3085 = vmatprep.subr.mxu0 0.0
      %3086 = vmatpush1.msra.mxu0 0.0
      %3087 = vmatprep.subr.mxu0 0.0
      %3088 = vmatpush1.msra.mxu0 0.0
      %3089 = vmatprep.subr.mxu0 0.0
      %3090 = vmatpush1.msra.mxu0 0.0
      %3091 = vmatprep.subr.mxu0 0.0
      %3092 = vmatpush1.msra.mxu0 0.0
      %3093 = vmatprep.subr.mxu0 0.0
      %3094 = vmatpush1.msra.mxu0 0.0
      %3095 = vmatprep.mubr.f32.mxu0 0.0
      %v3096 = vand.u32 %v284, 4294901760
      %v3097 = vsub.f32 %v284, %v3096
      %v3098 = vand.u32 %v3097, 4294901760
      %v3099 = vsub.f32 %v3097, %v3098
      %v3100 = vand.u32 %v3099, 4294901760
      %3101 = vmatmul.mubr.f32.gmra.mrb[0].mxu0 %v3100
      %v3102 = vpop.f32.mrb[0].mxu0
      %v3103 = vadd.f32 0.0, %v3102
      %v3104 = vpop.f32.mrb[0].mxu0
      %v3105 = vadd.f32 0.0, %v3104
      %3106 = vmatprep.mubr.f32.mxu0 0.0
      %v3107 = vand.u32 %v287, 4294901760
      %v3108 = vsub.f32 %v287, %v3107
      %v3109 = vand.u32 %v3108, 4294901760
      %v3110 = vsub.f32 %v3108, %v3109
      %v3111 = vand.u32 %v3110, 4294901760
      %3112 = vmatmul.mubr.f32.gmra.mrb[0].mxu0 %v3111
      %v3113 = vpop.f32.mrb[0].mxu0
      %v3114 = vadd.f32 0.0, %v3113
      %v3115 = vpop.f32.mrb[0].mxu0
      %v3116 = vadd.f32 0.0, %v3115
      %3117 = vmatprep.mubr.f32.mxu0 0.0
      %v3118 = vand.u32 %v290, 4294901760
      %v3119 = vsub.f32 %v290, %v3118
      %v3120 = vand.u32 %v3119, 4294901760
      %v3121 = vsub.f32 %v3119, %v3120
      %v3122 = vand.u32 %v3121, 4294901760
      %3123 = vmatmul.mubr.f32.gmra.mrb[0].mxu0 %v3122
      %v3124 = vpop.f32.mrb[0].mxu0
      %v3125 = vadd.f32 0.0, %v3124
      %v3126 = vpop.f32.mrb[0].mxu0
      %v3127 = vadd.f32 0.0, %v3126
      %3128 = vmatprep.mubr.f32.mxu0 0.0
      %v3129 = vand.u32 %v293, 4294901760
      %v3130 = vsub.f32 %v293, %v3129
      %v3131 = vand.u32 %v3130, 4294901760
      %v3132 = vsub.f32 %v3130, %v3131
      %v3133 = vand.u32 %v3132, 4294901760
      %3134 = vmatmul.mubr.f32.gmra.mrb[0].mxu0 %v3133
      %v3135 = vpop.f32.mrb[0].mxu0
      %v3136 = vadd.f32 0.0, %v3135
      %v3137 = vpop.f32.mrb[0].mxu0
      %v3138 = vadd.f32 0.0, %v3137
      %3139 = vmatprep.mubr.f32.mxu0 0.0
      %v3140 = vand.u32 %v296, 4294901760
      %v3141 = vsub.f32 %v296, %v3140
      %v3142 = vand.u32 %v3141, 4294901760
      %v3143 = vsub.f32 %v3141, %v3142
      %v3144 = vand.u32 %v3143, 4294901760
      %3145 = vmatmul.mubr.f32.gmra.mrb[0].mxu0 %v3144
      %v3146 = vpop.f32.mrb[0].mxu0
      %v3147 = vadd.f32 0.0, %v3146
      %v3148 = vpop.f32.mrb[0].mxu0
      %v3149 = vadd.f32 0.0, %v3148
      %3150 = vmatprep.mubr.f32.mxu0 0.0
      %v3151 = vand.u32 %v299, 4294901760
      %v3152 = vsub.f32 %v299, %v3151
      %v3153 = vand.u32 %v3152, 4294901760
      %v3154 = vsub.f32 %v3152, %v3153
      %v3155 = vand.u32 %v3154, 4294901760
      %3156 = vmatmul.mubr.f32.gmra.mrb[0].mxu0 %v3155
      %v3157 = vpop.f32.mrb[0].mxu0
      %v3158 = vadd.f32 0.0, %v3157
      %v3159 = vpop.f32.mrb[0].mxu0
      %v3160 = vadd.f32 0.0, %v3159
      %3161 = vmatprep.mubr.f32.mxu0 0.0
      %v3162 = vand.u32 %v302, 4294901760
      %v3163 = vsub.f32 %v302, %v3162
      %v3164 = vand.u32 %v3163, 4294901760
      %v3165 = vsub.f32 %v3163, %v3164
      %v3166 = vand.u32 %v3165, 4294901760
      %3167 = vmatmul.mubr.f32.gmra.mrb[0].mxu0 %v3166
      %v3168 = vpop.f32.mrb[0].mxu0
      %v3169 = vadd.f32 0.0, %v3168
      %v3170 = vpop.f32.mrb[0].mxu0
      %v3171 = vadd.f32 0.0, %v3170
      %3172 = vmatprep.mubr.f32.mxu0 0.0
      %v3173 = vand.u32 %v305, 4294901760
      %v3174 = vsub.f32 %v305, %v3173
      %v3175 = vand.u32 %v3174, 4294901760
      %v3176 = vsub.f32 %v3174, %v3175
      %v3177 = vand.u32 %v3176, 4294901760
      %3178 = vmatmul.mubr.f32.gmra.mrb[0].mxu0 %v3177
      %v3179 = vpop.f32.mrb[0].mxu0
      %v3180 = vadd.f32 0.0, %v3179
      %v3181 = vpop.f32.mrb[0].mxu0
      %v3182 = vadd.f32 0.0, %v3181
      %3183 = vmatprep.mubr.f32.mxu0 0.0
      %v3184 = vand.u32 %v308, 4294901760
      %v3185 = vsub.f32 %v308, %v3184
      %v3186 = vand.u32 %v3185, 4294901760
      %v3187 = vsub.f32 %v3185, %v3186
      %v3188 = vand.u32 %v3187, 4294901760
      %3189 = vmatmul.mubr.f32.gmra.mrb[0].mxu0 %v3188
      %v3190 = vpop.f32.mrb[0].mxu0
      %v3191 = vadd.f32 0.0, %v3190
      %v3192 = vpop.f32.mrb[0].mxu0
      %v3193 = vadd.f32 0.0, %v3192
      %3194 = vmatprep.mubr.f32.mxu0 0.0
      %v3195 = vand.u32 %v311, 4294901760
      %v3196 = vsub.f32 %v311, %v3195
      %v3197 = vand.u32 %v3196, 4294901760
      %v3198 = vsub.f32 %v3196, %v3197
      %v3199 = vand.u32 %v3198, 4294901760
      %3200 = vmatmul.mubr.f32.gmra.mrb[0].mxu0 %v3199
      %v3201 = vpop.f32.mrb[0].mxu0
      %v3202 = vadd.f32 0.0, %v3201
      %v3203 = vpop.f32.mrb[0].mxu0
      %v3204 = vadd.f32 0.0, %v3203
      %3205 = vmatprep.mubr.f32.mxu0 0.0
      %v3206 = vand.u32 %v314, 4294901760
      %v3207 = vsub.f32 %v314, %v3206
      %v3208 = vand.u32 %v3207, 4294901760
      %v3209 = vsub.f32 %v3207, %v3208
      %v3210 = vand.u32 %v3209, 4294901760
      %3211 = vmatmul.mubr.f32.gmra.mrb[0].mxu0 %v3210
      %v3212 = vpop.f32.mrb[0].mxu0
      %v3213 = vadd.f32 0.0, %v3212
      %v3214 = vpop.f32.mrb[0].mxu0
      %v3215 = vadd.f32 0.0, %v3214
      %3216 = vmatprep.mubr.f32.mxu0 0.0
      %v3217 = vand.u32 %v317, 4294901760
      %v3218 = vsub.f32 %v317, %v3217
      %v3219 = vand.u32 %v3218, 4294901760
      %v3220 = vsub.f32 %v3218, %v3219
      %v3221 = vand.u32 %v3220, 4294901760
      %3222 = vmatmul.mubr.f32.gmra.mrb[0].mxu0 %v3221
      %v3223 = vpop.f32.mrb[0].mxu0
      %v3224 = vadd.f32 0.0, %v3223
      %v3225 = vpop.f32.mrb[0].mxu0
      %v3226 = vadd.f32 0.0, %v3225
      %3227 = vdwg.mxu0
      %v3228 = vand.u32 %v149, 4294901760
      %v3229 = vsub.f32 %v149, %v3228
      %v3230 = vand.u32 %v3229, 4294901760
      %v3231 = vsub.f32 %v3229, %v3230
      %v3232 = vand.u32 %v3231, 4294901760
      %3233 = vmatprep.subr.mxu0 %v3232
      %v3234 = vand.u32 %v148, 4294901760
      %v3235 = vsub.f32 %v148, %v3234
      %v3236 = vand.u32 %v3235, 4294901760
      %v3237 = vsub.f32 %v3235, %v3236
      %v3238 = vand.u32 %v3237, 4294901760
      %3239 = vmatpush1.msra.mxu0 %v3238
      %v3240 = vand.u32 %v158, 4294901760
      %v3241 = vsub.f32 %v158, %v3240
      %v3242 = vand.u32 %v3241, 4294901760
      %v3243 = vsub.f32 %v3241, %v3242
      %v3244 = vand.u32 %v3243, 4294901760
      %3245 = vmatprep.subr.mxu0 %v3244
      %v3246 = vand.u32 %v157, 4294901760
      %v3247 = vsub.f32 %v157, %v3246
      %v3248 = vand.u32 %v3247, 4294901760
      %v3249 = vsub.f32 %v3247, %v3248
      %v3250 = vand.u32 %v3249, 4294901760
      %3251 = vmatpush1.msra.mxu0 %v3250
      %v3252 = vand.u32 %v167, 4294901760
      %v3253 = vsub.f32 %v167, %v3252
      %v3254 = vand.u32 %v3253, 4294901760
      %v3255 = vsub.f32 %v3253, %v3254
      %v3256 = vand.u32 %v3255, 4294901760
      %3257 = vmatprep.subr.mxu0 %v3256
      %v3258 = vand.u32 %v166, 4294901760
      %v3259 = vsub.f32 %v166, %v3258
      %v3260 = vand.u32 %v3259, 4294901760
      %v3261 = vsub.f32 %v3259, %v3260
      %v3262 = vand.u32 %v3261, 4294901760
      %3263 = vmatpush1.msra.mxu0 %v3262
      %v3264 = vand.u32 %v176, 4294901760
      %v3265 = vsub.f32 %v176, %v3264
      %v3266 = vand.u32 %v3265, 4294901760
      %v3267 = vsub.f32 %v3265, %v3266
      %v3268 = vand.u32 %v3267, 4294901760
      %3269 = vmatprep.subr.mxu0 %v3268
      %v3270 = vand.u32 %v175, 4294901760
      %v3271 = vsub.f32 %v175, %v3270
      %v3272 = vand.u32 %v3271, 4294901760
      %v3273 = vsub.f32 %v3271, %v3272
      %v3274 = vand.u32 %v3273, 4294901760
      %3275 = vmatpush1.msra.mxu0 %v3274
      %v3276 = vand.u32 %v185, 4294901760
      %v3277 = vsub.f32 %v185, %v3276
      %v3278 = vand.u32 %v3277, 4294901760
      %v3279 = vsub.f32 %v3277, %v3278
      %v3280 = vand.u32 %v3279, 4294901760
      %3281 = vmatprep.subr.mxu0 %v3280
      %v3282 = vand.u32 %v184, 4294901760
      %v3283 = vsub.f32 %v184, %v3282
      %v3284 = vand.u32 %v3283, 4294901760
      %v3285 = vsub.f32 %v3283, %v3284
      %v3286 = vand.u32 %v3285, 4294901760
      %3287 = vmatpush1.msra.mxu0 %v3286
      %v3288 = vand.u32 %v194, 4294901760
      %v3289 = vsub.f32 %v194, %v3288
      %v3290 = vand.u32 %v3289, 4294901760
      %v3291 = vsub.f32 %v3289, %v3290
      %v3292 = vand.u32 %v3291, 4294901760
      %3293 = vmatprep.subr.mxu0 %v3292
      %v3294 = vand.u32 %v193, 4294901760
      %v3295 = vsub.f32 %v193, %v3294
      %v3296 = vand.u32 %v3295, 4294901760
      %v3297 = vsub.f32 %v3295, %v3296
      %v3298 = vand.u32 %v3297, 4294901760
      %3299 = vmatpush1.msra.mxu0 %v3298
      %v3300 = vand.u32 %v203, 4294901760
      %v3301 = vsub.f32 %v203, %v3300
      %v3302 = vand.u32 %v3301, 4294901760
      %v3303 = vsub.f32 %v3301, %v3302
      %v3304 = vand.u32 %v3303, 4294901760
      %3305 = vmatprep.subr.mxu0 %v3304
      %v3306 = vand.u32 %v202, 4294901760
      %v3307 = vsub.f32 %v202, %v3306
      %v3308 = vand.u32 %v3307, 4294901760
      %v3309 = vsub.f32 %v3307, %v3308
      %v3310 = vand.u32 %v3309, 4294901760
      %3311 = vmatpush1.msra.mxu0 %v3310
      %v3312 = vand.u32 %v212, 4294901760
      %v3313 = vsub.f32 %v212, %v3312
      %v3314 = vand.u32 %v3313, 4294901760
      %v3315 = vsub.f32 %v3313, %v3314
      %v3316 = vand.u32 %v3315, 4294901760
      %3317 = vmatprep.subr.mxu0 %v3316
      %v3318 = vand.u32 %v211, 4294901760
      %v3319 = vsub.f32 %v211, %v3318
      %v3320 = vand.u32 %v3319, 4294901760
      %v3321 = vsub.f32 %v3319, %v3320
      %v3322 = vand.u32 %v3321, 4294901760
      %3323 = vmatpush1.msra.mxu0 %v3322
      %v3324 = vand.u32 %v221, 4294901760
      %v3325 = vsub.f32 %v221, %v3324
      %v3326 = vand.u32 %v3325, 4294901760
      %v3327 = vsub.f32 %v3325, %v3326
      %v3328 = vand.u32 %v3327, 4294901760
      %3329 = vmatprep.subr.mxu0 %v3328
      %v3330 = vand.u32 %v220, 4294901760
      %v3331 = vsub.f32 %v220, %v3330
      %v3332 = vand.u32 %v3331, 4294901760
      %v3333 = vsub.f32 %v3331, %v3332
      %v3334 = vand.u32 %v3333, 4294901760
      %3335 = vmatpush1.msra.mxu0 %v3334
      %v3336 = vand.u32 %v230, 4294901760
      %v3337 = vsub.f32 %v230, %v3336
      %v3338 = vand.u32 %v3337, 4294901760
      %v3339 = vsub.f32 %v3337, %v3338
      %v3340 = vand.u32 %v3339, 4294901760
      %3341 = vmatprep.subr.mxu0 %v3340
      %v3342 = vand.u32 %v229, 4294901760
      %v3343 = vsub.f32 %v229, %v3342
      %v3344 = vand.u32 %v3343, 4294901760
      %v3345 = vsub.f32 %v3343, %v3344
      %v3346 = vand.u32 %v3345, 4294901760
      %3347 = vmatpush1.msra.mxu0 %v3346
      %v3348 = vand.u32 %v239, 4294901760
      %v3349 = vsub.f32 %v239, %v3348
      %v3350 = vand.u32 %v3349, 4294901760
      %v3351 = vsub.f32 %v3349, %v3350
      %v3352 = vand.u32 %v3351, 4294901760
      %3353 = vmatprep.subr.mxu0 %v3352
      %v3354 = vand.u32 %v238, 4294901760
      %v3355 = vsub.f32 %v238, %v3354
      %v3356 = vand.u32 %v3355, 4294901760
      %v3357 = vsub.f32 %v3355, %v3356
      %v3358 = vand.u32 %v3357, 4294901760
      %3359 = vmatpush1.msra.mxu0 %v3358
      %v3360 = vand.u32 %v248, 4294901760
      %v3361 = vsub.f32 %v248, %v3360
      %v3362 = vand.u32 %v3361, 4294901760
      %v3363 = vsub.f32 %v3361, %v3362
      %v3364 = vand.u32 %v3363, 4294901760
      %3365 = vmatprep.subr.mxu0 %v3364
      %v3366 = vand.u32 %v247, 4294901760
      %v3367 = vsub.f32 %v247, %v3366
      %v3368 = vand.u32 %v3367, 4294901760
      %v3369 = vsub.f32 %v3367, %v3368
      %v3370 = vand.u32 %v3369, 4294901760
      %3371 = vmatpush1.msra.mxu0 %v3370
      %v3372 = vand.u32 %v257, 4294901760
      %v3373 = vsub.f32 %v257, %v3372
      %v3374 = vand.u32 %v3373, 4294901760
      %v3375 = vsub.f32 %v3373, %v3374
      %v3376 = vand.u32 %v3375, 4294901760
      %3377 = vmatprep.subr.mxu0 %v3376
      %v3378 = vand.u32 %v256, 4294901760
      %v3379 = vsub.f32 %v256, %v3378
      %v3380 = vand.u32 %v3379, 4294901760
      %v3381 = vsub.f32 %v3379, %v3380
      %v3382 = vand.u32 %v3381, 4294901760
      %3383 = vmatpush1.msra.mxu0 %v3382
      %v3384 = vand.u32 %v266, 4294901760
      %v3385 = vsub.f32 %v266, %v3384
      %v3386 = vand.u32 %v3385, 4294901760
      %v3387 = vsub.f32 %v3385, %v3386
      %v3388 = vand.u32 %v3387, 4294901760
      %3389 = vmatprep.subr.mxu0 %v3388
      %v3390 = vand.u32 %v265, 4294901760
      %v3391 = vsub.f32 %v265, %v3390
      %v3392 = vand.u32 %v3391, 4294901760
      %v3393 = vsub.f32 %v3391, %v3392
      %v3394 = vand.u32 %v3393, 4294901760
      %3395 = vmatpush1.msra.mxu0 %v3394
      %3396 = vmatprep.subr.mxu0 0.0
      %3397 = vmatpush1.msra.mxu0 0.0
      %3398 = vmatprep.subr.mxu0 0.0
      %3399 = vmatpush1.msra.mxu0 0.0
      %3400 = vmatprep.subr.mxu0 0.0
      %3401 = vmatpush1.msra.mxu0 0.0
      %3402 = vmatprep.subr.mxu0 0.0
      %3403 = vmatpush1.msra.mxu0 0.0
      %3404 = vmatprep.subr.mxu0 0.0
      %3405 = vmatpush1.msra.mxu0 0.0
      %3406 = vmatprep.subr.mxu0 0.0
      %3407 = vmatpush1.msra.mxu0 0.0
      %3408 = vmatprep.subr.mxu0 0.0
      %3409 = vmatpush1.msra.mxu0 0.0
      %3410 = vmatprep.subr.mxu0 0.0
      %3411 = vmatpush1.msra.mxu0 0.0
      %3412 = vmatprep.subr.mxu0 0.0
      %3413 = vmatpush1.msra.mxu0 0.0
      %3414 = vmatprep.subr.mxu0 0.0
      %3415 = vmatpush1.msra.mxu0 0.0
      %3416 = vmatprep.subr.mxu0 0.0
      %3417 = vmatpush1.msra.mxu0 0.0
      %3418 = vmatprep.subr.mxu0 0.0
      %3419 = vmatpush1.msra.mxu0 0.0
      %3420 = vmatprep.subr.mxu0 0.0
      %3421 = vmatpush1.msra.mxu0 0.0
      %3422 = vmatprep.subr.mxu0 0.0
      %3423 = vmatpush1.msra.mxu0 0.0
      %3424 = vmatprep.subr.mxu0 0.0
      %3425 = vmatpush1.msra.mxu0 0.0
      %3426 = vmatprep.subr.mxu0 0.0
      %3427 = vmatpush1.msra.mxu0 0.0
      %3428 = vmatprep.subr.mxu0 0.0
      %3429 = vmatpush1.msra.mxu0 0.0
      %3430 = vmatprep.subr.mxu0 0.0
      %3431 = vmatpush1.msra.mxu0 0.0
      %3432 = vmatprep.mubr.f32.mxu0 0.0
      %v3433 = vand.u32 %v284, 4294901760
      %3434 = vmatmul.mubr.f32.gmra.mrb[0].mxu0 %v3433
      %v3435 = vpop.f32.mrb[0].mxu0
      %v3436 = vadd.f32 %v3103, %v3435
      %v3437 = vpop.f32.mrb[0].mxu0
      %v3438 = vadd.f32 %v3105, %v3437
      %3439 = vmatprep.mubr.f32.mxu0 0.0
      %v3440 = vand.u32 %v287, 4294901760
      %3441 = vmatmul.mubr.f32.gmra.mrb[0].mxu0 %v3440
      %v3442 = vpop.f32.mrb[0].mxu0
      %v3443 = vadd.f32 %v3114, %v3442
      %v3444 = vpop.f32.mrb[0].mxu0
      %v3445 = vadd.f32 %v3116, %v3444
      %3446 = vmatprep.mubr.f32.mxu0 0.0
      %v3447 = vand.u32 %v290, 4294901760
      %3448 = vmatmul.mubr.f32.gmra.mrb[0].mxu0 %v3447
      %v3449 = vpop.f32.mrb[0].mxu0
      %v3450 = vadd.f32 %v3125, %v3449
      %v3451 = vpop.f32.mrb[0].mxu0
      %v3452 = vadd.f32 %v3127, %v3451
      %3453 = vmatprep.mubr.f32.mxu0 0.0
      %v3454 = vand.u32 %v293, 4294901760
      %3455 = vmatmul.mubr.f32.gmra.mrb[0].mxu0 %v3454
      %v3456 = vpop.f32.mrb[0].mxu0
      %v3457 = vadd.f32 %v3136, %v3456
      %v3458 = vpop.f32.mrb[0].mxu0
      %v3459 = vadd.f32 %v3138, %v3458
      %3460 = vmatprep.mubr.f32.mxu0 0.0
      %v3461 = vand.u32 %v296, 4294901760
      %3462 = vmatmul.mubr.f32.gmra.mrb[0].mxu0 %v3461
      %v3463 = vpop.f32.mrb[0].mxu0
      %v3464 = vadd.f32 %v3147, %v3463
      %v3465 = vpop.f32.mrb[0].mxu0
      %v3466 = vadd.f32 %v3149, %v3465
      %3467 = vmatprep.mubr.f32.mxu0 0.0
      %v3468 = vand.u32 %v299, 4294901760
      %3469 = vmatmul.mubr.f32.gmra.mrb[0].mxu0 %v3468
      %v3470 = vpop.f32.mrb[0].mxu0
      %v3471 = vadd.f32 %v3158, %v3470
      %v3472 = vpop.f32.mrb[0].mxu0
      %v3473 = vadd.f32 %v3160, %v3472
      %3474 = vmatprep.mubr.f32.mxu0 0.0
      %v3475 = vand.u32 %v302, 4294901760
      %3476 = vmatmul.mubr.f32.gmra.mrb[0].mxu0 %v3475
      %v3477 = vpop.f32.mrb[0].mxu0
      %v3478 = vadd.f32 %v3169, %v3477
      %v3479 = vpop.f32.mrb[0].mxu0
      %v3480 = vadd.f32 %v3171, %v3479
      %3481 = vmatprep.mubr.f32.mxu0 0.0
      %v3482 = vand.u32 %v305, 4294901760
      %3483 = vmatmul.mubr.f32.gmra.mrb[0].mxu0 %v3482
      %v3484 = vpop.f32.mrb[0].mxu0
      %v3485 = vadd.f32 %v3180, %v3484
      %v3486 = vpop.f32.mrb[0].mxu0
      %v3487 = vadd.f32 %v3182, %v3486
      %3488 = vmatprep.mubr.f32.mxu0 0.0
      %v3489 = vand.u32 %v308, 4294901760
      %3490 = vmatmul.mubr.f32.gmra.mrb[0].mxu0 %v3489
      %v3491 = vpop.f32.mrb[0].mxu0
      %v3492 = vadd.f32 %v3191, %v3491
      %v3493 = vpop.f32.mrb[0].mxu0
      %v3494 = vadd.f32 %v3193, %v3493
      %3495 = vmatprep.mubr.f32.mxu0 0.0
      %v3496 = vand.u32 %v311, 4294901760
      %3497 = vmatmul.mubr.f32.gmra.mrb[0].mxu0 %v3496
      %v3498 = vpop.f32.mrb[0].mxu0
      %v3499 = vadd.f32 %v3202, %v3498
      %v3500 = vpop.f32.mrb[0].mxu0
      %v3501 = vadd.f32 %v3204, %v3500
      %3502 = vmatprep.mubr.f32.mxu0 0.0
      %v3503 = vand.u32 %v314, 4294901760
      %3504 = vmatmul.mubr.f32.gmra.mrb[0].mxu0 %v3503
      %v3505 = vpop.f32.mrb[0].mxu0
      %v3506 = vadd.f32 %v3213, %v3505
      %v3507 = vpop.f32.mrb[0].mxu0
      %v3508 = vadd.f32 %v3215, %v3507
      %3509 = vmatprep.mubr.f32.mxu0 0.0
      %v3510 = vand.u32 %v317, 4294901760
      %3511 = vmatmul.mubr.f32.gmra.mrb[0].mxu0 %v3510
      %v3512 = vpop.f32.mrb[0].mxu0
      %v3513 = vadd.f32 %v3224, %v3512
      %v3514 = vpop.f32.mrb[0].mxu0
      %v3515 = vadd.f32 %v3226, %v3514
      %3516 = vdwg.mxu0
      %v3517 = vand.u32 %v149, 4294901760
      %v3518 = vsub.f32 %v149, %v3517
      %3519 = vmatprep.subr.mxu0 %v3518
      %v3520 = vand.u32 %v148, 4294901760
      %v3521 = vsub.f32 %v148, %v3520
      %3522 = vmatpush1.msra.mxu0 %v3521
      %v3523 = vand.u32 %v158, 4294901760
      %v3524 = vsub.f32 %v158, %v3523
      %3525 = vmatprep.subr.mxu0 %v3524
      %v3526 = vand.u32 %v157, 4294901760
      %v3527 = vsub.f32 %v157, %v3526
      %3528 = vmatpush1.msra.mxu0 %v3527
      %v3529 = vand.u32 %v167, 4294901760
      %v3530 = vsub.f32 %v167, %v3529
      %3531 = vmatprep.subr.mxu0 %v3530
      %v3532 = vand.u32 %v166, 4294901760
      %v3533 = vsub.f32 %v166, %v3532
      %3534 = vmatpush1.msra.mxu0 %v3533
      %v3535 = vand.u32 %v176, 4294901760
      %v3536 = vsub.f32 %v176, %v3535
      %3537 = vmatprep.subr.mxu0 %v3536
      %v3538 = vand.u32 %v175, 4294901760
      %v3539 = vsub.f32 %v175, %v3538
      %3540 = vmatpush1.msra.mxu0 %v3539
      %v3541 = vand.u32 %v185, 4294901760
      %v3542 = vsub.f32 %v185, %v3541
      %3543 = vmatprep.subr.mxu0 %v3542
      %v3544 = vand.u32 %v184, 4294901760
      %v3545 = vsub.f32 %v184, %v3544
      %3546 = vmatpush1.msra.mxu0 %v3545
      %v3547 = vand.u32 %v194, 4294901760
      %v3548 = vsub.f32 %v194, %v3547
      %3549 = vmatprep.subr.mxu0 %v3548
      %v3550 = vand.u32 %v193, 4294901760
      %v3551 = vsub.f32 %v193, %v3550
      %3552 = vmatpush1.msra.mxu0 %v3551
      %v3553 = vand.u32 %v203, 4294901760
      %v3554 = vsub.f32 %v203, %v3553
      %3555 = vmatprep.subr.mxu0 %v3554
      %v3556 = vand.u32 %v202, 4294901760
      %v3557 = vsub.f32 %v202, %v3556
      %3558 = vmatpush1.msra.mxu0 %v3557
      %v3559 = vand.u32 %v212, 4294901760
      %v3560 = vsub.f32 %v212, %v3559
      %3561 = vmatprep.subr.mxu0 %v3560
      %v3562 = vand.u32 %v211, 4294901760
      %v3563 = vsub.f32 %v211, %v3562
      %3564 = vmatpush1.msra.mxu0 %v3563
      %v3565 = vand.u32 %v221, 4294901760
      %v3566 = vsub.f32 %v221, %v3565
      %3567 = vmatprep.subr.mxu0 %v3566
      %v3568 = vand.u32 %v220, 4294901760
      %v3569 = vsub.f32 %v220, %v3568
      %3570 = vmatpush1.msra.mxu0 %v3569
      %v3571 = vand.u32 %v230, 4294901760
      %v3572 = vsub.f32 %v230, %v3571
      %3573 = vmatprep.subr.mxu0 %v3572
      %v3574 = vand.u32 %v229, 4294901760
      %v3575 = vsub.f32 %v229, %v3574
      %3576 = vmatpush1.msra.mxu0 %v3575
      %v3577 = vand.u32 %v239, 4294901760
      %v3578 = vsub.f32 %v239, %v3577
      %3579 = vmatprep.subr.mxu0 %v3578
      %v3580 = vand.u32 %v238, 4294901760
      %v3581 = vsub.f32 %v238, %v3580
      %3582 = vmatpush1.msra.mxu0 %v3581
      %v3583 = vand.u32 %v248, 4294901760
      %v3584 = vsub.f32 %v248, %v3583
      %3585 = vmatprep.subr.mxu0 %v3584
      %v3586 = vand.u32 %v247, 4294901760
      %v3587 = vsub.f32 %v247, %v3586
      %3588 = vmatpush1.msra.mxu0 %v3587
      %v3589 = vand.u32 %v257, 4294901760
      %v3590 = vsub.f32 %v257, %v3589
      %3591 = vmatprep.subr.mxu0 %v3590
      %v3592 = vand.u32 %v256, 4294901760
      %v3593 = vsub.f32 %v256, %v3592
      %3594 = vmatpush1.msra.mxu0 %v3593
      %v3595 = vand.u32 %v266, 4294901760
      %v3596 = vsub.f32 %v266, %v3595
      %3597 = vmatprep.subr.mxu0 %v3596
      %v3598 = vand.u32 %v265, 4294901760
      %v3599 = vsub.f32 %v265, %v3598
      %3600 = vmatpush1.msra.mxu0 %v3599
      %3601 = vmatprep.subr.mxu0 0.0
      %3602 = vmatpush1.msra.mxu0 0.0
      %3603 = vmatprep.subr.mxu0 0.0
      %3604 = vmatpush1.msra.mxu0 0.0
      %3605 = vmatprep.subr.mxu0 0.0
      %3606 = vmatpush1.msra.mxu0 0.0
      %3607 = vmatprep.subr.mxu0 0.0
      %3608 = vmatpush1.msra.mxu0 0.0
      %3609 = vmatprep.subr.mxu0 0.0
      %3610 = vmatpush1.msra.mxu0 0.0
      %3611 = vmatprep.subr.mxu0 0.0
      %3612 = vmatpush1.msra.mxu0 0.0
      %3613 = vmatprep.subr.mxu0 0.0
      %3614 = vmatpush1.msra.mxu0 0.0
      %3615 = vmatprep.subr.mxu0 0.0
      %3616 = vmatpush1.msra.mxu0 0.0
      %3617 = vmatprep.subr.mxu0 0.0
      %3618 = vmatpush1.msra.mxu0 0.0
      %3619 = vmatprep.subr.mxu0 0.0
      %3620 = vmatpush1.msra.mxu0 0.0
      %3621 = vmatprep.subr.mxu0 0.0
      %3622 = vmatpush1.msra.mxu0 0.0
      %3623 = vmatprep.subr.mxu0 0.0
      %3624 = vmatpush1.msra.mxu0 0.0
      %3625 = vmatprep.subr.mxu0 0.0
      %3626 = vmatpush1.msra.mxu0 0.0
      %3627 = vmatprep.subr.mxu0 0.0
      %3628 = vmatpush1.msra.mxu0 0.0
      %3629 = vmatprep.subr.mxu0 0.0
      %3630 = vmatpush1.msra.mxu0 0.0
      %3631 = vmatprep.subr.mxu0 0.0
      %3632 = vmatpush1.msra.mxu0 0.0
      %3633 = vmatprep.subr.mxu0 0.0
      %3634 = vmatpush1.msra.mxu0 0.0
      %3635 = vmatprep.subr.mxu0 0.0
      %3636 = vmatpush1.msra.mxu0 0.0
      %3637 = vmatprep.mubr.f32.mxu0 0.0
      %v3638 = vand.u32 %v284, 4294901760
      %v3639 = vsub.f32 %v284, %v3638
      %3640 = vmatmul.mubr.f32.gmra.mrb[0].mxu0 %v3639
      %v3641 = vpop.f32.mrb[0].mxu0
      %v3642 = vadd.f32 %v3436, %v3641
      %v3643 = vpop.f32.mrb[0].mxu0
      %v3644 = vadd.f32 %v3438, %v3643
      %3645 = vmatprep.mubr.f32.mxu0 0.0
      %v3646 = vand.u32 %v287, 4294901760
      %v3647 = vsub.f32 %v287, %v3646
      %3648 = vmatmul.mubr.f32.gmra.mrb[0].mxu0 %v3647
      %v3649 = vpop.f32.mrb[0].mxu0
      %v3650 = vadd.f32 %v3443, %v3649
      %v3651 = vpop.f32.mrb[0].mxu0
      %v3652 = vadd.f32 %v3445, %v3651
      %3653 = vmatprep.mubr.f32.mxu0 0.0
      %v3654 = vand.u32 %v290, 4294901760
      %v3655 = vsub.f32 %v290, %v3654
      %3656 = vmatmul.mubr.f32.gmra.mrb[0].mxu0 %v3655
      %v3657 = vpop.f32.mrb[0].mxu0
      %v3658 = vadd.f32 %v3450, %v3657
      %v3659 = vpop.f32.mrb[0].mxu0
      %v3660 = vadd.f32 %v3452, %v3659
      %3661 = vmatprep.mubr.f32.mxu0 0.0
      %v3662 = vand.u32 %v293, 4294901760
      %v3663 = vsub.f32 %v293, %v3662
      %3664 = vmatmul.mubr.f32.gmra.mrb[0].mxu0 %v3663
      %v3665 = vpop.f32.mrb[0].mxu0
      %v3666 = vadd.f32 %v3457, %v3665
      %v3667 = vpop.f32.mrb[0].mxu0
      %v3668 = vadd.f32 %v3459, %v3667
      %3669 = vmatprep.mubr.f32.mxu0 0.0
      %v3670 = vand.u32 %v296, 4294901760
      %v3671 = vsub.f32 %v296, %v3670
      %3672 = vmatmul.mubr.f32.gmra.mrb[0].mxu0 %v3671
      %v3673 = vpop.f32.mrb[0].mxu0
      %v3674 = vadd.f32 %v3464, %v3673
      %v3675 = vpop.f32.mrb[0].mxu0
      %v3676 = vadd.f32 %v3466, %v3675
      %3677 = vmatprep.mubr.f32.mxu0 0.0
      %v3678 = vand.u32 %v299, 4294901760
      %v3679 = vsub.f32 %v299, %v3678
      %3680 = vmatmul.mubr.f32.gmra.mrb[0].mxu0 %v3679
      %v3681 = vpop.f32.mrb[0].mxu0
      %v3682 = vadd.f32 %v3471, %v3681
      %v3683 = vpop.f32.mrb[0].mxu0
      %v3684 = vadd.f32 %v3473, %v3683
      %3685 = vmatprep.mubr.f32.mxu0 0.0
      %v3686 = vand.u32 %v302, 4294901760
      %v3687 = vsub.f32 %v302, %v3686
      %3688 = vmatmul.mubr.f32.gmra.mrb[0].mxu0 %v3687
      %v3689 = vpop.f32.mrb[0].mxu0
      %v3690 = vadd.f32 %v3478, %v3689
      %v3691 = vpop.f32.mrb[0].mxu0
      %v3692 = vadd.f32 %v3480, %v3691
      %3693 = vmatprep.mubr.f32.mxu0 0.0
      %v3694 = vand.u32 %v305, 4294901760
      %v3695 = vsub.f32 %v305, %v3694
      %3696 = vmatmul.mubr.f32.gmra.mrb[0].mxu0 %v3695
      %v3697 = vpop.f32.mrb[0].mxu0
      %v3698 = vadd.f32 %v3485, %v3697
      %v3699 = vpop.f32.mrb[0].mxu0
      %v3700 = vadd.f32 %v3487, %v3699
      %3701 = vmatprep.mubr.f32.mxu0 0.0
      %v3702 = vand.u32 %v308, 4294901760
      %v3703 = vsub.f32 %v308, %v3702
      %3704 = vmatmul.mubr.f32.gmra.mrb[0].mxu0 %v3703
      %v3705 = vpop.f32.mrb[0].mxu0
      %v3706 = vadd.f32 %v3492, %v3705
      %v3707 = vpop.f32.mrb[0].mxu0
      %v3708 = vadd.f32 %v3494, %v3707
      %3709 = vmatprep.mubr.f32.mxu0 0.0
      %v3710 = vand.u32 %v311, 4294901760
      %v3711 = vsub.f32 %v311, %v3710
      %3712 = vmatmul.mubr.f32.gmra.mrb[0].mxu0 %v3711
      %v3713 = vpop.f32.mrb[0].mxu0
      %v3714 = vadd.f32 %v3499, %v3713
      %v3715 = vpop.f32.mrb[0].mxu0
      %v3716 = vadd.f32 %v3501, %v3715
      %3717 = vmatprep.mubr.f32.mxu0 0.0
      %v3718 = vand.u32 %v314, 4294901760
      %v3719 = vsub.f32 %v314, %v3718
      %3720 = vmatmul.mubr.f32.gmra.mrb[0].mxu0 %v3719
      %v3721 = vpop.f32.mrb[0].mxu0
      %v3722 = vadd.f32 %v3506, %v3721
      %v3723 = vpop.f32.mrb[0].mxu0
      %v3724 = vadd.f32 %v3508, %v3723
      %3725 = vmatprep.mubr.f32.mxu0 0.0
      %v3726 = vand.u32 %v317, 4294901760
      %v3727 = vsub.f32 %v317, %v3726
      %3728 = vmatmul.mubr.f32.gmra.mrb[0].mxu0 %v3727
      %v3729 = vpop.f32.mrb[0].mxu0
      %v3730 = vadd.f32 %v3513, %v3729
      %v3731 = vpop.f32.mrb[0].mxu0
      %v3732 = vadd.f32 %v3515, %v3731
      %3733 = vdwg.mxu0
      %v3734 = vand.u32 %v149, 4294901760
      %3735 = vmatprep.subr.mxu0 %v3734
      %v3736 = vand.u32 %v148, 4294901760
      %3737 = vmatpush1.msra.mxu0 %v3736
      %v3738 = vand.u32 %v158, 4294901760
      %3739 = vmatprep.subr.mxu0 %v3738
      %v3740 = vand.u32 %v157, 4294901760
      %3741 = vmatpush1.msra.mxu0 %v3740
      %v3742 = vand.u32 %v167, 4294901760
      %3743 = vmatprep.subr.mxu0 %v3742
      %v3744 = vand.u32 %v166, 4294901760
      %3745 = vmatpush1.msra.mxu0 %v3744
      %v3746 = vand.u32 %v176, 4294901760
      %3747 = vmatprep.subr.mxu0 %v3746
      %v3748 = vand.u32 %v175, 4294901760
      %3749 = vmatpush1.msra.mxu0 %v3748
      %v3750 = vand.u32 %v185, 4294901760
      %3751 = vmatprep.subr.mxu0 %v3750
      %v3752 = vand.u32 %v184, 4294901760
      %3753 = vmatpush1.msra.mxu0 %v3752
      %v3754 = vand.u32 %v194, 4294901760
      %3755 = vmatprep.subr.mxu0 %v3754
      %v3756 = vand.u32 %v193, 4294901760
      %3757 = vmatpush1.msra.mxu0 %v3756
      %v3758 = vand.u32 %v203, 4294901760
      %3759 = vmatprep.subr.mxu0 %v3758
      %v3760 = vand.u32 %v202, 4294901760
      %3761 = vmatpush1.msra.mxu0 %v3760
      %v3762 = vand.u32 %v212, 4294901760
      %3763 = vmatprep.subr.mxu0 %v3762
      %v3764 = vand.u32 %v211, 4294901760
      %3765 = vmatpush1.msra.mxu0 %v3764
      %v3766 = vand.u32 %v221, 4294901760
      %3767 = vmatprep.subr.mxu0 %v3766
      %v3768 = vand.u32 %v220, 4294901760
      %3769 = vmatpush1.msra.mxu0 %v3768
      %v3770 = vand.u32 %v230, 4294901760
      %3771 = vmatprep.subr.mxu0 %v3770
      %v3772 = vand.u32 %v229, 4294901760
      %3773 = vmatpush1.msra.mxu0 %v3772
      %v3774 = vand.u32 %v239, 4294901760
      %3775 = vmatprep.subr.mxu0 %v3774
      %v3776 = vand.u32 %v238, 4294901760
      %3777 = vmatpush1.msra.mxu0 %v3776
      %v3778 = vand.u32 %v248, 4294901760
      %3779 = vmatprep.subr.mxu0 %v3778
      %v3780 = vand.u32 %v247, 4294901760
      %3781 = vmatpush1.msra.mxu0 %v3780
      %v3782 = vand.u32 %v257, 4294901760
      %3783 = vmatprep.subr.mxu0 %v3782
      %v3784 = vand.u32 %v256, 4294901760
      %3785 = vmatpush1.msra.mxu0 %v3784
      %v3786 = vand.u32 %v266, 4294901760
      %3787 = vmatprep.subr.mxu0 %v3786
      %v3788 = vand.u32 %v265, 4294901760
      %3789 = vmatpush1.msra.mxu0 %v3788
      %3790 = vmatprep.subr.mxu0 0.0
      %3791 = vmatpush1.msra.mxu0 0.0
      %3792 = vmatprep.subr.mxu0 0.0
      %3793 = vmatpush1.msra.mxu0 0.0
      %3794 = vmatprep.subr.mxu0 0.0
      %3795 = vmatpush1.msra.mxu0 0.0
      %3796 = vmatprep.subr.mxu0 0.0
      %3797 = vmatpush1.msra.mxu0 0.0
      %3798 = vmatprep.subr.mxu0 0.0
      %3799 = vmatpush1.msra.mxu0 0.0
      %3800 = vmatprep.subr.mxu0 0.0
      %3801 = vmatpush1.msra.mxu0 0.0
      %3802 = vmatprep.subr.mxu0 0.0
      %3803 = vmatpush1.msra.mxu0 0.0
      %3804 = vmatprep.subr.mxu0 0.0
      %3805 = vmatpush1.msra.mxu0 0.0
      %3806 = vmatprep.subr.mxu0 0.0
      %3807 = vmatpush1.msra.mxu0 0.0
      %3808 = vmatprep.subr.mxu0 0.0
      %3809 = vmatpush1.msra.mxu0 0.0
      %3810 = vmatprep.subr.mxu0 0.0
      %3811 = vmatpush1.msra.mxu0 0.0
      %3812 = vmatprep.subr.mxu0 0.0
      %3813 = vmatpush1.msra.mxu0 0.0
      %3814 = vmatprep.subr.mxu0 0.0
      %3815 = vmatpush1.msra.mxu0 0.0
      %3816 = vmatprep.subr.mxu0 0.0
      %3817 = vmatpush1.msra.mxu0 0.0
      %3818 = vmatprep.subr.mxu0 0.0
      %3819 = vmatpush1.msra.mxu0 0.0
      %3820 = vmatprep.subr.mxu0 0.0
      %3821 = vmatpush1.msra.mxu0 0.0
      %3822 = vmatprep.subr.mxu0 0.0
      %3823 = vmatpush1.msra.mxu0 0.0
      %3824 = vmatprep.subr.mxu0 0.0
      %3825 = vmatpush1.msra.mxu0 0.0
      %3826 = vmatprep.mubr.f32.mxu0 0.0
      %v3827 = vand.u32 %v284, 4294901760
      %v3828 = vsub.f32 %v284, %v3827
      %v3829 = vand.u32 %v3828, 4294901760
      %3830 = vmatmul.mubr.f32.gmra.mrb[0].mxu0 %v3829
      %v3831 = vpop.f32.mrb[0].mxu0
      %v3832 = vadd.f32 %v3642, %v3831
      %v3833 = vpop.f32.mrb[0].mxu0
      %v3834 = vadd.f32 %v3644, %v3833
      %3835 = vmatprep.mubr.f32.mxu0 0.0
      %v3836 = vand.u32 %v287, 4294901760
      %v3837 = vsub.f32 %v287, %v3836
      %v3838 = vand.u32 %v3837, 4294901760
      %3839 = vmatmul.mubr.f32.gmra.mrb[0].mxu0 %v3838
      %v3840 = vpop.f32.mrb[0].mxu0
      %v3841 = vadd.f32 %v3650, %v3840
      %v3842 = vpop.f32.mrb[0].mxu0
      %v3843 = vadd.f32 %v3652, %v3842
      %3844 = vmatprep.mubr.f32.mxu0 0.0
      %v3845 = vand.u32 %v290, 4294901760
      %v3846 = vsub.f32 %v290, %v3845
      %v3847 = vand.u32 %v3846, 4294901760
      %3848 = vmatmul.mubr.f32.gmra.mrb[0].mxu0 %v3847
      %v3849 = vpop.f32.mrb[0].mxu0
      %v3850 = vadd.f32 %v3658, %v3849
      %v3851 = vpop.f32.mrb[0].mxu0
      %v3852 = vadd.f32 %v3660, %v3851
      %3853 = vmatprep.mubr.f32.mxu0 0.0
      %v3854 = vand.u32 %v293, 4294901760
      %v3855 = vsub.f32 %v293, %v3854
      %v3856 = vand.u32 %v3855, 4294901760
      %3857 = vmatmul.mubr.f32.gmra.mrb[0].mxu0 %v3856
      %v3858 = vpop.f32.mrb[0].mxu0
      %v3859 = vadd.f32 %v3666, %v3858
      %v3860 = vpop.f32.mrb[0].mxu0
      %v3861 = vadd.f32 %v3668, %v3860
      %3862 = vmatprep.mubr.f32.mxu0 0.0
      %v3863 = vand.u32 %v296, 4294901760
      %v3864 = vsub.f32 %v296, %v3863
      %v3865 = vand.u32 %v3864, 4294901760
      %3866 = vmatmul.mubr.f32.gmra.mrb[0].mxu0 %v3865
      %v3867 = vpop.f32.mrb[0].mxu0
      %v3868 = vadd.f32 %v3674, %v3867
      %v3869 = vpop.f32.mrb[0].mxu0
      %v3870 = vadd.f32 %v3676, %v3869
      %3871 = vmatprep.mubr.f32.mxu0 0.0
      %v3872 = vand.u32 %v299, 4294901760
      %v3873 = vsub.f32 %v299, %v3872
      %v3874 = vand.u32 %v3873, 4294901760
      %3875 = vmatmul.mubr.f32.gmra.mrb[0].mxu0 %v3874
      %v3876 = vpop.f32.mrb[0].mxu0
      %v3877 = vadd.f32 %v3682, %v3876
      %v3878 = vpop.f32.mrb[0].mxu0
      %v3879 = vadd.f32 %v3684, %v3878
      %3880 = vmatprep.mubr.f32.mxu0 0.0
      %v3881 = vand.u32 %v302, 4294901760
      %v3882 = vsub.f32 %v302, %v3881
      %v3883 = vand.u32 %v3882, 4294901760
      %3884 = vmatmul.mubr.f32.gmra.mrb[0].mxu0 %v3883
      %v3885 = vpop.f32.mrb[0].mxu0
      %v3886 = vadd.f32 %v3690, %v3885
      %v3887 = vpop.f32.mrb[0].mxu0
      %v3888 = vadd.f32 %v3692, %v3887
      %3889 = vmatprep.mubr.f32.mxu0 0.0
      %v3890 = vand.u32 %v305, 4294901760
      %v3891 = vsub.f32 %v305, %v3890
      %v3892 = vand.u32 %v3891, 4294901760
      %3893 = vmatmul.mubr.f32.gmra.mrb[0].mxu0 %v3892
      %v3894 = vpop.f32.mrb[0].mxu0
      %v3895 = vadd.f32 %v3698, %v3894
      %v3896 = vpop.f32.mrb[0].mxu0
      %v3897 = vadd.f32 %v3700, %v3896
      %3898 = vmatprep.mubr.f32.mxu0 0.0
      %v3899 = vand.u32 %v308, 4294901760
      %v3900 = vsub.f32 %v308, %v3899
      %v3901 = vand.u32 %v3900, 4294901760
      %3902 = vmatmul.mubr.f32.gmra.mrb[0].mxu0 %v3901
      %v3903 = vpop.f32.mrb[0].mxu0
      %v3904 = vadd.f32 %v3706, %v3903
      %v3905 = vpop.f32.mrb[0].mxu0
      %v3906 = vadd.f32 %v3708, %v3905
      %3907 = vmatprep.mubr.f32.mxu0 0.0
      %v3908 = vand.u32 %v311, 4294901760
      %v3909 = vsub.f32 %v311, %v3908
      %v3910 = vand.u32 %v3909, 4294901760
      %3911 = vmatmul.mubr.f32.gmra.mrb[0].mxu0 %v3910
      %v3912 = vpop.f32.mrb[0].mxu0
      %v3913 = vadd.f32 %v3714, %v3912
      %v3914 = vpop.f32.mrb[0].mxu0
      %v3915 = vadd.f32 %v3716, %v3914
      %3916 = vmatprep.mubr.f32.mxu0 0.0
      %v3917 = vand.u32 %v314, 4294901760
      %v3918 = vsub.f32 %v314, %v3917
      %v3919 = vand.u32 %v3918, 4294901760
      %3920 = vmatmul.mubr.f32.gmra.mrb[0].mxu0 %v3919
      %v3921 = vpop.f32.mrb[0].mxu0
      %v3922 = vadd.f32 %v3722, %v3921
      %v3923 = vpop.f32.mrb[0].mxu0
      %v3924 = vadd.f32 %v3724, %v3923
      %3925 = vmatprep.mubr.f32.mxu0 0.0
      %v3926 = vand.u32 %v317, 4294901760
      %v3927 = vsub.f32 %v317, %v3926
      %v3928 = vand.u32 %v3927, 4294901760
      %3929 = vmatmul.mubr.f32.gmra.mrb[0].mxu0 %v3928
      %v3930 = vpop.f32.mrb[0].mxu0
      %v3931 = vadd.f32 %v3730, %v3930
      %v3932 = vpop.f32.mrb[0].mxu0
      %v3933 = vadd.f32 %v3732, %v3932
      %3934 = vdwg.mxu0
      %v3935 = vand.u32 %v149, 4294901760
      %v3936 = vsub.f32 %v149, %v3935
      %v3937 = vand.u32 %v3936, 4294901760
      %3938 = vmatprep.subr.mxu0 %v3937
      %v3939 = vand.u32 %v148, 4294901760
      %v3940 = vsub.f32 %v148, %v3939
      %v3941 = vand.u32 %v3940, 4294901760
      %3942 = vmatpush1.msra.mxu0 %v3941
      %v3943 = vand.u32 %v158, 4294901760
      %v3944 = vsub.f32 %v158, %v3943
      %v3945 = vand.u32 %v3944, 4294901760
      %3946 = vmatprep.subr.mxu0 %v3945
      %v3947 = vand.u32 %v157, 4294901760
      %v3948 = vsub.f32 %v157, %v3947
      %v3949 = vand.u32 %v3948, 4294901760
      %3950 = vmatpush1.msra.mxu0 %v3949
      %v3951 = vand.u32 %v167, 4294901760
      %v3952 = vsub.f32 %v167, %v3951
      %v3953 = vand.u32 %v3952, 4294901760
      %3954 = vmatprep.subr.mxu0 %v3953
      %v3955 = vand.u32 %v166, 4294901760
      %v3956 = vsub.f32 %v166, %v3955
      %v3957 = vand.u32 %v3956, 4294901760
      %3958 = vmatpush1.msra.mxu0 %v3957
      %v3959 = vand.u32 %v176, 4294901760
      %v3960 = vsub.f32 %v176, %v3959
      %v3961 = vand.u32 %v3960, 4294901760
      %3962 = vmatprep.subr.mxu0 %v3961
      %v3963 = vand.u32 %v175, 4294901760
      %v3964 = vsub.f32 %v175, %v3963
      %v3965 = vand.u32 %v3964, 4294901760
      %3966 = vmatpush1.msra.mxu0 %v3965
      %v3967 = vand.u32 %v185, 4294901760
      %v3968 = vsub.f32 %v185, %v3967
      %v3969 = vand.u32 %v3968, 4294901760
      %3970 = vmatprep.subr.mxu0 %v3969
      %v3971 = vand.u32 %v184, 4294901760
      %v3972 = vsub.f32 %v184, %v3971
      %v3973 = vand.u32 %v3972, 4294901760
      %3974 = vmatpush1.msra.mxu0 %v3973
      %v3975 = vand.u32 %v194, 4294901760
      %v3976 = vsub.f32 %v194, %v3975
      %v3977 = vand.u32 %v3976, 4294901760
      %3978 = vmatprep.subr.mxu0 %v3977
      %v3979 = vand.u32 %v193, 4294901760
      %v3980 = vsub.f32 %v193, %v3979
      %v3981 = vand.u32 %v3980, 4294901760
      %3982 = vmatpush1.msra.mxu0 %v3981
      %v3983 = vand.u32 %v203, 4294901760
      %v3984 = vsub.f32 %v203, %v3983
      %v3985 = vand.u32 %v3984, 4294901760
      %3986 = vmatprep.subr.mxu0 %v3985
      %v3987 = vand.u32 %v202, 4294901760
      %v3988 = vsub.f32 %v202, %v3987
      %v3989 = vand.u32 %v3988, 4294901760
      %3990 = vmatpush1.msra.mxu0 %v3989
      %v3991 = vand.u32 %v212, 4294901760
      %v3992 = vsub.f32 %v212, %v3991
      %v3993 = vand.u32 %v3992, 4294901760
      %3994 = vmatprep.subr.mxu0 %v3993
      %v3995 = vand.u32 %v211, 4294901760
      %v3996 = vsub.f32 %v211, %v3995
      %v3997 = vand.u32 %v3996, 4294901760
      %3998 = vmatpush1.msra.mxu0 %v3997
      %v3999 = vand.u32 %v221, 4294901760
      %v4000 = vsub.f32 %v221, %v3999
      %v4001 = vand.u32 %v4000, 4294901760
      %4002 = vmatprep.subr.mxu0 %v4001
      %v4003 = vand.u32 %v220, 4294901760
      %v4004 = vsub.f32 %v220, %v4003
      %v4005 = vand.u32 %v4004, 4294901760
      %4006 = vmatpush1.msra.mxu0 %v4005
      %v4007 = vand.u32 %v230, 4294901760
      %v4008 = vsub.f32 %v230, %v4007
      %v4009 = vand.u32 %v4008, 4294901760
      %4010 = vmatprep.subr.mxu0 %v4009
      %v4011 = vand.u32 %v229, 4294901760
      %v4012 = vsub.f32 %v229, %v4011
      %v4013 = vand.u32 %v4012, 4294901760
      %4014 = vmatpush1.msra.mxu0 %v4013
      %v4015 = vand.u32 %v239, 4294901760
      %v4016 = vsub.f32 %v239, %v4015
      %v4017 = vand.u32 %v4016, 4294901760
      %4018 = vmatprep.subr.mxu0 %v4017
      %v4019 = vand.u32 %v238, 4294901760
      %v4020 = vsub.f32 %v238, %v4019
      %v4021 = vand.u32 %v4020, 4294901760
      %4022 = vmatpush1.msra.mxu0 %v4021
      %v4023 = vand.u32 %v248, 4294901760
      %v4024 = vsub.f32 %v248, %v4023
      %v4025 = vand.u32 %v4024, 4294901760
      %4026 = vmatprep.subr.mxu0 %v4025
      %v4027 = vand.u32 %v247, 4294901760
      %v4028 = vsub.f32 %v247, %v4027
      %v4029 = vand.u32 %v4028, 4294901760
      %4030 = vmatpush1.msra.mxu0 %v4029
      %v4031 = vand.u32 %v257, 4294901760
      %v4032 = vsub.f32 %v257, %v4031
      %v4033 = vand.u32 %v4032, 4294901760
      %4034 = vmatprep.subr.mxu0 %v4033
      %v4035 = vand.u32 %v256, 4294901760
      %v4036 = vsub.f32 %v256, %v4035
      %v4037 = vand.u32 %v4036, 4294901760
      %4038 = vmatpush1.msra.mxu0 %v4037
      %v4039 = vand.u32 %v266, 4294901760
      %v4040 = vsub.f32 %v266, %v4039
      %v4041 = vand.u32 %v4040, 4294901760
      %4042 = vmatprep.subr.mxu0 %v4041
      %v4043 = vand.u32 %v265, 4294901760
      %v4044 = vsub.f32 %v265, %v4043
      %v4045 = vand.u32 %v4044, 4294901760
      %4046 = vmatpush1.msra.mxu0 %v4045
      %4047 = vmatprep.subr.mxu0 0.0
      %4048 = vmatpush1.msra.mxu0 0.0
      %4049 = vmatprep.subr.mxu0 0.0
      %4050 = vmatpush1.msra.mxu0 0.0
      %4051 = vmatprep.subr.mxu0 0.0
      %4052 = vmatpush1.msra.mxu0 0.0
      %4053 = vmatprep.subr.mxu0 0.0
      %4054 = vmatpush1.msra.mxu0 0.0
      %4055 = vmatprep.subr.mxu0 0.0
      %4056 = vmatpush1.msra.mxu0 0.0
      %4057 = vmatprep.subr.mxu0 0.0
      %4058 = vmatpush1.msra.mxu0 0.0
      %4059 = vmatprep.subr.mxu0 0.0
      %4060 = vmatpush1.msra.mxu0 0.0
      %4061 = vmatprep.subr.mxu0 0.0
      %4062 = vmatpush1.msra.mxu0 0.0
      %4063 = vmatprep.subr.mxu0 0.0
      %4064 = vmatpush1.msra.mxu0 0.0
      %4065 = vmatprep.subr.mxu0 0.0
      %4066 = vmatpush1.msra.mxu0 0.0
      %4067 = vmatprep.subr.mxu0 0.0
      %4068 = vmatpush1.msra.mxu0 0.0
      %4069 = vmatprep.subr.mxu0 0.0
      %4070 = vmatpush1.msra.mxu0 0.0
      %4071 = vmatprep.subr.mxu0 0.0
      %4072 = vmatpush1.msra.mxu0 0.0
      %4073 = vmatprep.subr.mxu0 0.0
      %4074 = vmatpush1.msra.mxu0 0.0
      %4075 = vmatprep.subr.mxu0 0.0
      %4076 = vmatpush1.msra.mxu0 0.0
      %4077 = vmatprep.subr.mxu0 0.0
      %4078 = vmatpush1.msra.mxu0 0.0
      %4079 = vmatprep.subr.mxu0 0.0
      %4080 = vmatpush1.msra.mxu0 0.0
      %4081 = vmatprep.subr.mxu0 0.0
      %4082 = vmatpush1.msra.mxu0 0.0
      %4083 = vmatprep.mubr.f32.mxu0 0.0
      %v4084 = vand.u32 %v284, 4294901760
      %4085 = vmatmul.mubr.f32.gmra.mrb[0].mxu0 %v4084
      %v4086 = vpop.f32.mrb[0].mxu0
      %v4087 = vadd.f32 %v3832, %v4086
      %v4088 = vpop.f32.mrb[0].mxu0
      %v4089 = vadd.f32 %v3834, %v4088
      %4090 = vmatprep.mubr.f32.mxu0 0.0
      %v4091 = vand.u32 %v287, 4294901760
      %4092 = vmatmul.mubr.f32.gmra.mrb[0].mxu0 %v4091
      %v4093 = vpop.f32.mrb[0].mxu0
      %v4094 = vadd.f32 %v3841, %v4093
      %v4095 = vpop.f32.mrb[0].mxu0
      %v4096 = vadd.f32 %v3843, %v4095
      %4097 = vmatprep.mubr.f32.mxu0 0.0
      %v4098 = vand.u32 %v290, 4294901760
      %4099 = vmatmul.mubr.f32.gmra.mrb[0].mxu0 %v4098
      %v4100 = vpop.f32.mrb[0].mxu0
      %v4101 = vadd.f32 %v3850, %v4100
      %v4102 = vpop.f32.mrb[0].mxu0
      %v4103 = vadd.f32 %v3852, %v4102
      %4104 = vmatprep.mubr.f32.mxu0 0.0
      %v4105 = vand.u32 %v293, 4294901760
      %4106 = vmatmul.mubr.f32.gmra.mrb[0].mxu0 %v4105
      %v4107 = vpop.f32.mrb[0].mxu0
      %v4108 = vadd.f32 %v3859, %v4107
      %v4109 = vpop.f32.mrb[0].mxu0
      %v4110 = vadd.f32 %v3861, %v4109
      %4111 = vmatprep.mubr.f32.mxu0 0.0
      %v4112 = vand.u32 %v296, 4294901760
      %4113 = vmatmul.mubr.f32.gmra.mrb[0].mxu0 %v4112
      %v4114 = vpop.f32.mrb[0].mxu0
      %v4115 = vadd.f32 %v3868, %v4114
      %v4116 = vpop.f32.mrb[0].mxu0
      %v4117 = vadd.f32 %v3870, %v4116
      %4118 = vmatprep.mubr.f32.mxu0 0.0
      %v4119 = vand.u32 %v299, 4294901760
      %4120 = vmatmul.mubr.f32.gmra.mrb[0].mxu0 %v4119
      %v4121 = vpop.f32.mrb[0].mxu0
      %v4122 = vadd.f32 %v3877, %v4121
      %v4123 = vpop.f32.mrb[0].mxu0
      %v4124 = vadd.f32 %v3879, %v4123
      %4125 = vmatprep.mubr.f32.mxu0 0.0
      %v4126 = vand.u32 %v302, 4294901760
      %4127 = vmatmul.mubr.f32.gmra.mrb[0].mxu0 %v4126
      %v4128 = vpop.f32.mrb[0].mxu0
      %v4129 = vadd.f32 %v3886, %v4128
      %v4130 = vpop.f32.mrb[0].mxu0
      %v4131 = vadd.f32 %v3888, %v4130
      %4132 = vmatprep.mubr.f32.mxu0 0.0
      %v4133 = vand.u32 %v305, 4294901760
      %4134 = vmatmul.mubr.f32.gmra.mrb[0].mxu0 %v4133
      %v4135 = vpop.f32.mrb[0].mxu0
      %v4136 = vadd.f32 %v3895, %v4135
      %v4137 = vpop.f32.mrb[0].mxu0
      %v4138 = vadd.f32 %v3897, %v4137
      %4139 = vmatprep.mubr.f32.mxu0 0.0
      %v4140 = vand.u32 %v308, 4294901760
      %4141 = vmatmul.mubr.f32.gmra.mrb[0].mxu0 %v4140
      %v4142 = vpop.f32.mrb[0].mxu0
      %v4143 = vadd.f32 %v3904, %v4142
      %v4144 = vpop.f32.mrb[0].mxu0
      %v4145 = vadd.f32 %v3906, %v4144
      %4146 = vmatprep.mubr.f32.mxu0 0.0
      %v4147 = vand.u32 %v311, 4294901760
      %4148 = vmatmul.mubr.f32.gmra.mrb[0].mxu0 %v4147
      %v4149 = vpop.f32.mrb[0].mxu0
      %v4150 = vadd.f32 %v3913, %v4149
      %v4151 = vpop.f32.mrb[0].mxu0
      %v4152 = vadd.f32 %v3915, %v4151
      %4153 = vmatprep.mubr.f32.mxu0 0.0
      %v4154 = vand.u32 %v314, 4294901760
      %4155 = vmatmul.mubr.f32.gmra.mrb[0].mxu0 %v4154
      %v4156 = vpop.f32.mrb[0].mxu0
      %v4157 = vadd.f32 %v3922, %v4156
      %v4158 = vpop.f32.mrb[0].mxu0
      %v4159 = vadd.f32 %v3924, %v4158
      %4160 = vmatprep.mubr.f32.mxu0 0.0
      %v4161 = vand.u32 %v317, 4294901760
      %4162 = vmatmul.mubr.f32.gmra.mrb[0].mxu0 %v4161
      %v4163 = vpop.f32.mrb[0].mxu0
      %v4164 = vadd.f32 %v3931, %v4163
      %v4165 = vpop.f32.mrb[0].mxu0
      %v4166 = vadd.f32 %v3933, %v4165
      %4167 = vdwg.mxu0
      %v4168 = vand.u32 %v149, 4294901760
      %4169 = vmatprep.subr.mxu0 %v4168
      %v4170 = vand.u32 %v148, 4294901760
      %4171 = vmatpush1.msra.mxu0 %v4170
      %v4172 = vand.u32 %v158, 4294901760
      %4173 = vmatprep.subr.mxu0 %v4172
      %v4174 = vand.u32 %v157, 4294901760
      %4175 = vmatpush1.msra.mxu0 %v4174
      %v4176 = vand.u32 %v167, 4294901760
      %4177 = vmatprep.subr.mxu0 %v4176
      %v4178 = vand.u32 %v166, 4294901760
      %4179 = vmatpush1.msra.mxu0 %v4178
      %v4180 = vand.u32 %v176, 4294901760
      %4181 = vmatprep.subr.mxu0 %v4180
      %v4182 = vand.u32 %v175, 4294901760
      %4183 = vmatpush1.msra.mxu0 %v4182
      %v4184 = vand.u32 %v185, 4294901760
      %4185 = vmatprep.subr.mxu0 %v4184
      %v4186 = vand.u32 %v184, 4294901760
      %4187 = vmatpush1.msra.mxu0 %v4186
      %v4188 = vand.u32 %v194, 4294901760
      %4189 = vmatprep.subr.mxu0 %v4188
      %v4190 = vand.u32 %v193, 4294901760
      %4191 = vmatpush1.msra.mxu0 %v4190
      %v4192 = vand.u32 %v203, 4294901760
      %4193 = vmatprep.subr.mxu0 %v4192
      %v4194 = vand.u32 %v202, 4294901760
      %4195 = vmatpush1.msra.mxu0 %v4194
      %v4196 = vand.u32 %v212, 4294901760
      %4197 = vmatprep.subr.mxu0 %v4196
      %v4198 = vand.u32 %v211, 4294901760
      %4199 = vmatpush1.msra.mxu0 %v4198
      %v4200 = vand.u32 %v221, 4294901760
      %4201 = vmatprep.subr.mxu0 %v4200
      %v4202 = vand.u32 %v220, 4294901760
      %4203 = vmatpush1.msra.mxu0 %v4202
      %v4204 = vand.u32 %v230, 4294901760
      %4205 = vmatprep.subr.mxu0 %v4204
      %v4206 = vand.u32 %v229, 4294901760
      %4207 = vmatpush1.msra.mxu0 %v4206
      %v4208 = vand.u32 %v239, 4294901760
      %4209 = vmatprep.subr.mxu0 %v4208
      %v4210 = vand.u32 %v238, 4294901760
      %4211 = vmatpush1.msra.mxu0 %v4210
      %v4212 = vand.u32 %v248, 4294901760
      %4213 = vmatprep.subr.mxu0 %v4212
      %v4214 = vand.u32 %v247, 4294901760
      %4215 = vmatpush1.msra.mxu0 %v4214
      %v4216 = vand.u32 %v257, 4294901760
      %4217 = vmatprep.subr.mxu0 %v4216
      %v4218 = vand.u32 %v256, 4294901760
      %4219 = vmatpush1.msra.mxu0 %v4218
      %v4220 = vand.u32 %v266, 4294901760
      %4221 = vmatprep.subr.mxu0 %v4220
      %v4222 = vand.u32 %v265, 4294901760
      %4223 = vmatpush1.msra.mxu0 %v4222
      %4224 = vmatprep.subr.mxu0 0.0
      %4225 = vmatpush1.msra.mxu0 0.0
      %4226 = vmatprep.subr.mxu0 0.0
      %4227 = vmatpush1.msra.mxu0 0.0
      %4228 = vmatprep.subr.mxu0 0.0
      %4229 = vmatpush1.msra.mxu0 0.0
      %4230 = vmatprep.subr.mxu0 0.0
      %4231 = vmatpush1.msra.mxu0 0.0
      %4232 = vmatprep.subr.mxu0 0.0
      %4233 = vmatpush1.msra.mxu0 0.0
      %4234 = vmatprep.subr.mxu0 0.0
      %4235 = vmatpush1.msra.mxu0 0.0
      %4236 = vmatprep.subr.mxu0 0.0
      %4237 = vmatpush1.msra.mxu0 0.0
      %4238 = vmatprep.subr.mxu0 0.0
      %4239 = vmatpush1.msra.mxu0 0.0
      %4240 = vmatprep.subr.mxu0 0.0
      %4241 = vmatpush1.msra.mxu0 0.0
      %4242 = vmatprep.subr.mxu0 0.0
      %4243 = vmatpush1.msra.mxu0 0.0
      %4244 = vmatprep.subr.mxu0 0.0
      %4245 = vmatpush1.msra.mxu0 0.0
      %4246 = vmatprep.subr.mxu0 0.0
      %4247 = vmatpush1.msra.mxu0 0.0
      %4248 = vmatprep.subr.mxu0 0.0
      %4249 = vmatpush1.msra.mxu0 0.0
      %4250 = vmatprep.subr.mxu0 0.0
      %4251 = vmatpush1.msra.mxu0 0.0
      %4252 = vmatprep.subr.mxu0 0.0
      %4253 = vmatpush1.msra.mxu0 0.0
      %4254 = vmatprep.subr.mxu0 0.0
      %4255 = vmatpush1.msra.mxu0 0.0
      %4256 = vmatprep.subr.mxu0 0.0
      %4257 = vmatpush1.msra.mxu0 0.0
      %4258 = vmatprep.subr.mxu0 0.0
      %4259 = vmatpush1.msra.mxu0 0.0
      %4260 = vmatprep.mubr.f32.mxu0 0.0
      %v4261 = vand.u32 %v284, 4294901760
      %4262 = vmatmul.mubr.f32.gmra.mrb[0].mxu0 %v4261
      %v4263 = vpop.f32.mrb[0].mxu0
      %v4264 = vadd.f32 %v4087, %v4263
      %v4265 = vpop.f32.mrb[0].mxu0
      %v4266 = vadd.f32 %v4089, %v4265
      %4267 = vmatprep.mubr.f32.mxu0 0.0
      %v4268 = vand.u32 %v287, 4294901760
      %4269 = vmatmul.mubr.f32.gmra.mrb[0].mxu0 %v4268
      %v4270 = vpop.f32.mrb[0].mxu0
      %v4271 = vadd.f32 %v4094, %v4270
      %v4272 = vpop.f32.mrb[0].mxu0
      %v4273 = vadd.f32 %v4096, %v4272
      %4274 = vmatprep.mubr.f32.mxu0 0.0
      %v4275 = vand.u32 %v290, 4294901760
      %4276 = vmatmul.mubr.f32.gmra.mrb[0].mxu0 %v4275
      %v4277 = vpop.f32.mrb[0].mxu0
      %v4278 = vadd.f32 %v4101, %v4277
      %v4279 = vpop.f32.mrb[0].mxu0
      %v4280 = vadd.f32 %v4103, %v4279
      %4281 = vmatprep.mubr.f32.mxu0 0.0
      %v4282 = vand.u32 %v293, 4294901760
      %4283 = vmatmul.mubr.f32.gmra.mrb[0].mxu0 %v4282
      %v4284 = vpop.f32.mrb[0].mxu0
      %v4285 = vadd.f32 %v4108, %v4284
      %v4286 = vpop.f32.mrb[0].mxu0
      %v4287 = vadd.f32 %v4110, %v4286
      %4288 = vmatprep.mubr.f32.mxu0 0.0
      %v4289 = vand.u32 %v296, 4294901760
      %4290 = vmatmul.mubr.f32.gmra.mrb[0].mxu0 %v4289
      %v4291 = vpop.f32.mrb[0].mxu0
      %v4292 = vadd.f32 %v4115, %v4291
      %v4293 = vpop.f32.mrb[0].mxu0
      %v4294 = vadd.f32 %v4117, %v4293
      %4295 = vmatprep.mubr.f32.mxu0 0.0
      %v4296 = vand.u32 %v299, 4294901760
      %4297 = vmatmul.mubr.f32.gmra.mrb[0].mxu0 %v4296
      %v4298 = vpop.f32.mrb[0].mxu0
      %v4299 = vadd.f32 %v4122, %v4298
      %v4300 = vpop.f32.mrb[0].mxu0
      %v4301 = vadd.f32 %v4124, %v4300
      %4302 = vmatprep.mubr.f32.mxu0 0.0
      %v4303 = vand.u32 %v302, 4294901760
      %4304 = vmatmul.mubr.f32.gmra.mrb[0].mxu0 %v4303
      %v4305 = vpop.f32.mrb[0].mxu0
      %v4306 = vadd.f32 %v4129, %v4305
      %v4307 = vpop.f32.mrb[0].mxu0
      %v4308 = vadd.f32 %v4131, %v4307
      %4309 = vmatprep.mubr.f32.mxu0 0.0
      %v4310 = vand.u32 %v305, 4294901760
      %4311 = vmatmul.mubr.f32.gmra.mrb[0].mxu0 %v4310
      %v4312 = vpop.f32.mrb[0].mxu0
      %v4313 = vadd.f32 %v4136, %v4312
      %v4314 = vpop.f32.mrb[0].mxu0
      %v4315 = vadd.f32 %v4138, %v4314
      %4316 = vmatprep.mubr.f32.mxu0 0.0
      %v4317 = vand.u32 %v308, 4294901760
      %4318 = vmatmul.mubr.f32.gmra.mrb[0].mxu0 %v4317
      %v4319 = vpop.f32.mrb[0].mxu0
      %v4320 = vadd.f32 %v4143, %v4319
      %v4321 = vpop.f32.mrb[0].mxu0
      %v4322 = vadd.f32 %v4145, %v4321
      %4323 = vmatprep.mubr.f32.mxu0 0.0
      %v4324 = vand.u32 %v311, 4294901760
      %4325 = vmatmul.mubr.f32.gmra.mrb[0].mxu0 %v4324
      %v4326 = vpop.f32.mrb[0].mxu0
      %v4327 = vadd.f32 %v4150, %v4326
      %v4328 = vpop.f32.mrb[0].mxu0
      %v4329 = vadd.f32 %v4152, %v4328
      %4330 = vmatprep.mubr.f32.mxu0 0.0
      %v4331 = vand.u32 %v314, 4294901760
      %4332 = vmatmul.mubr.f32.gmra.mrb[0].mxu0 %v4331
      %v4333 = vpop.f32.mrb[0].mxu0
      %v4334 = vadd.f32 %v4157, %v4333
      %v4335 = vpop.f32.mrb[0].mxu0
      %v4336 = vadd.f32 %v4159, %v4335
      %4337 = vmatprep.mubr.f32.mxu0 0.0
      %v4338 = vand.u32 %v317, 4294901760
      %4339 = vmatmul.mubr.f32.gmra.mrb[0].mxu0 %v4338
      %v4340 = vpop.f32.mrb[0].mxu0
      %v4341 = vadd.f32 %v4164, %v4340
      %v4342 = vpop.f32.mrb[0].mxu0
      %v4343 = vadd.f32 %v4166, %v4342
      %4344 = vdwg.mxu0
      %v4345 = vand.u32 %v151, 4294901760
      %4346 = vmatprep.subr.mxu0 %v4345
      %v4347 = vand.u32 %v150, 4294901760
      %4348 = vmatpush1.msra.mxu0 %v4347
      %v4349 = vand.u32 %v160, 4294901760
      %4350 = vmatprep.subr.mxu0 %v4349
      %v4351 = vand.u32 %v159, 4294901760
      %4352 = vmatpush1.msra.mxu0 %v4351
      %v4353 = vand.u32 %v169, 4294901760
      %4354 = vmatprep.subr.mxu0 %v4353
      %v4355 = vand.u32 %v168, 4294901760
      %4356 = vmatpush1.msra.mxu0 %v4355
      %v4357 = vand.u32 %v178, 4294901760
      %4358 = vmatprep.subr.mxu0 %v4357
      %v4359 = vand.u32 %v177, 4294901760
      %4360 = vmatpush1.msra.mxu0 %v4359
      %v4361 = vand.u32 %v187, 4294901760
      %4362 = vmatprep.subr.mxu0 %v4361
      %v4363 = vand.u32 %v186, 4294901760
      %4364 = vmatpush1.msra.mxu0 %v4363
      %v4365 = vand.u32 %v196, 4294901760
      %4366 = vmatprep.subr.mxu0 %v4365
      %v4367 = vand.u32 %v195, 4294901760
      %4368 = vmatpush1.msra.mxu0 %v4367
      %v4369 = vand.u32 %v205, 4294901760
      %4370 = vmatprep.subr.mxu0 %v4369
      %v4371 = vand.u32 %v204, 4294901760
      %4372 = vmatpush1.msra.mxu0 %v4371
      %v4373 = vand.u32 %v214, 4294901760
      %4374 = vmatprep.subr.mxu0 %v4373
      %v4375 = vand.u32 %v213, 4294901760
      %4376 = vmatpush1.msra.mxu0 %v4375
      %v4377 = vand.u32 %v223, 4294901760
      %4378 = vmatprep.subr.mxu0 %v4377
      %v4379 = vand.u32 %v222, 4294901760
      %4380 = vmatpush1.msra.mxu0 %v4379
      %v4381 = vand.u32 %v232, 4294901760
      %4382 = vmatprep.subr.mxu0 %v4381
      %v4383 = vand.u32 %v231, 4294901760
      %4384 = vmatpush1.msra.mxu0 %v4383
      %v4385 = vand.u32 %v241, 4294901760
      %4386 = vmatprep.subr.mxu0 %v4385
      %v4387 = vand.u32 %v240, 4294901760
      %4388 = vmatpush1.msra.mxu0 %v4387
      %v4389 = vand.u32 %v250, 4294901760
      %4390 = vmatprep.subr.mxu0 %v4389
      %v4391 = vand.u32 %v249, 4294901760
      %4392 = vmatpush1.msra.mxu0 %v4391
      %v4393 = vand.u32 %v259, 4294901760
      %4394 = vmatprep.subr.mxu0 %v4393
      %v4395 = vand.u32 %v258, 4294901760
      %4396 = vmatpush1.msra.mxu0 %v4395
      %v4397 = vand.u32 %v268, 4294901760
      %4398 = vmatprep.subr.mxu0 %v4397
      %v4399 = vand.u32 %v267, 4294901760
      %4400 = vmatpush1.msra.mxu0 %v4399
      %4401 = vmatprep.subr.mxu0 0.0
      %4402 = vmatpush1.msra.mxu0 0.0
      %4403 = vmatprep.subr.mxu0 0.0
      %4404 = vmatpush1.msra.mxu0 0.0
      %4405 = vmatprep.subr.mxu0 0.0
      %4406 = vmatpush1.msra.mxu0 0.0
      %4407 = vmatprep.subr.mxu0 0.0
      %4408 = vmatpush1.msra.mxu0 0.0
      %4409 = vmatprep.subr.mxu0 0.0
      %4410 = vmatpush1.msra.mxu0 0.0
      %4411 = vmatprep.subr.mxu0 0.0
      %4412 = vmatpush1.msra.mxu0 0.0
      %4413 = vmatprep.subr.mxu0 0.0
      %4414 = vmatpush1.msra.mxu0 0.0
      %4415 = vmatprep.subr.mxu0 0.0
      %4416 = vmatpush1.msra.mxu0 0.0
      %4417 = vmatprep.subr.mxu0 0.0
      %4418 = vmatpush1.msra.mxu0 0.0
      %4419 = vmatprep.subr.mxu0 0.0
      %4420 = vmatpush1.msra.mxu0 0.0
      %4421 = vmatprep.subr.mxu0 0.0
      %4422 = vmatpush1.msra.mxu0 0.0
      %4423 = vmatprep.subr.mxu0 0.0
      %4424 = vmatpush1.msra.mxu0 0.0
      %4425 = vmatprep.subr.mxu0 0.0
      %4426 = vmatpush1.msra.mxu0 0.0
      %4427 = vmatprep.subr.mxu0 0.0
      %4428 = vmatpush1.msra.mxu0 0.0
      %4429 = vmatprep.subr.mxu0 0.0
      %4430 = vmatpush1.msra.mxu0 0.0
      %4431 = vmatprep.subr.mxu0 0.0
      %4432 = vmatpush1.msra.mxu0 0.0
      %4433 = vmatprep.subr.mxu0 0.0
      %4434 = vmatpush1.msra.mxu0 0.0
      %4435 = vmatprep.subr.mxu0 0.0
      %4436 = vmatpush1.msra.mxu0 0.0
      %4437 = vmatprep.mubr.f32.mxu0 0.0
      %v4438 = vand.u32 %v284, 4294901760
      %v4439 = vsub.f32 %v284, %v4438
      %v4440 = vand.u32 %v4439, 4294901760
      %v4441 = vsub.f32 %v4439, %v4440
      %v4442 = vand.u32 %v4441, 4294901760
      %4443 = vmatmul.mubr.f32.gmra.mrb[0].mxu0 %v4442
      %v4444 = vpop.f32.mrb[0].mxu0
      %v4445 = vadd.f32 0.0, %v4444
      %v4446 = vpop.f32.mrb[0].mxu0
      %v4447 = vadd.f32 0.0, %v4446
      %4448 = vmatprep.mubr.f32.mxu0 0.0
      %v4449 = vand.u32 %v287, 4294901760
      %v4450 = vsub.f32 %v287, %v4449
      %v4451 = vand.u32 %v4450, 4294901760
      %v4452 = vsub.f32 %v4450, %v4451
      %v4453 = vand.u32 %v4452, 4294901760
      %4454 = vmatmul.mubr.f32.gmra.mrb[0].mxu0 %v4453
      %v4455 = vpop.f32.mrb[0].mxu0
      %v4456 = vadd.f32 0.0, %v4455
      %v4457 = vpop.f32.mrb[0].mxu0
      %v4458 = vadd.f32 0.0, %v4457
      %4459 = vmatprep.mubr.f32.mxu0 0.0
      %v4460 = vand.u32 %v290, 4294901760
      %v4461 = vsub.f32 %v290, %v4460
      %v4462 = vand.u32 %v4461, 4294901760
      %v4463 = vsub.f32 %v4461, %v4462
      %v4464 = vand.u32 %v4463, 4294901760
      %4465 = vmatmul.mubr.f32.gmra.mrb[0].mxu0 %v4464
      %v4466 = vpop.f32.mrb[0].mxu0
      %v4467 = vadd.f32 0.0, %v4466
      %v4468 = vpop.f32.mrb[0].mxu0
      %v4469 = vadd.f32 0.0, %v4468
      %4470 = vmatprep.mubr.f32.mxu0 0.0
      %v4471 = vand.u32 %v293, 4294901760
      %v4472 = vsub.f32 %v293, %v4471
      %v4473 = vand.u32 %v4472, 4294901760
      %v4474 = vsub.f32 %v4472, %v4473
      %v4475 = vand.u32 %v4474, 4294901760
      %4476 = vmatmul.mubr.f32.gmra.mrb[0].mxu0 %v4475
      %v4477 = vpop.f32.mrb[0].mxu0
      %v4478 = vadd.f32 0.0, %v4477
      %v4479 = vpop.f32.mrb[0].mxu0
      %v4480 = vadd.f32 0.0, %v4479
      %4481 = vmatprep.mubr.f32.mxu0 0.0
      %v4482 = vand.u32 %v296, 4294901760
      %v4483 = vsub.f32 %v296, %v4482
      %v4484 = vand.u32 %v4483, 4294901760
      %v4485 = vsub.f32 %v4483, %v4484
      %v4486 = vand.u32 %v4485, 4294901760
      %4487 = vmatmul.mubr.f32.gmra.mrb[0].mxu0 %v4486
      %v4488 = vpop.f32.mrb[0].mxu0
      %v4489 = vadd.f32 0.0, %v4488
      %v4490 = vpop.f32.mrb[0].mxu0
      %v4491 = vadd.f32 0.0, %v4490
      %4492 = vmatprep.mubr.f32.mxu0 0.0
      %v4493 = vand.u32 %v299, 4294901760
      %v4494 = vsub.f32 %v299, %v4493
      %v4495 = vand.u32 %v4494, 4294901760
      %v4496 = vsub.f32 %v4494, %v4495
      %v4497 = vand.u32 %v4496, 4294901760
      %4498 = vmatmul.mubr.f32.gmra.mrb[0].mxu0 %v4497
      %v4499 = vpop.f32.mrb[0].mxu0
      %v4500 = vadd.f32 0.0, %v4499
      %v4501 = vpop.f32.mrb[0].mxu0
      %v4502 = vadd.f32 0.0, %v4501
      %4503 = vmatprep.mubr.f32.mxu0 0.0
      %v4504 = vand.u32 %v302, 4294901760
      %v4505 = vsub.f32 %v302, %v4504
      %v4506 = vand.u32 %v4505, 4294901760
      %v4507 = vsub.f32 %v4505, %v4506
      %v4508 = vand.u32 %v4507, 4294901760
      %4509 = vmatmul.mubr.f32.gmra.mrb[0].mxu0 %v4508
      %v4510 = vpop.f32.mrb[0].mxu0
      %v4511 = vadd.f32 0.0, %v4510
      %v4512 = vpop.f32.mrb[0].mxu0
      %v4513 = vadd.f32 0.0, %v4512
      %4514 = vmatprep.mubr.f32.mxu0 0.0
      %v4515 = vand.u32 %v305, 4294901760
      %v4516 = vsub.f32 %v305, %v4515
      %v4517 = vand.u32 %v4516, 4294901760
      %v4518 = vsub.f32 %v4516, %v4517
      %v4519 = vand.u32 %v4518, 4294901760
      %4520 = vmatmul.mubr.f32.gmra.mrb[0].mxu0 %v4519
      %v4521 = vpop.f32.mrb[0].mxu0
      %v4522 = vadd.f32 0.0, %v4521
      %v4523 = vpop.f32.mrb[0].mxu0
      %v4524 = vadd.f32 0.0, %v4523
      %4525 = vmatprep.mubr.f32.mxu0 0.0
      %v4526 = vand.u32 %v308, 4294901760
      %v4527 = vsub.f32 %v308, %v4526
      %v4528 = vand.u32 %v4527, 4294901760
      %v4529 = vsub.f32 %v4527, %v4528
      %v4530 = vand.u32 %v4529, 4294901760
      %4531 = vmatmul.mubr.f32.gmra.mrb[0].mxu0 %v4530
      %v4532 = vpop.f32.mrb[0].mxu0
      %v4533 = vadd.f32 0.0, %v4532
      %v4534 = vpop.f32.mrb[0].mxu0
      %v4535 = vadd.f32 0.0, %v4534
      %4536 = vmatprep.mubr.f32.mxu0 0.0
      %v4537 = vand.u32 %v311, 4294901760
      %v4538 = vsub.f32 %v311, %v4537
      %v4539 = vand.u32 %v4538, 4294901760
      %v4540 = vsub.f32 %v4538, %v4539
      %v4541 = vand.u32 %v4540, 4294901760
      %4542 = vmatmul.mubr.f32.gmra.mrb[0].mxu0 %v4541
      %v4543 = vpop.f32.mrb[0].mxu0
      %v4544 = vadd.f32 0.0, %v4543
      %v4545 = vpop.f32.mrb[0].mxu0
      %v4546 = vadd.f32 0.0, %v4545
      %4547 = vmatprep.mubr.f32.mxu0 0.0
      %v4548 = vand.u32 %v314, 4294901760
      %v4549 = vsub.f32 %v314, %v4548
      %v4550 = vand.u32 %v4549, 4294901760
      %v4551 = vsub.f32 %v4549, %v4550
      %v4552 = vand.u32 %v4551, 4294901760
      %4553 = vmatmul.mubr.f32.gmra.mrb[0].mxu0 %v4552
      %v4554 = vpop.f32.mrb[0].mxu0
      %v4555 = vadd.f32 0.0, %v4554
      %v4556 = vpop.f32.mrb[0].mxu0
      %v4557 = vadd.f32 0.0, %v4556
      %4558 = vmatprep.mubr.f32.mxu0 0.0
      %v4559 = vand.u32 %v317, 4294901760
      %v4560 = vsub.f32 %v317, %v4559
      %v4561 = vand.u32 %v4560, 4294901760
      %v4562 = vsub.f32 %v4560, %v4561
      %v4563 = vand.u32 %v4562, 4294901760
      %4564 = vmatmul.mubr.f32.gmra.mrb[0].mxu0 %v4563
      %v4565 = vpop.f32.mrb[0].mxu0
      %v4566 = vadd.f32 0.0, %v4565
      %v4567 = vpop.f32.mrb[0].mxu0
      %v4568 = vadd.f32 0.0, %v4567
      %4569 = vdwg.mxu0
      %v4570 = vand.u32 %v151, 4294901760
      %v4571 = vsub.f32 %v151, %v4570
      %v4572 = vand.u32 %v4571, 4294901760
      %v4573 = vsub.f32 %v4571, %v4572
      %v4574 = vand.u32 %v4573, 4294901760
      %4575 = vmatprep.subr.mxu0 %v4574
      %v4576 = vand.u32 %v150, 4294901760
      %v4577 = vsub.f32 %v150, %v4576
      %v4578 = vand.u32 %v4577, 4294901760
      %v4579 = vsub.f32 %v4577, %v4578
      %v4580 = vand.u32 %v4579, 4294901760
      %4581 = vmatpush1.msra.mxu0 %v4580
      %v4582 = vand.u32 %v160, 4294901760
      %v4583 = vsub.f32 %v160, %v4582
      %v4584 = vand.u32 %v4583, 4294901760
      %v4585 = vsub.f32 %v4583, %v4584
      %v4586 = vand.u32 %v4585, 4294901760
      %4587 = vmatprep.subr.mxu0 %v4586
      %v4588 = vand.u32 %v159, 4294901760
      %v4589 = vsub.f32 %v159, %v4588
      %v4590 = vand.u32 %v4589, 4294901760
      %v4591 = vsub.f32 %v4589, %v4590
      %v4592 = vand.u32 %v4591, 4294901760
      %4593 = vmatpush1.msra.mxu0 %v4592
      %v4594 = vand.u32 %v169, 4294901760
      %v4595 = vsub.f32 %v169, %v4594
      %v4596 = vand.u32 %v4595, 4294901760
      %v4597 = vsub.f32 %v4595, %v4596
      %v4598 = vand.u32 %v4597, 4294901760
      %4599 = vmatprep.subr.mxu0 %v4598
      %v4600 = vand.u32 %v168, 4294901760
      %v4601 = vsub.f32 %v168, %v4600
      %v4602 = vand.u32 %v4601, 4294901760
      %v4603 = vsub.f32 %v4601, %v4602
      %v4604 = vand.u32 %v4603, 4294901760
      %4605 = vmatpush1.msra.mxu0 %v4604
      %v4606 = vand.u32 %v178, 4294901760
      %v4607 = vsub.f32 %v178, %v4606
      %v4608 = vand.u32 %v4607, 4294901760
      %v4609 = vsub.f32 %v4607, %v4608
      %v4610 = vand.u32 %v4609, 4294901760
      %4611 = vmatprep.subr.mxu0 %v4610
      %v4612 = vand.u32 %v177, 4294901760
      %v4613 = vsub.f32 %v177, %v4612
      %v4614 = vand.u32 %v4613, 4294901760
      %v4615 = vsub.f32 %v4613, %v4614
      %v4616 = vand.u32 %v4615, 4294901760
      %4617 = vmatpush1.msra.mxu0 %v4616
      %v4618 = vand.u32 %v187, 4294901760
      %v4619 = vsub.f32 %v187, %v4618
      %v4620 = vand.u32 %v4619, 4294901760
      %v4621 = vsub.f32 %v4619, %v4620
      %v4622 = vand.u32 %v4621, 4294901760
      %4623 = vmatprep.subr.mxu0 %v4622
      %v4624 = vand.u32 %v186, 4294901760
      %v4625 = vsub.f32 %v186, %v4624
      %v4626 = vand.u32 %v4625, 4294901760
      %v4627 = vsub.f32 %v4625, %v4626
      %v4628 = vand.u32 %v4627, 4294901760
      %4629 = vmatpush1.msra.mxu0 %v4628
      %v4630 = vand.u32 %v196, 4294901760
      %v4631 = vsub.f32 %v196, %v4630
      %v4632 = vand.u32 %v4631, 4294901760
      %v4633 = vsub.f32 %v4631, %v4632
      %v4634 = vand.u32 %v4633, 4294901760
      %4635 = vmatprep.subr.mxu0 %v4634
      %v4636 = vand.u32 %v195, 4294901760
      %v4637 = vsub.f32 %v195, %v4636
      %v4638 = vand.u32 %v4637, 4294901760
      %v4639 = vsub.f32 %v4637, %v4638
      %v4640 = vand.u32 %v4639, 4294901760
      %4641 = vmatpush1.msra.mxu0 %v4640
      %v4642 = vand.u32 %v205, 4294901760
      %v4643 = vsub.f32 %v205, %v4642
      %v4644 = vand.u32 %v4643, 4294901760
      %v4645 = vsub.f32 %v4643, %v4644
      %v4646 = vand.u32 %v4645, 4294901760
      %4647 = vmatprep.subr.mxu0 %v4646
      %v4648 = vand.u32 %v204, 4294901760
      %v4649 = vsub.f32 %v204, %v4648
      %v4650 = vand.u32 %v4649, 4294901760
      %v4651 = vsub.f32 %v4649, %v4650
      %v4652 = vand.u32 %v4651, 4294901760
      %4653 = vmatpush1.msra.mxu0 %v4652
      %v4654 = vand.u32 %v214, 4294901760
      %v4655 = vsub.f32 %v214, %v4654
      %v4656 = vand.u32 %v4655, 4294901760
      %v4657 = vsub.f32 %v4655, %v4656
      %v4658 = vand.u32 %v4657, 4294901760
      %4659 = vmatprep.subr.mxu0 %v4658
      %v4660 = vand.u32 %v213, 4294901760
      %v4661 = vsub.f32 %v213, %v4660
      %v4662 = vand.u32 %v4661, 4294901760
      %v4663 = vsub.f32 %v4661, %v4662
      %v4664 = vand.u32 %v4663, 4294901760
      %4665 = vmatpush1.msra.mxu0 %v4664
      %v4666 = vand.u32 %v223, 4294901760
      %v4667 = vsub.f32 %v223, %v4666
      %v4668 = vand.u32 %v4667, 4294901760
      %v4669 = vsub.f32 %v4667, %v4668
      %v4670 = vand.u32 %v4669, 4294901760
      %4671 = vmatprep.subr.mxu0 %v4670
      %v4672 = vand.u32 %v222, 4294901760
      %v4673 = vsub.f32 %v222, %v4672
      %v4674 = vand.u32 %v4673, 4294901760
      %v4675 = vsub.f32 %v4673, %v4674
      %v4676 = vand.u32 %v4675, 4294901760
      %4677 = vmatpush1.msra.mxu0 %v4676
      %v4678 = vand.u32 %v232, 4294901760
      %v4679 = vsub.f32 %v232, %v4678
      %v4680 = vand.u32 %v4679, 4294901760
      %v4681 = vsub.f32 %v4679, %v4680
      %v4682 = vand.u32 %v4681, 4294901760
      %4683 = vmatprep.subr.mxu0 %v4682
      %v4684 = vand.u32 %v231, 4294901760
      %v4685 = vsub.f32 %v231, %v4684
      %v4686 = vand.u32 %v4685, 4294901760
      %v4687 = vsub.f32 %v4685, %v4686
      %v4688 = vand.u32 %v4687, 4294901760
      %4689 = vmatpush1.msra.mxu0 %v4688
      %v4690 = vand.u32 %v241, 4294901760
      %v4691 = vsub.f32 %v241, %v4690
      %v4692 = vand.u32 %v4691, 4294901760
      %v4693 = vsub.f32 %v4691, %v4692
      %v4694 = vand.u32 %v4693, 4294901760
      %4695 = vmatprep.subr.mxu0 %v4694
      %v4696 = vand.u32 %v240, 4294901760
      %v4697 = vsub.f32 %v240, %v4696
      %v4698 = vand.u32 %v4697, 4294901760
      %v4699 = vsub.f32 %v4697, %v4698
      %v4700 = vand.u32 %v4699, 4294901760
      %4701 = vmatpush1.msra.mxu0 %v4700
      %v4702 = vand.u32 %v250, 4294901760
      %v4703 = vsub.f32 %v250, %v4702
      %v4704 = vand.u32 %v4703, 4294901760
      %v4705 = vsub.f32 %v4703, %v4704
      %v4706 = vand.u32 %v4705, 4294901760
      %4707 = vmatprep.subr.mxu0 %v4706
      %v4708 = vand.u32 %v249, 4294901760
      %v4709 = vsub.f32 %v249, %v4708
      %v4710 = vand.u32 %v4709, 4294901760
      %v4711 = vsub.f32 %v4709, %v4710
      %v4712 = vand.u32 %v4711, 4294901760
      %4713 = vmatpush1.msra.mxu0 %v4712
      %v4714 = vand.u32 %v259, 4294901760
      %v4715 = vsub.f32 %v259, %v4714
      %v4716 = vand.u32 %v4715, 4294901760
      %v4717 = vsub.f32 %v4715, %v4716
      %v4718 = vand.u32 %v4717, 4294901760
      %4719 = vmatprep.subr.mxu0 %v4718
      %v4720 = vand.u32 %v258, 4294901760
      %v4721 = vsub.f32 %v258, %v4720
      %v4722 = vand.u32 %v4721, 4294901760
      %v4723 = vsub.f32 %v4721, %v4722
      %v4724 = vand.u32 %v4723, 4294901760
      %4725 = vmatpush1.msra.mxu0 %v4724
      %v4726 = vand.u32 %v268, 4294901760
      %v4727 = vsub.f32 %v268, %v4726
      %v4728 = vand.u32 %v4727, 4294901760
      %v4729 = vsub.f32 %v4727, %v4728
      %v4730 = vand.u32 %v4729, 4294901760
      %4731 = vmatprep.subr.mxu0 %v4730
      %v4732 = vand.u32 %v267, 4294901760
      %v4733 = vsub.f32 %v267, %v4732
      %v4734 = vand.u32 %v4733, 4294901760
      %v4735 = vsub.f32 %v4733, %v4734
      %v4736 = vand.u32 %v4735, 4294901760
      %4737 = vmatpush1.msra.mxu0 %v4736
      %4738 = vmatprep.subr.mxu0 0.0
      %4739 = vmatpush1.msra.mxu0 0.0
      %4740 = vmatprep.subr.mxu0 0.0
      %4741 = vmatpush1.msra.mxu0 0.0
      %4742 = vmatprep.subr.mxu0 0.0
      %4743 = vmatpush1.msra.mxu0 0.0
      %4744 = vmatprep.subr.mxu0 0.0
      %4745 = vmatpush1.msra.mxu0 0.0
      %4746 = vmatprep.subr.mxu0 0.0
      %4747 = vmatpush1.msra.mxu0 0.0
      %4748 = vmatprep.subr.mxu0 0.0
      %4749 = vmatpush1.msra.mxu0 0.0
      %4750 = vmatprep.subr.mxu0 0.0
      %4751 = vmatpush1.msra.mxu0 0.0
      %4752 = vmatprep.subr.mxu0 0.0
      %4753 = vmatpush1.msra.mxu0 0.0
      %4754 = vmatprep.subr.mxu0 0.0
      %4755 = vmatpush1.msra.mxu0 0.0
      %4756 = vmatprep.subr.mxu0 0.0
      %4757 = vmatpush1.msra.mxu0 0.0
      %4758 = vmatprep.subr.mxu0 0.0
      %4759 = vmatpush1.msra.mxu0 0.0
      %4760 = vmatprep.subr.mxu0 0.0
      %4761 = vmatpush1.msra.mxu0 0.0
      %4762 = vmatprep.subr.mxu0 0.0
      %4763 = vmatpush1.msra.mxu0 0.0
      %4764 = vmatprep.subr.mxu0 0.0
      %4765 = vmatpush1.msra.mxu0 0.0
      %4766 = vmatprep.subr.mxu0 0.0
      %4767 = vmatpush1.msra.mxu0 0.0
      %4768 = vmatprep.subr.mxu0 0.0
      %4769 = vmatpush1.msra.mxu0 0.0
      %4770 = vmatprep.subr.mxu0 0.0
      %4771 = vmatpush1.msra.mxu0 0.0
      %4772 = vmatprep.subr.mxu0 0.0
      %4773 = vmatpush1.msra.mxu0 0.0
      %4774 = vmatprep.mubr.f32.mxu0 0.0
      %v4775 = vand.u32 %v284, 4294901760
      %4776 = vmatmul.mubr.f32.gmra.mrb[0].mxu0 %v4775
      %v4777 = vpop.f32.mrb[0].mxu0
      %v4778 = vadd.f32 %v4445, %v4777
      %v4779 = vpop.f32.mrb[0].mxu0
      %v4780 = vadd.f32 %v4447, %v4779
      %4781 = vmatprep.mubr.f32.mxu0 0.0
      %v4782 = vand.u32 %v287, 4294901760
      %4783 = vmatmul.mubr.f32.gmra.mrb[0].mxu0 %v4782
      %v4784 = vpop.f32.mrb[0].mxu0
      %v4785 = vadd.f32 %v4456, %v4784
      %v4786 = vpop.f32.mrb[0].mxu0
      %v4787 = vadd.f32 %v4458, %v4786
      %4788 = vmatprep.mubr.f32.mxu0 0.0
      %v4789 = vand.u32 %v290, 4294901760
      %4790 = vmatmul.mubr.f32.gmra.mrb[0].mxu0 %v4789
      %v4791 = vpop.f32.mrb[0].mxu0
      %v4792 = vadd.f32 %v4467, %v4791
      %v4793 = vpop.f32.mrb[0].mxu0
      %v4794 = vadd.f32 %v4469, %v4793
      %4795 = vmatprep.mubr.f32.mxu0 0.0
      %v4796 = vand.u32 %v293, 4294901760
      %4797 = vmatmul.mubr.f32.gmra.mrb[0].mxu0 %v4796
      %v4798 = vpop.f32.mrb[0].mxu0
      %v4799 = vadd.f32 %v4478, %v4798
      %v4800 = vpop.f32.mrb[0].mxu0
      %v4801 = vadd.f32 %v4480, %v4800
      %4802 = vmatprep.mubr.f32.mxu0 0.0
      %v4803 = vand.u32 %v296, 4294901760
      %4804 = vmatmul.mubr.f32.gmra.mrb[0].mxu0 %v4803
      %v4805 = vpop.f32.mrb[0].mxu0
      %v4806 = vadd.f32 %v4489, %v4805
      %v4807 = vpop.f32.mrb[0].mxu0
      %v4808 = vadd.f32 %v4491, %v4807
      %4809 = vmatprep.mubr.f32.mxu0 0.0
      %v4810 = vand.u32 %v299, 4294901760
      %4811 = vmatmul.mubr.f32.gmra.mrb[0].mxu0 %v4810
      %v4812 = vpop.f32.mrb[0].mxu0
      %v4813 = vadd.f32 %v4500, %v4812
      %v4814 = vpop.f32.mrb[0].mxu0
      %v4815 = vadd.f32 %v4502, %v4814
      %4816 = vmatprep.mubr.f32.mxu0 0.0
      %v4817 = vand.u32 %v302, 4294901760
      %4818 = vmatmul.mubr.f32.gmra.mrb[0].mxu0 %v4817
      %v4819 = vpop.f32.mrb[0].mxu0
      %v4820 = vadd.f32 %v4511, %v4819
      %v4821 = vpop.f32.mrb[0].mxu0
      %v4822 = vadd.f32 %v4513, %v4821
      %4823 = vmatprep.mubr.f32.mxu0 0.0
      %v4824 = vand.u32 %v305, 4294901760
      %4825 = vmatmul.mubr.f32.gmra.mrb[0].mxu0 %v4824
      %v4826 = vpop.f32.mrb[0].mxu0
      %v4827 = vadd.f32 %v4522, %v4826
      %v4828 = vpop.f32.mrb[0].mxu0
      %v4829 = vadd.f32 %v4524, %v4828
      %4830 = vmatprep.mubr.f32.mxu0 0.0
      %v4831 = vand.u32 %v308, 4294901760
      %4832 = vmatmul.mubr.f32.gmra.mrb[0].mxu0 %v4831
      %v4833 = vpop.f32.mrb[0].mxu0
      %v4834 = vadd.f32 %v4533, %v4833
      %v4835 = vpop.f32.mrb[0].mxu0
      %v4836 = vadd.f32 %v4535, %v4835
      %4837 = vmatprep.mubr.f32.mxu0 0.0
      %v4838 = vand.u32 %v311, 4294901760
      %4839 = vmatmul.mubr.f32.gmra.mrb[0].mxu0 %v4838
      %v4840 = vpop.f32.mrb[0].mxu0
      %v4841 = vadd.f32 %v4544, %v4840
      %v4842 = vpop.f32.mrb[0].mxu0
      %v4843 = vadd.f32 %v4546, %v4842
      %4844 = vmatprep.mubr.f32.mxu0 0.0
      %v4845 = vand.u32 %v314, 4294901760
      %4846 = vmatmul.mubr.f32.gmra.mrb[0].mxu0 %v4845
      %v4847 = vpop.f32.mrb[0].mxu0
      %v4848 = vadd.f32 %v4555, %v4847
      %v4849 = vpop.f32.mrb[0].mxu0
      %v4850 = vadd.f32 %v4557, %v4849
      %4851 = vmatprep.mubr.f32.mxu0 0.0
      %v4852 = vand.u32 %v317, 4294901760
      %4853 = vmatmul.mubr.f32.gmra.mrb[0].mxu0 %v4852
      %v4854 = vpop.f32.mrb[0].mxu0
      %v4855 = vadd.f32 %v4566, %v4854
      %v4856 = vpop.f32.mrb[0].mxu0
      %v4857 = vadd.f32 %v4568, %v4856
      %4858 = vdwg.mxu0
      %v4859 = vand.u32 %v151, 4294901760
      %v4860 = vsub.f32 %v151, %v4859
      %4861 = vmatprep.subr.mxu0 %v4860
      %v4862 = vand.u32 %v150, 4294901760
      %v4863 = vsub.f32 %v150, %v4862
      %4864 = vmatpush1.msra.mxu0 %v4863
      %v4865 = vand.u32 %v160, 4294901760
      %v4866 = vsub.f32 %v160, %v4865
      %4867 = vmatprep.subr.mxu0 %v4866
      %v4868 = vand.u32 %v159, 4294901760
      %v4869 = vsub.f32 %v159, %v4868
      %4870 = vmatpush1.msra.mxu0 %v4869
      %v4871 = vand.u32 %v169, 4294901760
      %v4872 = vsub.f32 %v169, %v4871
      %4873 = vmatprep.subr.mxu0 %v4872
      %v4874 = vand.u32 %v168, 4294901760
      %v4875 = vsub.f32 %v168, %v4874
      %4876 = vmatpush1.msra.mxu0 %v4875
      %v4877 = vand.u32 %v178, 4294901760
      %v4878 = vsub.f32 %v178, %v4877
      %4879 = vmatprep.subr.mxu0 %v4878
      %v4880 = vand.u32 %v177, 4294901760
      %v4881 = vsub.f32 %v177, %v4880
      %4882 = vmatpush1.msra.mxu0 %v4881
      %v4883 = vand.u32 %v187, 4294901760
      %v4884 = vsub.f32 %v187, %v4883
      %4885 = vmatprep.subr.mxu0 %v4884
      %v4886 = vand.u32 %v186, 4294901760
      %v4887 = vsub.f32 %v186, %v4886
      %4888 = vmatpush1.msra.mxu0 %v4887
      %v4889 = vand.u32 %v196, 4294901760
      %v4890 = vsub.f32 %v196, %v4889
      %4891 = vmatprep.subr.mxu0 %v4890
      %v4892 = vand.u32 %v195, 4294901760
      %v4893 = vsub.f32 %v195, %v4892
      %4894 = vmatpush1.msra.mxu0 %v4893
      %v4895 = vand.u32 %v205, 4294901760
      %v4896 = vsub.f32 %v205, %v4895
      %4897 = vmatprep.subr.mxu0 %v4896
      %v4898 = vand.u32 %v204, 4294901760
      %v4899 = vsub.f32 %v204, %v4898
      %4900 = vmatpush1.msra.mxu0 %v4899
      %v4901 = vand.u32 %v214, 4294901760
      %v4902 = vsub.f32 %v214, %v4901
      %4903 = vmatprep.subr.mxu0 %v4902
      %v4904 = vand.u32 %v213, 4294901760
      %v4905 = vsub.f32 %v213, %v4904
      %4906 = vmatpush1.msra.mxu0 %v4905
      %v4907 = vand.u32 %v223, 4294901760
      %v4908 = vsub.f32 %v223, %v4907
      %4909 = vmatprep.subr.mxu0 %v4908
      %v4910 = vand.u32 %v222, 4294901760
      %v4911 = vsub.f32 %v222, %v4910
      %4912 = vmatpush1.msra.mxu0 %v4911
      %v4913 = vand.u32 %v232, 4294901760
      %v4914 = vsub.f32 %v232, %v4913
      %4915 = vmatprep.subr.mxu0 %v4914
      %v4916 = vand.u32 %v231, 4294901760
      %v4917 = vsub.f32 %v231, %v4916
      %4918 = vmatpush1.msra.mxu0 %v4917
      %v4919 = vand.u32 %v241, 4294901760
      %v4920 = vsub.f32 %v241, %v4919
      %4921 = vmatprep.subr.mxu0 %v4920
      %v4922 = vand.u32 %v240, 4294901760
      %v4923 = vsub.f32 %v240, %v4922
      %4924 = vmatpush1.msra.mxu0 %v4923
      %v4925 = vand.u32 %v250, 4294901760
      %v4926 = vsub.f32 %v250, %v4925
      %4927 = vmatprep.subr.mxu0 %v4926
      %v4928 = vand.u32 %v249, 4294901760
      %v4929 = vsub.f32 %v249, %v4928
      %4930 = vmatpush1.msra.mxu0 %v4929
      %v4931 = vand.u32 %v259, 4294901760
      %v4932 = vsub.f32 %v259, %v4931
      %4933 = vmatprep.subr.mxu0 %v4932
      %v4934 = vand.u32 %v258, 4294901760
      %v4935 = vsub.f32 %v258, %v4934
      %4936 = vmatpush1.msra.mxu0 %v4935
      %v4937 = vand.u32 %v268, 4294901760
      %v4938 = vsub.f32 %v268, %v4937
      %4939 = vmatprep.subr.mxu0 %v4938
      %v4940 = vand.u32 %v267, 4294901760
      %v4941 = vsub.f32 %v267, %v4940
      %4942 = vmatpush1.msra.mxu0 %v4941
      %4943 = vmatprep.subr.mxu0 0.0
      %4944 = vmatpush1.msra.mxu0 0.0
      %4945 = vmatprep.subr.mxu0 0.0
      %4946 = vmatpush1.msra.mxu0 0.0
      %4947 = vmatprep.subr.mxu0 0.0
      %4948 = vmatpush1.msra.mxu0 0.0
      %4949 = vmatprep.subr.mxu0 0.0
      %4950 = vmatpush1.msra.mxu0 0.0
      %4951 = vmatprep.subr.mxu0 0.0
      %4952 = vmatpush1.msra.mxu0 0.0
      %4953 = vmatprep.subr.mxu0 0.0
      %4954 = vmatpush1.msra.mxu0 0.0
      %4955 = vmatprep.subr.mxu0 0.0
      %4956 = vmatpush1.msra.mxu0 0.0
      %4957 = vmatprep.subr.mxu0 0.0
      %4958 = vmatpush1.msra.mxu0 0.0
      %4959 = vmatprep.subr.mxu0 0.0
      %4960 = vmatpush1.msra.mxu0 0.0
      %4961 = vmatprep.subr.mxu0 0.0
      %4962 = vmatpush1.msra.mxu0 0.0
      %4963 = vmatprep.subr.mxu0 0.0
      %4964 = vmatpush1.msra.mxu0 0.0
      %4965 = vmatprep.subr.mxu0 0.0
      %4966 = vmatpush1.msra.mxu0 0.0
      %4967 = vmatprep.subr.mxu0 0.0
      %4968 = vmatpush1.msra.mxu0 0.0
      %4969 = vmatprep.subr.mxu0 0.0
      %4970 = vmatpush1.msra.mxu0 0.0
      %4971 = vmatprep.subr.mxu0 0.0
      %4972 = vmatpush1.msra.mxu0 0.0
      %4973 = vmatprep.subr.mxu0 0.0
      %4974 = vmatpush1.msra.mxu0 0.0
      %4975 = vmatprep.subr.mxu0 0.0
      %4976 = vmatpush1.msra.mxu0 0.0
      %4977 = vmatprep.subr.mxu0 0.0
      %4978 = vmatpush1.msra.mxu0 0.0
      %4979 = vmatprep.mubr.f32.mxu0 0.0
      %v4980 = vand.u32 %v284, 4294901760
      %v4981 = vsub.f32 %v284, %v4980
      %4982 = vmatmul.mubr.f32.gmra.mrb[0].mxu0 %v4981
      %v4983 = vpop.f32.mrb[0].mxu0
      %v4984 = vadd.f32 %v4778, %v4983
      %v4985 = vpop.f32.mrb[0].mxu0
      %v4986 = vadd.f32 %v4780, %v4985
      %4987 = vmatprep.mubr.f32.mxu0 0.0
      %v4988 = vand.u32 %v287, 4294901760
      %v4989 = vsub.f32 %v287, %v4988
      %4990 = vmatmul.mubr.f32.gmra.mrb[0].mxu0 %v4989
      %v4991 = vpop.f32.mrb[0].mxu0
      %v4992 = vadd.f32 %v4785, %v4991
      %v4993 = vpop.f32.mrb[0].mxu0
      %v4994 = vadd.f32 %v4787, %v4993
      %4995 = vmatprep.mubr.f32.mxu0 0.0
      %v4996 = vand.u32 %v290, 4294901760
      %v4997 = vsub.f32 %v290, %v4996
      %4998 = vmatmul.mubr.f32.gmra.mrb[0].mxu0 %v4997
      %v4999 = vpop.f32.mrb[0].mxu0
      %v5000 = vadd.f32 %v4792, %v4999
      %v5001 = vpop.f32.mrb[0].mxu0
      %v5002 = vadd.f32 %v4794, %v5001
      %5003 = vmatprep.mubr.f32.mxu0 0.0
      %v5004 = vand.u32 %v293, 4294901760
      %v5005 = vsub.f32 %v293, %v5004
      %5006 = vmatmul.mubr.f32.gmra.mrb[0].mxu0 %v5005
      %v5007 = vpop.f32.mrb[0].mxu0
      %v5008 = vadd.f32 %v4799, %v5007
      %v5009 = vpop.f32.mrb[0].mxu0
      %v5010 = vadd.f32 %v4801, %v5009
      %5011 = vmatprep.mubr.f32.mxu0 0.0
      %v5012 = vand.u32 %v296, 4294901760
      %v5013 = vsub.f32 %v296, %v5012
      %5014 = vmatmul.mubr.f32.gmra.mrb[0].mxu0 %v5013
      %v5015 = vpop.f32.mrb[0].mxu0
      %v5016 = vadd.f32 %v4806, %v5015
      %v5017 = vpop.f32.mrb[0].mxu0
      %v5018 = vadd.f32 %v4808, %v5017
      %5019 = vmatprep.mubr.f32.mxu0 0.0
      %v5020 = vand.u32 %v299, 4294901760
      %v5021 = vsub.f32 %v299, %v5020
      %5022 = vmatmul.mubr.f32.gmra.mrb[0].mxu0 %v5021
      %v5023 = vpop.f32.mrb[0].mxu0
      %v5024 = vadd.f32 %v4813, %v5023
      %v5025 = vpop.f32.mrb[0].mxu0
      %v5026 = vadd.f32 %v4815, %v5025
      %5027 = vmatprep.mubr.f32.mxu0 0.0
      %v5028 = vand.u32 %v302, 4294901760
      %v5029 = vsub.f32 %v302, %v5028
      %5030 = vmatmul.mubr.f32.gmra.mrb[0].mxu0 %v5029
      %v5031 = vpop.f32.mrb[0].mxu0
      %v5032 = vadd.f32 %v4820, %v5031
      %v5033 = vpop.f32.mrb[0].mxu0
      %v5034 = vadd.f32 %v4822, %v5033
      %5035 = vmatprep.mubr.f32.mxu0 0.0
      %v5036 = vand.u32 %v305, 4294901760
      %v5037 = vsub.f32 %v305, %v5036
      %5038 = vmatmul.mubr.f32.gmra.mrb[0].mxu0 %v5037
      %v5039 = vpop.f32.mrb[0].mxu0
      %v5040 = vadd.f32 %v4827, %v5039
      %v5041 = vpop.f32.mrb[0].mxu0
      %v5042 = vadd.f32 %v4829, %v5041
      %5043 = vmatprep.mubr.f32.mxu0 0.0
      %v5044 = vand.u32 %v308, 4294901760
      %v5045 = vsub.f32 %v308, %v5044
      %5046 = vmatmul.mubr.f32.gmra.mrb[0].mxu0 %v5045
      %v5047 = vpop.f32.mrb[0].mxu0
      %v5048 = vadd.f32 %v4834, %v5047
      %v5049 = vpop.f32.mrb[0].mxu0
      %v5050 = vadd.f32 %v4836, %v5049
      %5051 = vmatprep.mubr.f32.mxu0 0.0
      %v5052 = vand.u32 %v311, 4294901760
      %v5053 = vsub.f32 %v311, %v5052
      %5054 = vmatmul.mubr.f32.gmra.mrb[0].mxu0 %v5053
      %v5055 = vpop.f32.mrb[0].mxu0
      %v5056 = vadd.f32 %v4841, %v5055
      %v5057 = vpop.f32.mrb[0].mxu0
      %v5058 = vadd.f32 %v4843, %v5057
      %5059 = vmatprep.mubr.f32.mxu0 0.0
      %v5060 = vand.u32 %v314, 4294901760
      %v5061 = vsub.f32 %v314, %v5060
      %5062 = vmatmul.mubr.f32.gmra.mrb[0].mxu0 %v5061
      %v5063 = vpop.f32.mrb[0].mxu0
      %v5064 = vadd.f32 %v4848, %v5063
      %v5065 = vpop.f32.mrb[0].mxu0
      %v5066 = vadd.f32 %v4850, %v5065
      %5067 = vmatprep.mubr.f32.mxu0 0.0
      %v5068 = vand.u32 %v317, 4294901760
      %v5069 = vsub.f32 %v317, %v5068
      %5070 = vmatmul.mubr.f32.gmra.mrb[0].mxu0 %v5069
      %v5071 = vpop.f32.mrb[0].mxu0
      %v5072 = vadd.f32 %v4855, %v5071
      %v5073 = vpop.f32.mrb[0].mxu0
      %v5074 = vadd.f32 %v4857, %v5073
      %5075 = vdwg.mxu0
      %v5076 = vand.u32 %v151, 4294901760
      %5077 = vmatprep.subr.mxu0 %v5076
      %v5078 = vand.u32 %v150, 4294901760
      %5079 = vmatpush1.msra.mxu0 %v5078
      %v5080 = vand.u32 %v160, 4294901760
      %5081 = vmatprep.subr.mxu0 %v5080
      %v5082 = vand.u32 %v159, 4294901760
      %5083 = vmatpush1.msra.mxu0 %v5082
      %v5084 = vand.u32 %v169, 4294901760
      %5085 = vmatprep.subr.mxu0 %v5084
      %v5086 = vand.u32 %v168, 4294901760
      %5087 = vmatpush1.msra.mxu0 %v5086
      %v5088 = vand.u32 %v178, 4294901760
      %5089 = vmatprep.subr.mxu0 %v5088
      %v5090 = vand.u32 %v177, 4294901760
      %5091 = vmatpush1.msra.mxu0 %v5090
      %v5092 = vand.u32 %v187, 4294901760
      %5093 = vmatprep.subr.mxu0 %v5092
      %v5094 = vand.u32 %v186, 4294901760
      %5095 = vmatpush1.msra.mxu0 %v5094
      %v5096 = vand.u32 %v196, 4294901760
      %5097 = vmatprep.subr.mxu0 %v5096
      %v5098 = vand.u32 %v195, 4294901760
      %5099 = vmatpush1.msra.mxu0 %v5098
      %v5100 = vand.u32 %v205, 4294901760
      %5101 = vmatprep.subr.mxu0 %v5100
      %v5102 = vand.u32 %v204, 4294901760
      %5103 = vmatpush1.msra.mxu0 %v5102
      %v5104 = vand.u32 %v214, 4294901760
      %5105 = vmatprep.subr.mxu0 %v5104
      %v5106 = vand.u32 %v213, 4294901760
      %5107 = vmatpush1.msra.mxu0 %v5106
      %v5108 = vand.u32 %v223, 4294901760
      %5109 = vmatprep.subr.mxu0 %v5108
      %v5110 = vand.u32 %v222, 4294901760
      %5111 = vmatpush1.msra.mxu0 %v5110
      %v5112 = vand.u32 %v232, 4294901760
      %5113 = vmatprep.subr.mxu0 %v5112
      %v5114 = vand.u32 %v231, 4294901760
      %5115 = vmatpush1.msra.mxu0 %v5114
      %v5116 = vand.u32 %v241, 4294901760
      %5117 = vmatprep.subr.mxu0 %v5116
      %v5118 = vand.u32 %v240, 4294901760
      %5119 = vmatpush1.msra.mxu0 %v5118
      %v5120 = vand.u32 %v250, 4294901760
      %5121 = vmatprep.subr.mxu0 %v5120
      %v5122 = vand.u32 %v249, 4294901760
      %5123 = vmatpush1.msra.mxu0 %v5122
      %v5124 = vand.u32 %v259, 4294901760
      %5125 = vmatprep.subr.mxu0 %v5124
      %v5126 = vand.u32 %v258, 4294901760
      %5127 = vmatpush1.msra.mxu0 %v5126
      %v5128 = vand.u32 %v268, 4294901760
      %5129 = vmatprep.subr.mxu0 %v5128
      %v5130 = vand.u32 %v267, 4294901760
      %5131 = vmatpush1.msra.mxu0 %v5130
      %5132 = vmatprep.subr.mxu0 0.0
      %5133 = vmatpush1.msra.mxu0 0.0
      %5134 = vmatprep.subr.mxu0 0.0
      %5135 = vmatpush1.msra.mxu0 0.0
      %5136 = vmatprep.subr.mxu0 0.0
      %5137 = vmatpush1.msra.mxu0 0.0
      %5138 = vmatprep.subr.mxu0 0.0
      %5139 = vmatpush1.msra.mxu0 0.0
      %5140 = vmatprep.subr.mxu0 0.0
      %5141 = vmatpush1.msra.mxu0 0.0
      %5142 = vmatprep.subr.mxu0 0.0
      %5143 = vmatpush1.msra.mxu0 0.0
      %5144 = vmatprep.subr.mxu0 0.0
      %5145 = vmatpush1.msra.mxu0 0.0
      %5146 = vmatprep.subr.mxu0 0.0
      %5147 = vmatpush1.msra.mxu0 0.0
      %5148 = vmatprep.subr.mxu0 0.0
      %5149 = vmatpush1.msra.mxu0 0.0
      %5150 = vmatprep.subr.mxu0 0.0
      %5151 = vmatpush1.msra.mxu0 0.0
      %5152 = vmatprep.subr.mxu0 0.0
      %5153 = vmatpush1.msra.mxu0 0.0
      %5154 = vmatprep.subr.mxu0 0.0
      %5155 = vmatpush1.msra.mxu0 0.0
      %5156 = vmatprep.subr.mxu0 0.0
      %5157 = vmatpush1.msra.mxu0 0.0
      %5158 = vmatprep.subr.mxu0 0.0
      %5159 = vmatpush1.msra.mxu0 0.0
      %5160 = vmatprep.subr.mxu0 0.0
      %5161 = vmatpush1.msra.mxu0 0.0
      %5162 = vmatprep.subr.mxu0 0.0
      %5163 = vmatpush1.msra.mxu0 0.0
      %5164 = vmatprep.subr.mxu0 0.0
      %5165 = vmatpush1.msra.mxu0 0.0
      %5166 = vmatprep.subr.mxu0 0.0
      %5167 = vmatpush1.msra.mxu0 0.0
      %5168 = vmatprep.mubr.f32.mxu0 0.0
      %v5169 = vand.u32 %v284, 4294901760
      %v5170 = vsub.f32 %v284, %v5169
      %v5171 = vand.u32 %v5170, 4294901760
      %5172 = vmatmul.mubr.f32.gmra.mrb[0].mxu0 %v5171
      %v5173 = vpop.f32.mrb[0].mxu0
      %v5174 = vadd.f32 %v4984, %v5173
      %v5175 = vpop.f32.mrb[0].mxu0
      %v5176 = vadd.f32 %v4986, %v5175
      %5177 = vmatprep.mubr.f32.mxu0 0.0
      %v5178 = vand.u32 %v287, 4294901760
      %v5179 = vsub.f32 %v287, %v5178
      %v5180 = vand.u32 %v5179, 4294901760
      %5181 = vmatmul.mubr.f32.gmra.mrb[0].mxu0 %v5180
      %v5182 = vpop.f32.mrb[0].mxu0
      %v5183 = vadd.f32 %v4992, %v5182
      %v5184 = vpop.f32.mrb[0].mxu0
      %v5185 = vadd.f32 %v4994, %v5184
      %5186 = vmatprep.mubr.f32.mxu0 0.0
      %v5187 = vand.u32 %v290, 4294901760
      %v5188 = vsub.f32 %v290, %v5187
      %v5189 = vand.u32 %v5188, 4294901760
      %5190 = vmatmul.mubr.f32.gmra.mrb[0].mxu0 %v5189
      %v5191 = vpop.f32.mrb[0].mxu0
      %v5192 = vadd.f32 %v5000, %v5191
      %v5193 = vpop.f32.mrb[0].mxu0
      %v5194 = vadd.f32 %v5002, %v5193
      %5195 = vmatprep.mubr.f32.mxu0 0.0
      %v5196 = vand.u32 %v293, 4294901760
      %v5197 = vsub.f32 %v293, %v5196
      %v5198 = vand.u32 %v5197, 4294901760
      %5199 = vmatmul.mubr.f32.gmra.mrb[0].mxu0 %v5198
      %v5200 = vpop.f32.mrb[0].mxu0
      %v5201 = vadd.f32 %v5008, %v5200
      %v5202 = vpop.f32.mrb[0].mxu0
      %v5203 = vadd.f32 %v5010, %v5202
      %5204 = vmatprep.mubr.f32.mxu0 0.0
      %v5205 = vand.u32 %v296, 4294901760
      %v5206 = vsub.f32 %v296, %v5205
      %v5207 = vand.u32 %v5206, 4294901760
      %5208 = vmatmul.mubr.f32.gmra.mrb[0].mxu0 %v5207
      %v5209 = vpop.f32.mrb[0].mxu0
      %v5210 = vadd.f32 %v5016, %v5209
      %v5211 = vpop.f32.mrb[0].mxu0
      %v5212 = vadd.f32 %v5018, %v5211
      %5213 = vmatprep.mubr.f32.mxu0 0.0
      %v5214 = vand.u32 %v299, 4294901760
      %v5215 = vsub.f32 %v299, %v5214
      %v5216 = vand.u32 %v5215, 4294901760
      %5217 = vmatmul.mubr.f32.gmra.mrb[0].mxu0 %v5216
      %v5218 = vpop.f32.mrb[0].mxu0
      %v5219 = vadd.f32 %v5024, %v5218
      %v5220 = vpop.f32.mrb[0].mxu0
      %v5221 = vadd.f32 %v5026, %v5220
      %5222 = vmatprep.mubr.f32.mxu0 0.0
      %v5223 = vand.u32 %v302, 4294901760
      %v5224 = vsub.f32 %v302, %v5223
      %v5225 = vand.u32 %v5224, 4294901760
      %5226 = vmatmul.mubr.f32.gmra.mrb[0].mxu0 %v5225
      %v5227 = vpop.f32.mrb[0].mxu0
      %v5228 = vadd.f32 %v5032, %v5227
      %v5229 = vpop.f32.mrb[0].mxu0
      %v5230 = vadd.f32 %v5034, %v5229
      %5231 = vmatprep.mubr.f32.mxu0 0.0
      %v5232 = vand.u32 %v305, 4294901760
      %v5233 = vsub.f32 %v305, %v5232
      %v5234 = vand.u32 %v5233, 4294901760
      %5235 = vmatmul.mubr.f32.gmra.mrb[0].mxu0 %v5234
      %v5236 = vpop.f32.mrb[0].mxu0
      %v5237 = vadd.f32 %v5040, %v5236
      %v5238 = vpop.f32.mrb[0].mxu0
      %v5239 = vadd.f32 %v5042, %v5238
      %5240 = vmatprep.mubr.f32.mxu0 0.0
      %v5241 = vand.u32 %v308, 4294901760
      %v5242 = vsub.f32 %v308, %v5241
      %v5243 = vand.u32 %v5242, 4294901760
      %5244 = vmatmul.mubr.f32.gmra.mrb[0].mxu0 %v5243
      %v5245 = vpop.f32.mrb[0].mxu0
      %v5246 = vadd.f32 %v5048, %v5245
      %v5247 = vpop.f32.mrb[0].mxu0
      %v5248 = vadd.f32 %v5050, %v5247
      %5249 = vmatprep.mubr.f32.mxu0 0.0
      %v5250 = vand.u32 %v311, 4294901760
      %v5251 = vsub.f32 %v311, %v5250
      %v5252 = vand.u32 %v5251, 4294901760
      %5253 = vmatmul.mubr.f32.gmra.mrb[0].mxu0 %v5252
      %v5254 = vpop.f32.mrb[0].mxu0
      %v5255 = vadd.f32 %v5056, %v5254
      %v5256 = vpop.f32.mrb[0].mxu0
      %v5257 = vadd.f32 %v5058, %v5256
      %5258 = vmatprep.mubr.f32.mxu0 0.0
      %v5259 = vand.u32 %v314, 4294901760
      %v5260 = vsub.f32 %v314, %v5259
      %v5261 = vand.u32 %v5260, 4294901760
      %5262 = vmatmul.mubr.f32.gmra.mrb[0].mxu0 %v5261
      %v5263 = vpop.f32.mrb[0].mxu0
      %v5264 = vadd.f32 %v5064, %v5263
      %v5265 = vpop.f32.mrb[0].mxu0
      %v5266 = vadd.f32 %v5066, %v5265
      %5267 = vmatprep.mubr.f32.mxu0 0.0
      %v5268 = vand.u32 %v317, 4294901760
      %v5269 = vsub.f32 %v317, %v5268
      %v5270 = vand.u32 %v5269, 4294901760
      %5271 = vmatmul.mubr.f32.gmra.mrb[0].mxu0 %v5270
      %v5272 = vpop.f32.mrb[0].mxu0
      %v5273 = vadd.f32 %v5072, %v5272
      %v5274 = vpop.f32.mrb[0].mxu0
      %v5275 = vadd.f32 %v5074, %v5274
      %5276 = vdwg.mxu0
      %v5277 = vand.u32 %v151, 4294901760
      %v5278 = vsub.f32 %v151, %v5277
      %v5279 = vand.u32 %v5278, 4294901760
      %5280 = vmatprep.subr.mxu0 %v5279
      %v5281 = vand.u32 %v150, 4294901760
      %v5282 = vsub.f32 %v150, %v5281
      %v5283 = vand.u32 %v5282, 4294901760
      %5284 = vmatpush1.msra.mxu0 %v5283
      %v5285 = vand.u32 %v160, 4294901760
      %v5286 = vsub.f32 %v160, %v5285
      %v5287 = vand.u32 %v5286, 4294901760
      %5288 = vmatprep.subr.mxu0 %v5287
      %v5289 = vand.u32 %v159, 4294901760
      %v5290 = vsub.f32 %v159, %v5289
      %v5291 = vand.u32 %v5290, 4294901760
      %5292 = vmatpush1.msra.mxu0 %v5291
      %v5293 = vand.u32 %v169, 4294901760
      %v5294 = vsub.f32 %v169, %v5293
      %v5295 = vand.u32 %v5294, 4294901760
      %5296 = vmatprep.subr.mxu0 %v5295
      %v5297 = vand.u32 %v168, 4294901760
      %v5298 = vsub.f32 %v168, %v5297
      %v5299 = vand.u32 %v5298, 4294901760
      %5300 = vmatpush1.msra.mxu0 %v5299
      %v5301 = vand.u32 %v178, 4294901760
      %v5302 = vsub.f32 %v178, %v5301
      %v5303 = vand.u32 %v5302, 4294901760
      %5304 = vmatprep.subr.mxu0 %v5303
      %v5305 = vand.u32 %v177, 4294901760
      %v5306 = vsub.f32 %v177, %v5305
      %v5307 = vand.u32 %v5306, 4294901760
      %5308 = vmatpush1.msra.mxu0 %v5307
      %v5309 = vand.u32 %v187, 4294901760
      %v5310 = vsub.f32 %v187, %v5309
      %v5311 = vand.u32 %v5310, 4294901760
      %5312 = vmatprep.subr.mxu0 %v5311
      %v5313 = vand.u32 %v186, 4294901760
      %v5314 = vsub.f32 %v186, %v5313
      %v5315 = vand.u32 %v5314, 4294901760
      %5316 = vmatpush1.msra.mxu0 %v5315
      %v5317 = vand.u32 %v196, 4294901760
      %v5318 = vsub.f32 %v196, %v5317
      %v5319 = vand.u32 %v5318, 4294901760
      %5320 = vmatprep.subr.mxu0 %v5319
      %v5321 = vand.u32 %v195, 4294901760
      %v5322 = vsub.f32 %v195, %v5321
      %v5323 = vand.u32 %v5322, 4294901760
      %5324 = vmatpush1.msra.mxu0 %v5323
      %v5325 = vand.u32 %v205, 4294901760
      %v5326 = vsub.f32 %v205, %v5325
      %v5327 = vand.u32 %v5326, 4294901760
      %5328 = vmatprep.subr.mxu0 %v5327
      %v5329 = vand.u32 %v204, 4294901760
      %v5330 = vsub.f32 %v204, %v5329
      %v5331 = vand.u32 %v5330, 4294901760
      %5332 = vmatpush1.msra.mxu0 %v5331
      %v5333 = vand.u32 %v214, 4294901760
      %v5334 = vsub.f32 %v214, %v5333
      %v5335 = vand.u32 %v5334, 4294901760
      %5336 = vmatprep.subr.mxu0 %v5335
      %v5337 = vand.u32 %v213, 4294901760
      %v5338 = vsub.f32 %v213, %v5337
      %v5339 = vand.u32 %v5338, 4294901760
      %5340 = vmatpush1.msra.mxu0 %v5339
      %v5341 = vand.u32 %v223, 4294901760
      %v5342 = vsub.f32 %v223, %v5341
      %v5343 = vand.u32 %v5342, 4294901760
      %5344 = vmatprep.subr.mxu0 %v5343
      %v5345 = vand.u32 %v222, 4294901760
      %v5346 = vsub.f32 %v222, %v5345
      %v5347 = vand.u32 %v5346, 4294901760
      %5348 = vmatpush1.msra.mxu0 %v5347
      %v5349 = vand.u32 %v232, 4294901760
      %v5350 = vsub.f32 %v232, %v5349
      %v5351 = vand.u32 %v5350, 4294901760
      %5352 = vmatprep.subr.mxu0 %v5351
      %v5353 = vand.u32 %v231, 4294901760
      %v5354 = vsub.f32 %v231, %v5353
      %v5355 = vand.u32 %v5354, 4294901760
      %5356 = vmatpush1.msra.mxu0 %v5355
      %v5357 = vand.u32 %v241, 4294901760
      %v5358 = vsub.f32 %v241, %v5357
      %v5359 = vand.u32 %v5358, 4294901760
      %5360 = vmatprep.subr.mxu0 %v5359
      %v5361 = vand.u32 %v240, 4294901760
      %v5362 = vsub.f32 %v240, %v5361
      %v5363 = vand.u32 %v5362, 4294901760
      %5364 = vmatpush1.msra.mxu0 %v5363
      %v5365 = vand.u32 %v250, 4294901760
      %v5366 = vsub.f32 %v250, %v5365
      %v5367 = vand.u32 %v5366, 4294901760
      %5368 = vmatprep.subr.mxu0 %v5367
      %v5369 = vand.u32 %v249, 4294901760
      %v5370 = vsub.f32 %v249, %v5369
      %v5371 = vand.u32 %v5370, 4294901760
      %5372 = vmatpush1.msra.mxu0 %v5371
      %v5373 = vand.u32 %v259, 4294901760
      %v5374 = vsub.f32 %v259, %v5373
      %v5375 = vand.u32 %v5374, 4294901760
      %5376 = vmatprep.subr.mxu0 %v5375
      %v5377 = vand.u32 %v258, 4294901760
      %v5378 = vsub.f32 %v258, %v5377
      %v5379 = vand.u32 %v5378, 4294901760
      %5380 = vmatpush1.msra.mxu0 %v5379
      %v5381 = vand.u32 %v268, 4294901760
      %v5382 = vsub.f32 %v268, %v5381
      %v5383 = vand.u32 %v5382, 4294901760
      %5384 = vmatprep.subr.mxu0 %v5383
      %v5385 = vand.u32 %v267, 4294901760
      %v5386 = vsub.f32 %v267, %v5385
      %v5387 = vand.u32 %v5386, 4294901760
      %5388 = vmatpush1.msra.mxu0 %v5387
      %5389 = vmatprep.subr.mxu0 0.0
      %5390 = vmatpush1.msra.mxu0 0.0
      %5391 = vmatprep.subr.mxu0 0.0
      %5392 = vmatpush1.msra.mxu0 0.0
      %5393 = vmatprep.subr.mxu0 0.0
      %5394 = vmatpush1.msra.mxu0 0.0
      %5395 = vmatprep.subr.mxu0 0.0
      %5396 = vmatpush1.msra.mxu0 0.0
      %5397 = vmatprep.subr.mxu0 0.0
      %5398 = vmatpush1.msra.mxu0 0.0
      %5399 = vmatprep.subr.mxu0 0.0
      %5400 = vmatpush1.msra.mxu0 0.0
      %5401 = vmatprep.subr.mxu0 0.0
      %5402 = vmatpush1.msra.mxu0 0.0
      %5403 = vmatprep.subr.mxu0 0.0
      %5404 = vmatpush1.msra.mxu0 0.0
      %5405 = vmatprep.subr.mxu0 0.0
      %5406 = vmatpush1.msra.mxu0 0.0
      %5407 = vmatprep.subr.mxu0 0.0
      %5408 = vmatpush1.msra.mxu0 0.0
      %5409 = vmatprep.subr.mxu0 0.0
      %5410 = vmatpush1.msra.mxu0 0.0
      %5411 = vmatprep.subr.mxu0 0.0
      %5412 = vmatpush1.msra.mxu0 0.0
      %5413 = vmatprep.subr.mxu0 0.0
      %5414 = vmatpush1.msra.mxu0 0.0
      %5415 = vmatprep.subr.mxu0 0.0
      %5416 = vmatpush1.msra.mxu0 0.0
      %5417 = vmatprep.subr.mxu0 0.0
      %5418 = vmatpush1.msra.mxu0 0.0
      %5419 = vmatprep.subr.mxu0 0.0
      %5420 = vmatpush1.msra.mxu0 0.0
      %5421 = vmatprep.subr.mxu0 0.0
      %5422 = vmatpush1.msra.mxu0 0.0
      %5423 = vmatprep.subr.mxu0 0.0
      %5424 = vmatpush1.msra.mxu0 0.0
      %5425 = vmatprep.mubr.f32.mxu0 0.0
      %v5426 = vand.u32 %v284, 4294901760
      %5427 = vmatmul.mubr.f32.gmra.mrb[0].mxu0 %v5426
      %v5428 = vpop.f32.mrb[0].mxu0
      %v5429 = vadd.f32 %v5174, %v5428
      %v5430 = vpop.f32.mrb[0].mxu0
      %v5431 = vadd.f32 %v5176, %v5430
      %5432 = vmatprep.mubr.f32.mxu0 0.0
      %v5433 = vand.u32 %v287, 4294901760
      %5434 = vmatmul.mubr.f32.gmra.mrb[0].mxu0 %v5433
      %v5435 = vpop.f32.mrb[0].mxu0
      %v5436 = vadd.f32 %v5183, %v5435
      %v5437 = vpop.f32.mrb[0].mxu0
      %v5438 = vadd.f32 %v5185, %v5437
      %5439 = vmatprep.mubr.f32.mxu0 0.0
      %v5440 = vand.u32 %v290, 4294901760
      %5441 = vmatmul.mubr.f32.gmra.mrb[0].mxu0 %v5440
      %v5442 = vpop.f32.mrb[0].mxu0
      %v5443 = vadd.f32 %v5192, %v5442
      %v5444 = vpop.f32.mrb[0].mxu0
      %v5445 = vadd.f32 %v5194, %v5444
      %5446 = vmatprep.mubr.f32.mxu0 0.0
      %v5447 = vand.u32 %v293, 4294901760
      %5448 = vmatmul.mubr.f32.gmra.mrb[0].mxu0 %v5447
      %v5449 = vpop.f32.mrb[0].mxu0
      %v5450 = vadd.f32 %v5201, %v5449
      %v5451 = vpop.f32.mrb[0].mxu0
      %v5452 = vadd.f32 %v5203, %v5451
      %5453 = vmatprep.mubr.f32.mxu0 0.0
      %v5454 = vand.u32 %v296, 4294901760
      %5455 = vmatmul.mubr.f32.gmra.mrb[0].mxu0 %v5454
      %v5456 = vpop.f32.mrb[0].mxu0
      %v5457 = vadd.f32 %v5210, %v5456
      %v5458 = vpop.f32.mrb[0].mxu0
      %v5459 = vadd.f32 %v5212, %v5458
      %5460 = vmatprep.mubr.f32.mxu0 0.0
      %v5461 = vand.u32 %v299, 4294901760
      %5462 = vmatmul.mubr.f32.gmra.mrb[0].mxu0 %v5461
      %v5463 = vpop.f32.mrb[0].mxu0
      %v5464 = vadd.f32 %v5219, %v5463
      %v5465 = vpop.f32.mrb[0].mxu0
      %v5466 = vadd.f32 %v5221, %v5465
      %5467 = vmatprep.mubr.f32.mxu0 0.0
      %v5468 = vand.u32 %v302, 4294901760
      %5469 = vmatmul.mubr.f32.gmra.mrb[0].mxu0 %v5468
      %v5470 = vpop.f32.mrb[0].mxu0
      %v5471 = vadd.f32 %v5228, %v5470
      %v5472 = vpop.f32.mrb[0].mxu0
      %v5473 = vadd.f32 %v5230, %v5472
      %5474 = vmatprep.mubr.f32.mxu0 0.0
      %v5475 = vand.u32 %v305, 4294901760
      %5476 = vmatmul.mubr.f32.gmra.mrb[0].mxu0 %v5475
      %v5477 = vpop.f32.mrb[0].mxu0
      %v5478 = vadd.f32 %v5237, %v5477
      %v5479 = vpop.f32.mrb[0].mxu0
      %v5480 = vadd.f32 %v5239, %v5479
      %5481 = vmatprep.mubr.f32.mxu0 0.0
      %v5482 = vand.u32 %v308, 4294901760
      %5483 = vmatmul.mubr.f32.gmra.mrb[0].mxu0 %v5482
      %v5484 = vpop.f32.mrb[0].mxu0
      %v5485 = vadd.f32 %v5246, %v5484
      %v5486 = vpop.f32.mrb[0].mxu0
      %v5487 = vadd.f32 %v5248, %v5486
      %5488 = vmatprep.mubr.f32.mxu0 0.0
      %v5489 = vand.u32 %v311, 4294901760
      %5490 = vmatmul.mubr.f32.gmra.mrb[0].mxu0 %v5489
      %v5491 = vpop.f32.mrb[0].mxu0
      %v5492 = vadd.f32 %v5255, %v5491
      %v5493 = vpop.f32.mrb[0].mxu0
      %v5494 = vadd.f32 %v5257, %v5493
      %5495 = vmatprep.mubr.f32.mxu0 0.0
      %v5496 = vand.u32 %v314, 4294901760
      %5497 = vmatmul.mubr.f32.gmra.mrb[0].mxu0 %v5496
      %v5498 = vpop.f32.mrb[0].mxu0
      %v5499 = vadd.f32 %v5264, %v5498
      %v5500 = vpop.f32.mrb[0].mxu0
      %v5501 = vadd.f32 %v5266, %v5500
      %5502 = vmatprep.mubr.f32.mxu0 0.0
      %v5503 = vand.u32 %v317, 4294901760
      %5504 = vmatmul.mubr.f32.gmra.mrb[0].mxu0 %v5503
      %v5505 = vpop.f32.mrb[0].mxu0
      %v5506 = vadd.f32 %v5273, %v5505
      %v5507 = vpop.f32.mrb[0].mxu0
      %v5508 = vadd.f32 %v5275, %v5507
      %5509 = vdwg.mxu0
      %v5510 = vand.u32 %v151, 4294901760
      %5511 = vmatprep.subr.mxu0 %v5510
      %v5512 = vand.u32 %v150, 4294901760
      %5513 = vmatpush1.msra.mxu0 %v5512
      %v5514 = vand.u32 %v160, 4294901760
      %5515 = vmatprep.subr.mxu0 %v5514
      %v5516 = vand.u32 %v159, 4294901760
      %5517 = vmatpush1.msra.mxu0 %v5516
      %v5518 = vand.u32 %v169, 4294901760
      %5519 = vmatprep.subr.mxu0 %v5518
      %v5520 = vand.u32 %v168, 4294901760
      %5521 = vmatpush1.msra.mxu0 %v5520
      %v5522 = vand.u32 %v178, 4294901760
      %5523 = vmatprep.subr.mxu0 %v5522
      %v5524 = vand.u32 %v177, 4294901760
      %5525 = vmatpush1.msra.mxu0 %v5524
      %v5526 = vand.u32 %v187, 4294901760
      %5527 = vmatprep.subr.mxu0 %v5526
      %v5528 = vand.u32 %v186, 4294901760
      %5529 = vmatpush1.msra.mxu0 %v5528
      %v5530 = vand.u32 %v196, 4294901760
      %5531 = vmatprep.subr.mxu0 %v5530
      %v5532 = vand.u32 %v195, 4294901760
      %5533 = vmatpush1.msra.mxu0 %v5532
      %v5534 = vand.u32 %v205, 4294901760
      %5535 = vmatprep.subr.mxu0 %v5534
      %v5536 = vand.u32 %v204, 4294901760
      %5537 = vmatpush1.msra.mxu0 %v5536
      %v5538 = vand.u32 %v214, 4294901760
      %5539 = vmatprep.subr.mxu0 %v5538
      %v5540 = vand.u32 %v213, 4294901760
      %5541 = vmatpush1.msra.mxu0 %v5540
      %v5542 = vand.u32 %v223, 4294901760
      %5543 = vmatprep.subr.mxu0 %v5542
      %v5544 = vand.u32 %v222, 4294901760
      %5545 = vmatpush1.msra.mxu0 %v5544
      %v5546 = vand.u32 %v232, 4294901760
      %5547 = vmatprep.subr.mxu0 %v5546
      %v5548 = vand.u32 %v231, 4294901760
      %5549 = vmatpush1.msra.mxu0 %v5548
      %v5550 = vand.u32 %v241, 4294901760
      %5551 = vmatprep.subr.mxu0 %v5550
      %v5552 = vand.u32 %v240, 4294901760
      %5553 = vmatpush1.msra.mxu0 %v5552
      %v5554 = vand.u32 %v250, 4294901760
      %5555 = vmatprep.subr.mxu0 %v5554
      %v5556 = vand.u32 %v249, 4294901760
      %5557 = vmatpush1.msra.mxu0 %v5556
      %v5558 = vand.u32 %v259, 4294901760
      %5559 = vmatprep.subr.mxu0 %v5558
      %v5560 = vand.u32 %v258, 4294901760
      %5561 = vmatpush1.msra.mxu0 %v5560
      %v5562 = vand.u32 %v268, 4294901760
      %5563 = vmatprep.subr.mxu0 %v5562
      %v5564 = vand.u32 %v267, 4294901760
      %5565 = vmatpush1.msra.mxu0 %v5564
      %5566 = vmatprep.subr.mxu0 0.0
      %5567 = vmatpush1.msra.mxu0 0.0
      %5568 = vmatprep.subr.mxu0 0.0
      %5569 = vmatpush1.msra.mxu0 0.0
      %5570 = vmatprep.subr.mxu0 0.0
      %5571 = vmatpush1.msra.mxu0 0.0
      %5572 = vmatprep.subr.mxu0 0.0
      %5573 = vmatpush1.msra.mxu0 0.0
      %5574 = vmatprep.subr.mxu0 0.0
      %5575 = vmatpush1.msra.mxu0 0.0
      %5576 = vmatprep.subr.mxu0 0.0
      %5577 = vmatpush1.msra.mxu0 0.0
      %5578 = vmatprep.subr.mxu0 0.0
      %5579 = vmatpush1.msra.mxu0 0.0
      %5580 = vmatprep.subr.mxu0 0.0
      %5581 = vmatpush1.msra.mxu0 0.0
      %5582 = vmatprep.subr.mxu0 0.0
      %5583 = vmatpush1.msra.mxu0 0.0
      %5584 = vmatprep.subr.mxu0 0.0
      %5585 = vmatpush1.msra.mxu0 0.0
      %5586 = vmatprep.subr.mxu0 0.0
      %5587 = vmatpush1.msra.mxu0 0.0
      %5588 = vmatprep.subr.mxu0 0.0
      %5589 = vmatpush1.msra.mxu0 0.0
      %5590 = vmatprep.subr.mxu0 0.0
      %5591 = vmatpush1.msra.mxu0 0.0
      %5592 = vmatprep.subr.mxu0 0.0
      %5593 = vmatpush1.msra.mxu0 0.0
      %5594 = vmatprep.subr.mxu0 0.0
      %5595 = vmatpush1.msra.mxu0 0.0
      %5596 = vmatprep.subr.mxu0 0.0
      %5597 = vmatpush1.msra.mxu0 0.0
      %5598 = vmatprep.subr.mxu0 0.0
      %5599 = vmatpush1.msra.mxu0 0.0
      %5600 = vmatprep.subr.mxu0 0.0
      %5601 = vmatpush1.msra.mxu0 0.0
      %5602 = vmatprep.mubr.f32.mxu0 0.0
      %v5603 = vand.u32 %v284, 4294901760
      %5604 = vmatmul.mubr.f32.gmra.mrb[0].mxu0 %v5603
      %v5605 = vpop.f32.mrb[0].mxu0
      %v5606 = vadd.f32 %v5429, %v5605
      %v5607 = vpop.f32.mrb[0].mxu0
      %v5608 = vadd.f32 %v5431, %v5607
      %5609 = vmatprep.mubr.f32.mxu0 0.0
      %v5610 = vand.u32 %v287, 4294901760
      %5611 = vmatmul.mubr.f32.gmra.mrb[0].mxu0 %v5610
      %v5612 = vpop.f32.mrb[0].mxu0
      %v5613 = vadd.f32 %v5436, %v5612
      %v5614 = vpop.f32.mrb[0].mxu0
      %v5615 = vadd.f32 %v5438, %v5614
      %5616 = vmatprep.mubr.f32.mxu0 0.0
      %v5617 = vand.u32 %v290, 4294901760
      %5618 = vmatmul.mubr.f32.gmra.mrb[0].mxu0 %v5617
      %v5619 = vpop.f32.mrb[0].mxu0
      %v5620 = vadd.f32 %v5443, %v5619
      %v5621 = vpop.f32.mrb[0].mxu0
      %v5622 = vadd.f32 %v5445, %v5621
      %5623 = vmatprep.mubr.f32.mxu0 0.0
      %v5624 = vand.u32 %v293, 4294901760
      %5625 = vmatmul.mubr.f32.gmra.mrb[0].mxu0 %v5624
      %v5626 = vpop.f32.mrb[0].mxu0
      %v5627 = vadd.f32 %v5450, %v5626
      %v5628 = vpop.f32.mrb[0].mxu0
      %v5629 = vadd.f32 %v5452, %v5628
      %5630 = vmatprep.mubr.f32.mxu0 0.0
      %v5631 = vand.u32 %v296, 4294901760
      %5632 = vmatmul.mubr.f32.gmra.mrb[0].mxu0 %v5631
      %v5633 = vpop.f32.mrb[0].mxu0
      %v5634 = vadd.f32 %v5457, %v5633
      %v5635 = vpop.f32.mrb[0].mxu0
      %v5636 = vadd.f32 %v5459, %v5635
      %5637 = vmatprep.mubr.f32.mxu0 0.0
      %v5638 = vand.u32 %v299, 4294901760
      %5639 = vmatmul.mubr.f32.gmra.mrb[0].mxu0 %v5638
      %v5640 = vpop.f32.mrb[0].mxu0
      %v5641 = vadd.f32 %v5464, %v5640
      %v5642 = vpop.f32.mrb[0].mxu0
      %v5643 = vadd.f32 %v5466, %v5642
      %5644 = vmatprep.mubr.f32.mxu0 0.0
      %v5645 = vand.u32 %v302, 4294901760
      %5646 = vmatmul.mubr.f32.gmra.mrb[0].mxu0 %v5645
      %v5647 = vpop.f32.mrb[0].mxu0
      %v5648 = vadd.f32 %v5471, %v5647
      %v5649 = vpop.f32.mrb[0].mxu0
      %v5650 = vadd.f32 %v5473, %v5649
      %5651 = vmatprep.mubr.f32.mxu0 0.0
      %v5652 = vand.u32 %v305, 4294901760
      %5653 = vmatmul.mubr.f32.gmra.mrb[0].mxu0 %v5652
      %v5654 = vpop.f32.mrb[0].mxu0
      %v5655 = vadd.f32 %v5478, %v5654
      %v5656 = vpop.f32.mrb[0].mxu0
      %v5657 = vadd.f32 %v5480, %v5656
      %5658 = vmatprep.mubr.f32.mxu0 0.0
      %v5659 = vand.u32 %v308, 4294901760
      %5660 = vmatmul.mubr.f32.gmra.mrb[0].mxu0 %v5659
      %v5661 = vpop.f32.mrb[0].mxu0
      %v5662 = vadd.f32 %v5485, %v5661
      %v5663 = vpop.f32.mrb[0].mxu0
      %v5664 = vadd.f32 %v5487, %v5663
      %5665 = vmatprep.mubr.f32.mxu0 0.0
      %v5666 = vand.u32 %v311, 4294901760
      %5667 = vmatmul.mubr.f32.gmra.mrb[0].mxu0 %v5666
      %v5668 = vpop.f32.mrb[0].mxu0
      %v5669 = vadd.f32 %v5492, %v5668
      %v5670 = vpop.f32.mrb[0].mxu0
      %v5671 = vadd.f32 %v5494, %v5670
      %5672 = vmatprep.mubr.f32.mxu0 0.0
      %v5673 = vand.u32 %v314, 4294901760
      %5674 = vmatmul.mubr.f32.gmra.mrb[0].mxu0 %v5673
      %v5675 = vpop.f32.mrb[0].mxu0
      %v5676 = vadd.f32 %v5499, %v5675
      %v5677 = vpop.f32.mrb[0].mxu0
      %v5678 = vadd.f32 %v5501, %v5677
      %5679 = vmatprep.mubr.f32.mxu0 0.0
      %v5680 = vand.u32 %v317, 4294901760
      %5681 = vmatmul.mubr.f32.gmra.mrb[0].mxu0 %v5680
      %v5682 = vpop.f32.mrb[0].mxu0
      %v5683 = vadd.f32 %v5506, %v5682
      %v5684 = vpop.f32.mrb[0].mxu0
      %v5685 = vadd.f32 %v5508, %v5684
      %5686 = vdwg.mxu0
      %5687 = vmatprep.subr.mxu0 0.0
      %v5688 = vand.u32 %v152, 4294901760
      %5689 = vmatpush1.msra.mxu0 %v5688
      %5690 = vmatprep.subr.mxu0 0.0
      %v5691 = vand.u32 %v161, 4294901760
      %5692 = vmatpush1.msra.mxu0 %v5691
      %5693 = vmatprep.subr.mxu0 0.0
      %v5694 = vand.u32 %v170, 4294901760
      %5695 = vmatpush1.msra.mxu0 %v5694
      %5696 = vmatprep.subr.mxu0 0.0
      %v5697 = vand.u32 %v179, 4294901760
      %5698 = vmatpush1.msra.mxu0 %v5697
      %5699 = vmatprep.subr.mxu0 0.0
      %v5700 = vand.u32 %v188, 4294901760
      %5701 = vmatpush1.msra.mxu0 %v5700
      %5702 = vmatprep.subr.mxu0 0.0
      %v5703 = vand.u32 %v197, 4294901760
      %5704 = vmatpush1.msra.mxu0 %v5703
      %5705 = vmatprep.subr.mxu0 0.0
      %v5706 = vand.u32 %v206, 4294901760
      %5707 = vmatpush1.msra.mxu0 %v5706
      %5708 = vmatprep.subr.mxu0 0.0
      %v5709 = vand.u32 %v215, 4294901760
      %5710 = vmatpush1.msra.mxu0 %v5709
      %5711 = vmatprep.subr.mxu0 0.0
      %v5712 = vand.u32 %v224, 4294901760
      %5713 = vmatpush1.msra.mxu0 %v5712
      %5714 = vmatprep.subr.mxu0 0.0
      %v5715 = vand.u32 %v233, 4294901760
      %5716 = vmatpush1.msra.mxu0 %v5715
      %5717 = vmatprep.subr.mxu0 0.0
      %v5718 = vand.u32 %v242, 4294901760
      %5719 = vmatpush1.msra.mxu0 %v5718
      %5720 = vmatprep.subr.mxu0 0.0
      %v5721 = vand.u32 %v251, 4294901760
      %5722 = vmatpush1.msra.mxu0 %v5721
      %5723 = vmatprep.subr.mxu0 0.0
      %v5724 = vand.u32 %v260, 4294901760
      %5725 = vmatpush1.msra.mxu0 %v5724
      %5726 = vmatprep.subr.mxu0 0.0
      %v5727 = vand.u32 %v269, 4294901760
      %5728 = vmatpush1.msra.mxu0 %v5727
      %5729 = vmatprep.subr.mxu0 0.0
      %5730 = vmatpush1.msra.mxu0 0.0
      %5731 = vmatprep.subr.mxu0 0.0
      %5732 = vmatpush1.msra.mxu0 0.0
      %5733 = vmatprep.subr.mxu0 0.0
      %5734 = vmatpush1.msra.mxu0 0.0
      %5735 = vmatprep.subr.mxu0 0.0
      %5736 = vmatpush1.msra.mxu0 0.0
      %5737 = vmatprep.subr.mxu0 0.0
      %5738 = vmatpush1.msra.mxu0 0.0
      %5739 = vmatprep.subr.mxu0 0.0
      %5740 = vmatpush1.msra.mxu0 0.0
      %5741 = vmatprep.subr.mxu0 0.0
      %5742 = vmatpush1.msra.mxu0 0.0
      %5743 = vmatprep.subr.mxu0 0.0
      %5744 = vmatpush1.msra.mxu0 0.0
      %5745 = vmatprep.subr.mxu0 0.0
      %5746 = vmatpush1.msra.mxu0 0.0
      %5747 = vmatprep.subr.mxu0 0.0
      %5748 = vmatpush1.msra.mxu0 0.0
      %5749 = vmatprep.subr.mxu0 0.0
      %5750 = vmatpush1.msra.mxu0 0.0
      %5751 = vmatprep.subr.mxu0 0.0
      %5752 = vmatpush1.msra.mxu0 0.0
      %5753 = vmatprep.subr.mxu0 0.0
      %5754 = vmatpush1.msra.mxu0 0.0
      %5755 = vmatprep.subr.mxu0 0.0
      %5756 = vmatpush1.msra.mxu0 0.0
      %5757 = vmatprep.subr.mxu0 0.0
      %5758 = vmatpush1.msra.mxu0 0.0
      %5759 = vmatprep.subr.mxu0 0.0
      %5760 = vmatpush1.msra.mxu0 0.0
      %5761 = vmatprep.subr.mxu0 0.0
      %5762 = vmatpush1.msra.mxu0 0.0
      %5763 = vmatprep.subr.mxu0 0.0
      %5764 = vmatpush1.msra.mxu0 0.0
      %5765 = vmatprep.mubr.f32.mxu0 0.0
      %v5766 = vand.u32 %v284, 4294901760
      %v5767 = vsub.f32 %v284, %v5766
      %v5768 = vand.u32 %v5767, 4294901760
      %v5769 = vsub.f32 %v5767, %v5768
      %v5770 = vand.u32 %v5769, 4294901760
      %5771 = vmatmul.mubr.f32.gmra.mrb[0].mxu0 %v5770
      %v5772 = vpop.f32.mrb[0].mxu0
      %v5773 = vadd.f32 0.0, %v5772
      %v5774 = vpop.f32.mrb[0].mxu0
      %5775 = vmatprep.mubr.f32.mxu0 0.0
      %v5776 = vand.u32 %v287, 4294901760
      %v5777 = vsub.f32 %v287, %v5776
      %v5778 = vand.u32 %v5777, 4294901760
      %v5779 = vsub.f32 %v5777, %v5778
      %v5780 = vand.u32 %v5779, 4294901760
      %5781 = vmatmul.mubr.f32.gmra.mrb[0].mxu0 %v5780
      %v5782 = vpop.f32.mrb[0].mxu0
      %v5783 = vadd.f32 0.0, %v5782
      %v5784 = vpop.f32.mrb[0].mxu0
      %5785 = vmatprep.mubr.f32.mxu0 0.0
      %v5786 = vand.u32 %v290, 4294901760
      %v5787 = vsub.f32 %v290, %v5786
      %v5788 = vand.u32 %v5787, 4294901760
      %v5789 = vsub.f32 %v5787, %v5788
      %v5790 = vand.u32 %v5789, 4294901760
      %5791 = vmatmul.mubr.f32.gmra.mrb[0].mxu0 %v5790
      %v5792 = vpop.f32.mrb[0].mxu0
      %v5793 = vadd.f32 0.0, %v5792
      %v5794 = vpop.f32.mrb[0].mxu0
      %5795 = vmatprep.mubr.f32.mxu0 0.0
      %v5796 = vand.u32 %v293, 4294901760
      %v5797 = vsub.f32 %v293, %v5796
      %v5798 = vand.u32 %v5797, 4294901760
      %v5799 = vsub.f32 %v5797, %v5798
      %v5800 = vand.u32 %v5799, 4294901760
      %5801 = vmatmul.mubr.f32.gmra.mrb[0].mxu0 %v5800
      %v5802 = vpop.f32.mrb[0].mxu0
      %v5803 = vadd.f32 0.0, %v5802
      %v5804 = vpop.f32.mrb[0].mxu0
      %5805 = vmatprep.mubr.f32.mxu0 0.0
      %v5806 = vand.u32 %v296, 4294901760
      %v5807 = vsub.f32 %v296, %v5806
      %v5808 = vand.u32 %v5807, 4294901760
      %v5809 = vsub.f32 %v5807, %v5808
      %v5810 = vand.u32 %v5809, 4294901760
      %5811 = vmatmul.mubr.f32.gmra.mrb[0].mxu0 %v5810
      %v5812 = vpop.f32.mrb[0].mxu0
      %v5813 = vadd.f32 0.0, %v5812
      %v5814 = vpop.f32.mrb[0].mxu0
      %5815 = vmatprep.mubr.f32.mxu0 0.0
      %v5816 = vand.u32 %v299, 4294901760
      %v5817 = vsub.f32 %v299, %v5816
      %v5818 = vand.u32 %v5817, 4294901760
      %v5819 = vsub.f32 %v5817, %v5818
      %v5820 = vand.u32 %v5819, 4294901760
      %5821 = vmatmul.mubr.f32.gmra.mrb[0].mxu0 %v5820
      %v5822 = vpop.f32.mrb[0].mxu0
      %v5823 = vadd.f32 0.0, %v5822
      %v5824 = vpop.f32.mrb[0].mxu0
      %5825 = vmatprep.mubr.f32.mxu0 0.0
      %v5826 = vand.u32 %v302, 4294901760
      %v5827 = vsub.f32 %v302, %v5826
      %v5828 = vand.u32 %v5827, 4294901760
      %v5829 = vsub.f32 %v5827, %v5828
      %v5830 = vand.u32 %v5829, 4294901760
      %5831 = vmatmul.mubr.f32.gmra.mrb[0].mxu0 %v5830
      %v5832 = vpop.f32.mrb[0].mxu0
      %v5833 = vadd.f32 0.0, %v5832
      %v5834 = vpop.f32.mrb[0].mxu0
      %5835 = vmatprep.mubr.f32.mxu0 0.0
      %v5836 = vand.u32 %v305, 4294901760
      %v5837 = vsub.f32 %v305, %v5836
      %v5838 = vand.u32 %v5837, 4294901760
      %v5839 = vsub.f32 %v5837, %v5838
      %v5840 = vand.u32 %v5839, 4294901760
      %5841 = vmatmul.mubr.f32.gmra.mrb[0].mxu0 %v5840
      %v5842 = vpop.f32.mrb[0].mxu0
      %v5843 = vadd.f32 0.0, %v5842
      %v5844 = vpop.f32.mrb[0].mxu0
      %5845 = vmatprep.mubr.f32.mxu0 0.0
      %v5846 = vand.u32 %v308, 4294901760
      %v5847 = vsub.f32 %v308, %v5846
      %v5848 = vand.u32 %v5847, 4294901760
      %v5849 = vsub.f32 %v5847, %v5848
      %v5850 = vand.u32 %v5849, 4294901760
      %5851 = vmatmul.mubr.f32.gmra.mrb[0].mxu0 %v5850
      %v5852 = vpop.f32.mrb[0].mxu0
      %v5853 = vadd.f32 0.0, %v5852
      %v5854 = vpop.f32.mrb[0].mxu0
      %5855 = vmatprep.mubr.f32.mxu0 0.0
      %v5856 = vand.u32 %v311, 4294901760
      %v5857 = vsub.f32 %v311, %v5856
      %v5858 = vand.u32 %v5857, 4294901760
      %v5859 = vsub.f32 %v5857, %v5858
      %v5860 = vand.u32 %v5859, 4294901760
      %5861 = vmatmul.mubr.f32.gmra.mrb[0].mxu0 %v5860
      %v5862 = vpop.f32.mrb[0].mxu0
      %v5863 = vadd.f32 0.0, %v5862
      %v5864 = vpop.f32.mrb[0].mxu0
      %5865 = vmatprep.mubr.f32.mxu0 0.0
      %v5866 = vand.u32 %v314, 4294901760
      %v5867 = vsub.f32 %v314, %v5866
      %v5868 = vand.u32 %v5867, 4294901760
      %v5869 = vsub.f32 %v5867, %v5868
      %v5870 = vand.u32 %v5869, 4294901760
      %5871 = vmatmul.mubr.f32.gmra.mrb[0].mxu0 %v5870
      %v5872 = vpop.f32.mrb[0].mxu0
      %v5873 = vadd.f32 0.0, %v5872
      %v5874 = vpop.f32.mrb[0].mxu0
      %5875 = vmatprep.mubr.f32.mxu0 0.0
      %v5876 = vand.u32 %v317, 4294901760
      %v5877 = vsub.f32 %v317, %v5876
      %v5878 = vand.u32 %v5877, 4294901760
      %v5879 = vsub.f32 %v5877, %v5878
      %v5880 = vand.u32 %v5879, 4294901760
      %5881 = vmatmul.mubr.f32.gmra.mrb[0].mxu0 %v5880
      %v5882 = vpop.f32.mrb[0].mxu0
      %v5883 = vadd.f32 0.0, %v5882
      %v5884 = vpop.f32.mrb[0].mxu0
      %5885 = vdwg.mxu0
      %5886 = vmatprep.subr.mxu0 0.0
      %v5887 = vand.u32 %v152, 4294901760
      %v5888 = vsub.f32 %v152, %v5887
      %v5889 = vand.u32 %v5888, 4294901760
      %v5890 = vsub.f32 %v5888, %v5889
      %v5891 = vand.u32 %v5890, 4294901760
      %5892 = vmatpush1.msra.mxu0 %v5891
      %5893 = vmatprep.subr.mxu0 0.0
      %v5894 = vand.u32 %v161, 4294901760
      %v5895 = vsub.f32 %v161, %v5894
      %v5896 = vand.u32 %v5895, 4294901760
      %v5897 = vsub.f32 %v5895, %v5896
      %v5898 = vand.u32 %v5897, 4294901760
      %5899 = vmatpush1.msra.mxu0 %v5898
      %5900 = vmatprep.subr.mxu0 0.0
      %v5901 = vand.u32 %v170, 4294901760
      %v5902 = vsub.f32 %v170, %v5901
      %v5903 = vand.u32 %v5902, 4294901760
      %v5904 = vsub.f32 %v5902, %v5903
      %v5905 = vand.u32 %v5904, 4294901760
      %5906 = vmatpush1.msra.mxu0 %v5905
      %5907 = vmatprep.subr.mxu0 0.0
      %v5908 = vand.u32 %v179, 4294901760
      %v5909 = vsub.f32 %v179, %v5908
      %v5910 = vand.u32 %v5909, 4294901760
      %v5911 = vsub.f32 %v5909, %v5910
      %v5912 = vand.u32 %v5911, 4294901760
      %5913 = vmatpush1.msra.mxu0 %v5912
      %5914 = vmatprep.subr.mxu0 0.0
      %v5915 = vand.u32 %v188, 4294901760
      %v5916 = vsub.f32 %v188, %v5915
      %v5917 = vand.u32 %v5916, 4294901760
      %v5918 = vsub.f32 %v5916, %v5917
      %v5919 = vand.u32 %v5918, 4294901760
      %5920 = vmatpush1.msra.mxu0 %v5919
      %5921 = vmatprep.subr.mxu0 0.0
      %v5922 = vand.u32 %v197, 4294901760
      %v5923 = vsub.f32 %v197, %v5922
      %v5924 = vand.u32 %v5923, 4294901760
      %v5925 = vsub.f32 %v5923, %v5924
      %v5926 = vand.u32 %v5925, 4294901760
      %5927 = vmatpush1.msra.mxu0 %v5926
      %5928 = vmatprep.subr.mxu0 0.0
      %v5929 = vand.u32 %v206, 4294901760
      %v5930 = vsub.f32 %v206, %v5929
      %v5931 = vand.u32 %v5930, 4294901760
      %v5932 = vsub.f32 %v5930, %v5931
      %v5933 = vand.u32 %v5932, 4294901760
      %5934 = vmatpush1.msra.mxu0 %v5933
      %5935 = vmatprep.subr.mxu0 0.0
      %v5936 = vand.u32 %v215, 4294901760
      %v5937 = vsub.f32 %v215, %v5936
      %v5938 = vand.u32 %v5937, 4294901760
      %v5939 = vsub.f32 %v5937, %v5938
      %v5940 = vand.u32 %v5939, 4294901760
      %5941 = vmatpush1.msra.mxu0 %v5940
      %5942 = vmatprep.subr.mxu0 0.0
      %v5943 = vand.u32 %v224, 4294901760
      %v5944 = vsub.f32 %v224, %v5943
      %v5945 = vand.u32 %v5944, 4294901760
      %v5946 = vsub.f32 %v5944, %v5945
      %v5947 = vand.u32 %v5946, 4294901760
      %5948 = vmatpush1.msra.mxu0 %v5947
      %5949 = vmatprep.subr.mxu0 0.0
      %v5950 = vand.u32 %v233, 4294901760
      %v5951 = vsub.f32 %v233, %v5950
      %v5952 = vand.u32 %v5951, 4294901760
      %v5953 = vsub.f32 %v5951, %v5952
      %v5954 = vand.u32 %v5953, 4294901760
      %5955 = vmatpush1.msra.mxu0 %v5954
      %5956 = vmatprep.subr.mxu0 0.0
      %v5957 = vand.u32 %v242, 4294901760
      %v5958 = vsub.f32 %v242, %v5957
      %v5959 = vand.u32 %v5958, 4294901760
      %v5960 = vsub.f32 %v5958, %v5959
      %v5961 = vand.u32 %v5960, 4294901760
      %5962 = vmatpush1.msra.mxu0 %v5961
      %5963 = vmatprep.subr.mxu0 0.0
      %v5964 = vand.u32 %v251, 4294901760
      %v5965 = vsub.f32 %v251, %v5964
      %v5966 = vand.u32 %v5965, 4294901760
      %v5967 = vsub.f32 %v5965, %v5966
      %v5968 = vand.u32 %v5967, 4294901760
      %5969 = vmatpush1.msra.mxu0 %v5968
      %5970 = vmatprep.subr.mxu0 0.0
      %v5971 = vand.u32 %v260, 4294901760
      %v5972 = vsub.f32 %v260, %v5971
      %v5973 = vand.u32 %v5972, 4294901760
      %v5974 = vsub.f32 %v5972, %v5973
      %v5975 = vand.u32 %v5974, 4294901760
      %5976 = vmatpush1.msra.mxu0 %v5975
      %5977 = vmatprep.subr.mxu0 0.0
      %v5978 = vand.u32 %v269, 4294901760
      %v5979 = vsub.f32 %v269, %v5978
      %v5980 = vand.u32 %v5979, 4294901760
      %v5981 = vsub.f32 %v5979, %v5980
      %v5982 = vand.u32 %v5981, 4294901760
      %5983 = vmatpush1.msra.mxu0 %v5982
      %5984 = vmatprep.subr.mxu0 0.0
      %5985 = vmatpush1.msra.mxu0 0.0
      %5986 = vmatprep.subr.mxu0 0.0
      %5987 = vmatpush1.msra.mxu0 0.0
      %5988 = vmatprep.subr.mxu0 0.0
      %5989 = vmatpush1.msra.mxu0 0.0
      %5990 = vmatprep.subr.mxu0 0.0
      %5991 = vmatpush1.msra.mxu0 0.0
      %5992 = vmatprep.subr.mxu0 0.0
      %5993 = vmatpush1.msra.mxu0 0.0
      %5994 = vmatprep.subr.mxu0 0.0
      %5995 = vmatpush1.msra.mxu0 0.0
      %5996 = vmatprep.subr.mxu0 0.0
      %5997 = vmatpush1.msra.mxu0 0.0
      %5998 = vmatprep.subr.mxu0 0.0
      %5999 = vmatpush1.msra.mxu0 0.0
      %6000 = vmatprep.subr.mxu0 0.0
      %6001 = vmatpush1.msra.mxu0 0.0
      %6002 = vmatprep.subr.mxu0 0.0
      %6003 = vmatpush1.msra.mxu0 0.0
      %6004 = vmatprep.subr.mxu0 0.0
      %6005 = vmatpush1.msra.mxu0 0.0
      %6006 = vmatprep.subr.mxu0 0.0
      %6007 = vmatpush1.msra.mxu0 0.0
      %6008 = vmatprep.subr.mxu0 0.0
      %6009 = vmatpush1.msra.mxu0 0.0
      %6010 = vmatprep.subr.mxu0 0.0
      %6011 = vmatpush1.msra.mxu0 0.0
      %6012 = vmatprep.subr.mxu0 0.0
      %6013 = vmatpush1.msra.mxu0 0.0
      %6014 = vmatprep.subr.mxu0 0.0
      %6015 = vmatpush1.msra.mxu0 0.0
      %6016 = vmatprep.subr.mxu0 0.0
      %6017 = vmatpush1.msra.mxu0 0.0
      %6018 = vmatprep.subr.mxu0 0.0
      %6019 = vmatpush1.msra.mxu0 0.0
      %6020 = vmatprep.mubr.f32.mxu0 0.0
      %v6021 = vand.u32 %v284, 4294901760
      %6022 = vmatmul.mubr.f32.gmra.mrb[0].mxu0 %v6021
      %v6023 = vpop.f32.mrb[0].mxu0
      %v6024 = vadd.f32 %v5773, %v6023
      %v6025 = vpop.f32.mrb[0].mxu0
      %6026 = vmatprep.mubr.f32.mxu0 0.0
      %v6027 = vand.u32 %v287, 4294901760
      %6028 = vmatmul.mubr.f32.gmra.mrb[0].mxu0 %v6027
      %v6029 = vpop.f32.mrb[0].mxu0
      %v6030 = vadd.f32 %v5783, %v6029
      %v6031 = vpop.f32.mrb[0].mxu0
      %6032 = vmatprep.mubr.f32.mxu0 0.0
      %v6033 = vand.u32 %v290, 4294901760
      %6034 = vmatmul.mubr.f32.gmra.mrb[0].mxu0 %v6033
      %v6035 = vpop.f32.mrb[0].mxu0
      %v6036 = vadd.f32 %v5793, %v6035
      %v6037 = vpop.f32.mrb[0].mxu0
      %6038 = vmatprep.mubr.f32.mxu0 0.0
      %v6039 = vand.u32 %v293, 4294901760
      %6040 = vmatmul.mubr.f32.gmra.mrb[0].mxu0 %v6039
      %v6041 = vpop.f32.mrb[0].mxu0
      %v6042 = vadd.f32 %v5803, %v6041
      %v6043 = vpop.f32.mrb[0].mxu0
      %6044 = vmatprep.mubr.f32.mxu0 0.0
      %v6045 = vand.u32 %v296, 4294901760
      %6046 = vmatmul.mubr.f32.gmra.mrb[0].mxu0 %v6045
      %v6047 = vpop.f32.mrb[0].mxu0
      %v6048 = vadd.f32 %v5813, %v6047
      %v6049 = vpop.f32.mrb[0].mxu0
      %6050 = vmatprep.mubr.f32.mxu0 0.0
      %v6051 = vand.u32 %v299, 4294901760
      %6052 = vmatmul.mubr.f32.gmra.mrb[0].mxu0 %v6051
      %v6053 = vpop.f32.mrb[0].mxu0
      %v6054 = vadd.f32 %v5823, %v6053
      %v6055 = vpop.f32.mrb[0].mxu0
      %6056 = vmatprep.mubr.f32.mxu0 0.0
      %v6057 = vand.u32 %v302, 4294901760
      %6058 = vmatmul.mubr.f32.gmra.mrb[0].mxu0 %v6057
      %v6059 = vpop.f32.mrb[0].mxu0
      %v6060 = vadd.f32 %v5833, %v6059
      %v6061 = vpop.f32.mrb[0].mxu0
      %6062 = vmatprep.mubr.f32.mxu0 0.0
      %v6063 = vand.u32 %v305, 4294901760
      %6064 = vmatmul.mubr.f32.gmra.mrb[0].mxu0 %v6063
      %v6065 = vpop.f32.mrb[0].mxu0
      %v6066 = vadd.f32 %v5843, %v6065
      %v6067 = vpop.f32.mrb[0].mxu0
      %6068 = vmatprep.mubr.f32.mxu0 0.0
      %v6069 = vand.u32 %v308, 4294901760
      %6070 = vmatmul.mubr.f32.gmra.mrb[0].mxu0 %v6069
      %v6071 = vpop.f32.mrb[0].mxu0
      %v6072 = vadd.f32 %v5853, %v6071
      %v6073 = vpop.f32.mrb[0].mxu0
      %6074 = vmatprep.mubr.f32.mxu0 0.0
      %v6075 = vand.u32 %v311, 4294901760
      %6076 = vmatmul.mubr.f32.gmra.mrb[0].mxu0 %v6075
      %v6077 = vpop.f32.mrb[0].mxu0
      %v6078 = vadd.f32 %v5863, %v6077
      %v6079 = vpop.f32.mrb[0].mxu0
      %6080 = vmatprep.mubr.f32.mxu0 0.0
      %v6081 = vand.u32 %v314, 4294901760
      %6082 = vmatmul.mubr.f32.gmra.mrb[0].mxu0 %v6081
      %v6083 = vpop.f32.mrb[0].mxu0
      %v6084 = vadd.f32 %v5873, %v6083
      %v6085 = vpop.f32.mrb[0].mxu0
      %6086 = vmatprep.mubr.f32.mxu0 0.0
      %v6087 = vand.u32 %v317, 4294901760
      %6088 = vmatmul.mubr.f32.gmra.mrb[0].mxu0 %v6087
      %v6089 = vpop.f32.mrb[0].mxu0
      %v6090 = vadd.f32 %v5883, %v6089
      %v6091 = vpop.f32.mrb[0].mxu0
      %6092 = vdwg.mxu0
      %6093 = vmatprep.subr.mxu0 0.0
      %v6094 = vand.u32 %v152, 4294901760
      %v6095 = vsub.f32 %v152, %v6094
      %6096 = vmatpush1.msra.mxu0 %v6095
      %6097 = vmatprep.subr.mxu0 0.0
      %v6098 = vand.u32 %v161, 4294901760
      %v6099 = vsub.f32 %v161, %v6098
      %6100 = vmatpush1.msra.mxu0 %v6099
      %6101 = vmatprep.subr.mxu0 0.0
      %v6102 = vand.u32 %v170, 4294901760
      %v6103 = vsub.f32 %v170, %v6102
      %6104 = vmatpush1.msra.mxu0 %v6103
      %6105 = vmatprep.subr.mxu0 0.0
      %v6106 = vand.u32 %v179, 4294901760
      %v6107 = vsub.f32 %v179, %v6106
      %6108 = vmatpush1.msra.mxu0 %v6107
      %6109 = vmatprep.subr.mxu0 0.0
      %v6110 = vand.u32 %v188, 4294901760
      %v6111 = vsub.f32 %v188, %v6110
      %6112 = vmatpush1.msra.mxu0 %v6111
      %6113 = vmatprep.subr.mxu0 0.0
      %v6114 = vand.u32 %v197, 4294901760
      %v6115 = vsub.f32 %v197, %v6114
      %6116 = vmatpush1.msra.mxu0 %v6115
      %6117 = vmatprep.subr.mxu0 0.0
      %v6118 = vand.u32 %v206, 4294901760
      %v6119 = vsub.f32 %v206, %v6118
      %6120 = vmatpush1.msra.mxu0 %v6119
      %6121 = vmatprep.subr.mxu0 0.0
      %v6122 = vand.u32 %v215, 4294901760
      %v6123 = vsub.f32 %v215, %v6122
      %6124 = vmatpush1.msra.mxu0 %v6123
      %6125 = vmatprep.subr.mxu0 0.0
      %v6126 = vand.u32 %v224, 4294901760
      %v6127 = vsub.f32 %v224, %v6126
      %6128 = vmatpush1.msra.mxu0 %v6127
      %6129 = vmatprep.subr.mxu0 0.0
      %v6130 = vand.u32 %v233, 4294901760
      %v6131 = vsub.f32 %v233, %v6130
      %6132 = vmatpush1.msra.mxu0 %v6131
      %6133 = vmatprep.subr.mxu0 0.0
      %v6134 = vand.u32 %v242, 4294901760
      %v6135 = vsub.f32 %v242, %v6134
      %6136 = vmatpush1.msra.mxu0 %v6135
      %6137 = vmatprep.subr.mxu0 0.0
      %v6138 = vand.u32 %v251, 4294901760
      %v6139 = vsub.f32 %v251, %v6138
      %6140 = vmatpush1.msra.mxu0 %v6139
      %6141 = vmatprep.subr.mxu0 0.0
      %v6142 = vand.u32 %v260, 4294901760
      %v6143 = vsub.f32 %v260, %v6142
      %6144 = vmatpush1.msra.mxu0 %v6143
      %6145 = vmatprep.subr.mxu0 0.0
      %v6146 = vand.u32 %v269, 4294901760
      %v6147 = vsub.f32 %v269, %v6146
      %6148 = vmatpush1.msra.mxu0 %v6147
      %6149 = vmatprep.subr.mxu0 0.0
      %6150 = vmatpush1.msra.mxu0 0.0
      %6151 = vmatprep.subr.mxu0 0.0
      %6152 = vmatpush1.msra.mxu0 0.0
      %6153 = vmatprep.subr.mxu0 0.0
      %6154 = vmatpush1.msra.mxu0 0.0
      %6155 = vmatprep.subr.mxu0 0.0
      %6156 = vmatpush1.msra.mxu0 0.0
      %6157 = vmatprep.subr.mxu0 0.0
      %6158 = vmatpush1.msra.mxu0 0.0
      %6159 = vmatprep.subr.mxu0 0.0
      %6160 = vmatpush1.msra.mxu0 0.0
      %6161 = vmatprep.subr.mxu0 0.0
      %6162 = vmatpush1.msra.mxu0 0.0
      %6163 = vmatprep.subr.mxu0 0.0
      %6164 = vmatpush1.msra.mxu0 0.0
      %6165 = vmatprep.subr.mxu0 0.0
      %6166 = vmatpush1.msra.mxu0 0.0
      %6167 = vmatprep.subr.mxu0 0.0
      %6168 = vmatpush1.msra.mxu0 0.0
      %6169 = vmatprep.subr.mxu0 0.0
      %6170 = vmatpush1.msra.mxu0 0.0
      %6171 = vmatprep.subr.mxu0 0.0
      %6172 = vmatpush1.msra.mxu0 0.0
      %6173 = vmatprep.subr.mxu0 0.0
      %6174 = vmatpush1.msra.mxu0 0.0
      %6175 = vmatprep.subr.mxu0 0.0
      %6176 = vmatpush1.msra.mxu0 0.0
      %6177 = vmatprep.subr.mxu0 0.0
      %6178 = vmatpush1.msra.mxu0 0.0
      %6179 = vmatprep.subr.mxu0 0.0
      %6180 = vmatpush1.msra.mxu0 0.0
      %6181 = vmatprep.subr.mxu0 0.0
      %6182 = vmatpush1.msra.mxu0 0.0
      %6183 = vmatprep.subr.mxu0 0.0
      %6184 = vmatpush1.msra.mxu0 0.0
      %6185 = vmatprep.mubr.f32.mxu0 0.0
      %v6186 = vand.u32 %v284, 4294901760
      %v6187 = vsub.f32 %v284, %v6186
      %6188 = vmatmul.mubr.f32.gmra.mrb[0].mxu0 %v6187
      %v6189 = vpop.f32.mrb[0].mxu0
      %v6190 = vadd.f32 %v6024, %v6189
      %v6191 = vpop.f32.mrb[0].mxu0
      %6192 = vmatprep.mubr.f32.mxu0 0.0
      %v6193 = vand.u32 %v287, 4294901760
      %v6194 = vsub.f32 %v287, %v6193
      %6195 = vmatmul.mubr.f32.gmra.mrb[0].mxu0 %v6194
      %v6196 = vpop.f32.mrb[0].mxu0
      %v6197 = vadd.f32 %v6030, %v6196
      %v6198 = vpop.f32.mrb[0].mxu0
      %6199 = vmatprep.mubr.f32.mxu0 0.0
      %v6200 = vand.u32 %v290, 4294901760
      %v6201 = vsub.f32 %v290, %v6200
      %6202 = vmatmul.mubr.f32.gmra.mrb[0].mxu0 %v6201
      %v6203 = vpop.f32.mrb[0].mxu0
      %v6204 = vadd.f32 %v6036, %v6203
      %v6205 = vpop.f32.mrb[0].mxu0
      %6206 = vmatprep.mubr.f32.mxu0 0.0
      %v6207 = vand.u32 %v293, 4294901760
      %v6208 = vsub.f32 %v293, %v6207
      %6209 = vmatmul.mubr.f32.gmra.mrb[0].mxu0 %v6208
      %v6210 = vpop.f32.mrb[0].mxu0
      %v6211 = vadd.f32 %v6042, %v6210
      %v6212 = vpop.f32.mrb[0].mxu0
      %6213 = vmatprep.mubr.f32.mxu0 0.0
      %v6214 = vand.u32 %v296, 4294901760
      %v6215 = vsub.f32 %v296, %v6214
      %6216 = vmatmul.mubr.f32.gmra.mrb[0].mxu0 %v6215
      %v6217 = vpop.f32.mrb[0].mxu0
      %v6218 = vadd.f32 %v6048, %v6217
      %v6219 = vpop.f32.mrb[0].mxu0
      %6220 = vmatprep.mubr.f32.mxu0 0.0
      %v6221 = vand.u32 %v299, 4294901760
      %v6222 = vsub.f32 %v299, %v6221
      %6223 = vmatmul.mubr.f32.gmra.mrb[0].mxu0 %v6222
      %v6224 = vpop.f32.mrb[0].mxu0
      %v6225 = vadd.f32 %v6054, %v6224
      %v6226 = vpop.f32.mrb[0].mxu0
      %6227 = vmatprep.mubr.f32.mxu0 0.0
      %v6228 = vand.u32 %v302, 4294901760
      %v6229 = vsub.f32 %v302, %v6228
      %6230 = vmatmul.mubr.f32.gmra.mrb[0].mxu0 %v6229
      %v6231 = vpop.f32.mrb[0].mxu0
      %v6232 = vadd.f32 %v6060, %v6231
      %v6233 = vpop.f32.mrb[0].mxu0
      %6234 = vmatprep.mubr.f32.mxu0 0.0
      %v6235 = vand.u32 %v305, 4294901760
      %v6236 = vsub.f32 %v305, %v6235
      %6237 = vmatmul.mubr.f32.gmra.mrb[0].mxu0 %v6236
      %v6238 = vpop.f32.mrb[0].mxu0
      %v6239 = vadd.f32 %v6066, %v6238
      %v6240 = vpop.f32.mrb[0].mxu0
      %6241 = vmatprep.mubr.f32.mxu0 0.0
      %v6242 = vand.u32 %v308, 4294901760
      %v6243 = vsub.f32 %v308, %v6242
      %6244 = vmatmul.mubr.f32.gmra.mrb[0].mxu0 %v6243
      %v6245 = vpop.f32.mrb[0].mxu0
      %v6246 = vadd.f32 %v6072, %v6245
      %v6247 = vpop.f32.mrb[0].mxu0
      %6248 = vmatprep.mubr.f32.mxu0 0.0
      %v6249 = vand.u32 %v311, 4294901760
      %v6250 = vsub.f32 %v311, %v6249
      %6251 = vmatmul.mubr.f32.gmra.mrb[0].mxu0 %v6250
      %v6252 = vpop.f32.mrb[0].mxu0
      %v6253 = vadd.f32 %v6078, %v6252
      %v6254 = vpop.f32.mrb[0].mxu0
      %6255 = vmatprep.mubr.f32.mxu0 0.0
      %v6256 = vand.u32 %v314, 4294901760
      %v6257 = vsub.f32 %v314, %v6256
      %6258 = vmatmul.mubr.f32.gmra.mrb[0].mxu0 %v6257
      %v6259 = vpop.f32.mrb[0].mxu0
      %v6260 = vadd.f32 %v6084, %v6259
      %v6261 = vpop.f32.mrb[0].mxu0
      %6262 = vmatprep.mubr.f32.mxu0 0.0
      %v6263 = vand.u32 %v317, 4294901760
      %v6264 = vsub.f32 %v317, %v6263
      %6265 = vmatmul.mubr.f32.gmra.mrb[0].mxu0 %v6264
      %v6266 = vpop.f32.mrb[0].mxu0
      %v6267 = vadd.f32 %v6090, %v6266
      %v6268 = vpop.f32.mrb[0].mxu0
      %6269 = vdwg.mxu0
      %6270 = vmatprep.subr.mxu0 0.0
      %v6271 = vand.u32 %v152, 4294901760
      %6272 = vmatpush1.msra.mxu0 %v6271
      %6273 = vmatprep.subr.mxu0 0.0
      %v6274 = vand.u32 %v161, 4294901760
      %6275 = vmatpush1.msra.mxu0 %v6274
      %6276 = vmatprep.subr.mxu0 0.0
      %v6277 = vand.u32 %v170, 4294901760
      %6278 = vmatpush1.msra.mxu0 %v6277
      %6279 = vmatprep.subr.mxu0 0.0
      %v6280 = vand.u32 %v179, 4294901760
      %6281 = vmatpush1.msra.mxu0 %v6280
      %6282 = vmatprep.subr.mxu0 0.0
      %v6283 = vand.u32 %v188, 4294901760
      %6284 = vmatpush1.msra.mxu0 %v6283
      %6285 = vmatprep.subr.mxu0 0.0
      %v6286 = vand.u32 %v197, 4294901760
      %6287 = vmatpush1.msra.mxu0 %v6286
      %6288 = vmatprep.subr.mxu0 0.0
      %v6289 = vand.u32 %v206, 4294901760
      %6290 = vmatpush1.msra.mxu0 %v6289
      %6291 = vmatprep.subr.mxu0 0.0
      %v6292 = vand.u32 %v215, 4294901760
      %6293 = vmatpush1.msra.mxu0 %v6292
      %6294 = vmatprep.subr.mxu0 0.0
      %v6295 = vand.u32 %v224, 4294901760
      %6296 = vmatpush1.msra.mxu0 %v6295
      %6297 = vmatprep.subr.mxu0 0.0
      %v6298 = vand.u32 %v233, 4294901760
      %6299 = vmatpush1.msra.mxu0 %v6298
      %6300 = vmatprep.subr.mxu0 0.0
      %v6301 = vand.u32 %v242, 4294901760
      %6302 = vmatpush1.msra.mxu0 %v6301
      %6303 = vmatprep.subr.mxu0 0.0
      %v6304 = vand.u32 %v251, 4294901760
      %6305 = vmatpush1.msra.mxu0 %v6304
      %6306 = vmatprep.subr.mxu0 0.0
      %v6307 = vand.u32 %v260, 4294901760
      %6308 = vmatpush1.msra.mxu0 %v6307
      %6309 = vmatprep.subr.mxu0 0.0
      %v6310 = vand.u32 %v269, 4294901760
      %6311 = vmatpush1.msra.mxu0 %v6310
      %6312 = vmatprep.subr.mxu0 0.0
      %6313 = vmatpush1.msra.mxu0 0.0
      %6314 = vmatprep.subr.mxu0 0.0
      %6315 = vmatpush1.msra.mxu0 0.0
      %6316 = vmatprep.subr.mxu0 0.0
      %6317 = vmatpush1.msra.mxu0 0.0
      %6318 = vmatprep.subr.mxu0 0.0
      %6319 = vmatpush1.msra.mxu0 0.0
      %6320 = vmatprep.subr.mxu0 0.0
      %6321 = vmatpush1.msra.mxu0 0.0
      %6322 = vmatprep.subr.mxu0 0.0
      %6323 = vmatpush1.msra.mxu0 0.0
      %6324 = vmatprep.subr.mxu0 0.0
      %6325 = vmatpush1.msra.mxu0 0.0
      %6326 = vmatprep.subr.mxu0 0.0
      %6327 = vmatpush1.msra.mxu0 0.0
      %6328 = vmatprep.subr.mxu0 0.0
      %6329 = vmatpush1.msra.mxu0 0.0
      %6330 = vmatprep.subr.mxu0 0.0
      %6331 = vmatpush1.msra.mxu0 0.0
      %6332 = vmatprep.subr.mxu0 0.0
      %6333 = vmatpush1.msra.mxu0 0.0
      %6334 = vmatprep.subr.mxu0 0.0
      %6335 = vmatpush1.msra.mxu0 0.0
      %6336 = vmatprep.subr.mxu0 0.0
      %6337 = vmatpush1.msra.mxu0 0.0
      %6338 = vmatprep.subr.mxu0 0.0
      %6339 = vmatpush1.msra.mxu0 0.0
      %6340 = vmatprep.subr.mxu0 0.0
      %6341 = vmatpush1.msra.mxu0 0.0
      %6342 = vmatprep.subr.mxu0 0.0
      %6343 = vmatpush1.msra.mxu0 0.0
      %6344 = vmatprep.subr.mxu0 0.0
      %6345 = vmatpush1.msra.mxu0 0.0
      %6346 = vmatprep.subr.mxu0 0.0
      %6347 = vmatpush1.msra.mxu0 0.0
      %6348 = vmatprep.mubr.f32.mxu0 0.0
      %v6349 = vand.u32 %v284, 4294901760
      %v6350 = vsub.f32 %v284, %v6349
      %v6351 = vand.u32 %v6350, 4294901760
      %6352 = vmatmul.mubr.f32.gmra.mrb[0].mxu0 %v6351
      %v6353 = vpop.f32.mrb[0].mxu0
      %v6354 = vadd.f32 %v6190, %v6353
      %v6355 = vpop.f32.mrb[0].mxu0
      %6356 = vmatprep.mubr.f32.mxu0 0.0
      %v6357 = vand.u32 %v287, 4294901760
      %v6358 = vsub.f32 %v287, %v6357
      %v6359 = vand.u32 %v6358, 4294901760
      %6360 = vmatmul.mubr.f32.gmra.mrb[0].mxu0 %v6359
      %v6361 = vpop.f32.mrb[0].mxu0
      %v6362 = vadd.f32 %v6197, %v6361
      %v6363 = vpop.f32.mrb[0].mxu0
      %6364 = vmatprep.mubr.f32.mxu0 0.0
      %v6365 = vand.u32 %v290, 4294901760
      %v6366 = vsub.f32 %v290, %v6365
      %v6367 = vand.u32 %v6366, 4294901760
      %6368 = vmatmul.mubr.f32.gmra.mrb[0].mxu0 %v6367
      %v6369 = vpop.f32.mrb[0].mxu0
      %v6370 = vadd.f32 %v6204, %v6369
      %v6371 = vpop.f32.mrb[0].mxu0
      %6372 = vmatprep.mubr.f32.mxu0 0.0
      %v6373 = vand.u32 %v293, 4294901760
      %v6374 = vsub.f32 %v293, %v6373
      %v6375 = vand.u32 %v6374, 4294901760
      %6376 = vmatmul.mubr.f32.gmra.mrb[0].mxu0 %v6375
      %v6377 = vpop.f32.mrb[0].mxu0
      %v6378 = vadd.f32 %v6211, %v6377
      %v6379 = vpop.f32.mrb[0].mxu0
      %6380 = vmatprep.mubr.f32.mxu0 0.0
      %v6381 = vand.u32 %v296, 4294901760
      %v6382 = vsub.f32 %v296, %v6381
      %v6383 = vand.u32 %v6382, 4294901760
      %6384 = vmatmul.mubr.f32.gmra.mrb[0].mxu0 %v6383
      %v6385 = vpop.f32.mrb[0].mxu0
      %v6386 = vadd.f32 %v6218, %v6385
      %v6387 = vpop.f32.mrb[0].mxu0
      %6388 = vmatprep.mubr.f32.mxu0 0.0
      %v6389 = vand.u32 %v299, 4294901760
      %v6390 = vsub.f32 %v299, %v6389
      %v6391 = vand.u32 %v6390, 4294901760
      %6392 = vmatmul.mubr.f32.gmra.mrb[0].mxu0 %v6391
      %v6393 = vpop.f32.mrb[0].mxu0
      %v6394 = vadd.f32 %v6225, %v6393
      %v6395 = vpop.f32.mrb[0].mxu0
      %6396 = vmatprep.mubr.f32.mxu0 0.0
      %v6397 = vand.u32 %v302, 4294901760
      %v6398 = vsub.f32 %v302, %v6397
      %v6399 = vand.u32 %v6398, 4294901760
      %6400 = vmatmul.mubr.f32.gmra.mrb[0].mxu0 %v6399
      %v6401 = vpop.f32.mrb[0].mxu0
      %v6402 = vadd.f32 %v6232, %v6401
      %v6403 = vpop.f32.mrb[0].mxu0
      %6404 = vmatprep.mubr.f32.mxu0 0.0
      %v6405 = vand.u32 %v305, 4294901760
      %v6406 = vsub.f32 %v305, %v6405
      %v6407 = vand.u32 %v6406, 4294901760
      %6408 = vmatmul.mubr.f32.gmra.mrb[0].mxu0 %v6407
      %v6409 = vpop.f32.mrb[0].mxu0
      %v6410 = vadd.f32 %v6239, %v6409
      %v6411 = vpop.f32.mrb[0].mxu0
      %6412 = vmatprep.mubr.f32.mxu0 0.0
      %v6413 = vand.u32 %v308, 4294901760
      %v6414 = vsub.f32 %v308, %v6413
      %v6415 = vand.u32 %v6414, 4294901760
      %6416 = vmatmul.mubr.f32.gmra.mrb[0].mxu0 %v6415
      %v6417 = vpop.f32.mrb[0].mxu0
      %v6418 = vadd.f32 %v6246, %v6417
      %v6419 = vpop.f32.mrb[0].mxu0
      %6420 = vmatprep.mubr.f32.mxu0 0.0
      %v6421 = vand.u32 %v311, 4294901760
      %v6422 = vsub.f32 %v311, %v6421
      %v6423 = vand.u32 %v6422, 4294901760
      %6424 = vmatmul.mubr.f32.gmra.mrb[0].mxu0 %v6423
      %v6425 = vpop.f32.mrb[0].mxu0
      %v6426 = vadd.f32 %v6253, %v6425
      %v6427 = vpop.f32.mrb[0].mxu0
      %6428 = vmatprep.mubr.f32.mxu0 0.0
      %v6429 = vand.u32 %v314, 4294901760
      %v6430 = vsub.f32 %v314, %v6429
      %v6431 = vand.u32 %v6430, 4294901760
      %6432 = vmatmul.mubr.f32.gmra.mrb[0].mxu0 %v6431
      %v6433 = vpop.f32.mrb[0].mxu0
      %v6434 = vadd.f32 %v6260, %v6433
      %v6435 = vpop.f32.mrb[0].mxu0
      %6436 = vmatprep.mubr.f32.mxu0 0.0
      %v6437 = vand.u32 %v317, 4294901760
      %v6438 = vsub.f32 %v317, %v6437
      %v6439 = vand.u32 %v6438, 4294901760
      %6440 = vmatmul.mubr.f32.gmra.mrb[0].mxu0 %v6439
      %v6441 = vpop.f32.mrb[0].mxu0
      %v6442 = vadd.f32 %v6267, %v6441
      %v6443 = vpop.f32.mrb[0].mxu0
      %6444 = vdwg.mxu0
      %6445 = vmatprep.subr.mxu0 0.0
      %v6446 = vand.u32 %v152, 4294901760
      %v6447 = vsub.f32 %v152, %v6446
      %v6448 = vand.u32 %v6447, 4294901760
      %6449 = vmatpush1.msra.mxu0 %v6448
      %6450 = vmatprep.subr.mxu0 0.0
      %v6451 = vand.u32 %v161, 4294901760
      %v6452 = vsub.f32 %v161, %v6451
      %v6453 = vand.u32 %v6452, 4294901760
      %6454 = vmatpush1.msra.mxu0 %v6453
      %6455 = vmatprep.subr.mxu0 0.0
      %v6456 = vand.u32 %v170, 4294901760
      %v6457 = vsub.f32 %v170, %v6456
      %v6458 = vand.u32 %v6457, 4294901760
      %6459 = vmatpush1.msra.mxu0 %v6458
      %6460 = vmatprep.subr.mxu0 0.0
      %v6461 = vand.u32 %v179, 4294901760
      %v6462 = vsub.f32 %v179, %v6461
      %v6463 = vand.u32 %v6462, 4294901760
      %6464 = vmatpush1.msra.mxu0 %v6463
      %6465 = vmatprep.subr.mxu0 0.0
      %v6466 = vand.u32 %v188, 4294901760
      %v6467 = vsub.f32 %v188, %v6466
      %v6468 = vand.u32 %v6467, 4294901760
      %6469 = vmatpush1.msra.mxu0 %v6468
      %6470 = vmatprep.subr.mxu0 0.0
      %v6471 = vand.u32 %v197, 4294901760
      %v6472 = vsub.f32 %v197, %v6471
      %v6473 = vand.u32 %v6472, 4294901760
      %6474 = vmatpush1.msra.mxu0 %v6473
      %6475 = vmatprep.subr.mxu0 0.0
      %v6476 = vand.u32 %v206, 4294901760
      %v6477 = vsub.f32 %v206, %v6476
      %v6478 = vand.u32 %v6477, 4294901760
      %6479 = vmatpush1.msra.mxu0 %v6478
      %6480 = vmatprep.subr.mxu0 0.0
      %v6481 = vand.u32 %v215, 4294901760
      %v6482 = vsub.f32 %v215, %v6481
      %v6483 = vand.u32 %v6482, 4294901760
      %6484 = vmatpush1.msra.mxu0 %v6483
      %6485 = vmatprep.subr.mxu0 0.0
      %v6486 = vand.u32 %v224, 4294901760
      %v6487 = vsub.f32 %v224, %v6486
      %v6488 = vand.u32 %v6487, 4294901760
      %6489 = vmatpush1.msra.mxu0 %v6488
      %6490 = vmatprep.subr.mxu0 0.0
      %v6491 = vand.u32 %v233, 4294901760
      %v6492 = vsub.f32 %v233, %v6491
      %v6493 = vand.u32 %v6492, 4294901760
      %6494 = vmatpush1.msra.mxu0 %v6493
      %6495 = vmatprep.subr.mxu0 0.0
      %v6496 = vand.u32 %v242, 4294901760
      %v6497 = vsub.f32 %v242, %v6496
      %v6498 = vand.u32 %v6497, 4294901760
      %6499 = vmatpush1.msra.mxu0 %v6498
      %6500 = vmatprep.subr.mxu0 0.0
      %v6501 = vand.u32 %v251, 4294901760
      %v6502 = vsub.f32 %v251, %v6501
      %v6503 = vand.u32 %v6502, 4294901760
      %6504 = vmatpush1.msra.mxu0 %v6503
      %6505 = vmatprep.subr.mxu0 0.0
      %v6506 = vand.u32 %v260, 4294901760
      %v6507 = vsub.f32 %v260, %v6506
      %v6508 = vand.u32 %v6507, 4294901760
      %6509 = vmatpush1.msra.mxu0 %v6508
      %6510 = vmatprep.subr.mxu0 0.0
      %v6511 = vand.u32 %v269, 4294901760
      %v6512 = vsub.f32 %v269, %v6511
      %v6513 = vand.u32 %v6512, 4294901760
      %6514 = vmatpush1.msra.mxu0 %v6513
      %6515 = vmatprep.subr.mxu0 0.0
      %6516 = vmatpush1.msra.mxu0 0.0
      %6517 = vmatprep.subr.mxu0 0.0
      %6518 = vmatpush1.msra.mxu0 0.0
      %6519 = vmatprep.subr.mxu0 0.0
      %6520 = vmatpush1.msra.mxu0 0.0
      %6521 = vmatprep.subr.mxu0 0.0
      %6522 = vmatpush1.msra.mxu0 0.0
      %6523 = vmatprep.subr.mxu0 0.0
      %6524 = vmatpush1.msra.mxu0 0.0
      %6525 = vmatprep.subr.mxu0 0.0
      %6526 = vmatpush1.msra.mxu0 0.0
      %6527 = vmatprep.subr.mxu0 0.0
      %6528 = vmatpush1.msra.mxu0 0.0
      %6529 = vmatprep.subr.mxu0 0.0
      %6530 = vmatpush1.msra.mxu0 0.0
      %6531 = vmatprep.subr.mxu0 0.0
      %6532 = vmatpush1.msra.mxu0 0.0
      %6533 = vmatprep.subr.mxu0 0.0
      %6534 = vmatpush1.msra.mxu0 0.0
      %6535 = vmatprep.subr.mxu0 0.0
      %6536 = vmatpush1.msra.mxu0 0.0
      %6537 = vmatprep.subr.mxu0 0.0
      %6538 = vmatpush1.msra.mxu0 0.0
      %6539 = vmatprep.subr.mxu0 0.0
      %6540 = vmatpush1.msra.mxu0 0.0
      %6541 = vmatprep.subr.mxu0 0.0
      %6542 = vmatpush1.msra.mxu0 0.0
      %6543 = vmatprep.subr.mxu0 0.0
      %6544 = vmatpush1.msra.mxu0 0.0
      %6545 = vmatprep.subr.mxu0 0.0
      %6546 = vmatpush1.msra.mxu0 0.0
      %6547 = vmatprep.subr.mxu0 0.0
      %6548 = vmatpush1.msra.mxu0 0.0
      %6549 = vmatprep.subr.mxu0 0.0
      %6550 = vmatpush1.msra.mxu0 0.0
      %6551 = vmatprep.mubr.f32.mxu0 0.0
      %v6552 = vand.u32 %v284, 4294901760
      %6553 = vmatmul.mubr.f32.gmra.mrb[0].mxu0 %v6552
      %v6554 = vpop.f32.mrb[0].mxu0
      %v6555 = vadd.f32 %v6354, %v6554
      %v6556 = vpop.f32.mrb[0].mxu0
      %6557 = vmatprep.mubr.f32.mxu0 0.0
      %v6558 = vand.u32 %v287, 4294901760
      %6559 = vmatmul.mubr.f32.gmra.mrb[0].mxu0 %v6558
      %v6560 = vpop.f32.mrb[0].mxu0
      %v6561 = vadd.f32 %v6362, %v6560
      %v6562 = vpop.f32.mrb[0].mxu0
      %6563 = vmatprep.mubr.f32.mxu0 0.0
      %v6564 = vand.u32 %v290, 4294901760
      %6565 = vmatmul.mubr.f32.gmra.mrb[0].mxu0 %v6564
      %v6566 = vpop.f32.mrb[0].mxu0
      %v6567 = vadd.f32 %v6370, %v6566
      %v6568 = vpop.f32.mrb[0].mxu0
      %6569 = vmatprep.mubr.f32.mxu0 0.0
      %v6570 = vand.u32 %v293, 4294901760
      %6571 = vmatmul.mubr.f32.gmra.mrb[0].mxu0 %v6570
      %v6572 = vpop.f32.mrb[0].mxu0
      %v6573 = vadd.f32 %v6378, %v6572
      %v6574 = vpop.f32.mrb[0].mxu0
      %6575 = vmatprep.mubr.f32.mxu0 0.0
      %v6576 = vand.u32 %v296, 4294901760
      %6577 = vmatmul.mubr.f32.gmra.mrb[0].mxu0 %v6576
      %v6578 = vpop.f32.mrb[0].mxu0
      %v6579 = vadd.f32 %v6386, %v6578
      %v6580 = vpop.f32.mrb[0].mxu0
      %6581 = vmatprep.mubr.f32.mxu0 0.0
      %v6582 = vand.u32 %v299, 4294901760
      %6583 = vmatmul.mubr.f32.gmra.mrb[0].mxu0 %v6582
      %v6584 = vpop.f32.mrb[0].mxu0
      %v6585 = vadd.f32 %v6394, %v6584
      %v6586 = vpop.f32.mrb[0].mxu0
      %6587 = vmatprep.mubr.f32.mxu0 0.0
      %v6588 = vand.u32 %v302, 4294901760
      %6589 = vmatmul.mubr.f32.gmra.mrb[0].mxu0 %v6588
      %v6590 = vpop.f32.mrb[0].mxu0
      %v6591 = vadd.f32 %v6402, %v6590
      %v6592 = vpop.f32.mrb[0].mxu0
      %6593 = vmatprep.mubr.f32.mxu0 0.0
      %v6594 = vand.u32 %v305, 4294901760
      %6595 = vmatmul.mubr.f32.gmra.mrb[0].mxu0 %v6594
      %v6596 = vpop.f32.mrb[0].mxu0
      %v6597 = vadd.f32 %v6410, %v6596
      %v6598 = vpop.f32.mrb[0].mxu0
      %6599 = vmatprep.mubr.f32.mxu0 0.0
      %v6600 = vand.u32 %v308, 4294901760
      %6601 = vmatmul.mubr.f32.gmra.mrb[0].mxu0 %v6600
      %v6602 = vpop.f32.mrb[0].mxu0
      %v6603 = vadd.f32 %v6418, %v6602
      %v6604 = vpop.f32.mrb[0].mxu0
      %6605 = vmatprep.mubr.f32.mxu0 0.0
      %v6606 = vand.u32 %v311, 4294901760
      %6607 = vmatmul.mubr.f32.gmra.mrb[0].mxu0 %v6606
      %v6608 = vpop.f32.mrb[0].mxu0
      %v6609 = vadd.f32 %v6426, %v6608
      %v6610 = vpop.f32.mrb[0].mxu0
      %6611 = vmatprep.mubr.f32.mxu0 0.0
      %v6612 = vand.u32 %v314, 4294901760
      %6613 = vmatmul.mubr.f32.gmra.mrb[0].mxu0 %v6612
      %v6614 = vpop.f32.mrb[0].mxu0
      %v6615 = vadd.f32 %v6434, %v6614
      %v6616 = vpop.f32.mrb[0].mxu0
      %6617 = vmatprep.mubr.f32.mxu0 0.0
      %v6618 = vand.u32 %v317, 4294901760
      %6619 = vmatmul.mubr.f32.gmra.mrb[0].mxu0 %v6618
      %v6620 = vpop.f32.mrb[0].mxu0
      %v6621 = vadd.f32 %v6442, %v6620
      %v6622 = vpop.f32.mrb[0].mxu0
      %6623 = vdwg.mxu0
      %6624 = vmatprep.subr.mxu0 0.0
      %v6625 = vand.u32 %v152, 4294901760
      %6626 = vmatpush1.msra.mxu0 %v6625
      %6627 = vmatprep.subr.mxu0 0.0
      %v6628 = vand.u32 %v161, 4294901760
      %6629 = vmatpush1.msra.mxu0 %v6628
      %6630 = vmatprep.subr.mxu0 0.0
      %v6631 = vand.u32 %v170, 4294901760
      %6632 = vmatpush1.msra.mxu0 %v6631
      %6633 = vmatprep.subr.mxu0 0.0
      %v6634 = vand.u32 %v179, 4294901760
      %6635 = vmatpush1.msra.mxu0 %v6634
      %6636 = vmatprep.subr.mxu0 0.0
      %v6637 = vand.u32 %v188, 4294901760
      %6638 = vmatpush1.msra.mxu0 %v6637
      %6639 = vmatprep.subr.mxu0 0.0
      %v6640 = vand.u32 %v197, 4294901760
      %6641 = vmatpush1.msra.mxu0 %v6640
      %6642 = vmatprep.subr.mxu0 0.0
      %v6643 = vand.u32 %v206, 4294901760
      %6644 = vmatpush1.msra.mxu0 %v6643
      %6645 = vmatprep.subr.mxu0 0.0
      %v6646 = vand.u32 %v215, 4294901760
      %6647 = vmatpush1.msra.mxu0 %v6646
      %6648 = vmatprep.subr.mxu0 0.0
      %v6649 = vand.u32 %v224, 4294901760
      %6650 = vmatpush1.msra.mxu0 %v6649
      %6651 = vmatprep.subr.mxu0 0.0
      %v6652 = vand.u32 %v233, 4294901760
      %6653 = vmatpush1.msra.mxu0 %v6652
      %6654 = vmatprep.subr.mxu0 0.0
      %v6655 = vand.u32 %v242, 4294901760
      %6656 = vmatpush1.msra.mxu0 %v6655
      %6657 = vmatprep.subr.mxu0 0.0
      %v6658 = vand.u32 %v251, 4294901760
      %6659 = vmatpush1.msra.mxu0 %v6658
      %6660 = vmatprep.subr.mxu0 0.0
      %v6661 = vand.u32 %v260, 4294901760
      %6662 = vmatpush1.msra.mxu0 %v6661
      %6663 = vmatprep.subr.mxu0 0.0
      %v6664 = vand.u32 %v269, 4294901760
      %6665 = vmatpush1.msra.mxu0 %v6664
      %6666 = vmatprep.subr.mxu0 0.0
      %6667 = vmatpush1.msra.mxu0 0.0
      %6668 = vmatprep.subr.mxu0 0.0
      %6669 = vmatpush1.msra.mxu0 0.0
      %6670 = vmatprep.subr.mxu0 0.0
      %6671 = vmatpush1.msra.mxu0 0.0
      %6672 = vmatprep.subr.mxu0 0.0
      %6673 = vmatpush1.msra.mxu0 0.0
      %6674 = vmatprep.subr.mxu0 0.0
      %6675 = vmatpush1.msra.mxu0 0.0
      %6676 = vmatprep.subr.mxu0 0.0
      %6677 = vmatpush1.msra.mxu0 0.0
      %6678 = vmatprep.subr.mxu0 0.0
      %6679 = vmatpush1.msra.mxu0 0.0
      %6680 = vmatprep.subr.mxu0 0.0
      %6681 = vmatpush1.msra.mxu0 0.0
      %6682 = vmatprep.subr.mxu0 0.0
      %6683 = vmatpush1.msra.mxu0 0.0
      %6684 = vmatprep.subr.mxu0 0.0
      %6685 = vmatpush1.msra.mxu0 0.0
      %6686 = vmatprep.subr.mxu0 0.0
      %6687 = vmatpush1.msra.mxu0 0.0
      %6688 = vmatprep.subr.mxu0 0.0
      %6689 = vmatpush1.msra.mxu0 0.0
      %6690 = vmatprep.subr.mxu0 0.0
      %6691 = vmatpush1.msra.mxu0 0.0
      %6692 = vmatprep.subr.mxu0 0.0
      %6693 = vmatpush1.msra.mxu0 0.0
      %6694 = vmatprep.subr.mxu0 0.0
      %6695 = vmatpush1.msra.mxu0 0.0
      %6696 = vmatprep.subr.mxu0 0.0
      %6697 = vmatpush1.msra.mxu0 0.0
      %6698 = vmatprep.subr.mxu0 0.0
      %6699 = vmatpush1.msra.mxu0 0.0
      %6700 = vmatprep.subr.mxu0 0.0
      %6701 = vmatpush1.msra.mxu0 0.0
      %6702 = vmatprep.mubr.f32.mxu0 0.0
      %v6703 = vand.u32 %v284, 4294901760
      %6704 = vmatmul.mubr.f32.gmra.mrb[0].mxu0 %v6703
      %v6705 = vpop.f32.mrb[0].mxu0
      %v6706 = vadd.f32 %v6555, %v6705
      %v6707 = vpop.f32.mrb[0].mxu0
      %6708 = vmatprep.mubr.f32.mxu0 0.0
      %v6709 = vand.u32 %v287, 4294901760
      %6710 = vmatmul.mubr.f32.gmra.mrb[0].mxu0 %v6709
      %v6711 = vpop.f32.mrb[0].mxu0
      %v6712 = vadd.f32 %v6561, %v6711
      %v6713 = vpop.f32.mrb[0].mxu0
      %6714 = vmatprep.mubr.f32.mxu0 0.0
      %v6715 = vand.u32 %v290, 4294901760
      %6716 = vmatmul.mubr.f32.gmra.mrb[0].mxu0 %v6715
      %v6717 = vpop.f32.mrb[0].mxu0
      %v6718 = vadd.f32 %v6567, %v6717
      %v6719 = vpop.f32.mrb[0].mxu0
      %6720 = vmatprep.mubr.f32.mxu0 0.0
      %v6721 = vand.u32 %v293, 4294901760
      %6722 = vmatmul.mubr.f32.gmra.mrb[0].mxu0 %v6721
      %v6723 = vpop.f32.mrb[0].mxu0
      %v6724 = vadd.f32 %v6573, %v6723
      %v6725 = vpop.f32.mrb[0].mxu0
      %6726 = vmatprep.mubr.f32.mxu0 0.0
      %v6727 = vand.u32 %v296, 4294901760
      %6728 = vmatmul.mubr.f32.gmra.mrb[0].mxu0 %v6727
      %v6729 = vpop.f32.mrb[0].mxu0
      %v6730 = vadd.f32 %v6579, %v6729
      %v6731 = vpop.f32.mrb[0].mxu0
      %6732 = vmatprep.mubr.f32.mxu0 0.0
      %v6733 = vand.u32 %v299, 4294901760
      %6734 = vmatmul.mubr.f32.gmra.mrb[0].mxu0 %v6733
      %v6735 = vpop.f32.mrb[0].mxu0
      %v6736 = vadd.f32 %v6585, %v6735
      %v6737 = vpop.f32.mrb[0].mxu0
      %6738 = vmatprep.mubr.f32.mxu0 0.0
      %v6739 = vand.u32 %v302, 4294901760
      %6740 = vmatmul.mubr.f32.gmra.mrb[0].mxu0 %v6739
      %v6741 = vpop.f32.mrb[0].mxu0
      %v6742 = vadd.f32 %v6591, %v6741
      %v6743 = vpop.f32.mrb[0].mxu0
      %6744 = vmatprep.mubr.f32.mxu0 0.0
      %v6745 = vand.u32 %v305, 4294901760
      %6746 = vmatmul.mubr.f32.gmra.mrb[0].mxu0 %v6745
      %v6747 = vpop.f32.mrb[0].mxu0
      %v6748 = vadd.f32 %v6597, %v6747
      %v6749 = vpop.f32.mrb[0].mxu0
      %6750 = vmatprep.mubr.f32.mxu0 0.0
      %v6751 = vand.u32 %v308, 4294901760
      %6752 = vmatmul.mubr.f32.gmra.mrb[0].mxu0 %v6751
      %v6753 = vpop.f32.mrb[0].mxu0
      %v6754 = vadd.f32 %v6603, %v6753
      %v6755 = vpop.f32.mrb[0].mxu0
      %6756 = vmatprep.mubr.f32.mxu0 0.0
      %v6757 = vand.u32 %v311, 4294901760
      %6758 = vmatmul.mubr.f32.gmra.mrb[0].mxu0 %v6757
      %v6759 = vpop.f32.mrb[0].mxu0
      %v6760 = vadd.f32 %v6609, %v6759
      %v6761 = vpop.f32.mrb[0].mxu0
      %6762 = vmatprep.mubr.f32.mxu0 0.0
      %v6763 = vand.u32 %v314, 4294901760
      %6764 = vmatmul.mubr.f32.gmra.mrb[0].mxu0 %v6763
      %v6765 = vpop.f32.mrb[0].mxu0
      %v6766 = vadd.f32 %v6615, %v6765
      %v6767 = vpop.f32.mrb[0].mxu0
      %6768 = vmatprep.mubr.f32.mxu0 0.0
      %v6769 = vand.u32 %v317, 4294901760
      %6770 = vmatmul.mubr.f32.gmra.mrb[0].mxu0 %v6769
      %v6771 = vpop.f32.mrb[0].mxu0
      %v6772 = vadd.f32 %v6621, %v6771
      %v6773 = vpop.f32.mrb[0].mxu0
      %6774 = vdwg.mxu0
      %v6775 = vmul.f32 %v1608, %v1608
      %v6776 = vmul.f32 %v1610, %v1610
      %v6777 = vmul.f32 %v2950, %v2950
      %v6778 = vmul.f32 %v2952, %v2952
      %v6779 = vmul.f32 %v4292, %v4292
      %v6780 = vmul.f32 %v4294, %v4294
      %v6781 = vmul.f32 %v5634, %v5634
      %v6782 = vmul.f32 %v5636, %v5636
      %v6783 = vmul.f32 %v6730, %v6730
      %v6784 = vmul.f32 %v1615, %v1615
      %v6785 = vmul.f32 %v1617, %v1617
      %v6786 = vmul.f32 %v2957, %v2957
      %v6787 = vmul.f32 %v2959, %v2959
      %v6788 = vmul.f32 %v4299, %v4299
      %v6789 = vmul.f32 %v4301, %v4301
      %v6790 = vmul.f32 %v5641, %v5641
      %v6791 = vmul.f32 %v5643, %v5643
      %v6792 = vmul.f32 %v6736, %v6736
      %v6793 = vmul.f32 %v1622, %v1622
      %v6794 = vmul.f32 %v1624, %v1624
      %v6795 = vmul.f32 %v2964, %v2964
      %v6796 = vmul.f32 %v2966, %v2966
      %v6797 = vmul.f32 %v4306, %v4306
      %v6798 = vmul.f32 %v4308, %v4308
      %v6799 = vmul.f32 %v5648, %v5648
      %v6800 = vmul.f32 %v5650, %v5650
      %v6801 = vmul.f32 %v6742, %v6742
      %v6802 = vmul.f32 %v1629, %v1629
      %v6803 = vmul.f32 %v1631, %v1631
      %v6804 = vmul.f32 %v2971, %v2971
      %v6805 = vmul.f32 %v2973, %v2973
      %v6806 = vmul.f32 %v4313, %v4313
      %v6807 = vmul.f32 %v4315, %v4315
      %v6808 = vmul.f32 %v5655, %v5655
      %v6809 = vmul.f32 %v5657, %v5657
      %v6810 = vmul.f32 %v6748, %v6748
      %v6811 = vrot.slane %v6775, 4
      %v6812 = vadd.f32 %v6775, %v6811
      %v6813 = vrot.slane %v6812, 2
      %v6814 = vadd.f32 %v6812, %v6813
      %v6815 = vrot.slane %v6814, 1
      %v6816 = vadd.f32 %v6814, %v6815
      %v6817 = vrot.slane %v6776, 4
      %v6818 = vadd.f32 %v6776, %v6817
      %v6819 = vrot.slane %v6818, 2
      %v6820 = vadd.f32 %v6818, %v6819
      %v6821 = vrot.slane %v6820, 1
      %v6822 = vadd.f32 %v6820, %v6821
      %v6823 = vrot.slane %v6777, 4
      %v6824 = vadd.f32 %v6777, %v6823
      %v6825 = vrot.slane %v6824, 2
      %v6826 = vadd.f32 %v6824, %v6825
      %v6827 = vrot.slane %v6826, 1
      %v6828 = vadd.f32 %v6826, %v6827
      %v6829 = vrot.slane %v6778, 4
      %v6830 = vadd.f32 %v6778, %v6829
      %v6831 = vrot.slane %v6830, 2
      %v6832 = vadd.f32 %v6830, %v6831
      %v6833 = vrot.slane %v6832, 1
      %v6834 = vadd.f32 %v6832, %v6833
      %v6835 = vrot.slane %v6779, 4
      %v6836 = vadd.f32 %v6779, %v6835
      %v6837 = vrot.slane %v6836, 2
      %v6838 = vadd.f32 %v6836, %v6837
      %v6839 = vrot.slane %v6838, 1
      %v6840 = vadd.f32 %v6838, %v6839
      %v6841 = vrot.slane %v6780, 4
      %v6842 = vadd.f32 %v6780, %v6841
      %v6843 = vrot.slane %v6842, 2
      %v6844 = vadd.f32 %v6842, %v6843
      %v6845 = vrot.slane %v6844, 1
      %v6846 = vadd.f32 %v6844, %v6845
      %v6847 = vrot.slane %v6781, 4
      %v6848 = vadd.f32 %v6781, %v6847
      %v6849 = vrot.slane %v6848, 2
      %v6850 = vadd.f32 %v6848, %v6849
      %v6851 = vrot.slane %v6850, 1
      %v6852 = vadd.f32 %v6850, %v6851
      %v6853 = vrot.slane %v6782, 4
      %v6854 = vadd.f32 %v6782, %v6853
      %v6855 = vrot.slane %v6854, 2
      %v6856 = vadd.f32 %v6854, %v6855
      %v6857 = vrot.slane %v6856, 1
      %v6858 = vadd.f32 %v6856, %v6857
      %v6859 = vrot.slane %v6783, 4
      %v6860 = vadd.f32 %v6783, %v6859
      %v6861 = vrot.slane %v6860, 2
      %v6862 = vadd.f32 %v6860, %v6861
      %v6863 = vrot.slane %v6862, 1
      %v6864 = vadd.f32 %v6862, %v6863
      %v6865 = vrot.slane %v6784, 4
      %v6866 = vadd.f32 %v6784, %v6865
      %v6867 = vrot.slane %v6866, 2
      %v6868 = vadd.f32 %v6866, %v6867
      %v6869 = vrot.slane %v6868, 1
      %v6870 = vadd.f32 %v6868, %v6869
      %v6871 = vrot.slane %v6785, 4
      %v6872 = vadd.f32 %v6785, %v6871
      %v6873 = vrot.slane %v6872, 2
      %v6874 = vadd.f32 %v6872, %v6873
      %v6875 = vrot.slane %v6874, 1
      %v6876 = vadd.f32 %v6874, %v6875
      %v6877 = vrot.slane %v6786, 4
      %v6878 = vadd.f32 %v6786, %v6877
      %v6879 = vrot.slane %v6878, 2
      %v6880 = vadd.f32 %v6878, %v6879
      %v6881 = vrot.slane %v6880, 1
      %v6882 = vadd.f32 %v6880, %v6881
      %v6883 = vrot.slane %v6787, 4
      %v6884 = vadd.f32 %v6787, %v6883
      %v6885 = vrot.slane %v6884, 2
      %v6886 = vadd.f32 %v6884, %v6885
      %v6887 = vrot.slane %v6886, 1
      %v6888 = vadd.f32 %v6886, %v6887
      %v6889 = vrot.slane %v6788, 4
      %v6890 = vadd.f32 %v6788, %v6889
      %v6891 = vrot.slane %v6890, 2
      %v6892 = vadd.f32 %v6890, %v6891
      %v6893 = vrot.slane %v6892, 1
      %v6894 = vadd.f32 %v6892, %v6893
      %v6895 = vrot.slane %v6789, 4
      %v6896 = vadd.f32 %v6789, %v6895
      %v6897 = vrot.slane %v6896, 2
      %v6898 = vadd.f32 %v6896, %v6897
      %v6899 = vrot.slane %v6898, 1
      %v6900 = vadd.f32 %v6898, %v6899
      %v6901 = vrot.slane %v6790, 4
      %v6902 = vadd.f32 %v6790, %v6901
      %v6903 = vrot.slane %v6902, 2
      %v6904 = vadd.f32 %v6902, %v6903
      %v6905 = vrot.slane %v6904, 1
      %v6906 = vadd.f32 %v6904, %v6905
      %v6907 = vrot.slane %v6791, 4
      %v6908 = vadd.f32 %v6791, %v6907
      %v6909 = vrot.slane %v6908, 2
      %v6910 = vadd.f32 %v6908, %v6909
      %v6911 = vrot.slane %v6910, 1
      %v6912 = vadd.f32 %v6910, %v6911
      %v6913 = vrot.slane %v6792, 4
      %v6914 = vadd.f32 %v6792, %v6913
      %v6915 = vrot.slane %v6914, 2
      %v6916 = vadd.f32 %v6914, %v6915
      %v6917 = vrot.slane %v6916, 1
      %v6918 = vadd.f32 %v6916, %v6917
      %v6919 = vrot.slane %v6793, 4
      %v6920 = vadd.f32 %v6793, %v6919
      %v6921 = vrot.slane %v6920, 2
      %v6922 = vadd.f32 %v6920, %v6921
      %v6923 = vrot.slane %v6922, 1
      %v6924 = vadd.f32 %v6922, %v6923
      %v6925 = vrot.slane %v6794, 4
      %v6926 = vadd.f32 %v6794, %v6925
      %v6927 = vrot.slane %v6926, 2
      %v6928 = vadd.f32 %v6926, %v6927
      %v6929 = vrot.slane %v6928, 1
      %v6930 = vadd.f32 %v6928, %v6929
      %v6931 = vrot.slane %v6795, 4
      %v6932 = vadd.f32 %v6795, %v6931
      %v6933 = vrot.slane %v6932, 2
      %v6934 = vadd.f32 %v6932, %v6933
      %v6935 = vrot.slane %v6934, 1
      %v6936 = vadd.f32 %v6934, %v6935
      %v6937 = vrot.slane %v6796, 4
      %v6938 = vadd.f32 %v6796, %v6937
      %v6939 = vrot.slane %v6938, 2
      %v6940 = vadd.f32 %v6938, %v6939
      %v6941 = vrot.slane %v6940, 1
      %v6942 = vadd.f32 %v6940, %v6941
      %v6943 = vrot.slane %v6797, 4
      %v6944 = vadd.f32 %v6797, %v6943
      %v6945 = vrot.slane %v6944, 2
      %v6946 = vadd.f32 %v6944, %v6945
      %v6947 = vrot.slane %v6946, 1
      %v6948 = vadd.f32 %v6946, %v6947
      %v6949 = vrot.slane %v6798, 4
      %v6950 = vadd.f32 %v6798, %v6949
      %v6951 = vrot.slane %v6950, 2
      %v6952 = vadd.f32 %v6950, %v6951
      %v6953 = vrot.slane %v6952, 1
      %v6954 = vadd.f32 %v6952, %v6953
      %v6955 = vrot.slane %v6799, 4
      %v6956 = vadd.f32 %v6799, %v6955
      %v6957 = vrot.slane %v6956, 2
      %v6958 = vadd.f32 %v6956, %v6957
      %v6959 = vrot.slane %v6958, 1
      %v6960 = vadd.f32 %v6958, %v6959
      %v6961 = vrot.slane %v6800, 4
      %v6962 = vadd.f32 %v6800, %v6961
      %v6963 = vrot.slane %v6962, 2
      %v6964 = vadd.f32 %v6962, %v6963
      %v6965 = vrot.slane %v6964, 1
      %v6966 = vadd.f32 %v6964, %v6965
      %v6967 = vrot.slane %v6801, 4
      %v6968 = vadd.f32 %v6801, %v6967
      %v6969 = vrot.slane %v6968, 2
      %v6970 = vadd.f32 %v6968, %v6969
      %v6971 = vrot.slane %v6970, 1
      %v6972 = vadd.f32 %v6970, %v6971
      %v6973 = vrot.slane %v6802, 4
      %v6974 = vadd.f32 %v6802, %v6973
      %v6975 = vrot.slane %v6974, 2
      %v6976 = vadd.f32 %v6974, %v6975
      %v6977 = vrot.slane %v6976, 1
      %v6978 = vadd.f32 %v6976, %v6977
      %v6979 = vrot.slane %v6803, 4
      %v6980 = vadd.f32 %v6803, %v6979
      %v6981 = vrot.slane %v6980, 2
      %v6982 = vadd.f32 %v6980, %v6981
      %v6983 = vrot.slane %v6982, 1
      %v6984 = vadd.f32 %v6982, %v6983
      %v6985 = vrot.slane %v6804, 4
      %v6986 = vadd.f32 %v6804, %v6985
      %v6987 = vrot.slane %v6986, 2
      %v6988 = vadd.f32 %v6986, %v6987
      %v6989 = vrot.slane %v6988, 1
      %v6990 = vadd.f32 %v6988, %v6989
      %v6991 = vrot.slane %v6805, 4
      %v6992 = vadd.f32 %v6805, %v6991
      %v6993 = vrot.slane %v6992, 2
      %v6994 = vadd.f32 %v6992, %v6993
      %v6995 = vrot.slane %v6994, 1
      %v6996 = vadd.f32 %v6994, %v6995
      %v6997 = vrot.slane %v6806, 4
      %v6998 = vadd.f32 %v6806, %v6997
      %v6999 = vrot.slane %v6998, 2
      %v7000 = vadd.f32 %v6998, %v6999
      %v7001 = vrot.slane %v7000, 1
      %v7002 = vadd.f32 %v7000, %v7001
      %v7003 = vrot.slane %v6807, 4
      %v7004 = vadd.f32 %v6807, %v7003
      %v7005 = vrot.slane %v7004, 2
      %v7006 = vadd.f32 %v7004, %v7005
      %v7007 = vrot.slane %v7006, 1
      %v7008 = vadd.f32 %v7006, %v7007
      %v7009 = vrot.slane %v6808, 4
      %v7010 = vadd.f32 %v6808, %v7009
      %v7011 = vrot.slane %v7010, 2
      %v7012 = vadd.f32 %v7010, %v7011
      %v7013 = vrot.slane %v7012, 1
      %v7014 = vadd.f32 %v7012, %v7013
      %v7015 = vrot.slane %v6809, 4
      %v7016 = vadd.f32 %v6809, %v7015
      %v7017 = vrot.slane %v7016, 2
      %v7018 = vadd.f32 %v7016, %v7017
      %v7019 = vrot.slane %v7018, 1
      %v7020 = vadd.f32 %v7018, %v7019
      %v7021 = vrot.slane %v6810, 4
      %v7022 = vadd.f32 %v6810, %v7021
      %v7023 = vrot.slane %v7022, 2
      %v7024 = vadd.f32 %v7022, %v7023
      %v7025 = vrot.slane %v7024, 1
      %v7026 = vadd.f32 %v7024, %v7025
      %v7027 = vmax.f32 %v6816, 1e-24
      %v7028 = vmax.f32 %v6822, 1e-24
      %v7029 = vmax.f32 %v6828, 1e-24
      %v7030 = vmax.f32 %v6834, 1e-24
      %v7031 = vmax.f32 %v6840, 1e-24
      %v7032 = vmax.f32 %v6846, 1e-24
      %v7033 = vmax.f32 %v6852, 1e-24
      %v7034 = vmax.f32 %v6858, 1e-24
      %v7035 = vmax.f32 %v6864, 1e-24
      %v7036 = vmax.f32 %v6870, 1e-24
      %v7037 = vmax.f32 %v6876, 1e-24
      %v7038 = vmax.f32 %v6882, 1e-24
      %v7039 = vmax.f32 %v6888, 1e-24
      %v7040 = vmax.f32 %v6894, 1e-24
      %v7041 = vmax.f32 %v6900, 1e-24
      %v7042 = vmax.f32 %v6906, 1e-24
      %v7043 = vmax.f32 %v6912, 1e-24
      %v7044 = vmax.f32 %v6918, 1e-24
      %v7045 = vmax.f32 %v6924, 1e-24
      %v7046 = vmax.f32 %v6930, 1e-24
      %v7047 = vmax.f32 %v6936, 1e-24
      %v7048 = vmax.f32 %v6942, 1e-24
      %v7049 = vmax.f32 %v6948, 1e-24
      %v7050 = vmax.f32 %v6954, 1e-24
      %v7051 = vmax.f32 %v6960, 1e-24
      %v7052 = vmax.f32 %v6966, 1e-24
      %v7053 = vmax.f32 %v6972, 1e-24
      %v7054 = vmax.f32 %v6978, 1e-24
      %v7055 = vmax.f32 %v6984, 1e-24
      %v7056 = vmax.f32 %v6990, 1e-24
      %v7057 = vmax.f32 %v6996, 1e-24
      %v7058 = vmax.f32 %v7002, 1e-24
      %v7059 = vmax.f32 %v7008, 1e-24
      %v7060 = vmax.f32 %v7014, 1e-24
      %v7061 = vmax.f32 %v7020, 1e-24
      %v7062 = vmax.f32 %v7026, 1e-24
      %v7063 = vrsqrt.pop %v7027
      %v7064 = vrsqrt.pop %v7028
      %v7065 = vrsqrt.pop %v7029
      %v7066 = vrsqrt.pop %v7030
      %v7067 = vrsqrt.pop %v7031
      %v7068 = vrsqrt.pop %v7032
      %v7069 = vrsqrt.pop %v7033
      %v7070 = vrsqrt.pop %v7034
      %v7071 = vrsqrt.pop %v7035
      %v7072 = vrsqrt.pop %v7036
      %v7073 = vrsqrt.pop %v7037
      %v7074 = vrsqrt.pop %v7038
      %v7075 = vrsqrt.pop %v7039
      %v7076 = vrsqrt.pop %v7040
      %v7077 = vrsqrt.pop %v7041
      %v7078 = vrsqrt.pop %v7042
      %v7079 = vrsqrt.pop %v7043
      %v7080 = vrsqrt.pop %v7044
      %v7081 = vrsqrt.pop %v7045
      %v7082 = vrsqrt.pop %v7046
      %v7083 = vrsqrt.pop %v7047
      %v7084 = vrsqrt.pop %v7048
      %v7085 = vrsqrt.pop %v7049
      %v7086 = vrsqrt.pop %v7050
      %v7087 = vrsqrt.pop %v7051
      %v7088 = vrsqrt.pop %v7052
      %v7089 = vrsqrt.pop %v7053
      %v7090 = vrsqrt.pop %v7054
      %v7091 = vrsqrt.pop %v7055
      %v7092 = vrsqrt.pop %v7056
      %v7093 = vrsqrt.pop %v7057
      %v7094 = vrsqrt.pop %v7058
      %v7095 = vrsqrt.pop %v7059
      %v7096 = vrsqrt.pop %v7060
      %v7097 = vrsqrt.pop %v7061
      %v7098 = vrsqrt.pop %v7062
      %v7099 = vmul.f32 %v1608, %v7063
      %v7100 = vmul.f32 %v1610, %v7064
      %v7101 = vmul.f32 %v2950, %v7065
      %v7102 = vmul.f32 %v2952, %v7066
      %v7103 = vmul.f32 %v4292, %v7067
      %v7104 = vmul.f32 %v4294, %v7068
      %v7105 = vmul.f32 %v5634, %v7069
      %v7106 = vmul.f32 %v5636, %v7070
      %v7107 = vmul.f32 %v6730, %v7071
      %v7108 = vmul.f32 %v1615, %v7072
      %v7109 = vmul.f32 %v1617, %v7073
      %v7110 = vmul.f32 %v2957, %v7074
      %v7111 = vmul.f32 %v2959, %v7075
      %v7112 = vmul.f32 %v4299, %v7076
      %v7113 = vmul.f32 %v4301, %v7077
      %v7114 = vmul.f32 %v5641, %v7078
      %v7115 = vmul.f32 %v5643, %v7079
      %v7116 = vmul.f32 %v6736, %v7080
      %v7117 = vmul.f32 %v1622, %v7081
      %v7118 = vmul.f32 %v1624, %v7082
      %v7119 = vmul.f32 %v2964, %v7083
      %v7120 = vmul.f32 %v2966, %v7084
      %v7121 = vmul.f32 %v4306, %v7085
      %v7122 = vmul.f32 %v4308, %v7086
      %v7123 = vmul.f32 %v5648, %v7087
      %v7124 = vmul.f32 %v5650, %v7088
      %v7125 = vmul.f32 %v6742, %v7089
      %v7126 = vmul.f32 %v1629, %v7090
      %v7127 = vmul.f32 %v1631, %v7091
      %v7128 = vmul.f32 %v2971, %v7092
      %v7129 = vmul.f32 %v2973, %v7093
      %v7130 = vmul.f32 %v4313, %v7094
      %v7131 = vmul.f32 %v4315, %v7095
      %v7132 = vmul.f32 %v5655, %v7096
      %v7133 = vmul.f32 %v5657, %v7097
      %v7134 = vmul.f32 %v6748, %v7098
      %v7135 = vmul.f32 %v1636, %v1636
      %v7136 = vmul.f32 %v1638, %v1638
      %v7137 = vmul.f32 %v2978, %v2978
      %v7138 = vmul.f32 %v2980, %v2980
      %v7139 = vmul.f32 %v4320, %v4320
      %v7140 = vmul.f32 %v4322, %v4322
      %v7141 = vmul.f32 %v5662, %v5662
      %v7142 = vmul.f32 %v5664, %v5664
      %v7143 = vmul.f32 %v6754, %v6754
      %v7144 = vmul.f32 %v1643, %v1643
      %v7145 = vmul.f32 %v1645, %v1645
      %v7146 = vmul.f32 %v2985, %v2985
      %v7147 = vmul.f32 %v2987, %v2987
      %v7148 = vmul.f32 %v4327, %v4327
      %v7149 = vmul.f32 %v4329, %v4329
      %v7150 = vmul.f32 %v5669, %v5669
      %v7151 = vmul.f32 %v5671, %v5671
      %v7152 = vmul.f32 %v6760, %v6760
      %v7153 = vmul.f32 %v1650, %v1650
      %v7154 = vmul.f32 %v1652, %v1652
      %v7155 = vmul.f32 %v2992, %v2992
      %v7156 = vmul.f32 %v2994, %v2994
      %v7157 = vmul.f32 %v4334, %v4334
      %v7158 = vmul.f32 %v4336, %v4336
      %v7159 = vmul.f32 %v5676, %v5676
      %v7160 = vmul.f32 %v5678, %v5678
      %v7161 = vmul.f32 %v6766, %v6766
      %v7162 = vmul.f32 %v1657, %v1657
      %v7163 = vmul.f32 %v1659, %v1659
      %v7164 = vmul.f32 %v2999, %v2999
      %v7165 = vmul.f32 %v3001, %v3001
      %v7166 = vmul.f32 %v4341, %v4341
      %v7167 = vmul.f32 %v4343, %v4343
      %v7168 = vmul.f32 %v5683, %v5683
      %v7169 = vmul.f32 %v5685, %v5685
      %v7170 = vmul.f32 %v6772, %v6772
      %v7171 = vrot.slane %v7135, 4
      %v7172 = vadd.f32 %v7135, %v7171
      %v7173 = vrot.slane %v7172, 2
      %v7174 = vadd.f32 %v7172, %v7173
      %v7175 = vrot.slane %v7174, 1
      %v7176 = vadd.f32 %v7174, %v7175
      %v7177 = vrot.slane %v7136, 4
      %v7178 = vadd.f32 %v7136, %v7177
      %v7179 = vrot.slane %v7178, 2
      %v7180 = vadd.f32 %v7178, %v7179
      %v7181 = vrot.slane %v7180, 1
      %v7182 = vadd.f32 %v7180, %v7181
      %v7183 = vrot.slane %v7137, 4
      %v7184 = vadd.f32 %v7137, %v7183
      %v7185 = vrot.slane %v7184, 2
      %v7186 = vadd.f32 %v7184, %v7185
      %v7187 = vrot.slane %v7186, 1
      %v7188 = vadd.f32 %v7186, %v7187
      %v7189 = vrot.slane %v7138, 4
      %v7190 = vadd.f32 %v7138, %v7189
      %v7191 = vrot.slane %v7190, 2
      %v7192 = vadd.f32 %v7190, %v7191
      %v7193 = vrot.slane %v7192, 1
      %v7194 = vadd.f32 %v7192, %v7193
      %v7195 = vrot.slane %v7139, 4
      %v7196 = vadd.f32 %v7139, %v7195
      %v7197 = vrot.slane %v7196, 2
      %v7198 = vadd.f32 %v7196, %v7197
      %v7199 = vrot.slane %v7198, 1
      %v7200 = vadd.f32 %v7198, %v7199
      %v7201 = vrot.slane %v7140, 4
      %v7202 = vadd.f32 %v7140, %v7201
      %v7203 = vrot.slane %v7202, 2
      %v7204 = vadd.f32 %v7202, %v7203
      %v7205 = vrot.slane %v7204, 1
      %v7206 = vadd.f32 %v7204, %v7205
      %v7207 = vrot.slane %v7141, 4
      %v7208 = vadd.f32 %v7141, %v7207
      %v7209 = vrot.slane %v7208, 2
      %v7210 = vadd.f32 %v7208, %v7209
      %v7211 = vrot.slane %v7210, 1
      %v7212 = vadd.f32 %v7210, %v7211
      %v7213 = vrot.slane %v7142, 4
      %v7214 = vadd.f32 %v7142, %v7213
      %v7215 = vrot.slane %v7214, 2
      %v7216 = vadd.f32 %v7214, %v7215
      %v7217 = vrot.slane %v7216, 1
      %v7218 = vadd.f32 %v7216, %v7217
      %v7219 = vrot.slane %v7143, 4
      %v7220 = vadd.f32 %v7143, %v7219
      %v7221 = vrot.slane %v7220, 2
      %v7222 = vadd.f32 %v7220, %v7221
      %v7223 = vrot.slane %v7222, 1
      %v7224 = vadd.f32 %v7222, %v7223
      %v7225 = vrot.slane %v7144, 4
      %v7226 = vadd.f32 %v7144, %v7225
      %v7227 = vrot.slane %v7226, 2
      %v7228 = vadd.f32 %v7226, %v7227
      %v7229 = vrot.slane %v7228, 1
      %v7230 = vadd.f32 %v7228, %v7229
      %v7231 = vrot.slane %v7145, 4
      %v7232 = vadd.f32 %v7145, %v7231
      %v7233 = vrot.slane %v7232, 2
      %v7234 = vadd.f32 %v7232, %v7233
      %v7235 = vrot.slane %v7234, 1
      %v7236 = vadd.f32 %v7234, %v7235
      %v7237 = vrot.slane %v7146, 4
      %v7238 = vadd.f32 %v7146, %v7237
      %v7239 = vrot.slane %v7238, 2
      %v7240 = vadd.f32 %v7238, %v7239
      %v7241 = vrot.slane %v7240, 1
      %v7242 = vadd.f32 %v7240, %v7241
      %v7243 = vrot.slane %v7147, 4
      %v7244 = vadd.f32 %v7147, %v7243
      %v7245 = vrot.slane %v7244, 2
      %v7246 = vadd.f32 %v7244, %v7245
      %v7247 = vrot.slane %v7246, 1
      %v7248 = vadd.f32 %v7246, %v7247
      %v7249 = vrot.slane %v7148, 4
      %v7250 = vadd.f32 %v7148, %v7249
      %v7251 = vrot.slane %v7250, 2
      %v7252 = vadd.f32 %v7250, %v7251
      %v7253 = vrot.slane %v7252, 1
      %v7254 = vadd.f32 %v7252, %v7253
      %v7255 = vrot.slane %v7149, 4
      %v7256 = vadd.f32 %v7149, %v7255
      %v7257 = vrot.slane %v7256, 2
      %v7258 = vadd.f32 %v7256, %v7257
      %v7259 = vrot.slane %v7258, 1
      %v7260 = vadd.f32 %v7258, %v7259
      %v7261 = vrot.slane %v7150, 4
      %v7262 = vadd.f32 %v7150, %v7261
      %v7263 = vrot.slane %v7262, 2
      %v7264 = vadd.f32 %v7262, %v7263
      %v7265 = vrot.slane %v7264, 1
      %v7266 = vadd.f32 %v7264, %v7265
      %v7267 = vrot.slane %v7151, 4
      %v7268 = vadd.f32 %v7151, %v7267
      %v7269 = vrot.slane %v7268, 2
      %v7270 = vadd.f32 %v7268, %v7269
      %v7271 = vrot.slane %v7270, 1
      %v7272 = vadd.f32 %v7270, %v7271
      %v7273 = vrot.slane %v7152, 4
      %v7274 = vadd.f32 %v7152, %v7273
      %v7275 = vrot.slane %v7274, 2
      %v7276 = vadd.f32 %v7274, %v7275
      %v7277 = vrot.slane %v7276, 1
      %v7278 = vadd.f32 %v7276, %v7277
      %v7279 = vrot.slane %v7153, 4
      %v7280 = vadd.f32 %v7153, %v7279
      %v7281 = vrot.slane %v7280, 2
      %v7282 = vadd.f32 %v7280, %v7281
      %v7283 = vrot.slane %v7282, 1
      %v7284 = vadd.f32 %v7282, %v7283
      %v7285 = vrot.slane %v7154, 4
      %v7286 = vadd.f32 %v7154, %v7285
      %v7287 = vrot.slane %v7286, 2
      %v7288 = vadd.f32 %v7286, %v7287
      %v7289 = vrot.slane %v7288, 1
      %v7290 = vadd.f32 %v7288, %v7289
      %v7291 = vrot.slane %v7155, 4
      %v7292 = vadd.f32 %v7155, %v7291
      %v7293 = vrot.slane %v7292, 2
      %v7294 = vadd.f32 %v7292, %v7293
      %v7295 = vrot.slane %v7294, 1
      %v7296 = vadd.f32 %v7294, %v7295
      %v7297 = vrot.slane %v7156, 4
      %v7298 = vadd.f32 %v7156, %v7297
      %v7299 = vrot.slane %v7298, 2
      %v7300 = vadd.f32 %v7298, %v7299
      %v7301 = vrot.slane %v7300, 1
      %v7302 = vadd.f32 %v7300, %v7301
      %v7303 = vrot.slane %v7157, 4
      %v7304 = vadd.f32 %v7157, %v7303
      %v7305 = vrot.slane %v7304, 2
      %v7306 = vadd.f32 %v7304, %v7305
      %v7307 = vrot.slane %v7306, 1
      %v7308 = vadd.f32 %v7306, %v7307
      %v7309 = vrot.slane %v7158, 4
      %v7310 = vadd.f32 %v7158, %v7309
      %v7311 = vrot.slane %v7310, 2
      %v7312 = vadd.f32 %v7310, %v7311
      %v7313 = vrot.slane %v7312, 1
      %v7314 = vadd.f32 %v7312, %v7313
      %v7315 = vrot.slane %v7159, 4
      %v7316 = vadd.f32 %v7159, %v7315
      %v7317 = vrot.slane %v7316, 2
      %v7318 = vadd.f32 %v7316, %v7317
      %v7319 = vrot.slane %v7318, 1
      %v7320 = vadd.f32 %v7318, %v7319
      %v7321 = vrot.slane %v7160, 4
      %v7322 = vadd.f32 %v7160, %v7321
      %v7323 = vrot.slane %v7322, 2
      %v7324 = vadd.f32 %v7322, %v7323
      %v7325 = vrot.slane %v7324, 1
      %v7326 = vadd.f32 %v7324, %v7325
      %v7327 = vrot.slane %v7161, 4
      %v7328 = vadd.f32 %v7161, %v7327
      %v7329 = vrot.slane %v7328, 2
      %v7330 = vadd.f32 %v7328, %v7329
      %v7331 = vrot.slane %v7330, 1
      %v7332 = vadd.f32 %v7330, %v7331
      %v7333 = vrot.slane %v7162, 4
      %v7334 = vadd.f32 %v7162, %v7333
      %v7335 = vrot.slane %v7334, 2
      %v7336 = vadd.f32 %v7334, %v7335
      %v7337 = vrot.slane %v7336, 1
      %v7338 = vadd.f32 %v7336, %v7337
      %v7339 = vrot.slane %v7163, 4
      %v7340 = vadd.f32 %v7163, %v7339
      %v7341 = vrot.slane %v7340, 2
      %v7342 = vadd.f32 %v7340, %v7341
      %v7343 = vrot.slane %v7342, 1
      %v7344 = vadd.f32 %v7342, %v7343
      %v7345 = vrot.slane %v7164, 4
      %v7346 = vadd.f32 %v7164, %v7345
      %v7347 = vrot.slane %v7346, 2
      %v7348 = vadd.f32 %v7346, %v7347
      %v7349 = vrot.slane %v7348, 1
      %v7350 = vadd.f32 %v7348, %v7349
      %v7351 = vrot.slane %v7165, 4
      %v7352 = vadd.f32 %v7165, %v7351
      %v7353 = vrot.slane %v7352, 2
      %v7354 = vadd.f32 %v7352, %v7353
      %v7355 = vrot.slane %v7354, 1
      %v7356 = vadd.f32 %v7354, %v7355
      %v7357 = vrot.slane %v7166, 4
      %v7358 = vadd.f32 %v7166, %v7357
      %v7359 = vrot.slane %v7358, 2
      %v7360 = vadd.f32 %v7358, %v7359
      %v7361 = vrot.slane %v7360, 1
      %v7362 = vadd.f32 %v7360, %v7361
      %v7363 = vrot.slane %v7167, 4
      %v7364 = vadd.f32 %v7167, %v7363
      %v7365 = vrot.slane %v7364, 2
      %v7366 = vadd.f32 %v7364, %v7365
      %v7367 = vrot.slane %v7366, 1
      %v7368 = vadd.f32 %v7366, %v7367
      %v7369 = vrot.slane %v7168, 4
      %v7370 = vadd.f32 %v7168, %v7369
      %v7371 = vrot.slane %v7370, 2
      %v7372 = vadd.f32 %v7370, %v7371
      %v7373 = vrot.slane %v7372, 1
      %v7374 = vadd.f32 %v7372, %v7373
      %v7375 = vrot.slane %v7169, 4
      %v7376 = vadd.f32 %v7169, %v7375
      %v7377 = vrot.slane %v7376, 2
      %v7378 = vadd.f32 %v7376, %v7377
      %v7379 = vrot.slane %v7378, 1
      %v7380 = vadd.f32 %v7378, %v7379
      %v7381 = vrot.slane %v7170, 4
      %v7382 = vadd.f32 %v7170, %v7381
      %v7383 = vrot.slane %v7382, 2
      %v7384 = vadd.f32 %v7382, %v7383
      %v7385 = vrot.slane %v7384, 1
      %v7386 = vadd.f32 %v7384, %v7385
      %v7387 = vmax.f32 %v7176, 1e-24
      %v7388 = vmax.f32 %v7182, 1e-24
      %v7389 = vmax.f32 %v7188, 1e-24
      %v7390 = vmax.f32 %v7194, 1e-24
      %v7391 = vmax.f32 %v7200, 1e-24
      %v7392 = vmax.f32 %v7206, 1e-24
      %v7393 = vmax.f32 %v7212, 1e-24
      %v7394 = vmax.f32 %v7218, 1e-24
      %v7395 = vmax.f32 %v7224, 1e-24
      %v7396 = vmax.f32 %v7230, 1e-24
      %v7397 = vmax.f32 %v7236, 1e-24
      %v7398 = vmax.f32 %v7242, 1e-24
      %v7399 = vmax.f32 %v7248, 1e-24
      %v7400 = vmax.f32 %v7254, 1e-24
      %v7401 = vmax.f32 %v7260, 1e-24
      %v7402 = vmax.f32 %v7266, 1e-24
      %v7403 = vmax.f32 %v7272, 1e-24
      %v7404 = vmax.f32 %v7278, 1e-24
      %v7405 = vmax.f32 %v7284, 1e-24
      %v7406 = vmax.f32 %v7290, 1e-24
      %v7407 = vmax.f32 %v7296, 1e-24
      %v7408 = vmax.f32 %v7302, 1e-24
      %v7409 = vmax.f32 %v7308, 1e-24
      %v7410 = vmax.f32 %v7314, 1e-24
      %v7411 = vmax.f32 %v7320, 1e-24
      %v7412 = vmax.f32 %v7326, 1e-24
      %v7413 = vmax.f32 %v7332, 1e-24
      %v7414 = vmax.f32 %v7338, 1e-24
      %v7415 = vmax.f32 %v7344, 1e-24
      %v7416 = vmax.f32 %v7350, 1e-24
      %v7417 = vmax.f32 %v7356, 1e-24
      %v7418 = vmax.f32 %v7362, 1e-24
      %v7419 = vmax.f32 %v7368, 1e-24
      %v7420 = vmax.f32 %v7374, 1e-24
      %v7421 = vmax.f32 %v7380, 1e-24
      %v7422 = vmax.f32 %v7386, 1e-24
      %v7423 = vrsqrt.pop %v7387
      %v7424 = vrsqrt.pop %v7388
      %v7425 = vrsqrt.pop %v7389
      %v7426 = vrsqrt.pop %v7390
      %v7427 = vrsqrt.pop %v7391
      %v7428 = vrsqrt.pop %v7392
      %v7429 = vrsqrt.pop %v7393
      %v7430 = vrsqrt.pop %v7394
      %v7431 = vrsqrt.pop %v7395
      %v7432 = vrsqrt.pop %v7396
      %v7433 = vrsqrt.pop %v7397
      %v7434 = vrsqrt.pop %v7398
      %v7435 = vrsqrt.pop %v7399
      %v7436 = vrsqrt.pop %v7400
      %v7437 = vrsqrt.pop %v7401
      %v7438 = vrsqrt.pop %v7402
      %v7439 = vrsqrt.pop %v7403
      %v7440 = vrsqrt.pop %v7404
      %v7441 = vrsqrt.pop %v7405
      %v7442 = vrsqrt.pop %v7406
      %v7443 = vrsqrt.pop %v7407
      %v7444 = vrsqrt.pop %v7408
      %v7445 = vrsqrt.pop %v7409
      %v7446 = vrsqrt.pop %v7410
      %v7447 = vrsqrt.pop %v7411
      %v7448 = vrsqrt.pop %v7412
      %v7449 = vrsqrt.pop %v7413
      %v7450 = vrsqrt.pop %v7414
      %v7451 = vrsqrt.pop %v7415
      %v7452 = vrsqrt.pop %v7416
      %v7453 = vrsqrt.pop %v7417
      %v7454 = vrsqrt.pop %v7418
      %v7455 = vrsqrt.pop %v7419
      %v7456 = vrsqrt.pop %v7420
      %v7457 = vrsqrt.pop %v7421
      %v7458 = vrsqrt.pop %v7422
      %v7459 = vmul.f32 %v1636, %v7423
      %v7460 = vmul.f32 %v1638, %v7424
      %v7461 = vmul.f32 %v2978, %v7425
      %v7462 = vmul.f32 %v2980, %v7426
      %v7463 = vmul.f32 %v4320, %v7427
      %v7464 = vmul.f32 %v4322, %v7428
      %v7465 = vmul.f32 %v5662, %v7429
      %v7466 = vmul.f32 %v5664, %v7430
      %v7467 = vmul.f32 %v6754, %v7431
      %v7468 = vmul.f32 %v1643, %v7432
      %v7469 = vmul.f32 %v1645, %v7433
      %v7470 = vmul.f32 %v2985, %v7434
      %v7471 = vmul.f32 %v2987, %v7435
      %v7472 = vmul.f32 %v4327, %v7436
      %v7473 = vmul.f32 %v4329, %v7437
      %v7474 = vmul.f32 %v5669, %v7438
      %v7475 = vmul.f32 %v5671, %v7439
      %v7476 = vmul.f32 %v6760, %v7440
      %v7477 = vmul.f32 %v1650, %v7441
      %v7478 = vmul.f32 %v1652, %v7442
      %v7479 = vmul.f32 %v2992, %v7443
      %v7480 = vmul.f32 %v2994, %v7444
      %v7481 = vmul.f32 %v4334, %v7445
      %v7482 = vmul.f32 %v4336, %v7446
      %v7483 = vmul.f32 %v5676, %v7447
      %v7484 = vmul.f32 %v5678, %v7448
      %v7485 = vmul.f32 %v6766, %v7449
      %v7486 = vmul.f32 %v1657, %v7450
      %v7487 = vmul.f32 %v1659, %v7451
      %v7488 = vmul.f32 %v2999, %v7452
      %v7489 = vmul.f32 %v3001, %v7453
      %v7490 = vmul.f32 %v4341, %v7454
      %v7491 = vmul.f32 %v4343, %v7455
      %v7492 = vmul.f32 %v5683, %v7456
      %v7493 = vmul.f32 %v5685, %v7457
      %v7494 = vmul.f32 %v6772, %v7458
      %v7495 = vmul.f32 %v1580, %v7099
      %v7496 = vmul.f32 %v1587, %v7108
      %v7497 = vmul.f32 %v1594, %v7117
      %v7498 = vmul.f32 %v1601, %v7126
      %v7499 = vrot.slane %v7495, 4
      %v7500 = vadd.f32 %v7495, %v7499
      %v7501 = vrot.slane %v7500, 2
      %v7502 = vadd.f32 %v7500, %v7501
      %v7503 = vrot.slane %v7502, 1
      %v7504 = vadd.f32 %v7502, %v7503
      %v7505 = vrot.slane %v7496, 4
      %v7506 = vadd.f32 %v7496, %v7505
      %v7507 = vrot.slane %v7506, 2
      %v7508 = vadd.f32 %v7506, %v7507
      %v7509 = vrot.slane %v7508, 1
      %v7510 = vadd.f32 %v7508, %v7509
      %v7511 = vrot.slane %v7497, 4
      %v7512 = vadd.f32 %v7497, %v7511
      %v7513 = vrot.slane %v7512, 2
      %v7514 = vadd.f32 %v7512, %v7513
      %v7515 = vrot.slane %v7514, 1
      %v7516 = vadd.f32 %v7514, %v7515
      %v7517 = vrot.slane %v7498, 4
      %v7518 = vadd.f32 %v7498, %v7517
      %v7519 = vrot.slane %v7518, 2
      %v7520 = vadd.f32 %v7518, %v7519
      %v7521 = vrot.slane %v7520, 1
      %v7522 = vadd.f32 %v7520, %v7521
      %v7523 = vmul.f32 %v7504, %v7459
      %v7524 = vmul.f32 %v7510, %v7468
      %v7525 = vmul.f32 %v7516, %v7477
      %v7526 = vmul.f32 %v7522, %v7486
      %v7527 = vmul.f32 %v1580, %v7100
      %v7528 = vmul.f32 %v1587, %v7109
      %v7529 = vmul.f32 %v1594, %v7118
      %v7530 = vmul.f32 %v1601, %v7127
      %v7531 = vrot.slane %v7527, 4
      %v7532 = vadd.f32 %v7527, %v7531
      %v7533 = vrot.slane %v7532, 2
      %v7534 = vadd.f32 %v7532, %v7533
      %v7535 = vrot.slane %v7534, 1
      %v7536 = vadd.f32 %v7534, %v7535
      %v7537 = vrot.slane %v7528, 4
      %v7538 = vadd.f32 %v7528, %v7537
      %v7539 = vrot.slane %v7538, 2
      %v7540 = vadd.f32 %v7538, %v7539
      %v7541 = vrot.slane %v7540, 1
      %v7542 = vadd.f32 %v7540, %v7541
      %v7543 = vrot.slane %v7529, 4
      %v7544 = vadd.f32 %v7529, %v7543
      %v7545 = vrot.slane %v7544, 2
      %v7546 = vadd.f32 %v7544, %v7545
      %v7547 = vrot.slane %v7546, 1
      %v7548 = vadd.f32 %v7546, %v7547
      %v7549 = vrot.slane %v7530, 4
      %v7550 = vadd.f32 %v7530, %v7549
      %v7551 = vrot.slane %v7550, 2
      %v7552 = vadd.f32 %v7550, %v7551
      %v7553 = vrot.slane %v7552, 1
      %v7554 = vadd.f32 %v7552, %v7553
      %v7555 = vmul.f32 %v7536, %v7460
      %v7556 = vmul.f32 %v7542, %v7469
      %v7557 = vmul.f32 %v7548, %v7478
      %v7558 = vmul.f32 %v7554, %v7487
      %v7559 = vadd.f32 %v7523, %v7555
      %v7560 = vadd.f32 %v7524, %v7556
      %v7561 = vadd.f32 %v7525, %v7557
      %v7562 = vadd.f32 %v7526, %v7558
      %v7563 = vmul.f32 %v1580, %v7101
      %v7564 = vmul.f32 %v1587, %v7110
      %v7565 = vmul.f32 %v1594, %v7119
      %v7566 = vmul.f32 %v1601, %v7128
      %v7567 = vrot.slane %v7563, 4
      %v7568 = vadd.f32 %v7563, %v7567
      %v7569 = vrot.slane %v7568, 2
      %v7570 = vadd.f32 %v7568, %v7569
      %v7571 = vrot.slane %v7570, 1
      %v7572 = vadd.f32 %v7570, %v7571
      %v7573 = vrot.slane %v7564, 4
      %v7574 = vadd.f32 %v7564, %v7573
      %v7575 = vrot.slane %v7574, 2
      %v7576 = vadd.f32 %v7574, %v7575
      %v7577 = vrot.slane %v7576, 1
      %v7578 = vadd.f32 %v7576, %v7577
      %v7579 = vrot.slane %v7565, 4
      %v7580 = vadd.f32 %v7565, %v7579
      %v7581 = vrot.slane %v7580, 2
      %v7582 = vadd.f32 %v7580, %v7581
      %v7583 = vrot.slane %v7582, 1
      %v7584 = vadd.f32 %v7582, %v7583
      %v7585 = vrot.slane %v7566, 4
      %v7586 = vadd.f32 %v7566, %v7585
      %v7587 = vrot.slane %v7586, 2
      %v7588 = vadd.f32 %v7586, %v7587
      %v7589 = vrot.slane %v7588, 1
      %v7590 = vadd.f32 %v7588, %v7589
      %v7591 = vmul.f32 %v7572, %v7461
      %v7592 = vmul.f32 %v7578, %v7470
      %v7593 = vmul.f32 %v7584, %v7479
      %v7594 = vmul.f32 %v7590, %v7488
      %v7595 = vadd.f32 %v7559, %v7591
      %v7596 = vadd.f32 %v7560, %v7592
      %v7597 = vadd.f32 %v7561, %v7593
      %v7598 = vadd.f32 %v7562, %v7594
      %v7599 = vmul.f32 %v1580, %v7102
      %v7600 = vmul.f32 %v1587, %v7111
      %v7601 = vmul.f32 %v1594, %v7120
      %v7602 = vmul.f32 %v1601, %v7129
      %v7603 = vrot.slane %v7599, 4
      %v7604 = vadd.f32 %v7599, %v7603
      %v7605 = vrot.slane %v7604, 2
      %v7606 = vadd.f32 %v7604, %v7605
      %v7607 = vrot.slane %v7606, 1
      %v7608 = vadd.f32 %v7606, %v7607
      %v7609 = vrot.slane %v7600, 4
      %v7610 = vadd.f32 %v7600, %v7609
      %v7611 = vrot.slane %v7610, 2
      %v7612 = vadd.f32 %v7610, %v7611
      %v7613 = vrot.slane %v7612, 1
      %v7614 = vadd.f32 %v7612, %v7613
      %v7615 = vrot.slane %v7601, 4
      %v7616 = vadd.f32 %v7601, %v7615
      %v7617 = vrot.slane %v7616, 2
      %v7618 = vadd.f32 %v7616, %v7617
      %v7619 = vrot.slane %v7618, 1
      %v7620 = vadd.f32 %v7618, %v7619
      %v7621 = vrot.slane %v7602, 4
      %v7622 = vadd.f32 %v7602, %v7621
      %v7623 = vrot.slane %v7622, 2
      %v7624 = vadd.f32 %v7622, %v7623
      %v7625 = vrot.slane %v7624, 1
      %v7626 = vadd.f32 %v7624, %v7625
      %v7627 = vmul.f32 %v7608, %v7462
      %v7628 = vmul.f32 %v7614, %v7471
      %v7629 = vmul.f32 %v7620, %v7480
      %v7630 = vmul.f32 %v7626, %v7489
      %v7631 = vadd.f32 %v7595, %v7627
      %v7632 = vadd.f32 %v7596, %v7628
      %v7633 = vadd.f32 %v7597, %v7629
      %v7634 = vadd.f32 %v7598, %v7630
      %v7635 = vmul.f32 %v1580, %v7103
      %v7636 = vmul.f32 %v1587, %v7112
      %v7637 = vmul.f32 %v1594, %v7121
      %v7638 = vmul.f32 %v1601, %v7130
      %v7639 = vrot.slane %v7635, 4
      %v7640 = vadd.f32 %v7635, %v7639
      %v7641 = vrot.slane %v7640, 2
      %v7642 = vadd.f32 %v7640, %v7641
      %v7643 = vrot.slane %v7642, 1
      %v7644 = vadd.f32 %v7642, %v7643
      %v7645 = vrot.slane %v7636, 4
      %v7646 = vadd.f32 %v7636, %v7645
      %v7647 = vrot.slane %v7646, 2
      %v7648 = vadd.f32 %v7646, %v7647
      %v7649 = vrot.slane %v7648, 1
      %v7650 = vadd.f32 %v7648, %v7649
      %v7651 = vrot.slane %v7637, 4
      %v7652 = vadd.f32 %v7637, %v7651
      %v7653 = vrot.slane %v7652, 2
      %v7654 = vadd.f32 %v7652, %v7653
      %v7655 = vrot.slane %v7654, 1
      %v7656 = vadd.f32 %v7654, %v7655
      %v7657 = vrot.slane %v7638, 4
      %v7658 = vadd.f32 %v7638, %v7657
      %v7659 = vrot.slane %v7658, 2
      %v7660 = vadd.f32 %v7658, %v7659
      %v7661 = vrot.slane %v7660, 1
      %v7662 = vadd.f32 %v7660, %v7661
      %v7663 = vmul.f32 %v7644, %v7463
      %v7664 = vmul.f32 %v7650, %v7472
      %v7665 = vmul.f32 %v7656, %v7481
      %v7666 = vmul.f32 %v7662, %v7490
      %v7667 = vadd.f32 %v7631, %v7663
      %v7668 = vadd.f32 %v7632, %v7664
      %v7669 = vadd.f32 %v7633, %v7665
      %v7670 = vadd.f32 %v7634, %v7666
      %v7671 = vmul.f32 %v1580, %v7104
      %v7672 = vmul.f32 %v1587, %v7113
      %v7673 = vmul.f32 %v1594, %v7122
      %v7674 = vmul.f32 %v1601, %v7131
      %v7675 = vrot.slane %v7671, 4
      %v7676 = vadd.f32 %v7671, %v7675
      %v7677 = vrot.slane %v7676, 2
      %v7678 = vadd.f32 %v7676, %v7677
      %v7679 = vrot.slane %v7678, 1
      %v7680 = vadd.f32 %v7678, %v7679
      %v7681 = vrot.slane %v7672, 4
      %v7682 = vadd.f32 %v7672, %v7681
      %v7683 = vrot.slane %v7682, 2
      %v7684 = vadd.f32 %v7682, %v7683
      %v7685 = vrot.slane %v7684, 1
      %v7686 = vadd.f32 %v7684, %v7685
      %v7687 = vrot.slane %v7673, 4
      %v7688 = vadd.f32 %v7673, %v7687
      %v7689 = vrot.slane %v7688, 2
      %v7690 = vadd.f32 %v7688, %v7689
      %v7691 = vrot.slane %v7690, 1
      %v7692 = vadd.f32 %v7690, %v7691
      %v7693 = vrot.slane %v7674, 4
      %v7694 = vadd.f32 %v7674, %v7693
      %v7695 = vrot.slane %v7694, 2
      %v7696 = vadd.f32 %v7694, %v7695
      %v7697 = vrot.slane %v7696, 1
      %v7698 = vadd.f32 %v7696, %v7697
      %v7699 = vmul.f32 %v7680, %v7464
      %v7700 = vmul.f32 %v7686, %v7473
      %v7701 = vmul.f32 %v7692, %v7482
      %v7702 = vmul.f32 %v7698, %v7491
      %v7703 = vadd.f32 %v7667, %v7699
      %v7704 = vadd.f32 %v7668, %v7700
      %v7705 = vadd.f32 %v7669, %v7701
      %v7706 = vadd.f32 %v7670, %v7702
      %v7707 = vmul.f32 %v1580, %v7105
      %v7708 = vmul.f32 %v1587, %v7114
      %v7709 = vmul.f32 %v1594, %v7123
      %v7710 = vmul.f32 %v1601, %v7132
      %v7711 = vrot.slane %v7707, 4
      %v7712 = vadd.f32 %v7707, %v7711
      %v7713 = vrot.slane %v7712, 2
      %v7714 = vadd.f32 %v7712, %v7713
      %v7715 = vrot.slane %v7714, 1
      %v7716 = vadd.f32 %v7714, %v7715
      %v7717 = vrot.slane %v7708, 4
      %v7718 = vadd.f32 %v7708, %v7717
      %v7719 = vrot.slane %v7718, 2
      %v7720 = vadd.f32 %v7718, %v7719
      %v7721 = vrot.slane %v7720, 1
      %v7722 = vadd.f32 %v7720, %v7721
      %v7723 = vrot.slane %v7709, 4
      %v7724 = vadd.f32 %v7709, %v7723
      %v7725 = vrot.slane %v7724, 2
      %v7726 = vadd.f32 %v7724, %v7725
      %v7727 = vrot.slane %v7726, 1
      %v7728 = vadd.f32 %v7726, %v7727
      %v7729 = vrot.slane %v7710, 4
      %v7730 = vadd.f32 %v7710, %v7729
      %v7731 = vrot.slane %v7730, 2
      %v7732 = vadd.f32 %v7730, %v7731
      %v7733 = vrot.slane %v7732, 1
      %v7734 = vadd.f32 %v7732, %v7733
      %v7735 = vmul.f32 %v7716, %v7465
      %v7736 = vmul.f32 %v7722, %v7474
      %v7737 = vmul.f32 %v7728, %v7483
      %v7738 = vmul.f32 %v7734, %v7492
      %v7739 = vadd.f32 %v7703, %v7735
      %v7740 = vadd.f32 %v7704, %v7736
      %v7741 = vadd.f32 %v7705, %v7737
      %v7742 = vadd.f32 %v7706, %v7738
      %v7743 = vmul.f32 %v1580, %v7106
      %v7744 = vmul.f32 %v1587, %v7115
      %v7745 = vmul.f32 %v1594, %v7124
      %v7746 = vmul.f32 %v1601, %v7133
      %v7747 = vrot.slane %v7743, 4
      %v7748 = vadd.f32 %v7743, %v7747
      %v7749 = vrot.slane %v7748, 2
      %v7750 = vadd.f32 %v7748, %v7749
      %v7751 = vrot.slane %v7750, 1
      %v7752 = vadd.f32 %v7750, %v7751
      %v7753 = vrot.slane %v7744, 4
      %v7754 = vadd.f32 %v7744, %v7753
      %v7755 = vrot.slane %v7754, 2
      %v7756 = vadd.f32 %v7754, %v7755
      %v7757 = vrot.slane %v7756, 1
      %v7758 = vadd.f32 %v7756, %v7757
      %v7759 = vrot.slane %v7745, 4
      %v7760 = vadd.f32 %v7745, %v7759
      %v7761 = vrot.slane %v7760, 2
      %v7762 = vadd.f32 %v7760, %v7761
      %v7763 = vrot.slane %v7762, 1
      %v7764 = vadd.f32 %v7762, %v7763
      %v7765 = vrot.slane %v7746, 4
      %v7766 = vadd.f32 %v7746, %v7765
      %v7767 = vrot.slane %v7766, 2
      %v7768 = vadd.f32 %v7766, %v7767
      %v7769 = vrot.slane %v7768, 1
      %v7770 = vadd.f32 %v7768, %v7769
      %v7771 = vmul.f32 %v7752, %v7466
      %v7772 = vmul.f32 %v7758, %v7475
      %v7773 = vmul.f32 %v7764, %v7484
      %v7774 = vmul.f32 %v7770, %v7493
      %v7775 = vadd.f32 %v7739, %v7771
      %v7776 = vadd.f32 %v7740, %v7772
      %v7777 = vadd.f32 %v7741, %v7773
      %v7778 = vadd.f32 %v7742, %v7774
      %v7779 = vmul.f32 %v1580, %v7107
      %v7780 = vmul.f32 %v1587, %v7116
      %v7781 = vmul.f32 %v1594, %v7125
      %v7782 = vmul.f32 %v1601, %v7134
      %v7783 = vrot.slane %v7779, 4
      %v7784 = vadd.f32 %v7779, %v7783
      %v7785 = vrot.slane %v7784, 2
      %v7786 = vadd.f32 %v7784, %v7785
      %v7787 = vrot.slane %v7786, 1
      %v7788 = vadd.f32 %v7786, %v7787
      %v7789 = vrot.slane %v7780, 4
      %v7790 = vadd.f32 %v7780, %v7789
      %v7791 = vrot.slane %v7790, 2
      %v7792 = vadd.f32 %v7790, %v7791
      %v7793 = vrot.slane %v7792, 1
      %v7794 = vadd.f32 %v7792, %v7793
      %v7795 = vrot.slane %v7781, 4
      %v7796 = vadd.f32 %v7781, %v7795
      %v7797 = vrot.slane %v7796, 2
      %v7798 = vadd.f32 %v7796, %v7797
      %v7799 = vrot.slane %v7798, 1
      %v7800 = vadd.f32 %v7798, %v7799
      %v7801 = vrot.slane %v7782, 4
      %v7802 = vadd.f32 %v7782, %v7801
      %v7803 = vrot.slane %v7802, 2
      %v7804 = vadd.f32 %v7802, %v7803
      %v7805 = vrot.slane %v7804, 1
      %v7806 = vadd.f32 %v7804, %v7805
      %v7807 = vmul.f32 %v7788, %v7467
      %v7808 = vmul.f32 %v7794, %v7476
      %v7809 = vmul.f32 %v7800, %v7485
      %v7810 = vmul.f32 %v7806, %v7494
      %v7811 = vadd.f32 %v7775, %v7807
      %v7812 = vadd.f32 %v7776, %v7808
      %v7813 = vadd.f32 %v7777, %v7809
      %v7814 = vadd.f32 %v7778, %v7810
      %7815 = vst [vmem:[%s143] sm:$0xff] %v7811
      %7816 = vst [vmem:[%s143 + $0x48] sm:$0xff] %v7812
      %7817 = vst [vmem:[%s143 + $0x90] sm:$0xff] %v7813
      %7818 = vst [vmem:[%s143 + $0xd8] sm:$0xff] %v7814
      %v7819 = vmul.f32 %v1582, %v7099
      %v7820 = vmul.f32 %v1589, %v7108
      %v7821 = vmul.f32 %v1596, %v7117
      %v7822 = vmul.f32 %v1603, %v7126
      %v7823 = vrot.slane %v7819, 4
      %v7824 = vadd.f32 %v7819, %v7823
      %v7825 = vrot.slane %v7824, 2
      %v7826 = vadd.f32 %v7824, %v7825
      %v7827 = vrot.slane %v7826, 1
      %v7828 = vadd.f32 %v7826, %v7827
      %v7829 = vrot.slane %v7820, 4
      %v7830 = vadd.f32 %v7820, %v7829
      %v7831 = vrot.slane %v7830, 2
      %v7832 = vadd.f32 %v7830, %v7831
      %v7833 = vrot.slane %v7832, 1
      %v7834 = vadd.f32 %v7832, %v7833
      %v7835 = vrot.slane %v7821, 4
      %v7836 = vadd.f32 %v7821, %v7835
      %v7837 = vrot.slane %v7836, 2
      %v7838 = vadd.f32 %v7836, %v7837
      %v7839 = vrot.slane %v7838, 1
      %v7840 = vadd.f32 %v7838, %v7839
      %v7841 = vrot.slane %v7822, 4
      %v7842 = vadd.f32 %v7822, %v7841
      %v7843 = vrot.slane %v7842, 2
      %v7844 = vadd.f32 %v7842, %v7843
      %v7845 = vrot.slane %v7844, 1
      %v7846 = vadd.f32 %v7844, %v7845
      %v7847 = vmul.f32 %v7828, %v7459
      %v7848 = vmul.f32 %v7834, %v7468
      %v7849 = vmul.f32 %v7840, %v7477
      %v7850 = vmul.f32 %v7846, %v7486
      %v7851 = vmul.f32 %v1582, %v7100
      %v7852 = vmul.f32 %v1589, %v7109
      %v7853 = vmul.f32 %v1596, %v7118
      %v7854 = vmul.f32 %v1603, %v7127
      %v7855 = vrot.slane %v7851, 4
      %v7856 = vadd.f32 %v7851, %v7855
      %v7857 = vrot.slane %v7856, 2
      %v7858 = vadd.f32 %v7856, %v7857
      %v7859 = vrot.slane %v7858, 1
      %v7860 = vadd.f32 %v7858, %v7859
      %v7861 = vrot.slane %v7852, 4
      %v7862 = vadd.f32 %v7852, %v7861
      %v7863 = vrot.slane %v7862, 2
      %v7864 = vadd.f32 %v7862, %v7863
      %v7865 = vrot.slane %v7864, 1
      %v7866 = vadd.f32 %v7864, %v7865
      %v7867 = vrot.slane %v7853, 4
      %v7868 = vadd.f32 %v7853, %v7867
      %v7869 = vrot.slane %v7868, 2
      %v7870 = vadd.f32 %v7868, %v7869
      %v7871 = vrot.slane %v7870, 1
      %v7872 = vadd.f32 %v7870, %v7871
      %v7873 = vrot.slane %v7854, 4
      %v7874 = vadd.f32 %v7854, %v7873
      %v7875 = vrot.slane %v7874, 2
      %v7876 = vadd.f32 %v7874, %v7875
      %v7877 = vrot.slane %v7876, 1
      %v7878 = vadd.f32 %v7876, %v7877
      %v7879 = vmul.f32 %v7860, %v7460
      %v7880 = vmul.f32 %v7866, %v7469
      %v7881 = vmul.f32 %v7872, %v7478
      %v7882 = vmul.f32 %v7878, %v7487
      %v7883 = vadd.f32 %v7847, %v7879
      %v7884 = vadd.f32 %v7848, %v7880
      %v7885 = vadd.f32 %v7849, %v7881
      %v7886 = vadd.f32 %v7850, %v7882
      %v7887 = vmul.f32 %v1582, %v7101
      %v7888 = vmul.f32 %v1589, %v7110
      %v7889 = vmul.f32 %v1596, %v7119
      %v7890 = vmul.f32 %v1603, %v7128
      %v7891 = vrot.slane %v7887, 4
      %v7892 = vadd.f32 %v7887, %v7891
      %v7893 = vrot.slane %v7892, 2
      %v7894 = vadd.f32 %v7892, %v7893
      %v7895 = vrot.slane %v7894, 1
      %v7896 = vadd.f32 %v7894, %v7895
      %v7897 = vrot.slane %v7888, 4
      %v7898 = vadd.f32 %v7888, %v7897
      %v7899 = vrot.slane %v7898, 2
      %v7900 = vadd.f32 %v7898, %v7899
      %v7901 = vrot.slane %v7900, 1
      %v7902 = vadd.f32 %v7900, %v7901
      %v7903 = vrot.slane %v7889, 4
      %v7904 = vadd.f32 %v7889, %v7903
      %v7905 = vrot.slane %v7904, 2
      %v7906 = vadd.f32 %v7904, %v7905
      %v7907 = vrot.slane %v7906, 1
      %v7908 = vadd.f32 %v7906, %v7907
      %v7909 = vrot.slane %v7890, 4
      %v7910 = vadd.f32 %v7890, %v7909
      %v7911 = vrot.slane %v7910, 2
      %v7912 = vadd.f32 %v7910, %v7911
      %v7913 = vrot.slane %v7912, 1
      %v7914 = vadd.f32 %v7912, %v7913
      %v7915 = vmul.f32 %v7896, %v7461
      %v7916 = vmul.f32 %v7902, %v7470
      %v7917 = vmul.f32 %v7908, %v7479
      %v7918 = vmul.f32 %v7914, %v7488
      %v7919 = vadd.f32 %v7883, %v7915
      %v7920 = vadd.f32 %v7884, %v7916
      %v7921 = vadd.f32 %v7885, %v7917
      %v7922 = vadd.f32 %v7886, %v7918
      %v7923 = vmul.f32 %v1582, %v7102
      %v7924 = vmul.f32 %v1589, %v7111
      %v7925 = vmul.f32 %v1596, %v7120
      %v7926 = vmul.f32 %v1603, %v7129
      %v7927 = vrot.slane %v7923, 4
      %v7928 = vadd.f32 %v7923, %v7927
      %v7929 = vrot.slane %v7928, 2
      %v7930 = vadd.f32 %v7928, %v7929
      %v7931 = vrot.slane %v7930, 1
      %v7932 = vadd.f32 %v7930, %v7931
      %v7933 = vrot.slane %v7924, 4
      %v7934 = vadd.f32 %v7924, %v7933
      %v7935 = vrot.slane %v7934, 2
      %v7936 = vadd.f32 %v7934, %v7935
      %v7937 = vrot.slane %v7936, 1
      %v7938 = vadd.f32 %v7936, %v7937
      %v7939 = vrot.slane %v7925, 4
      %v7940 = vadd.f32 %v7925, %v7939
      %v7941 = vrot.slane %v7940, 2
      %v7942 = vadd.f32 %v7940, %v7941
      %v7943 = vrot.slane %v7942, 1
      %v7944 = vadd.f32 %v7942, %v7943
      %v7945 = vrot.slane %v7926, 4
      %v7946 = vadd.f32 %v7926, %v7945
      %v7947 = vrot.slane %v7946, 2
      %v7948 = vadd.f32 %v7946, %v7947
      %v7949 = vrot.slane %v7948, 1
      %v7950 = vadd.f32 %v7948, %v7949
      %v7951 = vmul.f32 %v7932, %v7462
      %v7952 = vmul.f32 %v7938, %v7471
      %v7953 = vmul.f32 %v7944, %v7480
      %v7954 = vmul.f32 %v7950, %v7489
      %v7955 = vadd.f32 %v7919, %v7951
      %v7956 = vadd.f32 %v7920, %v7952
      %v7957 = vadd.f32 %v7921, %v7953
      %v7958 = vadd.f32 %v7922, %v7954
      %v7959 = vmul.f32 %v1582, %v7103
      %v7960 = vmul.f32 %v1589, %v7112
      %v7961 = vmul.f32 %v1596, %v7121
      %v7962 = vmul.f32 %v1603, %v7130
      %v7963 = vrot.slane %v7959, 4
      %v7964 = vadd.f32 %v7959, %v7963
      %v7965 = vrot.slane %v7964, 2
      %v7966 = vadd.f32 %v7964, %v7965
      %v7967 = vrot.slane %v7966, 1
      %v7968 = vadd.f32 %v7966, %v7967
      %v7969 = vrot.slane %v7960, 4
      %v7970 = vadd.f32 %v7960, %v7969
      %v7971 = vrot.slane %v7970, 2
      %v7972 = vadd.f32 %v7970, %v7971
      %v7973 = vrot.slane %v7972, 1
      %v7974 = vadd.f32 %v7972, %v7973
      %v7975 = vrot.slane %v7961, 4
      %v7976 = vadd.f32 %v7961, %v7975
      %v7977 = vrot.slane %v7976, 2
      %v7978 = vadd.f32 %v7976, %v7977
      %v7979 = vrot.slane %v7978, 1
      %v7980 = vadd.f32 %v7978, %v7979
      %v7981 = vrot.slane %v7962, 4
      %v7982 = vadd.f32 %v7962, %v7981
      %v7983 = vrot.slane %v7982, 2
      %v7984 = vadd.f32 %v7982, %v7983
      %v7985 = vrot.slane %v7984, 1
      %v7986 = vadd.f32 %v7984, %v7985
      %v7987 = vmul.f32 %v7968, %v7463
      %v7988 = vmul.f32 %v7974, %v7472
      %v7989 = vmul.f32 %v7980, %v7481
      %v7990 = vmul.f32 %v7986, %v7490
      %v7991 = vadd.f32 %v7955, %v7987
      %v7992 = vadd.f32 %v7956, %v7988
      %v7993 = vadd.f32 %v7957, %v7989
      %v7994 = vadd.f32 %v7958, %v7990
      %v7995 = vmul.f32 %v1582, %v7104
      %v7996 = vmul.f32 %v1589, %v7113
      %v7997 = vmul.f32 %v1596, %v7122
      %v7998 = vmul.f32 %v1603, %v7131
      %v7999 = vrot.slane %v7995, 4
      %v8000 = vadd.f32 %v7995, %v7999
      %v8001 = vrot.slane %v8000, 2
      %v8002 = vadd.f32 %v8000, %v8001
      %v8003 = vrot.slane %v8002, 1
      %v8004 = vadd.f32 %v8002, %v8003
      %v8005 = vrot.slane %v7996, 4
      %v8006 = vadd.f32 %v7996, %v8005
      %v8007 = vrot.slane %v8006, 2
      %v8008 = vadd.f32 %v8006, %v8007
      %v8009 = vrot.slane %v8008, 1
      %v8010 = vadd.f32 %v8008, %v8009
      %v8011 = vrot.slane %v7997, 4
      %v8012 = vadd.f32 %v7997, %v8011
      %v8013 = vrot.slane %v8012, 2
      %v8014 = vadd.f32 %v8012, %v8013
      %v8015 = vrot.slane %v8014, 1
      %v8016 = vadd.f32 %v8014, %v8015
      %v8017 = vrot.slane %v7998, 4
      %v8018 = vadd.f32 %v7998, %v8017
      %v8019 = vrot.slane %v8018, 2
      %v8020 = vadd.f32 %v8018, %v8019
      %v8021 = vrot.slane %v8020, 1
      %v8022 = vadd.f32 %v8020, %v8021
      %v8023 = vmul.f32 %v8004, %v7464
      %v8024 = vmul.f32 %v8010, %v7473
      %v8025 = vmul.f32 %v8016, %v7482
      %v8026 = vmul.f32 %v8022, %v7491
      %v8027 = vadd.f32 %v7991, %v8023
      %v8028 = vadd.f32 %v7992, %v8024
      %v8029 = vadd.f32 %v7993, %v8025
      %v8030 = vadd.f32 %v7994, %v8026
      %v8031 = vmul.f32 %v1582, %v7105
      %v8032 = vmul.f32 %v1589, %v7114
      %v8033 = vmul.f32 %v1596, %v7123
      %v8034 = vmul.f32 %v1603, %v7132
      %v8035 = vrot.slane %v8031, 4
      %v8036 = vadd.f32 %v8031, %v8035
      %v8037 = vrot.slane %v8036, 2
      %v8038 = vadd.f32 %v8036, %v8037
      %v8039 = vrot.slane %v8038, 1
      %v8040 = vadd.f32 %v8038, %v8039
      %v8041 = vrot.slane %v8032, 4
      %v8042 = vadd.f32 %v8032, %v8041
      %v8043 = vrot.slane %v8042, 2
      %v8044 = vadd.f32 %v8042, %v8043
      %v8045 = vrot.slane %v8044, 1
      %v8046 = vadd.f32 %v8044, %v8045
      %v8047 = vrot.slane %v8033, 4
      %v8048 = vadd.f32 %v8033, %v8047
      %v8049 = vrot.slane %v8048, 2
      %v8050 = vadd.f32 %v8048, %v8049
      %v8051 = vrot.slane %v8050, 1
      %v8052 = vadd.f32 %v8050, %v8051
      %v8053 = vrot.slane %v8034, 4
      %v8054 = vadd.f32 %v8034, %v8053
      %v8055 = vrot.slane %v8054, 2
      %v8056 = vadd.f32 %v8054, %v8055
      %v8057 = vrot.slane %v8056, 1
      %v8058 = vadd.f32 %v8056, %v8057
      %v8059 = vmul.f32 %v8040, %v7465
      %v8060 = vmul.f32 %v8046, %v7474
      %v8061 = vmul.f32 %v8052, %v7483
      %v8062 = vmul.f32 %v8058, %v7492
      %v8063 = vadd.f32 %v8027, %v8059
      %v8064 = vadd.f32 %v8028, %v8060
      %v8065 = vadd.f32 %v8029, %v8061
      %v8066 = vadd.f32 %v8030, %v8062
      %v8067 = vmul.f32 %v1582, %v7106
      %v8068 = vmul.f32 %v1589, %v7115
      %v8069 = vmul.f32 %v1596, %v7124
      %v8070 = vmul.f32 %v1603, %v7133
      %v8071 = vrot.slane %v8067, 4
      %v8072 = vadd.f32 %v8067, %v8071
      %v8073 = vrot.slane %v8072, 2
      %v8074 = vadd.f32 %v8072, %v8073
      %v8075 = vrot.slane %v8074, 1
      %v8076 = vadd.f32 %v8074, %v8075
      %v8077 = vrot.slane %v8068, 4
      %v8078 = vadd.f32 %v8068, %v8077
      %v8079 = vrot.slane %v8078, 2
      %v8080 = vadd.f32 %v8078, %v8079
      %v8081 = vrot.slane %v8080, 1
      %v8082 = vadd.f32 %v8080, %v8081
      %v8083 = vrot.slane %v8069, 4
      %v8084 = vadd.f32 %v8069, %v8083
      %v8085 = vrot.slane %v8084, 2
      %v8086 = vadd.f32 %v8084, %v8085
      %v8087 = vrot.slane %v8086, 1
      %v8088 = vadd.f32 %v8086, %v8087
      %v8089 = vrot.slane %v8070, 4
      %v8090 = vadd.f32 %v8070, %v8089
      %v8091 = vrot.slane %v8090, 2
      %v8092 = vadd.f32 %v8090, %v8091
      %v8093 = vrot.slane %v8092, 1
      %v8094 = vadd.f32 %v8092, %v8093
      %v8095 = vmul.f32 %v8076, %v7466
      %v8096 = vmul.f32 %v8082, %v7475
      %v8097 = vmul.f32 %v8088, %v7484
      %v8098 = vmul.f32 %v8094, %v7493
      %v8099 = vadd.f32 %v8063, %v8095
      %v8100 = vadd.f32 %v8064, %v8096
      %v8101 = vadd.f32 %v8065, %v8097
      %v8102 = vadd.f32 %v8066, %v8098
      %v8103 = vmul.f32 %v1582, %v7107
      %v8104 = vmul.f32 %v1589, %v7116
      %v8105 = vmul.f32 %v1596, %v7125
      %v8106 = vmul.f32 %v1603, %v7134
      %v8107 = vrot.slane %v8103, 4
      %v8108 = vadd.f32 %v8103, %v8107
      %v8109 = vrot.slane %v8108, 2
      %v8110 = vadd.f32 %v8108, %v8109
      %v8111 = vrot.slane %v8110, 1
      %v8112 = vadd.f32 %v8110, %v8111
      %v8113 = vrot.slane %v8104, 4
      %v8114 = vadd.f32 %v8104, %v8113
      %v8115 = vrot.slane %v8114, 2
      %v8116 = vadd.f32 %v8114, %v8115
      %v8117 = vrot.slane %v8116, 1
      %v8118 = vadd.f32 %v8116, %v8117
      %v8119 = vrot.slane %v8105, 4
      %v8120 = vadd.f32 %v8105, %v8119
      %v8121 = vrot.slane %v8120, 2
      %v8122 = vadd.f32 %v8120, %v8121
      %v8123 = vrot.slane %v8122, 1
      %v8124 = vadd.f32 %v8122, %v8123
      %v8125 = vrot.slane %v8106, 4
      %v8126 = vadd.f32 %v8106, %v8125
      %v8127 = vrot.slane %v8126, 2
      %v8128 = vadd.f32 %v8126, %v8127
      %v8129 = vrot.slane %v8128, 1
      %v8130 = vadd.f32 %v8128, %v8129
      %v8131 = vmul.f32 %v8112, %v7467
      %v8132 = vmul.f32 %v8118, %v7476
      %v8133 = vmul.f32 %v8124, %v7485
      %v8134 = vmul.f32 %v8130, %v7494
      %v8135 = vadd.f32 %v8099, %v8131
      %v8136 = vadd.f32 %v8100, %v8132
      %v8137 = vadd.f32 %v8101, %v8133
      %v8138 = vadd.f32 %v8102, %v8134
      %8139 = vst [vmem:[%s143 + $0x8] sm:$0xff] %v8135
      %8140 = vst [vmem:[%s143 + $0x50] sm:$0xff] %v8136
      %8141 = vst [vmem:[%s143 + $0x98] sm:$0xff] %v8137
      %8142 = vst [vmem:[%s143 + $0xe0] sm:$0xff] %v8138
      %v8143 = vmul.f32 %v2922, %v7099
      %v8144 = vmul.f32 %v2929, %v7108
      %v8145 = vmul.f32 %v2936, %v7117
      %v8146 = vmul.f32 %v2943, %v7126
      %v8147 = vrot.slane %v8143, 4
      %v8148 = vadd.f32 %v8143, %v8147
      %v8149 = vrot.slane %v8148, 2
      %v8150 = vadd.f32 %v8148, %v8149
      %v8151 = vrot.slane %v8150, 1
      %v8152 = vadd.f32 %v8150, %v8151
      %v8153 = vrot.slane %v8144, 4
      %v8154 = vadd.f32 %v8144, %v8153
      %v8155 = vrot.slane %v8154, 2
      %v8156 = vadd.f32 %v8154, %v8155
      %v8157 = vrot.slane %v8156, 1
      %v8158 = vadd.f32 %v8156, %v8157
      %v8159 = vrot.slane %v8145, 4
      %v8160 = vadd.f32 %v8145, %v8159
      %v8161 = vrot.slane %v8160, 2
      %v8162 = vadd.f32 %v8160, %v8161
      %v8163 = vrot.slane %v8162, 1
      %v8164 = vadd.f32 %v8162, %v8163
      %v8165 = vrot.slane %v8146, 4
      %v8166 = vadd.f32 %v8146, %v8165
      %v8167 = vrot.slane %v8166, 2
      %v8168 = vadd.f32 %v8166, %v8167
      %v8169 = vrot.slane %v8168, 1
      %v8170 = vadd.f32 %v8168, %v8169
      %v8171 = vmul.f32 %v8152, %v7459
      %v8172 = vmul.f32 %v8158, %v7468
      %v8173 = vmul.f32 %v8164, %v7477
      %v8174 = vmul.f32 %v8170, %v7486
      %v8175 = vmul.f32 %v2922, %v7100
      %v8176 = vmul.f32 %v2929, %v7109
      %v8177 = vmul.f32 %v2936, %v7118
      %v8178 = vmul.f32 %v2943, %v7127
      %v8179 = vrot.slane %v8175, 4
      %v8180 = vadd.f32 %v8175, %v8179
      %v8181 = vrot.slane %v8180, 2
      %v8182 = vadd.f32 %v8180, %v8181
      %v8183 = vrot.slane %v8182, 1
      %v8184 = vadd.f32 %v8182, %v8183
      %v8185 = vrot.slane %v8176, 4
      %v8186 = vadd.f32 %v8176, %v8185
      %v8187 = vrot.slane %v8186, 2
      %v8188 = vadd.f32 %v8186, %v8187
      %v8189 = vrot.slane %v8188, 1
      %v8190 = vadd.f32 %v8188, %v8189
      %v8191 = vrot.slane %v8177, 4
      %v8192 = vadd.f32 %v8177, %v8191
      %v8193 = vrot.slane %v8192, 2
      %v8194 = vadd.f32 %v8192, %v8193
      %v8195 = vrot.slane %v8194, 1
      %v8196 = vadd.f32 %v8194, %v8195
      %v8197 = vrot.slane %v8178, 4
      %v8198 = vadd.f32 %v8178, %v8197
      %v8199 = vrot.slane %v8198, 2
      %v8200 = vadd.f32 %v8198, %v8199
      %v8201 = vrot.slane %v8200, 1
      %v8202 = vadd.f32 %v8200, %v8201
      %v8203 = vmul.f32 %v8184, %v7460
      %v8204 = vmul.f32 %v8190, %v7469
      %v8205 = vmul.f32 %v8196, %v7478
      %v8206 = vmul.f32 %v8202, %v7487
      %v8207 = vadd.f32 %v8171, %v8203
      %v8208 = vadd.f32 %v8172, %v8204
      %v8209 = vadd.f32 %v8173, %v8205
      %v8210 = vadd.f32 %v8174, %v8206
      %v8211 = vmul.f32 %v2922, %v7101
      %v8212 = vmul.f32 %v2929, %v7110
      %v8213 = vmul.f32 %v2936, %v7119
      %v8214 = vmul.f32 %v2943, %v7128
      %v8215 = vrot.slane %v8211, 4
      %v8216 = vadd.f32 %v8211, %v8215
      %v8217 = vrot.slane %v8216, 2
      %v8218 = vadd.f32 %v8216, %v8217
      %v8219 = vrot.slane %v8218, 1
      %v8220 = vadd.f32 %v8218, %v8219
      %v8221 = vrot.slane %v8212, 4
      %v8222 = vadd.f32 %v8212, %v8221
      %v8223 = vrot.slane %v8222, 2
      %v8224 = vadd.f32 %v8222, %v8223
      %v8225 = vrot.slane %v8224, 1
      %v8226 = vadd.f32 %v8224, %v8225
      %v8227 = vrot.slane %v8213, 4
      %v8228 = vadd.f32 %v8213, %v8227
      %v8229 = vrot.slane %v8228, 2
      %v8230 = vadd.f32 %v8228, %v8229
      %v8231 = vrot.slane %v8230, 1
      %v8232 = vadd.f32 %v8230, %v8231
      %v8233 = vrot.slane %v8214, 4
      %v8234 = vadd.f32 %v8214, %v8233
      %v8235 = vrot.slane %v8234, 2
      %v8236 = vadd.f32 %v8234, %v8235
      %v8237 = vrot.slane %v8236, 1
      %v8238 = vadd.f32 %v8236, %v8237
      %v8239 = vmul.f32 %v8220, %v7461
      %v8240 = vmul.f32 %v8226, %v7470
      %v8241 = vmul.f32 %v8232, %v7479
      %v8242 = vmul.f32 %v8238, %v7488
      %v8243 = vadd.f32 %v8207, %v8239
      %v8244 = vadd.f32 %v8208, %v8240
      %v8245 = vadd.f32 %v8209, %v8241
      %v8246 = vadd.f32 %v8210, %v8242
      %v8247 = vmul.f32 %v2922, %v7102
      %v8248 = vmul.f32 %v2929, %v7111
      %v8249 = vmul.f32 %v2936, %v7120
      %v8250 = vmul.f32 %v2943, %v7129
      %v8251 = vrot.slane %v8247, 4
      %v8252 = vadd.f32 %v8247, %v8251
      %v8253 = vrot.slane %v8252, 2
      %v8254 = vadd.f32 %v8252, %v8253
      %v8255 = vrot.slane %v8254, 1
      %v8256 = vadd.f32 %v8254, %v8255
      %v8257 = vrot.slane %v8248, 4
      %v8258 = vadd.f32 %v8248, %v8257
      %v8259 = vrot.slane %v8258, 2
      %v8260 = vadd.f32 %v8258, %v8259
      %v8261 = vrot.slane %v8260, 1
      %v8262 = vadd.f32 %v8260, %v8261
      %v8263 = vrot.slane %v8249, 4
      %v8264 = vadd.f32 %v8249, %v8263
      %v8265 = vrot.slane %v8264, 2
      %v8266 = vadd.f32 %v8264, %v8265
      %v8267 = vrot.slane %v8266, 1
      %v8268 = vadd.f32 %v8266, %v8267
      %v8269 = vrot.slane %v8250, 4
      %v8270 = vadd.f32 %v8250, %v8269
      %v8271 = vrot.slane %v8270, 2
      %v8272 = vadd.f32 %v8270, %v8271
      %v8273 = vrot.slane %v8272, 1
      %v8274 = vadd.f32 %v8272, %v8273
      %v8275 = vmul.f32 %v8256, %v7462
      %v8276 = vmul.f32 %v8262, %v7471
      %v8277 = vmul.f32 %v8268, %v7480
      %v8278 = vmul.f32 %v8274, %v7489
      %v8279 = vadd.f32 %v8243, %v8275
      %v8280 = vadd.f32 %v8244, %v8276
      %v8281 = vadd.f32 %v8245, %v8277
      %v8282 = vadd.f32 %v8246, %v8278
      %v8283 = vmul.f32 %v2922, %v7103
      %v8284 = vmul.f32 %v2929, %v7112
      %v8285 = vmul.f32 %v2936, %v7121
      %v8286 = vmul.f32 %v2943, %v7130
      %v8287 = vrot.slane %v8283, 4
      %v8288 = vadd.f32 %v8283, %v8287
      %v8289 = vrot.slane %v8288, 2
      %v8290 = vadd.f32 %v8288, %v8289
      %v8291 = vrot.slane %v8290, 1
      %v8292 = vadd.f32 %v8290, %v8291
      %v8293 = vrot.slane %v8284, 4
      %v8294 = vadd.f32 %v8284, %v8293
      %v8295 = vrot.slane %v8294, 2
      %v8296 = vadd.f32 %v8294, %v8295
      %v8297 = vrot.slane %v8296, 1
      %v8298 = vadd.f32 %v8296, %v8297
      %v8299 = vrot.slane %v8285, 4
      %v8300 = vadd.f32 %v8285, %v8299
      %v8301 = vrot.slane %v8300, 2
      %v8302 = vadd.f32 %v8300, %v8301
      %v8303 = vrot.slane %v8302, 1
      %v8304 = vadd.f32 %v8302, %v8303
      %v8305 = vrot.slane %v8286, 4
      %v8306 = vadd.f32 %v8286, %v8305
      %v8307 = vrot.slane %v8306, 2
      %v8308 = vadd.f32 %v8306, %v8307
      %v8309 = vrot.slane %v8308, 1
      %v8310 = vadd.f32 %v8308, %v8309
      %v8311 = vmul.f32 %v8292, %v7463
      %v8312 = vmul.f32 %v8298, %v7472
      %v8313 = vmul.f32 %v8304, %v7481
      %v8314 = vmul.f32 %v8310, %v7490
      %v8315 = vadd.f32 %v8279, %v8311
      %v8316 = vadd.f32 %v8280, %v8312
      %v8317 = vadd.f32 %v8281, %v8313
      %v8318 = vadd.f32 %v8282, %v8314
      %v8319 = vmul.f32 %v2922, %v7104
      %v8320 = vmul.f32 %v2929, %v7113
      %v8321 = vmul.f32 %v2936, %v7122
      %v8322 = vmul.f32 %v2943, %v7131
      %v8323 = vrot.slane %v8319, 4
      %v8324 = vadd.f32 %v8319, %v8323
      %v8325 = vrot.slane %v8324, 2
      %v8326 = vadd.f32 %v8324, %v8325
      %v8327 = vrot.slane %v8326, 1
      %v8328 = vadd.f32 %v8326, %v8327
      %v8329 = vrot.slane %v8320, 4
      %v8330 = vadd.f32 %v8320, %v8329
      %v8331 = vrot.slane %v8330, 2
      %v8332 = vadd.f32 %v8330, %v8331
      %v8333 = vrot.slane %v8332, 1
      %v8334 = vadd.f32 %v8332, %v8333
      %v8335 = vrot.slane %v8321, 4
      %v8336 = vadd.f32 %v8321, %v8335
      %v8337 = vrot.slane %v8336, 2
      %v8338 = vadd.f32 %v8336, %v8337
      %v8339 = vrot.slane %v8338, 1
      %v8340 = vadd.f32 %v8338, %v8339
      %v8341 = vrot.slane %v8322, 4
      %v8342 = vadd.f32 %v8322, %v8341
      %v8343 = vrot.slane %v8342, 2
      %v8344 = vadd.f32 %v8342, %v8343
      %v8345 = vrot.slane %v8344, 1
      %v8346 = vadd.f32 %v8344, %v8345
      %v8347 = vmul.f32 %v8328, %v7464
      %v8348 = vmul.f32 %v8334, %v7473
      %v8349 = vmul.f32 %v8340, %v7482
      %v8350 = vmul.f32 %v8346, %v7491
      %v8351 = vadd.f32 %v8315, %v8347
      %v8352 = vadd.f32 %v8316, %v8348
      %v8353 = vadd.f32 %v8317, %v8349
      %v8354 = vadd.f32 %v8318, %v8350
      %v8355 = vmul.f32 %v2922, %v7105
      %v8356 = vmul.f32 %v2929, %v7114
      %v8357 = vmul.f32 %v2936, %v7123
      %v8358 = vmul.f32 %v2943, %v7132
      %v8359 = vrot.slane %v8355, 4
      %v8360 = vadd.f32 %v8355, %v8359
      %v8361 = vrot.slane %v8360, 2
      %v8362 = vadd.f32 %v8360, %v8361
      %v8363 = vrot.slane %v8362, 1
      %v8364 = vadd.f32 %v8362, %v8363
      %v8365 = vrot.slane %v8356, 4
      %v8366 = vadd.f32 %v8356, %v8365
      %v8367 = vrot.slane %v8366, 2
      %v8368 = vadd.f32 %v8366, %v8367
      %v8369 = vrot.slane %v8368, 1
      %v8370 = vadd.f32 %v8368, %v8369
      %v8371 = vrot.slane %v8357, 4
      %v8372 = vadd.f32 %v8357, %v8371
      %v8373 = vrot.slane %v8372, 2
      %v8374 = vadd.f32 %v8372, %v8373
      %v8375 = vrot.slane %v8374, 1
      %v8376 = vadd.f32 %v8374, %v8375
      %v8377 = vrot.slane %v8358, 4
      %v8378 = vadd.f32 %v8358, %v8377
      %v8379 = vrot.slane %v8378, 2
      %v8380 = vadd.f32 %v8378, %v8379
      %v8381 = vrot.slane %v8380, 1
      %v8382 = vadd.f32 %v8380, %v8381
      %v8383 = vmul.f32 %v8364, %v7465
      %v8384 = vmul.f32 %v8370, %v7474
      %v8385 = vmul.f32 %v8376, %v7483
      %v8386 = vmul.f32 %v8382, %v7492
      %v8387 = vadd.f32 %v8351, %v8383
      %v8388 = vadd.f32 %v8352, %v8384
      %v8389 = vadd.f32 %v8353, %v8385
      %v8390 = vadd.f32 %v8354, %v8386
      %v8391 = vmul.f32 %v2922, %v7106
      %v8392 = vmul.f32 %v2929, %v7115
      %v8393 = vmul.f32 %v2936, %v7124
      %v8394 = vmul.f32 %v2943, %v7133
      %v8395 = vrot.slane %v8391, 4
      %v8396 = vadd.f32 %v8391, %v8395
      %v8397 = vrot.slane %v8396, 2
      %v8398 = vadd.f32 %v8396, %v8397
      %v8399 = vrot.slane %v8398, 1
      %v8400 = vadd.f32 %v8398, %v8399
      %v8401 = vrot.slane %v8392, 4
      %v8402 = vadd.f32 %v8392, %v8401
      %v8403 = vrot.slane %v8402, 2
      %v8404 = vadd.f32 %v8402, %v8403
      %v8405 = vrot.slane %v8404, 1
      %v8406 = vadd.f32 %v8404, %v8405
      %v8407 = vrot.slane %v8393, 4
      %v8408 = vadd.f32 %v8393, %v8407
      %v8409 = vrot.slane %v8408, 2
      %v8410 = vadd.f32 %v8408, %v8409
      %v8411 = vrot.slane %v8410, 1
      %v8412 = vadd.f32 %v8410, %v8411
      %v8413 = vrot.slane %v8394, 4
      %v8414 = vadd.f32 %v8394, %v8413
      %v8415 = vrot.slane %v8414, 2
      %v8416 = vadd.f32 %v8414, %v8415
      %v8417 = vrot.slane %v8416, 1
      %v8418 = vadd.f32 %v8416, %v8417
      %v8419 = vmul.f32 %v8400, %v7466
      %v8420 = vmul.f32 %v8406, %v7475
      %v8421 = vmul.f32 %v8412, %v7484
      %v8422 = vmul.f32 %v8418, %v7493
      %v8423 = vadd.f32 %v8387, %v8419
      %v8424 = vadd.f32 %v8388, %v8420
      %v8425 = vadd.f32 %v8389, %v8421
      %v8426 = vadd.f32 %v8390, %v8422
      %v8427 = vmul.f32 %v2922, %v7107
      %v8428 = vmul.f32 %v2929, %v7116
      %v8429 = vmul.f32 %v2936, %v7125
      %v8430 = vmul.f32 %v2943, %v7134
      %v8431 = vrot.slane %v8427, 4
      %v8432 = vadd.f32 %v8427, %v8431
      %v8433 = vrot.slane %v8432, 2
      %v8434 = vadd.f32 %v8432, %v8433
      %v8435 = vrot.slane %v8434, 1
      %v8436 = vadd.f32 %v8434, %v8435
      %v8437 = vrot.slane %v8428, 4
      %v8438 = vadd.f32 %v8428, %v8437
      %v8439 = vrot.slane %v8438, 2
      %v8440 = vadd.f32 %v8438, %v8439
      %v8441 = vrot.slane %v8440, 1
      %v8442 = vadd.f32 %v8440, %v8441
      %v8443 = vrot.slane %v8429, 4
      %v8444 = vadd.f32 %v8429, %v8443
      %v8445 = vrot.slane %v8444, 2
      %v8446 = vadd.f32 %v8444, %v8445
      %v8447 = vrot.slane %v8446, 1
      %v8448 = vadd.f32 %v8446, %v8447
      %v8449 = vrot.slane %v8430, 4
      %v8450 = vadd.f32 %v8430, %v8449
      %v8451 = vrot.slane %v8450, 2
      %v8452 = vadd.f32 %v8450, %v8451
      %v8453 = vrot.slane %v8452, 1
      %v8454 = vadd.f32 %v8452, %v8453
      %v8455 = vmul.f32 %v8436, %v7467
      %v8456 = vmul.f32 %v8442, %v7476
      %v8457 = vmul.f32 %v8448, %v7485
      %v8458 = vmul.f32 %v8454, %v7494
      %v8459 = vadd.f32 %v8423, %v8455
      %v8460 = vadd.f32 %v8424, %v8456
      %v8461 = vadd.f32 %v8425, %v8457
      %v8462 = vadd.f32 %v8426, %v8458
      %8463 = vst [vmem:[%s143 + $0x10] sm:$0xff] %v8459
      %8464 = vst [vmem:[%s143 + $0x58] sm:$0xff] %v8460
      %8465 = vst [vmem:[%s143 + $0xa0] sm:$0xff] %v8461
      %8466 = vst [vmem:[%s143 + $0xe8] sm:$0xff] %v8462
      %v8467 = vmul.f32 %v2924, %v7099
      %v8468 = vmul.f32 %v2931, %v7108
      %v8469 = vmul.f32 %v2938, %v7117
      %v8470 = vmul.f32 %v2945, %v7126
      %v8471 = vrot.slane %v8467, 4
      %v8472 = vadd.f32 %v8467, %v8471
      %v8473 = vrot.slane %v8472, 2
      %v8474 = vadd.f32 %v8472, %v8473
      %v8475 = vrot.slane %v8474, 1
      %v8476 = vadd.f32 %v8474, %v8475
      %v8477 = vrot.slane %v8468, 4
      %v8478 = vadd.f32 %v8468, %v8477
      %v8479 = vrot.slane %v8478, 2
      %v8480 = vadd.f32 %v8478, %v8479
      %v8481 = vrot.slane %v8480, 1
      %v8482 = vadd.f32 %v8480, %v8481
      %v8483 = vrot.slane %v8469, 4
      %v8484 = vadd.f32 %v8469, %v8483
      %v8485 = vrot.slane %v8484, 2
      %v8486 = vadd.f32 %v8484, %v8485
      %v8487 = vrot.slane %v8486, 1
      %v8488 = vadd.f32 %v8486, %v8487
      %v8489 = vrot.slane %v8470, 4
      %v8490 = vadd.f32 %v8470, %v8489
      %v8491 = vrot.slane %v8490, 2
      %v8492 = vadd.f32 %v8490, %v8491
      %v8493 = vrot.slane %v8492, 1
      %v8494 = vadd.f32 %v8492, %v8493
      %v8495 = vmul.f32 %v8476, %v7459
      %v8496 = vmul.f32 %v8482, %v7468
      %v8497 = vmul.f32 %v8488, %v7477
      %v8498 = vmul.f32 %v8494, %v7486
      %v8499 = vmul.f32 %v2924, %v7100
      %v8500 = vmul.f32 %v2931, %v7109
      %v8501 = vmul.f32 %v2938, %v7118
      %v8502 = vmul.f32 %v2945, %v7127
      %v8503 = vrot.slane %v8499, 4
      %v8504 = vadd.f32 %v8499, %v8503
      %v8505 = vrot.slane %v8504, 2
      %v8506 = vadd.f32 %v8504, %v8505
      %v8507 = vrot.slane %v8506, 1
      %v8508 = vadd.f32 %v8506, %v8507
      %v8509 = vrot.slane %v8500, 4
      %v8510 = vadd.f32 %v8500, %v8509
      %v8511 = vrot.slane %v8510, 2
      %v8512 = vadd.f32 %v8510, %v8511
      %v8513 = vrot.slane %v8512, 1
      %v8514 = vadd.f32 %v8512, %v8513
      %v8515 = vrot.slane %v8501, 4
      %v8516 = vadd.f32 %v8501, %v8515
      %v8517 = vrot.slane %v8516, 2
      %v8518 = vadd.f32 %v8516, %v8517
      %v8519 = vrot.slane %v8518, 1
      %v8520 = vadd.f32 %v8518, %v8519
      %v8521 = vrot.slane %v8502, 4
      %v8522 = vadd.f32 %v8502, %v8521
      %v8523 = vrot.slane %v8522, 2
      %v8524 = vadd.f32 %v8522, %v8523
      %v8525 = vrot.slane %v8524, 1
      %v8526 = vadd.f32 %v8524, %v8525
      %v8527 = vmul.f32 %v8508, %v7460
      %v8528 = vmul.f32 %v8514, %v7469
      %v8529 = vmul.f32 %v8520, %v7478
      %v8530 = vmul.f32 %v8526, %v7487
      %v8531 = vadd.f32 %v8495, %v8527
      %v8532 = vadd.f32 %v8496, %v8528
      %v8533 = vadd.f32 %v8497, %v8529
      %v8534 = vadd.f32 %v8498, %v8530
      %v8535 = vmul.f32 %v2924, %v7101
      %v8536 = vmul.f32 %v2931, %v7110
      %v8537 = vmul.f32 %v2938, %v7119
      %v8538 = vmul.f32 %v2945, %v7128
      %v8539 = vrot.slane %v8535, 4
      %v8540 = vadd.f32 %v8535, %v8539
      %v8541 = vrot.slane %v8540, 2
      %v8542 = vadd.f32 %v8540, %v8541
      %v8543 = vrot.slane %v8542, 1
      %v8544 = vadd.f32 %v8542, %v8543
      %v8545 = vrot.slane %v8536, 4
      %v8546 = vadd.f32 %v8536, %v8545
      %v8547 = vrot.slane %v8546, 2
      %v8548 = vadd.f32 %v8546, %v8547
      %v8549 = vrot.slane %v8548, 1
      %v8550 = vadd.f32 %v8548, %v8549
      %v8551 = vrot.slane %v8537, 4
      %v8552 = vadd.f32 %v8537, %v8551
      %v8553 = vrot.slane %v8552, 2
      %v8554 = vadd.f32 %v8552, %v8553
      %v8555 = vrot.slane %v8554, 1
      %v8556 = vadd.f32 %v8554, %v8555
      %v8557 = vrot.slane %v8538, 4
      %v8558 = vadd.f32 %v8538, %v8557
      %v8559 = vrot.slane %v8558, 2
      %v8560 = vadd.f32 %v8558, %v8559
      %v8561 = vrot.slane %v8560, 1
      %v8562 = vadd.f32 %v8560, %v8561
      %v8563 = vmul.f32 %v8544, %v7461
      %v8564 = vmul.f32 %v8550, %v7470
      %v8565 = vmul.f32 %v8556, %v7479
      %v8566 = vmul.f32 %v8562, %v7488
      %v8567 = vadd.f32 %v8531, %v8563
      %v8568 = vadd.f32 %v8532, %v8564
      %v8569 = vadd.f32 %v8533, %v8565
      %v8570 = vadd.f32 %v8534, %v8566
      %v8571 = vmul.f32 %v2924, %v7102
      %v8572 = vmul.f32 %v2931, %v7111
      %v8573 = vmul.f32 %v2938, %v7120
      %v8574 = vmul.f32 %v2945, %v7129
      %v8575 = vrot.slane %v8571, 4
      %v8576 = vadd.f32 %v8571, %v8575
      %v8577 = vrot.slane %v8576, 2
      %v8578 = vadd.f32 %v8576, %v8577
      %v8579 = vrot.slane %v8578, 1
      %v8580 = vadd.f32 %v8578, %v8579
      %v8581 = vrot.slane %v8572, 4
      %v8582 = vadd.f32 %v8572, %v8581
      %v8583 = vrot.slane %v8582, 2
      %v8584 = vadd.f32 %v8582, %v8583
      %v8585 = vrot.slane %v8584, 1
      %v8586 = vadd.f32 %v8584, %v8585
      %v8587 = vrot.slane %v8573, 4
      %v8588 = vadd.f32 %v8573, %v8587
      %v8589 = vrot.slane %v8588, 2
      %v8590 = vadd.f32 %v8588, %v8589
      %v8591 = vrot.slane %v8590, 1
      %v8592 = vadd.f32 %v8590, %v8591
      %v8593 = vrot.slane %v8574, 4
      %v8594 = vadd.f32 %v8574, %v8593
      %v8595 = vrot.slane %v8594, 2
      %v8596 = vadd.f32 %v8594, %v8595
      %v8597 = vrot.slane %v8596, 1
      %v8598 = vadd.f32 %v8596, %v8597
      %v8599 = vmul.f32 %v8580, %v7462
      %v8600 = vmul.f32 %v8586, %v7471
      %v8601 = vmul.f32 %v8592, %v7480
      %v8602 = vmul.f32 %v8598, %v7489
      %v8603 = vadd.f32 %v8567, %v8599
      %v8604 = vadd.f32 %v8568, %v8600
      %v8605 = vadd.f32 %v8569, %v8601
      %v8606 = vadd.f32 %v8570, %v8602
      %v8607 = vmul.f32 %v2924, %v7103
      %v8608 = vmul.f32 %v2931, %v7112
      %v8609 = vmul.f32 %v2938, %v7121
      %v8610 = vmul.f32 %v2945, %v7130
      %v8611 = vrot.slane %v8607, 4
      %v8612 = vadd.f32 %v8607, %v8611
      %v8613 = vrot.slane %v8612, 2
      %v8614 = vadd.f32 %v8612, %v8613
      %v8615 = vrot.slane %v8614, 1
      %v8616 = vadd.f32 %v8614, %v8615
      %v8617 = vrot.slane %v8608, 4
      %v8618 = vadd.f32 %v8608, %v8617
      %v8619 = vrot.slane %v8618, 2
      %v8620 = vadd.f32 %v8618, %v8619
      %v8621 = vrot.slane %v8620, 1
      %v8622 = vadd.f32 %v8620, %v8621
      %v8623 = vrot.slane %v8609, 4
      %v8624 = vadd.f32 %v8609, %v8623
      %v8625 = vrot.slane %v8624, 2
      %v8626 = vadd.f32 %v8624, %v8625
      %v8627 = vrot.slane %v8626, 1
      %v8628 = vadd.f32 %v8626, %v8627
      %v8629 = vrot.slane %v8610, 4
      %v8630 = vadd.f32 %v8610, %v8629
      %v8631 = vrot.slane %v8630, 2
      %v8632 = vadd.f32 %v8630, %v8631
      %v8633 = vrot.slane %v8632, 1
      %v8634 = vadd.f32 %v8632, %v8633
      %v8635 = vmul.f32 %v8616, %v7463
      %v8636 = vmul.f32 %v8622, %v7472
      %v8637 = vmul.f32 %v8628, %v7481
      %v8638 = vmul.f32 %v8634, %v7490
      %v8639 = vadd.f32 %v8603, %v8635
      %v8640 = vadd.f32 %v8604, %v8636
      %v8641 = vadd.f32 %v8605, %v8637
      %v8642 = vadd.f32 %v8606, %v8638
      %v8643 = vmul.f32 %v2924, %v7104
      %v8644 = vmul.f32 %v2931, %v7113
      %v8645 = vmul.f32 %v2938, %v7122
      %v8646 = vmul.f32 %v2945, %v7131
      %v8647 = vrot.slane %v8643, 4
      %v8648 = vadd.f32 %v8643, %v8647
      %v8649 = vrot.slane %v8648, 2
      %v8650 = vadd.f32 %v8648, %v8649
      %v8651 = vrot.slane %v8650, 1
      %v8652 = vadd.f32 %v8650, %v8651
      %v8653 = vrot.slane %v8644, 4
      %v8654 = vadd.f32 %v8644, %v8653
      %v8655 = vrot.slane %v8654, 2
      %v8656 = vadd.f32 %v8654, %v8655
      %v8657 = vrot.slane %v8656, 1
      %v8658 = vadd.f32 %v8656, %v8657
      %v8659 = vrot.slane %v8645, 4
      %v8660 = vadd.f32 %v8645, %v8659
      %v8661 = vrot.slane %v8660, 2
      %v8662 = vadd.f32 %v8660, %v8661
      %v8663 = vrot.slane %v8662, 1
      %v8664 = vadd.f32 %v8662, %v8663
      %v8665 = vrot.slane %v8646, 4
      %v8666 = vadd.f32 %v8646, %v8665
      %v8667 = vrot.slane %v8666, 2
      %v8668 = vadd.f32 %v8666, %v8667
      %v8669 = vrot.slane %v8668, 1
      %v8670 = vadd.f32 %v8668, %v8669
      %v8671 = vmul.f32 %v8652, %v7464
      %v8672 = vmul.f32 %v8658, %v7473
      %v8673 = vmul.f32 %v8664, %v7482
      %v8674 = vmul.f32 %v8670, %v7491
      %v8675 = vadd.f32 %v8639, %v8671
      %v8676 = vadd.f32 %v8640, %v8672
      %v8677 = vadd.f32 %v8641, %v8673
      %v8678 = vadd.f32 %v8642, %v8674
      %v8679 = vmul.f32 %v2924, %v7105
      %v8680 = vmul.f32 %v2931, %v7114
      %v8681 = vmul.f32 %v2938, %v7123
      %v8682 = vmul.f32 %v2945, %v7132
      %v8683 = vrot.slane %v8679, 4
      %v8684 = vadd.f32 %v8679, %v8683
      %v8685 = vrot.slane %v8684, 2
      %v8686 = vadd.f32 %v8684, %v8685
      %v8687 = vrot.slane %v8686, 1
      %v8688 = vadd.f32 %v8686, %v8687
      %v8689 = vrot.slane %v8680, 4
      %v8690 = vadd.f32 %v8680, %v8689
      %v8691 = vrot.slane %v8690, 2
      %v8692 = vadd.f32 %v8690, %v8691
      %v8693 = vrot.slane %v8692, 1
      %v8694 = vadd.f32 %v8692, %v8693
      %v8695 = vrot.slane %v8681, 4
      %v8696 = vadd.f32 %v8681, %v8695
      %v8697 = vrot.slane %v8696, 2
      %v8698 = vadd.f32 %v8696, %v8697
      %v8699 = vrot.slane %v8698, 1
      %v8700 = vadd.f32 %v8698, %v8699
      %v8701 = vrot.slane %v8682, 4
      %v8702 = vadd.f32 %v8682, %v8701
      %v8703 = vrot.slane %v8702, 2
      %v8704 = vadd.f32 %v8702, %v8703
      %v8705 = vrot.slane %v8704, 1
      %v8706 = vadd.f32 %v8704, %v8705
      %v8707 = vmul.f32 %v8688, %v7465
      %v8708 = vmul.f32 %v8694, %v7474
      %v8709 = vmul.f32 %v8700, %v7483
      %v8710 = vmul.f32 %v8706, %v7492
      %v8711 = vadd.f32 %v8675, %v8707
      %v8712 = vadd.f32 %v8676, %v8708
      %v8713 = vadd.f32 %v8677, %v8709
      %v8714 = vadd.f32 %v8678, %v8710
      %v8715 = vmul.f32 %v2924, %v7106
      %v8716 = vmul.f32 %v2931, %v7115
      %v8717 = vmul.f32 %v2938, %v7124
      %v8718 = vmul.f32 %v2945, %v7133
      %v8719 = vrot.slane %v8715, 4
      %v8720 = vadd.f32 %v8715, %v8719
      %v8721 = vrot.slane %v8720, 2
      %v8722 = vadd.f32 %v8720, %v8721
      %v8723 = vrot.slane %v8722, 1
      %v8724 = vadd.f32 %v8722, %v8723
      %v8725 = vrot.slane %v8716, 4
      %v8726 = vadd.f32 %v8716, %v8725
      %v8727 = vrot.slane %v8726, 2
      %v8728 = vadd.f32 %v8726, %v8727
      %v8729 = vrot.slane %v8728, 1
      %v8730 = vadd.f32 %v8728, %v8729
      %v8731 = vrot.slane %v8717, 4
      %v8732 = vadd.f32 %v8717, %v8731
      %v8733 = vrot.slane %v8732, 2
      %v8734 = vadd.f32 %v8732, %v8733
      %v8735 = vrot.slane %v8734, 1
      %v8736 = vadd.f32 %v8734, %v8735
      %v8737 = vrot.slane %v8718, 4
      %v8738 = vadd.f32 %v8718, %v8737
      %v8739 = vrot.slane %v8738, 2
      %v8740 = vadd.f32 %v8738, %v8739
      %v8741 = vrot.slane %v8740, 1
      %v8742 = vadd.f32 %v8740, %v8741
      %v8743 = vmul.f32 %v8724, %v7466
      %v8744 = vmul.f32 %v8730, %v7475
      %v8745 = vmul.f32 %v8736, %v7484
      %v8746 = vmul.f32 %v8742, %v7493
      %v8747 = vadd.f32 %v8711, %v8743
      %v8748 = vadd.f32 %v8712, %v8744
      %v8749 = vadd.f32 %v8713, %v8745
      %v8750 = vadd.f32 %v8714, %v8746
      %v8751 = vmul.f32 %v2924, %v7107
      %v8752 = vmul.f32 %v2931, %v7116
      %v8753 = vmul.f32 %v2938, %v7125
      %v8754 = vmul.f32 %v2945, %v7134
      %v8755 = vrot.slane %v8751, 4
      %v8756 = vadd.f32 %v8751, %v8755
      %v8757 = vrot.slane %v8756, 2
      %v8758 = vadd.f32 %v8756, %v8757
      %v8759 = vrot.slane %v8758, 1
      %v8760 = vadd.f32 %v8758, %v8759
      %v8761 = vrot.slane %v8752, 4
      %v8762 = vadd.f32 %v8752, %v8761
      %v8763 = vrot.slane %v8762, 2
      %v8764 = vadd.f32 %v8762, %v8763
      %v8765 = vrot.slane %v8764, 1
      %v8766 = vadd.f32 %v8764, %v8765
      %v8767 = vrot.slane %v8753, 4
      %v8768 = vadd.f32 %v8753, %v8767
      %v8769 = vrot.slane %v8768, 2
      %v8770 = vadd.f32 %v8768, %v8769
      %v8771 = vrot.slane %v8770, 1
      %v8772 = vadd.f32 %v8770, %v8771
      %v8773 = vrot.slane %v8754, 4
      %v8774 = vadd.f32 %v8754, %v8773
      %v8775 = vrot.slane %v8774, 2
      %v8776 = vadd.f32 %v8774, %v8775
      %v8777 = vrot.slane %v8776, 1
      %v8778 = vadd.f32 %v8776, %v8777
      %v8779 = vmul.f32 %v8760, %v7467
      %v8780 = vmul.f32 %v8766, %v7476
      %v8781 = vmul.f32 %v8772, %v7485
      %v8782 = vmul.f32 %v8778, %v7494
      %v8783 = vadd.f32 %v8747, %v8779
      %v8784 = vadd.f32 %v8748, %v8780
      %v8785 = vadd.f32 %v8749, %v8781
      %v8786 = vadd.f32 %v8750, %v8782
      %8787 = vst [vmem:[%s143 + $0x18] sm:$0xff] %v8783
      %8788 = vst [vmem:[%s143 + $0x60] sm:$0xff] %v8784
      %8789 = vst [vmem:[%s143 + $0xa8] sm:$0xff] %v8785
      %8790 = vst [vmem:[%s143 + $0xf0] sm:$0xff] %v8786
      %v8791 = vmul.f32 %v4264, %v7099
      %v8792 = vmul.f32 %v4271, %v7108
      %v8793 = vmul.f32 %v4278, %v7117
      %v8794 = vmul.f32 %v4285, %v7126
      %v8795 = vrot.slane %v8791, 4
      %v8796 = vadd.f32 %v8791, %v8795
      %v8797 = vrot.slane %v8796, 2
      %v8798 = vadd.f32 %v8796, %v8797
      %v8799 = vrot.slane %v8798, 1
      %v8800 = vadd.f32 %v8798, %v8799
      %v8801 = vrot.slane %v8792, 4
      %v8802 = vadd.f32 %v8792, %v8801
      %v8803 = vrot.slane %v8802, 2
      %v8804 = vadd.f32 %v8802, %v8803
      %v8805 = vrot.slane %v8804, 1
      %v8806 = vadd.f32 %v8804, %v8805
      %v8807 = vrot.slane %v8793, 4
      %v8808 = vadd.f32 %v8793, %v8807
      %v8809 = vrot.slane %v8808, 2
      %v8810 = vadd.f32 %v8808, %v8809
      %v8811 = vrot.slane %v8810, 1
      %v8812 = vadd.f32 %v8810, %v8811
      %v8813 = vrot.slane %v8794, 4
      %v8814 = vadd.f32 %v8794, %v8813
      %v8815 = vrot.slane %v8814, 2
      %v8816 = vadd.f32 %v8814, %v8815
      %v8817 = vrot.slane %v8816, 1
      %v8818 = vadd.f32 %v8816, %v8817
      %v8819 = vmul.f32 %v8800, %v7459
      %v8820 = vmul.f32 %v8806, %v7468
      %v8821 = vmul.f32 %v8812, %v7477
      %v8822 = vmul.f32 %v8818, %v7486
      %v8823 = vmul.f32 %v4264, %v7100
      %v8824 = vmul.f32 %v4271, %v7109
      %v8825 = vmul.f32 %v4278, %v7118
      %v8826 = vmul.f32 %v4285, %v7127
      %v8827 = vrot.slane %v8823, 4
      %v8828 = vadd.f32 %v8823, %v8827
      %v8829 = vrot.slane %v8828, 2
      %v8830 = vadd.f32 %v8828, %v8829
      %v8831 = vrot.slane %v8830, 1
      %v8832 = vadd.f32 %v8830, %v8831
      %v8833 = vrot.slane %v8824, 4
      %v8834 = vadd.f32 %v8824, %v8833
      %v8835 = vrot.slane %v8834, 2
      %v8836 = vadd.f32 %v8834, %v8835
      %v8837 = vrot.slane %v8836, 1
      %v8838 = vadd.f32 %v8836, %v8837
      %v8839 = vrot.slane %v8825, 4
      %v8840 = vadd.f32 %v8825, %v8839
      %v8841 = vrot.slane %v8840, 2
      %v8842 = vadd.f32 %v8840, %v8841
      %v8843 = vrot.slane %v8842, 1
      %v8844 = vadd.f32 %v8842, %v8843
      %v8845 = vrot.slane %v8826, 4
      %v8846 = vadd.f32 %v8826, %v8845
      %v8847 = vrot.slane %v8846, 2
      %v8848 = vadd.f32 %v8846, %v8847
      %v8849 = vrot.slane %v8848, 1
      %v8850 = vadd.f32 %v8848, %v8849
      %v8851 = vmul.f32 %v8832, %v7460
      %v8852 = vmul.f32 %v8838, %v7469
      %v8853 = vmul.f32 %v8844, %v7478
      %v8854 = vmul.f32 %v8850, %v7487
      %v8855 = vadd.f32 %v8819, %v8851
      %v8856 = vadd.f32 %v8820, %v8852
      %v8857 = vadd.f32 %v8821, %v8853
      %v8858 = vadd.f32 %v8822, %v8854
      %v8859 = vmul.f32 %v4264, %v7101
      %v8860 = vmul.f32 %v4271, %v7110
      %v8861 = vmul.f32 %v4278, %v7119
      %v8862 = vmul.f32 %v4285, %v7128
      %v8863 = vrot.slane %v8859, 4
      %v8864 = vadd.f32 %v8859, %v8863
      %v8865 = vrot.slane %v8864, 2
      %v8866 = vadd.f32 %v8864, %v8865
      %v8867 = vrot.slane %v8866, 1
      %v8868 = vadd.f32 %v8866, %v8867
      %v8869 = vrot.slane %v8860, 4
      %v8870 = vadd.f32 %v8860, %v8869
      %v8871 = vrot.slane %v8870, 2
      %v8872 = vadd.f32 %v8870, %v8871
      %v8873 = vrot.slane %v8872, 1
      %v8874 = vadd.f32 %v8872, %v8873
      %v8875 = vrot.slane %v8861, 4
      %v8876 = vadd.f32 %v8861, %v8875
      %v8877 = vrot.slane %v8876, 2
      %v8878 = vadd.f32 %v8876, %v8877
      %v8879 = vrot.slane %v8878, 1
      %v8880 = vadd.f32 %v8878, %v8879
      %v8881 = vrot.slane %v8862, 4
      %v8882 = vadd.f32 %v8862, %v8881
      %v8883 = vrot.slane %v8882, 2
      %v8884 = vadd.f32 %v8882, %v8883
      %v8885 = vrot.slane %v8884, 1
      %v8886 = vadd.f32 %v8884, %v8885
      %v8887 = vmul.f32 %v8868, %v7461
      %v8888 = vmul.f32 %v8874, %v7470
      %v8889 = vmul.f32 %v8880, %v7479
      %v8890 = vmul.f32 %v8886, %v7488
      %v8891 = vadd.f32 %v8855, %v8887
      %v8892 = vadd.f32 %v8856, %v8888
      %v8893 = vadd.f32 %v8857, %v8889
      %v8894 = vadd.f32 %v8858, %v8890
      %v8895 = vmul.f32 %v4264, %v7102
      %v8896 = vmul.f32 %v4271, %v7111
      %v8897 = vmul.f32 %v4278, %v7120
      %v8898 = vmul.f32 %v4285, %v7129
      %v8899 = vrot.slane %v8895, 4
      %v8900 = vadd.f32 %v8895, %v8899
      %v8901 = vrot.slane %v8900, 2
      %v8902 = vadd.f32 %v8900, %v8901
      %v8903 = vrot.slane %v8902, 1
      %v8904 = vadd.f32 %v8902, %v8903
      %v8905 = vrot.slane %v8896, 4
      %v8906 = vadd.f32 %v8896, %v8905
      %v8907 = vrot.slane %v8906, 2
      %v8908 = vadd.f32 %v8906, %v8907
      %v8909 = vrot.slane %v8908, 1
      %v8910 = vadd.f32 %v8908, %v8909
      %v8911 = vrot.slane %v8897, 4
      %v8912 = vadd.f32 %v8897, %v8911
      %v8913 = vrot.slane %v8912, 2
      %v8914 = vadd.f32 %v8912, %v8913
      %v8915 = vrot.slane %v8914, 1
      %v8916 = vadd.f32 %v8914, %v8915
      %v8917 = vrot.slane %v8898, 4
      %v8918 = vadd.f32 %v8898, %v8917
      %v8919 = vrot.slane %v8918, 2
      %v8920 = vadd.f32 %v8918, %v8919
      %v8921 = vrot.slane %v8920, 1
      %v8922 = vadd.f32 %v8920, %v8921
      %v8923 = vmul.f32 %v8904, %v7462
      %v8924 = vmul.f32 %v8910, %v7471
      %v8925 = vmul.f32 %v8916, %v7480
      %v8926 = vmul.f32 %v8922, %v7489
      %v8927 = vadd.f32 %v8891, %v8923
      %v8928 = vadd.f32 %v8892, %v8924
      %v8929 = vadd.f32 %v8893, %v8925
      %v8930 = vadd.f32 %v8894, %v8926
      %v8931 = vmul.f32 %v4264, %v7103
      %v8932 = vmul.f32 %v4271, %v7112
      %v8933 = vmul.f32 %v4278, %v7121
      %v8934 = vmul.f32 %v4285, %v7130
      %v8935 = vrot.slane %v8931, 4
      %v8936 = vadd.f32 %v8931, %v8935
      %v8937 = vrot.slane %v8936, 2
      %v8938 = vadd.f32 %v8936, %v8937
      %v8939 = vrot.slane %v8938, 1
      %v8940 = vadd.f32 %v8938, %v8939
      %v8941 = vrot.slane %v8932, 4
      %v8942 = vadd.f32 %v8932, %v8941
      %v8943 = vrot.slane %v8942, 2
      %v8944 = vadd.f32 %v8942, %v8943
      %v8945 = vrot.slane %v8944, 1
      %v8946 = vadd.f32 %v8944, %v8945
      %v8947 = vrot.slane %v8933, 4
      %v8948 = vadd.f32 %v8933, %v8947
      %v8949 = vrot.slane %v8948, 2
      %v8950 = vadd.f32 %v8948, %v8949
      %v8951 = vrot.slane %v8950, 1
      %v8952 = vadd.f32 %v8950, %v8951
      %v8953 = vrot.slane %v8934, 4
      %v8954 = vadd.f32 %v8934, %v8953
      %v8955 = vrot.slane %v8954, 2
      %v8956 = vadd.f32 %v8954, %v8955
      %v8957 = vrot.slane %v8956, 1
      %v8958 = vadd.f32 %v8956, %v8957
      %v8959 = vmul.f32 %v8940, %v7463
      %v8960 = vmul.f32 %v8946, %v7472
      %v8961 = vmul.f32 %v8952, %v7481
      %v8962 = vmul.f32 %v8958, %v7490
      %v8963 = vadd.f32 %v8927, %v8959
      %v8964 = vadd.f32 %v8928, %v8960
      %v8965 = vadd.f32 %v8929, %v8961
      %v8966 = vadd.f32 %v8930, %v8962
      %v8967 = vmul.f32 %v4264, %v7104
      %v8968 = vmul.f32 %v4271, %v7113
      %v8969 = vmul.f32 %v4278, %v7122
      %v8970 = vmul.f32 %v4285, %v7131
      %v8971 = vrot.slane %v8967, 4
      %v8972 = vadd.f32 %v8967, %v8971
      %v8973 = vrot.slane %v8972, 2
      %v8974 = vadd.f32 %v8972, %v8973
      %v8975 = vrot.slane %v8974, 1
      %v8976 = vadd.f32 %v8974, %v8975
      %v8977 = vrot.slane %v8968, 4
      %v8978 = vadd.f32 %v8968, %v8977
      %v8979 = vrot.slane %v8978, 2
      %v8980 = vadd.f32 %v8978, %v8979
      %v8981 = vrot.slane %v8980, 1
      %v8982 = vadd.f32 %v8980, %v8981
      %v8983 = vrot.slane %v8969, 4
      %v8984 = vadd.f32 %v8969, %v8983
      %v8985 = vrot.slane %v8984, 2
      %v8986 = vadd.f32 %v8984, %v8985
      %v8987 = vrot.slane %v8986, 1
      %v8988 = vadd.f32 %v8986, %v8987
      %v8989 = vrot.slane %v8970, 4
      %v8990 = vadd.f32 %v8970, %v8989
      %v8991 = vrot.slane %v8990, 2
      %v8992 = vadd.f32 %v8990, %v8991
      %v8993 = vrot.slane %v8992, 1
      %v8994 = vadd.f32 %v8992, %v8993
      %v8995 = vmul.f32 %v8976, %v7464
      %v8996 = vmul.f32 %v8982, %v7473
      %v8997 = vmul.f32 %v8988, %v7482
      %v8998 = vmul.f32 %v8994, %v7491
      %v8999 = vadd.f32 %v8963, %v8995
      %v9000 = vadd.f32 %v8964, %v8996
      %v9001 = vadd.f32 %v8965, %v8997
      %v9002 = vadd.f32 %v8966, %v8998
      %v9003 = vmul.f32 %v4264, %v7105
      %v9004 = vmul.f32 %v4271, %v7114
      %v9005 = vmul.f32 %v4278, %v7123
      %v9006 = vmul.f32 %v4285, %v7132
      %v9007 = vrot.slane %v9003, 4
      %v9008 = vadd.f32 %v9003, %v9007
      %v9009 = vrot.slane %v9008, 2
      %v9010 = vadd.f32 %v9008, %v9009
      %v9011 = vrot.slane %v9010, 1
      %v9012 = vadd.f32 %v9010, %v9011
      %v9013 = vrot.slane %v9004, 4
      %v9014 = vadd.f32 %v9004, %v9013
      %v9015 = vrot.slane %v9014, 2
      %v9016 = vadd.f32 %v9014, %v9015
      %v9017 = vrot.slane %v9016, 1
      %v9018 = vadd.f32 %v9016, %v9017
      %v9019 = vrot.slane %v9005, 4
      %v9020 = vadd.f32 %v9005, %v9019
      %v9021 = vrot.slane %v9020, 2
      %v9022 = vadd.f32 %v9020, %v9021
      %v9023 = vrot.slane %v9022, 1
      %v9024 = vadd.f32 %v9022, %v9023
      %v9025 = vrot.slane %v9006, 4
      %v9026 = vadd.f32 %v9006, %v9025
      %v9027 = vrot.slane %v9026, 2
      %v9028 = vadd.f32 %v9026, %v9027
      %v9029 = vrot.slane %v9028, 1
      %v9030 = vadd.f32 %v9028, %v9029
      %v9031 = vmul.f32 %v9012, %v7465
      %v9032 = vmul.f32 %v9018, %v7474
      %v9033 = vmul.f32 %v9024, %v7483
      %v9034 = vmul.f32 %v9030, %v7492
      %v9035 = vadd.f32 %v8999, %v9031
      %v9036 = vadd.f32 %v9000, %v9032
      %v9037 = vadd.f32 %v9001, %v9033
      %v9038 = vadd.f32 %v9002, %v9034
      %v9039 = vmul.f32 %v4264, %v7106
      %v9040 = vmul.f32 %v4271, %v7115
      %v9041 = vmul.f32 %v4278, %v7124
      %v9042 = vmul.f32 %v4285, %v7133
      %v9043 = vrot.slane %v9039, 4
      %v9044 = vadd.f32 %v9039, %v9043
      %v9045 = vrot.slane %v9044, 2
      %v9046 = vadd.f32 %v9044, %v9045
      %v9047 = vrot.slane %v9046, 1
      %v9048 = vadd.f32 %v9046, %v9047
      %v9049 = vrot.slane %v9040, 4
      %v9050 = vadd.f32 %v9040, %v9049
      %v9051 = vrot.slane %v9050, 2
      %v9052 = vadd.f32 %v9050, %v9051
      %v9053 = vrot.slane %v9052, 1
      %v9054 = vadd.f32 %v9052, %v9053
      %v9055 = vrot.slane %v9041, 4
      %v9056 = vadd.f32 %v9041, %v9055
      %v9057 = vrot.slane %v9056, 2
      %v9058 = vadd.f32 %v9056, %v9057
      %v9059 = vrot.slane %v9058, 1
      %v9060 = vadd.f32 %v9058, %v9059
      %v9061 = vrot.slane %v9042, 4
      %v9062 = vadd.f32 %v9042, %v9061
      %v9063 = vrot.slane %v9062, 2
      %v9064 = vadd.f32 %v9062, %v9063
      %v9065 = vrot.slane %v9064, 1
      %v9066 = vadd.f32 %v9064, %v9065
      %v9067 = vmul.f32 %v9048, %v7466
      %v9068 = vmul.f32 %v9054, %v7475
      %v9069 = vmul.f32 %v9060, %v7484
      %v9070 = vmul.f32 %v9066, %v7493
      %v9071 = vadd.f32 %v9035, %v9067
      %v9072 = vadd.f32 %v9036, %v9068
      %v9073 = vadd.f32 %v9037, %v9069
      %v9074 = vadd.f32 %v9038, %v9070
      %v9075 = vmul.f32 %v4264, %v7107
      %v9076 = vmul.f32 %v4271, %v7116
      %v9077 = vmul.f32 %v4278, %v7125
      %v9078 = vmul.f32 %v4285, %v7134
      %v9079 = vrot.slane %v9075, 4
      %v9080 = vadd.f32 %v9075, %v9079
      %v9081 = vrot.slane %v9080, 2
      %v9082 = vadd.f32 %v9080, %v9081
      %v9083 = vrot.slane %v9082, 1
      %v9084 = vadd.f32 %v9082, %v9083
      %v9085 = vrot.slane %v9076, 4
      %v9086 = vadd.f32 %v9076, %v9085
      %v9087 = vrot.slane %v9086, 2
      %v9088 = vadd.f32 %v9086, %v9087
      %v9089 = vrot.slane %v9088, 1
      %v9090 = vadd.f32 %v9088, %v9089
      %v9091 = vrot.slane %v9077, 4
      %v9092 = vadd.f32 %v9077, %v9091
      %v9093 = vrot.slane %v9092, 2
      %v9094 = vadd.f32 %v9092, %v9093
      %v9095 = vrot.slane %v9094, 1
      %v9096 = vadd.f32 %v9094, %v9095
      %v9097 = vrot.slane %v9078, 4
      %v9098 = vadd.f32 %v9078, %v9097
      %v9099 = vrot.slane %v9098, 2
      %v9100 = vadd.f32 %v9098, %v9099
      %v9101 = vrot.slane %v9100, 1
      %v9102 = vadd.f32 %v9100, %v9101
      %v9103 = vmul.f32 %v9084, %v7467
      %v9104 = vmul.f32 %v9090, %v7476
      %v9105 = vmul.f32 %v9096, %v7485
      %v9106 = vmul.f32 %v9102, %v7494
      %v9107 = vadd.f32 %v9071, %v9103
      %v9108 = vadd.f32 %v9072, %v9104
      %v9109 = vadd.f32 %v9073, %v9105
      %v9110 = vadd.f32 %v9074, %v9106
      %9111 = vst [vmem:[%s143 + $0x20] sm:$0xff] %v9107
      %9112 = vst [vmem:[%s143 + $0x68] sm:$0xff] %v9108
      %9113 = vst [vmem:[%s143 + $0xb0] sm:$0xff] %v9109
      %9114 = vst [vmem:[%s143 + $0xf8] sm:$0xff] %v9110
      %v9115 = vmul.f32 %v4266, %v7099
      %v9116 = vmul.f32 %v4273, %v7108
      %v9117 = vmul.f32 %v4280, %v7117
      %v9118 = vmul.f32 %v4287, %v7126
      %v9119 = vrot.slane %v9115, 4
      %v9120 = vadd.f32 %v9115, %v9119
      %v9121 = vrot.slane %v9120, 2
      %v9122 = vadd.f32 %v9120, %v9121
      %v9123 = vrot.slane %v9122, 1
      %v9124 = vadd.f32 %v9122, %v9123
      %v9125 = vrot.slane %v9116, 4
      %v9126 = vadd.f32 %v9116, %v9125
      %v9127 = vrot.slane %v9126, 2
      %v9128 = vadd.f32 %v9126, %v9127
      %v9129 = vrot.slane %v9128, 1
      %v9130 = vadd.f32 %v9128, %v9129
      %v9131 = vrot.slane %v9117, 4
      %v9132 = vadd.f32 %v9117, %v9131
      %v9133 = vrot.slane %v9132, 2
      %v9134 = vadd.f32 %v9132, %v9133
      %v9135 = vrot.slane %v9134, 1
      %v9136 = vadd.f32 %v9134, %v9135
      %v9137 = vrot.slane %v9118, 4
      %v9138 = vadd.f32 %v9118, %v9137
      %v9139 = vrot.slane %v9138, 2
      %v9140 = vadd.f32 %v9138, %v9139
      %v9141 = vrot.slane %v9140, 1
      %v9142 = vadd.f32 %v9140, %v9141
      %v9143 = vmul.f32 %v9124, %v7459
      %v9144 = vmul.f32 %v9130, %v7468
      %v9145 = vmul.f32 %v9136, %v7477
      %v9146 = vmul.f32 %v9142, %v7486
      %v9147 = vmul.f32 %v4266, %v7100
      %v9148 = vmul.f32 %v4273, %v7109
      %v9149 = vmul.f32 %v4280, %v7118
      %v9150 = vmul.f32 %v4287, %v7127
      %v9151 = vrot.slane %v9147, 4
      %v9152 = vadd.f32 %v9147, %v9151
      %v9153 = vrot.slane %v9152, 2
      %v9154 = vadd.f32 %v9152, %v9153
      %v9155 = vrot.slane %v9154, 1
      %v9156 = vadd.f32 %v9154, %v9155
      %v9157 = vrot.slane %v9148, 4
      %v9158 = vadd.f32 %v9148, %v9157
      %v9159 = vrot.slane %v9158, 2
      %v9160 = vadd.f32 %v9158, %v9159
      %v9161 = vrot.slane %v9160, 1
      %v9162 = vadd.f32 %v9160, %v9161
      %v9163 = vrot.slane %v9149, 4
      %v9164 = vadd.f32 %v9149, %v9163
      %v9165 = vrot.slane %v9164, 2
      %v9166 = vadd.f32 %v9164, %v9165
      %v9167 = vrot.slane %v9166, 1
      %v9168 = vadd.f32 %v9166, %v9167
      %v9169 = vrot.slane %v9150, 4
      %v9170 = vadd.f32 %v9150, %v9169
      %v9171 = vrot.slane %v9170, 2
      %v9172 = vadd.f32 %v9170, %v9171
      %v9173 = vrot.slane %v9172, 1
      %v9174 = vadd.f32 %v9172, %v9173
      %v9175 = vmul.f32 %v9156, %v7460
      %v9176 = vmul.f32 %v9162, %v7469
      %v9177 = vmul.f32 %v9168, %v7478
      %v9178 = vmul.f32 %v9174, %v7487
      %v9179 = vadd.f32 %v9143, %v9175
      %v9180 = vadd.f32 %v9144, %v9176
      %v9181 = vadd.f32 %v9145, %v9177
      %v9182 = vadd.f32 %v9146, %v9178
      %v9183 = vmul.f32 %v4266, %v7101
      %v9184 = vmul.f32 %v4273, %v7110
      %v9185 = vmul.f32 %v4280, %v7119
      %v9186 = vmul.f32 %v4287, %v7128
      %v9187 = vrot.slane %v9183, 4
      %v9188 = vadd.f32 %v9183, %v9187
      %v9189 = vrot.slane %v9188, 2
      %v9190 = vadd.f32 %v9188, %v9189
      %v9191 = vrot.slane %v9190, 1
      %v9192 = vadd.f32 %v9190, %v9191
      %v9193 = vrot.slane %v9184, 4
      %v9194 = vadd.f32 %v9184, %v9193
      %v9195 = vrot.slane %v9194, 2
      %v9196 = vadd.f32 %v9194, %v9195
      %v9197 = vrot.slane %v9196, 1
      %v9198 = vadd.f32 %v9196, %v9197
      %v9199 = vrot.slane %v9185, 4
      %v9200 = vadd.f32 %v9185, %v9199
      %v9201 = vrot.slane %v9200, 2
      %v9202 = vadd.f32 %v9200, %v9201
      %v9203 = vrot.slane %v9202, 1
      %v9204 = vadd.f32 %v9202, %v9203
      %v9205 = vrot.slane %v9186, 4
      %v9206 = vadd.f32 %v9186, %v9205
      %v9207 = vrot.slane %v9206, 2
      %v9208 = vadd.f32 %v9206, %v9207
      %v9209 = vrot.slane %v9208, 1
      %v9210 = vadd.f32 %v9208, %v9209
      %v9211 = vmul.f32 %v9192, %v7461
      %v9212 = vmul.f32 %v9198, %v7470
      %v9213 = vmul.f32 %v9204, %v7479
      %v9214 = vmul.f32 %v9210, %v7488
      %v9215 = vadd.f32 %v9179, %v9211
      %v9216 = vadd.f32 %v9180, %v9212
      %v9217 = vadd.f32 %v9181, %v9213
      %v9218 = vadd.f32 %v9182, %v9214
      %v9219 = vmul.f32 %v4266, %v7102
      %v9220 = vmul.f32 %v4273, %v7111
      %v9221 = vmul.f32 %v4280, %v7120
      %v9222 = vmul.f32 %v4287, %v7129
      %v9223 = vrot.slane %v9219, 4
      %v9224 = vadd.f32 %v9219, %v9223
      %v9225 = vrot.slane %v9224, 2
      %v9226 = vadd.f32 %v9224, %v9225
      %v9227 = vrot.slane %v9226, 1
      %v9228 = vadd.f32 %v9226, %v9227
      %v9229 = vrot.slane %v9220, 4
      %v9230 = vadd.f32 %v9220, %v9229
      %v9231 = vrot.slane %v9230, 2
      %v9232 = vadd.f32 %v9230, %v9231
      %v9233 = vrot.slane %v9232, 1
      %v9234 = vadd.f32 %v9232, %v9233
      %v9235 = vrot.slane %v9221, 4
      %v9236 = vadd.f32 %v9221, %v9235
      %v9237 = vrot.slane %v9236, 2
      %v9238 = vadd.f32 %v9236, %v9237
      %v9239 = vrot.slane %v9238, 1
      %v9240 = vadd.f32 %v9238, %v9239
      %v9241 = vrot.slane %v9222, 4
      %v9242 = vadd.f32 %v9222, %v9241
      %v9243 = vrot.slane %v9242, 2
      %v9244 = vadd.f32 %v9242, %v9243
      %v9245 = vrot.slane %v9244, 1
      %v9246 = vadd.f32 %v9244, %v9245
      %v9247 = vmul.f32 %v9228, %v7462
      %v9248 = vmul.f32 %v9234, %v7471
      %v9249 = vmul.f32 %v9240, %v7480
      %v9250 = vmul.f32 %v9246, %v7489
      %v9251 = vadd.f32 %v9215, %v9247
      %v9252 = vadd.f32 %v9216, %v9248
      %v9253 = vadd.f32 %v9217, %v9249
      %v9254 = vadd.f32 %v9218, %v9250
      %v9255 = vmul.f32 %v4266, %v7103
      %v9256 = vmul.f32 %v4273, %v7112
      %v9257 = vmul.f32 %v4280, %v7121
      %v9258 = vmul.f32 %v4287, %v7130
      %v9259 = vrot.slane %v9255, 4
      %v9260 = vadd.f32 %v9255, %v9259
      %v9261 = vrot.slane %v9260, 2
      %v9262 = vadd.f32 %v9260, %v9261
      %v9263 = vrot.slane %v9262, 1
      %v9264 = vadd.f32 %v9262, %v9263
      %v9265 = vrot.slane %v9256, 4
      %v9266 = vadd.f32 %v9256, %v9265
      %v9267 = vrot.slane %v9266, 2
      %v9268 = vadd.f32 %v9266, %v9267
      %v9269 = vrot.slane %v9268, 1
      %v9270 = vadd.f32 %v9268, %v9269
      %v9271 = vrot.slane %v9257, 4
      %v9272 = vadd.f32 %v9257, %v9271
      %v9273 = vrot.slane %v9272, 2
      %v9274 = vadd.f32 %v9272, %v9273
      %v9275 = vrot.slane %v9274, 1
      %v9276 = vadd.f32 %v9274, %v9275
      %v9277 = vrot.slane %v9258, 4
      %v9278 = vadd.f32 %v9258, %v9277
      %v9279 = vrot.slane %v9278, 2
      %v9280 = vadd.f32 %v9278, %v9279
      %v9281 = vrot.slane %v9280, 1
      %v9282 = vadd.f32 %v9280, %v9281
      %v9283 = vmul.f32 %v9264, %v7463
      %v9284 = vmul.f32 %v9270, %v7472
      %v9285 = vmul.f32 %v9276, %v7481
      %v9286 = vmul.f32 %v9282, %v7490
      %v9287 = vadd.f32 %v9251, %v9283
      %v9288 = vadd.f32 %v9252, %v9284
      %v9289 = vadd.f32 %v9253, %v9285
      %v9290 = vadd.f32 %v9254, %v9286
      %v9291 = vmul.f32 %v4266, %v7104
      %v9292 = vmul.f32 %v4273, %v7113
      %v9293 = vmul.f32 %v4280, %v7122
      %v9294 = vmul.f32 %v4287, %v7131
      %v9295 = vrot.slane %v9291, 4
      %v9296 = vadd.f32 %v9291, %v9295
      %v9297 = vrot.slane %v9296, 2
      %v9298 = vadd.f32 %v9296, %v9297
      %v9299 = vrot.slane %v9298, 1
      %v9300 = vadd.f32 %v9298, %v9299
      %v9301 = vrot.slane %v9292, 4
      %v9302 = vadd.f32 %v9292, %v9301
      %v9303 = vrot.slane %v9302, 2
      %v9304 = vadd.f32 %v9302, %v9303
      %v9305 = vrot.slane %v9304, 1
      %v9306 = vadd.f32 %v9304, %v9305
      %v9307 = vrot.slane %v9293, 4
      %v9308 = vadd.f32 %v9293, %v9307
      %v9309 = vrot.slane %v9308, 2
      %v9310 = vadd.f32 %v9308, %v9309
      %v9311 = vrot.slane %v9310, 1
      %v9312 = vadd.f32 %v9310, %v9311
      %v9313 = vrot.slane %v9294, 4
      %v9314 = vadd.f32 %v9294, %v9313
      %v9315 = vrot.slane %v9314, 2
      %v9316 = vadd.f32 %v9314, %v9315
      %v9317 = vrot.slane %v9316, 1
      %v9318 = vadd.f32 %v9316, %v9317
      %v9319 = vmul.f32 %v9300, %v7464
      %v9320 = vmul.f32 %v9306, %v7473
      %v9321 = vmul.f32 %v9312, %v7482
      %v9322 = vmul.f32 %v9318, %v7491
      %v9323 = vadd.f32 %v9287, %v9319
      %v9324 = vadd.f32 %v9288, %v9320
      %v9325 = vadd.f32 %v9289, %v9321
      %v9326 = vadd.f32 %v9290, %v9322
      %v9327 = vmul.f32 %v4266, %v7105
      %v9328 = vmul.f32 %v4273, %v7114
      %v9329 = vmul.f32 %v4280, %v7123
      %v9330 = vmul.f32 %v4287, %v7132
      %v9331 = vrot.slane %v9327, 4
      %v9332 = vadd.f32 %v9327, %v9331
      %v9333 = vrot.slane %v9332, 2
      %v9334 = vadd.f32 %v9332, %v9333
      %v9335 = vrot.slane %v9334, 1
      %v9336 = vadd.f32 %v9334, %v9335
      %v9337 = vrot.slane %v9328, 4
      %v9338 = vadd.f32 %v9328, %v9337
      %v9339 = vrot.slane %v9338, 2
      %v9340 = vadd.f32 %v9338, %v9339
      %v9341 = vrot.slane %v9340, 1
      %v9342 = vadd.f32 %v9340, %v9341
      %v9343 = vrot.slane %v9329, 4
      %v9344 = vadd.f32 %v9329, %v9343
      %v9345 = vrot.slane %v9344, 2
      %v9346 = vadd.f32 %v9344, %v9345
      %v9347 = vrot.slane %v9346, 1
      %v9348 = vadd.f32 %v9346, %v9347
      %v9349 = vrot.slane %v9330, 4
      %v9350 = vadd.f32 %v9330, %v9349
      %v9351 = vrot.slane %v9350, 2
      %v9352 = vadd.f32 %v9350, %v9351
      %v9353 = vrot.slane %v9352, 1
      %v9354 = vadd.f32 %v9352, %v9353
      %v9355 = vmul.f32 %v9336, %v7465
      %v9356 = vmul.f32 %v9342, %v7474
      %v9357 = vmul.f32 %v9348, %v7483
      %v9358 = vmul.f32 %v9354, %v7492
      %v9359 = vadd.f32 %v9323, %v9355
      %v9360 = vadd.f32 %v9324, %v9356
      %v9361 = vadd.f32 %v9325, %v9357
      %v9362 = vadd.f32 %v9326, %v9358
      %v9363 = vmul.f32 %v4266, %v7106
      %v9364 = vmul.f32 %v4273, %v7115
      %v9365 = vmul.f32 %v4280, %v7124
      %v9366 = vmul.f32 %v4287, %v7133
      %v9367 = vrot.slane %v9363, 4
      %v9368 = vadd.f32 %v9363, %v9367
      %v9369 = vrot.slane %v9368, 2
      %v9370 = vadd.f32 %v9368, %v9369
      %v9371 = vrot.slane %v9370, 1
      %v9372 = vadd.f32 %v9370, %v9371
      %v9373 = vrot.slane %v9364, 4
      %v9374 = vadd.f32 %v9364, %v9373
      %v9375 = vrot.slane %v9374, 2
      %v9376 = vadd.f32 %v9374, %v9375
      %v9377 = vrot.slane %v9376, 1
      %v9378 = vadd.f32 %v9376, %v9377
      %v9379 = vrot.slane %v9365, 4
      %v9380 = vadd.f32 %v9365, %v9379
      %v9381 = vrot.slane %v9380, 2
      %v9382 = vadd.f32 %v9380, %v9381
      %v9383 = vrot.slane %v9382, 1
      %v9384 = vadd.f32 %v9382, %v9383
      %v9385 = vrot.slane %v9366, 4
      %v9386 = vadd.f32 %v9366, %v9385
      %v9387 = vrot.slane %v9386, 2
      %v9388 = vadd.f32 %v9386, %v9387
      %v9389 = vrot.slane %v9388, 1
      %v9390 = vadd.f32 %v9388, %v9389
      %v9391 = vmul.f32 %v9372, %v7466
      %v9392 = vmul.f32 %v9378, %v7475
      %v9393 = vmul.f32 %v9384, %v7484
      %v9394 = vmul.f32 %v9390, %v7493
      %v9395 = vadd.f32 %v9359, %v9391
      %v9396 = vadd.f32 %v9360, %v9392
      %v9397 = vadd.f32 %v9361, %v9393
      %v9398 = vadd.f32 %v9362, %v9394
      %v9399 = vmul.f32 %v4266, %v7107
      %v9400 = vmul.f32 %v4273, %v7116
      %v9401 = vmul.f32 %v4280, %v7125
      %v9402 = vmul.f32 %v4287, %v7134
      %v9403 = vrot.slane %v9399, 4
      %v9404 = vadd.f32 %v9399, %v9403
      %v9405 = vrot.slane %v9404, 2
      %v9406 = vadd.f32 %v9404, %v9405
      %v9407 = vrot.slane %v9406, 1
      %v9408 = vadd.f32 %v9406, %v9407
      %v9409 = vrot.slane %v9400, 4
      %v9410 = vadd.f32 %v9400, %v9409
      %v9411 = vrot.slane %v9410, 2
      %v9412 = vadd.f32 %v9410, %v9411
      %v9413 = vrot.slane %v9412, 1
      %v9414 = vadd.f32 %v9412, %v9413
      %v9415 = vrot.slane %v9401, 4
      %v9416 = vadd.f32 %v9401, %v9415
      %v9417 = vrot.slane %v9416, 2
      %v9418 = vadd.f32 %v9416, %v9417
      %v9419 = vrot.slane %v9418, 1
      %v9420 = vadd.f32 %v9418, %v9419
      %v9421 = vrot.slane %v9402, 4
      %v9422 = vadd.f32 %v9402, %v9421
      %v9423 = vrot.slane %v9422, 2
      %v9424 = vadd.f32 %v9422, %v9423
      %v9425 = vrot.slane %v9424, 1
      %v9426 = vadd.f32 %v9424, %v9425
      %v9427 = vmul.f32 %v9408, %v7467
      %v9428 = vmul.f32 %v9414, %v7476
      %v9429 = vmul.f32 %v9420, %v7485
      %v9430 = vmul.f32 %v9426, %v7494
      %v9431 = vadd.f32 %v9395, %v9427
      %v9432 = vadd.f32 %v9396, %v9428
      %v9433 = vadd.f32 %v9397, %v9429
      %v9434 = vadd.f32 %v9398, %v9430
      %9435 = vst [vmem:[%s143 + $0x28] sm:$0xff] %v9431
      %9436 = vst [vmem:[%s143 + $0x70] sm:$0xff] %v9432
      %9437 = vst [vmem:[%s143 + $0xb8] sm:$0xff] %v9433
      %9438 = vst [vmem:[%s143 + $0x100] sm:$0xff] %v9434
      %v9439 = vmul.f32 %v5606, %v7099
      %v9440 = vmul.f32 %v5613, %v7108
      %v9441 = vmul.f32 %v5620, %v7117
      %v9442 = vmul.f32 %v5627, %v7126
      %v9443 = vrot.slane %v9439, 4
      %v9444 = vadd.f32 %v9439, %v9443
      %v9445 = vrot.slane %v9444, 2
      %v9446 = vadd.f32 %v9444, %v9445
      %v9447 = vrot.slane %v9446, 1
      %v9448 = vadd.f32 %v9446, %v9447
      %v9449 = vrot.slane %v9440, 4
      %v9450 = vadd.f32 %v9440, %v9449
      %v9451 = vrot.slane %v9450, 2
      %v9452 = vadd.f32 %v9450, %v9451
      %v9453 = vrot.slane %v9452, 1
      %v9454 = vadd.f32 %v9452, %v9453
      %v9455 = vrot.slane %v9441, 4
      %v9456 = vadd.f32 %v9441, %v9455
      %v9457 = vrot.slane %v9456, 2
      %v9458 = vadd.f32 %v9456, %v9457
      %v9459 = vrot.slane %v9458, 1
      %v9460 = vadd.f32 %v9458, %v9459
      %v9461 = vrot.slane %v9442, 4
      %v9462 = vadd.f32 %v9442, %v9461
      %v9463 = vrot.slane %v9462, 2
      %v9464 = vadd.f32 %v9462, %v9463
      %v9465 = vrot.slane %v9464, 1
      %v9466 = vadd.f32 %v9464, %v9465
      %v9467 = vmul.f32 %v9448, %v7459
      %v9468 = vmul.f32 %v9454, %v7468
      %v9469 = vmul.f32 %v9460, %v7477
      %v9470 = vmul.f32 %v9466, %v7486
      %v9471 = vmul.f32 %v5606, %v7100
      %v9472 = vmul.f32 %v5613, %v7109
      %v9473 = vmul.f32 %v5620, %v7118
      %v9474 = vmul.f32 %v5627, %v7127
      %v9475 = vrot.slane %v9471, 4
      %v9476 = vadd.f32 %v9471, %v9475
      %v9477 = vrot.slane %v9476, 2
      %v9478 = vadd.f32 %v9476, %v9477
      %v9479 = vrot.slane %v9478, 1
      %v9480 = vadd.f32 %v9478, %v9479
      %v9481 = vrot.slane %v9472, 4
      %v9482 = vadd.f32 %v9472, %v9481
      %v9483 = vrot.slane %v9482, 2
      %v9484 = vadd.f32 %v9482, %v9483
      %v9485 = vrot.slane %v9484, 1
      %v9486 = vadd.f32 %v9484, %v9485
      %v9487 = vrot.slane %v9473, 4
      %v9488 = vadd.f32 %v9473, %v9487
      %v9489 = vrot.slane %v9488, 2
      %v9490 = vadd.f32 %v9488, %v9489
      %v9491 = vrot.slane %v9490, 1
      %v9492 = vadd.f32 %v9490, %v9491
      %v9493 = vrot.slane %v9474, 4
      %v9494 = vadd.f32 %v9474, %v9493
      %v9495 = vrot.slane %v9494, 2
      %v9496 = vadd.f32 %v9494, %v9495
      %v9497 = vrot.slane %v9496, 1
      %v9498 = vadd.f32 %v9496, %v9497
      %v9499 = vmul.f32 %v9480, %v7460
      %v9500 = vmul.f32 %v9486, %v7469
      %v9501 = vmul.f32 %v9492, %v7478
      %v9502 = vmul.f32 %v9498, %v7487
      %v9503 = vadd.f32 %v9467, %v9499
      %v9504 = vadd.f32 %v9468, %v9500
      %v9505 = vadd.f32 %v9469, %v9501
      %v9506 = vadd.f32 %v9470, %v9502
      %v9507 = vmul.f32 %v5606, %v7101
      %v9508 = vmul.f32 %v5613, %v7110
      %v9509 = vmul.f32 %v5620, %v7119
      %v9510 = vmul.f32 %v5627, %v7128
      %v9511 = vrot.slane %v9507, 4
      %v9512 = vadd.f32 %v9507, %v9511
      %v9513 = vrot.slane %v9512, 2
      %v9514 = vadd.f32 %v9512, %v9513
      %v9515 = vrot.slane %v9514, 1
      %v9516 = vadd.f32 %v9514, %v9515
      %v9517 = vrot.slane %v9508, 4
      %v9518 = vadd.f32 %v9508, %v9517
      %v9519 = vrot.slane %v9518, 2
      %v9520 = vadd.f32 %v9518, %v9519
      %v9521 = vrot.slane %v9520, 1
      %v9522 = vadd.f32 %v9520, %v9521
      %v9523 = vrot.slane %v9509, 4
      %v9524 = vadd.f32 %v9509, %v9523
      %v9525 = vrot.slane %v9524, 2
      %v9526 = vadd.f32 %v9524, %v9525
      %v9527 = vrot.slane %v9526, 1
      %v9528 = vadd.f32 %v9526, %v9527
      %v9529 = vrot.slane %v9510, 4
      %v9530 = vadd.f32 %v9510, %v9529
      %v9531 = vrot.slane %v9530, 2
      %v9532 = vadd.f32 %v9530, %v9531
      %v9533 = vrot.slane %v9532, 1
      %v9534 = vadd.f32 %v9532, %v9533
      %v9535 = vmul.f32 %v9516, %v7461
      %v9536 = vmul.f32 %v9522, %v7470
      %v9537 = vmul.f32 %v9528, %v7479
      %v9538 = vmul.f32 %v9534, %v7488
      %v9539 = vadd.f32 %v9503, %v9535
      %v9540 = vadd.f32 %v9504, %v9536
      %v9541 = vadd.f32 %v9505, %v9537
      %v9542 = vadd.f32 %v9506, %v9538
      %v9543 = vmul.f32 %v5606, %v7102
      %v9544 = vmul.f32 %v5613, %v7111
      %v9545 = vmul.f32 %v5620, %v7120
      %v9546 = vmul.f32 %v5627, %v7129
      %v9547 = vrot.slane %v9543, 4
      %v9548 = vadd.f32 %v9543, %v9547
      %v9549 = vrot.slane %v9548, 2
      %v9550 = vadd.f32 %v9548, %v9549
      %v9551 = vrot.slane %v9550, 1
      %v9552 = vadd.f32 %v9550, %v9551
      %v9553 = vrot.slane %v9544, 4
      %v9554 = vadd.f32 %v9544, %v9553
      %v9555 = vrot.slane %v9554, 2
      %v9556 = vadd.f32 %v9554, %v9555
      %v9557 = vrot.slane %v9556, 1
      %v9558 = vadd.f32 %v9556, %v9557
      %v9559 = vrot.slane %v9545, 4
      %v9560 = vadd.f32 %v9545, %v9559
      %v9561 = vrot.slane %v9560, 2
      %v9562 = vadd.f32 %v9560, %v9561
      %v9563 = vrot.slane %v9562, 1
      %v9564 = vadd.f32 %v9562, %v9563
      %v9565 = vrot.slane %v9546, 4
      %v9566 = vadd.f32 %v9546, %v9565
      %v9567 = vrot.slane %v9566, 2
      %v9568 = vadd.f32 %v9566, %v9567
      %v9569 = vrot.slane %v9568, 1
      %v9570 = vadd.f32 %v9568, %v9569
      %v9571 = vmul.f32 %v9552, %v7462
      %v9572 = vmul.f32 %v9558, %v7471
      %v9573 = vmul.f32 %v9564, %v7480
      %v9574 = vmul.f32 %v9570, %v7489
      %v9575 = vadd.f32 %v9539, %v9571
      %v9576 = vadd.f32 %v9540, %v9572
      %v9577 = vadd.f32 %v9541, %v9573
      %v9578 = vadd.f32 %v9542, %v9574
      %v9579 = vmul.f32 %v5606, %v7103
      %v9580 = vmul.f32 %v5613, %v7112
      %v9581 = vmul.f32 %v5620, %v7121
      %v9582 = vmul.f32 %v5627, %v7130
      %v9583 = vrot.slane %v9579, 4
      %v9584 = vadd.f32 %v9579, %v9583
      %v9585 = vrot.slane %v9584, 2
      %v9586 = vadd.f32 %v9584, %v9585
      %v9587 = vrot.slane %v9586, 1
      %v9588 = vadd.f32 %v9586, %v9587
      %v9589 = vrot.slane %v9580, 4
      %v9590 = vadd.f32 %v9580, %v9589
      %v9591 = vrot.slane %v9590, 2
      %v9592 = vadd.f32 %v9590, %v9591
      %v9593 = vrot.slane %v9592, 1
      %v9594 = vadd.f32 %v9592, %v9593
      %v9595 = vrot.slane %v9581, 4
      %v9596 = vadd.f32 %v9581, %v9595
      %v9597 = vrot.slane %v9596, 2
      %v9598 = vadd.f32 %v9596, %v9597
      %v9599 = vrot.slane %v9598, 1
      %v9600 = vadd.f32 %v9598, %v9599
      %v9601 = vrot.slane %v9582, 4
      %v9602 = vadd.f32 %v9582, %v9601
      %v9603 = vrot.slane %v9602, 2
      %v9604 = vadd.f32 %v9602, %v9603
      %v9605 = vrot.slane %v9604, 1
      %v9606 = vadd.f32 %v9604, %v9605
      %v9607 = vmul.f32 %v9588, %v7463
      %v9608 = vmul.f32 %v9594, %v7472
      %v9609 = vmul.f32 %v9600, %v7481
      %v9610 = vmul.f32 %v9606, %v7490
      %v9611 = vadd.f32 %v9575, %v9607
      %v9612 = vadd.f32 %v9576, %v9608
      %v9613 = vadd.f32 %v9577, %v9609
      %v9614 = vadd.f32 %v9578, %v9610
      %v9615 = vmul.f32 %v5606, %v7104
      %v9616 = vmul.f32 %v5613, %v7113
      %v9617 = vmul.f32 %v5620, %v7122
      %v9618 = vmul.f32 %v5627, %v7131
      %v9619 = vrot.slane %v9615, 4
      %v9620 = vadd.f32 %v9615, %v9619
      %v9621 = vrot.slane %v9620, 2
      %v9622 = vadd.f32 %v9620, %v9621
      %v9623 = vrot.slane %v9622, 1
      %v9624 = vadd.f32 %v9622, %v9623
      %v9625 = vrot.slane %v9616, 4
      %v9626 = vadd.f32 %v9616, %v9625
      %v9627 = vrot.slane %v9626, 2
      %v9628 = vadd.f32 %v9626, %v9627
      %v9629 = vrot.slane %v9628, 1
      %v9630 = vadd.f32 %v9628, %v9629
      %v9631 = vrot.slane %v9617, 4
      %v9632 = vadd.f32 %v9617, %v9631
      %v9633 = vrot.slane %v9632, 2
      %v9634 = vadd.f32 %v9632, %v9633
      %v9635 = vrot.slane %v9634, 1
      %v9636 = vadd.f32 %v9634, %v9635
      %v9637 = vrot.slane %v9618, 4
      %v9638 = vadd.f32 %v9618, %v9637
      %v9639 = vrot.slane %v9638, 2
      %v9640 = vadd.f32 %v9638, %v9639
      %v9641 = vrot.slane %v9640, 1
      %v9642 = vadd.f32 %v9640, %v9641
      %v9643 = vmul.f32 %v9624, %v7464
      %v9644 = vmul.f32 %v9630, %v7473
      %v9645 = vmul.f32 %v9636, %v7482
      %v9646 = vmul.f32 %v9642, %v7491
      %v9647 = vadd.f32 %v9611, %v9643
      %v9648 = vadd.f32 %v9612, %v9644
      %v9649 = vadd.f32 %v9613, %v9645
      %v9650 = vadd.f32 %v9614, %v9646
      %v9651 = vmul.f32 %v5606, %v7105
      %v9652 = vmul.f32 %v5613, %v7114
      %v9653 = vmul.f32 %v5620, %v7123
      %v9654 = vmul.f32 %v5627, %v7132
      %v9655 = vrot.slane %v9651, 4
      %v9656 = vadd.f32 %v9651, %v9655
      %v9657 = vrot.slane %v9656, 2
      %v9658 = vadd.f32 %v9656, %v9657
      %v9659 = vrot.slane %v9658, 1
      %v9660 = vadd.f32 %v9658, %v9659
      %v9661 = vrot.slane %v9652, 4
      %v9662 = vadd.f32 %v9652, %v9661
      %v9663 = vrot.slane %v9662, 2
      %v9664 = vadd.f32 %v9662, %v9663
      %v9665 = vrot.slane %v9664, 1
      %v9666 = vadd.f32 %v9664, %v9665
      %v9667 = vrot.slane %v9653, 4
      %v9668 = vadd.f32 %v9653, %v9667
      %v9669 = vrot.slane %v9668, 2
      %v9670 = vadd.f32 %v9668, %v9669
      %v9671 = vrot.slane %v9670, 1
      %v9672 = vadd.f32 %v9670, %v9671
      %v9673 = vrot.slane %v9654, 4
      %v9674 = vadd.f32 %v9654, %v9673
      %v9675 = vrot.slane %v9674, 2
      %v9676 = vadd.f32 %v9674, %v9675
      %v9677 = vrot.slane %v9676, 1
      %v9678 = vadd.f32 %v9676, %v9677
      %v9679 = vmul.f32 %v9660, %v7465
      %v9680 = vmul.f32 %v9666, %v7474
      %v9681 = vmul.f32 %v9672, %v7483
      %v9682 = vmul.f32 %v9678, %v7492
      %v9683 = vadd.f32 %v9647, %v9679
      %v9684 = vadd.f32 %v9648, %v9680
      %v9685 = vadd.f32 %v9649, %v9681
      %v9686 = vadd.f32 %v9650, %v9682
      %v9687 = vmul.f32 %v5606, %v7106
      %v9688 = vmul.f32 %v5613, %v7115
      %v9689 = vmul.f32 %v5620, %v7124
      %v9690 = vmul.f32 %v5627, %v7133
      %v9691 = vrot.slane %v9687, 4
      %v9692 = vadd.f32 %v9687, %v9691
      %v9693 = vrot.slane %v9692, 2
      %v9694 = vadd.f32 %v9692, %v9693
      %v9695 = vrot.slane %v9694, 1
      %v9696 = vadd.f32 %v9694, %v9695
      %v9697 = vrot.slane %v9688, 4
      %v9698 = vadd.f32 %v9688, %v9697
      %v9699 = vrot.slane %v9698, 2
      %v9700 = vadd.f32 %v9698, %v9699
      %v9701 = vrot.slane %v9700, 1
      %v9702 = vadd.f32 %v9700, %v9701
      %v9703 = vrot.slane %v9689, 4
      %v9704 = vadd.f32 %v9689, %v9703
      %v9705 = vrot.slane %v9704, 2
      %v9706 = vadd.f32 %v9704, %v9705
      %v9707 = vrot.slane %v9706, 1
      %v9708 = vadd.f32 %v9706, %v9707
      %v9709 = vrot.slane %v9690, 4
      %v9710 = vadd.f32 %v9690, %v9709
      %v9711 = vrot.slane %v9710, 2
      %v9712 = vadd.f32 %v9710, %v9711
      %v9713 = vrot.slane %v9712, 1
      %v9714 = vadd.f32 %v9712, %v9713
      %v9715 = vmul.f32 %v9696, %v7466
      %v9716 = vmul.f32 %v9702, %v7475
      %v9717 = vmul.f32 %v9708, %v7484
      %v9718 = vmul.f32 %v9714, %v7493
      %v9719 = vadd.f32 %v9683, %v9715
      %v9720 = vadd.f32 %v9684, %v9716
      %v9721 = vadd.f32 %v9685, %v9717
      %v9722 = vadd.f32 %v9686, %v9718
      %v9723 = vmul.f32 %v5606, %v7107
      %v9724 = vmul.f32 %v5613, %v7116
      %v9725 = vmul.f32 %v5620, %v7125
      %v9726 = vmul.f32 %v5627, %v7134
      %v9727 = vrot.slane %v9723, 4
      %v9728 = vadd.f32 %v9723, %v9727
      %v9729 = vrot.slane %v9728, 2
      %v9730 = vadd.f32 %v9728, %v9729
      %v9731 = vrot.slane %v9730, 1
      %v9732 = vadd.f32 %v9730, %v9731
      %v9733 = vrot.slane %v9724, 4
      %v9734 = vadd.f32 %v9724, %v9733
      %v9735 = vrot.slane %v9734, 2
      %v9736 = vadd.f32 %v9734, %v9735
      %v9737 = vrot.slane %v9736, 1
      %v9738 = vadd.f32 %v9736, %v9737
      %v9739 = vrot.slane %v9725, 4
      %v9740 = vadd.f32 %v9725, %v9739
      %v9741 = vrot.slane %v9740, 2
      %v9742 = vadd.f32 %v9740, %v9741
      %v9743 = vrot.slane %v9742, 1
      %v9744 = vadd.f32 %v9742, %v9743
      %v9745 = vrot.slane %v9726, 4
      %v9746 = vadd.f32 %v9726, %v9745
      %v9747 = vrot.slane %v9746, 2
      %v9748 = vadd.f32 %v9746, %v9747
      %v9749 = vrot.slane %v9748, 1
      %v9750 = vadd.f32 %v9748, %v9749
      %v9751 = vmul.f32 %v9732, %v7467
      %v9752 = vmul.f32 %v9738, %v7476
      %v9753 = vmul.f32 %v9744, %v7485
      %v9754 = vmul.f32 %v9750, %v7494
      %v9755 = vadd.f32 %v9719, %v9751
      %v9756 = vadd.f32 %v9720, %v9752
      %v9757 = vadd.f32 %v9721, %v9753
      %v9758 = vadd.f32 %v9722, %v9754
      %9759 = vst [vmem:[%s143 + $0x30] sm:$0xff] %v9755
      %9760 = vst [vmem:[%s143 + $0x78] sm:$0xff] %v9756
      %9761 = vst [vmem:[%s143 + $0xc0] sm:$0xff] %v9757
      %9762 = vst [vmem:[%s143 + $0x108] sm:$0xff] %v9758
      %v9763 = vmul.f32 %v5608, %v7099
      %v9764 = vmul.f32 %v5615, %v7108
      %v9765 = vmul.f32 %v5622, %v7117
      %v9766 = vmul.f32 %v5629, %v7126
      %v9767 = vrot.slane %v9763, 4
      %v9768 = vadd.f32 %v9763, %v9767
      %v9769 = vrot.slane %v9768, 2
      %v9770 = vadd.f32 %v9768, %v9769
      %v9771 = vrot.slane %v9770, 1
      %v9772 = vadd.f32 %v9770, %v9771
      %v9773 = vrot.slane %v9764, 4
      %v9774 = vadd.f32 %v9764, %v9773
      %v9775 = vrot.slane %v9774, 2
      %v9776 = vadd.f32 %v9774, %v9775
      %v9777 = vrot.slane %v9776, 1
      %v9778 = vadd.f32 %v9776, %v9777
      %v9779 = vrot.slane %v9765, 4
      %v9780 = vadd.f32 %v9765, %v9779
      %v9781 = vrot.slane %v9780, 2
      %v9782 = vadd.f32 %v9780, %v9781
      %v9783 = vrot.slane %v9782, 1
      %v9784 = vadd.f32 %v9782, %v9783
      %v9785 = vrot.slane %v9766, 4
      %v9786 = vadd.f32 %v9766, %v9785
      %v9787 = vrot.slane %v9786, 2
      %v9788 = vadd.f32 %v9786, %v9787
      %v9789 = vrot.slane %v9788, 1
      %v9790 = vadd.f32 %v9788, %v9789
      %v9791 = vmul.f32 %v9772, %v7459
      %v9792 = vmul.f32 %v9778, %v7468
      %v9793 = vmul.f32 %v9784, %v7477
      %v9794 = vmul.f32 %v9790, %v7486
      %v9795 = vmul.f32 %v5608, %v7100
      %v9796 = vmul.f32 %v5615, %v7109
      %v9797 = vmul.f32 %v5622, %v7118
      %v9798 = vmul.f32 %v5629, %v7127
      %v9799 = vrot.slane %v9795, 4
      %v9800 = vadd.f32 %v9795, %v9799
      %v9801 = vrot.slane %v9800, 2
      %v9802 = vadd.f32 %v9800, %v9801
      %v9803 = vrot.slane %v9802, 1
      %v9804 = vadd.f32 %v9802, %v9803
      %v9805 = vrot.slane %v9796, 4
      %v9806 = vadd.f32 %v9796, %v9805
      %v9807 = vrot.slane %v9806, 2
      %v9808 = vadd.f32 %v9806, %v9807
      %v9809 = vrot.slane %v9808, 1
      %v9810 = vadd.f32 %v9808, %v9809
      %v9811 = vrot.slane %v9797, 4
      %v9812 = vadd.f32 %v9797, %v9811
      %v9813 = vrot.slane %v9812, 2
      %v9814 = vadd.f32 %v9812, %v9813
      %v9815 = vrot.slane %v9814, 1
      %v9816 = vadd.f32 %v9814, %v9815
      %v9817 = vrot.slane %v9798, 4
      %v9818 = vadd.f32 %v9798, %v9817
      %v9819 = vrot.slane %v9818, 2
      %v9820 = vadd.f32 %v9818, %v9819
      %v9821 = vrot.slane %v9820, 1
      %v9822 = vadd.f32 %v9820, %v9821
      %v9823 = vmul.f32 %v9804, %v7460
      %v9824 = vmul.f32 %v9810, %v7469
      %v9825 = vmul.f32 %v9816, %v7478
      %v9826 = vmul.f32 %v9822, %v7487
      %v9827 = vadd.f32 %v9791, %v9823
      %v9828 = vadd.f32 %v9792, %v9824
      %v9829 = vadd.f32 %v9793, %v9825
      %v9830 = vadd.f32 %v9794, %v9826
      %v9831 = vmul.f32 %v5608, %v7101
      %v9832 = vmul.f32 %v5615, %v7110
      %v9833 = vmul.f32 %v5622, %v7119
      %v9834 = vmul.f32 %v5629, %v7128
      %v9835 = vrot.slane %v9831, 4
      %v9836 = vadd.f32 %v9831, %v9835
      %v9837 = vrot.slane %v9836, 2
      %v9838 = vadd.f32 %v9836, %v9837
      %v9839 = vrot.slane %v9838, 1
      %v9840 = vadd.f32 %v9838, %v9839
      %v9841 = vrot.slane %v9832, 4
      %v9842 = vadd.f32 %v9832, %v9841
      %v9843 = vrot.slane %v9842, 2
      %v9844 = vadd.f32 %v9842, %v9843
      %v9845 = vrot.slane %v9844, 1
      %v9846 = vadd.f32 %v9844, %v9845
      %v9847 = vrot.slane %v9833, 4
      %v9848 = vadd.f32 %v9833, %v9847
      %v9849 = vrot.slane %v9848, 2
      %v9850 = vadd.f32 %v9848, %v9849
      %v9851 = vrot.slane %v9850, 1
      %v9852 = vadd.f32 %v9850, %v9851
      %v9853 = vrot.slane %v9834, 4
      %v9854 = vadd.f32 %v9834, %v9853
      %v9855 = vrot.slane %v9854, 2
      %v9856 = vadd.f32 %v9854, %v9855
      %v9857 = vrot.slane %v9856, 1
      %v9858 = vadd.f32 %v9856, %v9857
      %v9859 = vmul.f32 %v9840, %v7461
      %v9860 = vmul.f32 %v9846, %v7470
      %v9861 = vmul.f32 %v9852, %v7479
      %v9862 = vmul.f32 %v9858, %v7488
      %v9863 = vadd.f32 %v9827, %v9859
      %v9864 = vadd.f32 %v9828, %v9860
      %v9865 = vadd.f32 %v9829, %v9861
      %v9866 = vadd.f32 %v9830, %v9862
      %v9867 = vmul.f32 %v5608, %v7102
      %v9868 = vmul.f32 %v5615, %v7111
      %v9869 = vmul.f32 %v5622, %v7120
      %v9870 = vmul.f32 %v5629, %v7129
      %v9871 = vrot.slane %v9867, 4
      %v9872 = vadd.f32 %v9867, %v9871
      %v9873 = vrot.slane %v9872, 2
      %v9874 = vadd.f32 %v9872, %v9873
      %v9875 = vrot.slane %v9874, 1
      %v9876 = vadd.f32 %v9874, %v9875
      %v9877 = vrot.slane %v9868, 4
      %v9878 = vadd.f32 %v9868, %v9877
      %v9879 = vrot.slane %v9878, 2
      %v9880 = vadd.f32 %v9878, %v9879
      %v9881 = vrot.slane %v9880, 1
      %v9882 = vadd.f32 %v9880, %v9881
      %v9883 = vrot.slane %v9869, 4
      %v9884 = vadd.f32 %v9869, %v9883
      %v9885 = vrot.slane %v9884, 2
      %v9886 = vadd.f32 %v9884, %v9885
      %v9887 = vrot.slane %v9886, 1
      %v9888 = vadd.f32 %v9886, %v9887
      %v9889 = vrot.slane %v9870, 4
      %v9890 = vadd.f32 %v9870, %v9889
      %v9891 = vrot.slane %v9890, 2
      %v9892 = vadd.f32 %v9890, %v9891
      %v9893 = vrot.slane %v9892, 1
      %v9894 = vadd.f32 %v9892, %v9893
      %v9895 = vmul.f32 %v9876, %v7462
      %v9896 = vmul.f32 %v9882, %v7471
      %v9897 = vmul.f32 %v9888, %v7480
      %v9898 = vmul.f32 %v9894, %v7489
      %v9899 = vadd.f32 %v9863, %v9895
      %v9900 = vadd.f32 %v9864, %v9896
      %v9901 = vadd.f32 %v9865, %v9897
      %v9902 = vadd.f32 %v9866, %v9898
      %v9903 = vmul.f32 %v5608, %v7103
      %v9904 = vmul.f32 %v5615, %v7112
      %v9905 = vmul.f32 %v5622, %v7121
      %v9906 = vmul.f32 %v5629, %v7130
      %v9907 = vrot.slane %v9903, 4
      %v9908 = vadd.f32 %v9903, %v9907
      %v9909 = vrot.slane %v9908, 2
      %v9910 = vadd.f32 %v9908, %v9909
      %v9911 = vrot.slane %v9910, 1
      %v9912 = vadd.f32 %v9910, %v9911
      %v9913 = vrot.slane %v9904, 4
      %v9914 = vadd.f32 %v9904, %v9913
      %v9915 = vrot.slane %v9914, 2
      %v9916 = vadd.f32 %v9914, %v9915
      %v9917 = vrot.slane %v9916, 1
      %v9918 = vadd.f32 %v9916, %v9917
      %v9919 = vrot.slane %v9905, 4
      %v9920 = vadd.f32 %v9905, %v9919
      %v9921 = vrot.slane %v9920, 2
      %v9922 = vadd.f32 %v9920, %v9921
      %v9923 = vrot.slane %v9922, 1
      %v9924 = vadd.f32 %v9922, %v9923
      %v9925 = vrot.slane %v9906, 4
      %v9926 = vadd.f32 %v9906, %v9925
      %v9927 = vrot.slane %v9926, 2
      %v9928 = vadd.f32 %v9926, %v9927
      %v9929 = vrot.slane %v9928, 1
      %v9930 = vadd.f32 %v9928, %v9929
      %v9931 = vmul.f32 %v9912, %v7463
      %v9932 = vmul.f32 %v9918, %v7472
      %v9933 = vmul.f32 %v9924, %v7481
      %v9934 = vmul.f32 %v9930, %v7490
      %v9935 = vadd.f32 %v9899, %v9931
      %v9936 = vadd.f32 %v9900, %v9932
      %v9937 = vadd.f32 %v9901, %v9933
      %v9938 = vadd.f32 %v9902, %v9934
      %v9939 = vmul.f32 %v5608, %v7104
      %v9940 = vmul.f32 %v5615, %v7113
      %v9941 = vmul.f32 %v5622, %v7122
      %v9942 = vmul.f32 %v5629, %v7131
      %v9943 = vrot.slane %v9939, 4
      %v9944 = vadd.f32 %v9939, %v9943
      %v9945 = vrot.slane %v9944, 2
      %v9946 = vadd.f32 %v9944, %v9945
      %v9947 = vrot.slane %v9946, 1
      %v9948 = vadd.f32 %v9946, %v9947
      %v9949 = vrot.slane %v9940, 4
      %v9950 = vadd.f32 %v9940, %v9949
      %v9951 = vrot.slane %v9950, 2
      %v9952 = vadd.f32 %v9950, %v9951
      %v9953 = vrot.slane %v9952, 1
      %v9954 = vadd.f32 %v9952, %v9953
      %v9955 = vrot.slane %v9941, 4
      %v9956 = vadd.f32 %v9941, %v9955
      %v9957 = vrot.slane %v9956, 2
      %v9958 = vadd.f32 %v9956, %v9957
      %v9959 = vrot.slane %v9958, 1
      %v9960 = vadd.f32 %v9958, %v9959
      %v9961 = vrot.slane %v9942, 4
      %v9962 = vadd.f32 %v9942, %v9961
      %v9963 = vrot.slane %v9962, 2
      %v9964 = vadd.f32 %v9962, %v9963
      %v9965 = vrot.slane %v9964, 1
      %v9966 = vadd.f32 %v9964, %v9965
      %v9967 = vmul.f32 %v9948, %v7464
      %v9968 = vmul.f32 %v9954, %v7473
      %v9969 = vmul.f32 %v9960, %v7482
      %v9970 = vmul.f32 %v9966, %v7491
      %v9971 = vadd.f32 %v9935, %v9967
      %v9972 = vadd.f32 %v9936, %v9968
      %v9973 = vadd.f32 %v9937, %v9969
      %v9974 = vadd.f32 %v9938, %v9970
      %v9975 = vmul.f32 %v5608, %v7105
      %v9976 = vmul.f32 %v5615, %v7114
      %v9977 = vmul.f32 %v5622, %v7123
      %v9978 = vmul.f32 %v5629, %v7132
      %v9979 = vrot.slane %v9975, 4
      %v9980 = vadd.f32 %v9975, %v9979
      %v9981 = vrot.slane %v9980, 2
      %v9982 = vadd.f32 %v9980, %v9981
      %v9983 = vrot.slane %v9982, 1
      %v9984 = vadd.f32 %v9982, %v9983
      %v9985 = vrot.slane %v9976, 4
      %v9986 = vadd.f32 %v9976, %v9985
      %v9987 = vrot.slane %v9986, 2
      %v9988 = vadd.f32 %v9986, %v9987
      %v9989 = vrot.slane %v9988, 1
      %v9990 = vadd.f32 %v9988, %v9989
      %v9991 = vrot.slane %v9977, 4
      %v9992 = vadd.f32 %v9977, %v9991
      %v9993 = vrot.slane %v9992, 2
      %v9994 = vadd.f32 %v9992, %v9993
      %v9995 = vrot.slane %v9994, 1
      %v9996 = vadd.f32 %v9994, %v9995
      %v9997 = vrot.slane %v9978, 4
      %v9998 = vadd.f32 %v9978, %v9997
      %v9999 = vrot.slane %v9998, 2
      %v10000 = vadd.f32 %v9998, %v9999
      %v10001 = vrot.slane %v10000, 1
      %v10002 = vadd.f32 %v10000, %v10001
      %v10003 = vmul.f32 %v9984, %v7465
      %v10004 = vmul.f32 %v9990, %v7474
      %v10005 = vmul.f32 %v9996, %v7483
      %v10006 = vmul.f32 %v10002, %v7492
      %v10007 = vadd.f32 %v9971, %v10003
      %v10008 = vadd.f32 %v9972, %v10004
      %v10009 = vadd.f32 %v9973, %v10005
      %v10010 = vadd.f32 %v9974, %v10006
      %v10011 = vmul.f32 %v5608, %v7106
      %v10012 = vmul.f32 %v5615, %v7115
      %v10013 = vmul.f32 %v5622, %v7124
      %v10014 = vmul.f32 %v5629, %v7133
      %v10015 = vrot.slane %v10011, 4
      %v10016 = vadd.f32 %v10011, %v10015
      %v10017 = vrot.slane %v10016, 2
      %v10018 = vadd.f32 %v10016, %v10017
      %v10019 = vrot.slane %v10018, 1
      %v10020 = vadd.f32 %v10018, %v10019
      %v10021 = vrot.slane %v10012, 4
      %v10022 = vadd.f32 %v10012, %v10021
      %v10023 = vrot.slane %v10022, 2
      %v10024 = vadd.f32 %v10022, %v10023
      %v10025 = vrot.slane %v10024, 1
      %v10026 = vadd.f32 %v10024, %v10025
      %v10027 = vrot.slane %v10013, 4
      %v10028 = vadd.f32 %v10013, %v10027
      %v10029 = vrot.slane %v10028, 2
      %v10030 = vadd.f32 %v10028, %v10029
      %v10031 = vrot.slane %v10030, 1
      %v10032 = vadd.f32 %v10030, %v10031
      %v10033 = vrot.slane %v10014, 4
      %v10034 = vadd.f32 %v10014, %v10033
      %v10035 = vrot.slane %v10034, 2
      %v10036 = vadd.f32 %v10034, %v10035
      %v10037 = vrot.slane %v10036, 1
      %v10038 = vadd.f32 %v10036, %v10037
      %v10039 = vmul.f32 %v10020, %v7466
      %v10040 = vmul.f32 %v10026, %v7475
      %v10041 = vmul.f32 %v10032, %v7484
      %v10042 = vmul.f32 %v10038, %v7493
      %v10043 = vadd.f32 %v10007, %v10039
      %v10044 = vadd.f32 %v10008, %v10040
      %v10045 = vadd.f32 %v10009, %v10041
      %v10046 = vadd.f32 %v10010, %v10042
      %v10047 = vmul.f32 %v5608, %v7107
      %v10048 = vmul.f32 %v5615, %v7116
      %v10049 = vmul.f32 %v5622, %v7125
      %v10050 = vmul.f32 %v5629, %v7134
      %v10051 = vrot.slane %v10047, 4
      %v10052 = vadd.f32 %v10047, %v10051
      %v10053 = vrot.slane %v10052, 2
      %v10054 = vadd.f32 %v10052, %v10053
      %v10055 = vrot.slane %v10054, 1
      %v10056 = vadd.f32 %v10054, %v10055
      %v10057 = vrot.slane %v10048, 4
      %v10058 = vadd.f32 %v10048, %v10057
      %v10059 = vrot.slane %v10058, 2
      %v10060 = vadd.f32 %v10058, %v10059
      %v10061 = vrot.slane %v10060, 1
      %v10062 = vadd.f32 %v10060, %v10061
      %v10063 = vrot.slane %v10049, 4
      %v10064 = vadd.f32 %v10049, %v10063
      %v10065 = vrot.slane %v10064, 2
      %v10066 = vadd.f32 %v10064, %v10065
      %v10067 = vrot.slane %v10066, 1
      %v10068 = vadd.f32 %v10066, %v10067
      %v10069 = vrot.slane %v10050, 4
      %v10070 = vadd.f32 %v10050, %v10069
      %v10071 = vrot.slane %v10070, 2
      %v10072 = vadd.f32 %v10070, %v10071
      %v10073 = vrot.slane %v10072, 1
      %v10074 = vadd.f32 %v10072, %v10073
      %v10075 = vmul.f32 %v10056, %v7467
      %v10076 = vmul.f32 %v10062, %v7476
      %v10077 = vmul.f32 %v10068, %v7485
      %v10078 = vmul.f32 %v10074, %v7494
      %v10079 = vadd.f32 %v10043, %v10075
      %v10080 = vadd.f32 %v10044, %v10076
      %v10081 = vadd.f32 %v10045, %v10077
      %v10082 = vadd.f32 %v10046, %v10078
      %10083 = vst [vmem:[%s143 + $0x38] sm:$0xff] %v10079
      %10084 = vst [vmem:[%s143 + $0x80] sm:$0xff] %v10080
      %10085 = vst [vmem:[%s143 + $0xc8] sm:$0xff] %v10081
      %10086 = vst [vmem:[%s143 + $0x110] sm:$0xff] %v10082
      %v10087 = vmul.f32 %v6706, %v7099
      %v10088 = vmul.f32 %v6712, %v7108
      %v10089 = vmul.f32 %v6718, %v7117
      %v10090 = vmul.f32 %v6724, %v7126
      %v10091 = vrot.slane %v10087, 4
      %v10092 = vadd.f32 %v10087, %v10091
      %v10093 = vrot.slane %v10092, 2
      %v10094 = vadd.f32 %v10092, %v10093
      %v10095 = vrot.slane %v10094, 1
      %v10096 = vadd.f32 %v10094, %v10095
      %v10097 = vrot.slane %v10088, 4
      %v10098 = vadd.f32 %v10088, %v10097
      %v10099 = vrot.slane %v10098, 2
      %v10100 = vadd.f32 %v10098, %v10099
      %v10101 = vrot.slane %v10100, 1
      %v10102 = vadd.f32 %v10100, %v10101
      %v10103 = vrot.slane %v10089, 4
      %v10104 = vadd.f32 %v10089, %v10103
      %v10105 = vrot.slane %v10104, 2
      %v10106 = vadd.f32 %v10104, %v10105
      %v10107 = vrot.slane %v10106, 1
      %v10108 = vadd.f32 %v10106, %v10107
      %v10109 = vrot.slane %v10090, 4
      %v10110 = vadd.f32 %v10090, %v10109
      %v10111 = vrot.slane %v10110, 2
      %v10112 = vadd.f32 %v10110, %v10111
      %v10113 = vrot.slane %v10112, 1
      %v10114 = vadd.f32 %v10112, %v10113
      %v10115 = vmul.f32 %v10096, %v7459
      %v10116 = vmul.f32 %v10102, %v7468
      %v10117 = vmul.f32 %v10108, %v7477
      %v10118 = vmul.f32 %v10114, %v7486
      %v10119 = vmul.f32 %v6706, %v7100
      %v10120 = vmul.f32 %v6712, %v7109
      %v10121 = vmul.f32 %v6718, %v7118
      %v10122 = vmul.f32 %v6724, %v7127
      %v10123 = vrot.slane %v10119, 4
      %v10124 = vadd.f32 %v10119, %v10123
      %v10125 = vrot.slane %v10124, 2
      %v10126 = vadd.f32 %v10124, %v10125
      %v10127 = vrot.slane %v10126, 1
      %v10128 = vadd.f32 %v10126, %v10127
      %v10129 = vrot.slane %v10120, 4
      %v10130 = vadd.f32 %v10120, %v10129
      %v10131 = vrot.slane %v10130, 2
      %v10132 = vadd.f32 %v10130, %v10131
      %v10133 = vrot.slane %v10132, 1
      %v10134 = vadd.f32 %v10132, %v10133
      %v10135 = vrot.slane %v10121, 4
      %v10136 = vadd.f32 %v10121, %v10135
      %v10137 = vrot.slane %v10136, 2
      %v10138 = vadd.f32 %v10136, %v10137
      %v10139 = vrot.slane %v10138, 1
      %v10140 = vadd.f32 %v10138, %v10139
      %v10141 = vrot.slane %v10122, 4
      %v10142 = vadd.f32 %v10122, %v10141
      %v10143 = vrot.slane %v10142, 2
      %v10144 = vadd.f32 %v10142, %v10143
      %v10145 = vrot.slane %v10144, 1
      %v10146 = vadd.f32 %v10144, %v10145
      %v10147 = vmul.f32 %v10128, %v7460
      %v10148 = vmul.f32 %v10134, %v7469
      %v10149 = vmul.f32 %v10140, %v7478
      %v10150 = vmul.f32 %v10146, %v7487
      %v10151 = vadd.f32 %v10115, %v10147
      %v10152 = vadd.f32 %v10116, %v10148
      %v10153 = vadd.f32 %v10117, %v10149
      %v10154 = vadd.f32 %v10118, %v10150
      %v10155 = vmul.f32 %v6706, %v7101
      %v10156 = vmul.f32 %v6712, %v7110
      %v10157 = vmul.f32 %v6718, %v7119
      %v10158 = vmul.f32 %v6724, %v7128
      %v10159 = vrot.slane %v10155, 4
      %v10160 = vadd.f32 %v10155, %v10159
      %v10161 = vrot.slane %v10160, 2
      %v10162 = vadd.f32 %v10160, %v10161
      %v10163 = vrot.slane %v10162, 1
      %v10164 = vadd.f32 %v10162, %v10163
      %v10165 = vrot.slane %v10156, 4
      %v10166 = vadd.f32 %v10156, %v10165
      %v10167 = vrot.slane %v10166, 2
      %v10168 = vadd.f32 %v10166, %v10167
      %v10169 = vrot.slane %v10168, 1
      %v10170 = vadd.f32 %v10168, %v10169
      %v10171 = vrot.slane %v10157, 4
      %v10172 = vadd.f32 %v10157, %v10171
      %v10173 = vrot.slane %v10172, 2
      %v10174 = vadd.f32 %v10172, %v10173
      %v10175 = vrot.slane %v10174, 1
      %v10176 = vadd.f32 %v10174, %v10175
      %v10177 = vrot.slane %v10158, 4
      %v10178 = vadd.f32 %v10158, %v10177
      %v10179 = vrot.slane %v10178, 2
      %v10180 = vadd.f32 %v10178, %v10179
      %v10181 = vrot.slane %v10180, 1
      %v10182 = vadd.f32 %v10180, %v10181
      %v10183 = vmul.f32 %v10164, %v7461
      %v10184 = vmul.f32 %v10170, %v7470
      %v10185 = vmul.f32 %v10176, %v7479
      %v10186 = vmul.f32 %v10182, %v7488
      %v10187 = vadd.f32 %v10151, %v10183
      %v10188 = vadd.f32 %v10152, %v10184
      %v10189 = vadd.f32 %v10153, %v10185
      %v10190 = vadd.f32 %v10154, %v10186
      %v10191 = vmul.f32 %v6706, %v7102
      %v10192 = vmul.f32 %v6712, %v7111
      %v10193 = vmul.f32 %v6718, %v7120
      %v10194 = vmul.f32 %v6724, %v7129
      %v10195 = vrot.slane %v10191, 4
      %v10196 = vadd.f32 %v10191, %v10195
      %v10197 = vrot.slane %v10196, 2
      %v10198 = vadd.f32 %v10196, %v10197
      %v10199 = vrot.slane %v10198, 1
      %v10200 = vadd.f32 %v10198, %v10199
      %v10201 = vrot.slane %v10192, 4
      %v10202 = vadd.f32 %v10192, %v10201
      %v10203 = vrot.slane %v10202, 2
      %v10204 = vadd.f32 %v10202, %v10203
      %v10205 = vrot.slane %v10204, 1
      %v10206 = vadd.f32 %v10204, %v10205
      %v10207 = vrot.slane %v10193, 4
      %v10208 = vadd.f32 %v10193, %v10207
      %v10209 = vrot.slane %v10208, 2
      %v10210 = vadd.f32 %v10208, %v10209
      %v10211 = vrot.slane %v10210, 1
      %v10212 = vadd.f32 %v10210, %v10211
      %v10213 = vrot.slane %v10194, 4
      %v10214 = vadd.f32 %v10194, %v10213
      %v10215 = vrot.slane %v10214, 2
      %v10216 = vadd.f32 %v10214, %v10215
      %v10217 = vrot.slane %v10216, 1
      %v10218 = vadd.f32 %v10216, %v10217
      %v10219 = vmul.f32 %v10200, %v7462
      %v10220 = vmul.f32 %v10206, %v7471
      %v10221 = vmul.f32 %v10212, %v7480
      %v10222 = vmul.f32 %v10218, %v7489
      %v10223 = vadd.f32 %v10187, %v10219
      %v10224 = vadd.f32 %v10188, %v10220
      %v10225 = vadd.f32 %v10189, %v10221
      %v10226 = vadd.f32 %v10190, %v10222
      %v10227 = vmul.f32 %v6706, %v7103
      %v10228 = vmul.f32 %v6712, %v7112
      %v10229 = vmul.f32 %v6718, %v7121
      %v10230 = vmul.f32 %v6724, %v7130
      %v10231 = vrot.slane %v10227, 4
      %v10232 = vadd.f32 %v10227, %v10231
      %v10233 = vrot.slane %v10232, 2
      %v10234 = vadd.f32 %v10232, %v10233
      %v10235 = vrot.slane %v10234, 1
      %v10236 = vadd.f32 %v10234, %v10235
      %v10237 = vrot.slane %v10228, 4
      %v10238 = vadd.f32 %v10228, %v10237
      %v10239 = vrot.slane %v10238, 2
      %v10240 = vadd.f32 %v10238, %v10239
      %v10241 = vrot.slane %v10240, 1
      %v10242 = vadd.f32 %v10240, %v10241
      %v10243 = vrot.slane %v10229, 4
      %v10244 = vadd.f32 %v10229, %v10243
      %v10245 = vrot.slane %v10244, 2
      %v10246 = vadd.f32 %v10244, %v10245
      %v10247 = vrot.slane %v10246, 1
      %v10248 = vadd.f32 %v10246, %v10247
      %v10249 = vrot.slane %v10230, 4
      %v10250 = vadd.f32 %v10230, %v10249
      %v10251 = vrot.slane %v10250, 2
      %v10252 = vadd.f32 %v10250, %v10251
      %v10253 = vrot.slane %v10252, 1
      %v10254 = vadd.f32 %v10252, %v10253
      %v10255 = vmul.f32 %v10236, %v7463
      %v10256 = vmul.f32 %v10242, %v7472
      %v10257 = vmul.f32 %v10248, %v7481
      %v10258 = vmul.f32 %v10254, %v7490
      %v10259 = vadd.f32 %v10223, %v10255
      %v10260 = vadd.f32 %v10224, %v10256
      %v10261 = vadd.f32 %v10225, %v10257
      %v10262 = vadd.f32 %v10226, %v10258
      %v10263 = vmul.f32 %v6706, %v7104
      %v10264 = vmul.f32 %v6712, %v7113
      %v10265 = vmul.f32 %v6718, %v7122
      %v10266 = vmul.f32 %v6724, %v7131
      %v10267 = vrot.slane %v10263, 4
      %v10268 = vadd.f32 %v10263, %v10267
      %v10269 = vrot.slane %v10268, 2
      %v10270 = vadd.f32 %v10268, %v10269
      %v10271 = vrot.slane %v10270, 1
      %v10272 = vadd.f32 %v10270, %v10271
      %v10273 = vrot.slane %v10264, 4
      %v10274 = vadd.f32 %v10264, %v10273
      %v10275 = vrot.slane %v10274, 2
      %v10276 = vadd.f32 %v10274, %v10275
      %v10277 = vrot.slane %v10276, 1
      %v10278 = vadd.f32 %v10276, %v10277
      %v10279 = vrot.slane %v10265, 4
      %v10280 = vadd.f32 %v10265, %v10279
      %v10281 = vrot.slane %v10280, 2
      %v10282 = vadd.f32 %v10280, %v10281
      %v10283 = vrot.slane %v10282, 1
      %v10284 = vadd.f32 %v10282, %v10283
      %v10285 = vrot.slane %v10266, 4
      %v10286 = vadd.f32 %v10266, %v10285
      %v10287 = vrot.slane %v10286, 2
      %v10288 = vadd.f32 %v10286, %v10287
      %v10289 = vrot.slane %v10288, 1
      %v10290 = vadd.f32 %v10288, %v10289
      %v10291 = vmul.f32 %v10272, %v7464
      %v10292 = vmul.f32 %v10278, %v7473
      %v10293 = vmul.f32 %v10284, %v7482
      %v10294 = vmul.f32 %v10290, %v7491
      %v10295 = vadd.f32 %v10259, %v10291
      %v10296 = vadd.f32 %v10260, %v10292
      %v10297 = vadd.f32 %v10261, %v10293
      %v10298 = vadd.f32 %v10262, %v10294
      %v10299 = vmul.f32 %v6706, %v7105
      %v10300 = vmul.f32 %v6712, %v7114
      %v10301 = vmul.f32 %v6718, %v7123
      %v10302 = vmul.f32 %v6724, %v7132
      %v10303 = vrot.slane %v10299, 4
      %v10304 = vadd.f32 %v10299, %v10303
      %v10305 = vrot.slane %v10304, 2
      %v10306 = vadd.f32 %v10304, %v10305
      %v10307 = vrot.slane %v10306, 1
      %v10308 = vadd.f32 %v10306, %v10307
      %v10309 = vrot.slane %v10300, 4
      %v10310 = vadd.f32 %v10300, %v10309
      %v10311 = vrot.slane %v10310, 2
      %v10312 = vadd.f32 %v10310, %v10311
      %v10313 = vrot.slane %v10312, 1
      %v10314 = vadd.f32 %v10312, %v10313
      %v10315 = vrot.slane %v10301, 4
      %v10316 = vadd.f32 %v10301, %v10315
      %v10317 = vrot.slane %v10316, 2
      %v10318 = vadd.f32 %v10316, %v10317
      %v10319 = vrot.slane %v10318, 1
      %v10320 = vadd.f32 %v10318, %v10319
      %v10321 = vrot.slane %v10302, 4
      %v10322 = vadd.f32 %v10302, %v10321
      %v10323 = vrot.slane %v10322, 2
      %v10324 = vadd.f32 %v10322, %v10323
      %v10325 = vrot.slane %v10324, 1
      %v10326 = vadd.f32 %v10324, %v10325
      %v10327 = vmul.f32 %v10308, %v7465
      %v10328 = vmul.f32 %v10314, %v7474
      %v10329 = vmul.f32 %v10320, %v7483
      %v10330 = vmul.f32 %v10326, %v7492
      %v10331 = vadd.f32 %v10295, %v10327
      %v10332 = vadd.f32 %v10296, %v10328
      %v10333 = vadd.f32 %v10297, %v10329
      %v10334 = vadd.f32 %v10298, %v10330
      %v10335 = vmul.f32 %v6706, %v7106
      %v10336 = vmul.f32 %v6712, %v7115
      %v10337 = vmul.f32 %v6718, %v7124
      %v10338 = vmul.f32 %v6724, %v7133
      %v10339 = vrot.slane %v10335, 4
      %v10340 = vadd.f32 %v10335, %v10339
      %v10341 = vrot.slane %v10340, 2
      %v10342 = vadd.f32 %v10340, %v10341
      %v10343 = vrot.slane %v10342, 1
      %v10344 = vadd.f32 %v10342, %v10343
      %v10345 = vrot.slane %v10336, 4
      %v10346 = vadd.f32 %v10336, %v10345
      %v10347 = vrot.slane %v10346, 2
      %v10348 = vadd.f32 %v10346, %v10347
      %v10349 = vrot.slane %v10348, 1
      %v10350 = vadd.f32 %v10348, %v10349
      %v10351 = vrot.slane %v10337, 4
      %v10352 = vadd.f32 %v10337, %v10351
      %v10353 = vrot.slane %v10352, 2
      %v10354 = vadd.f32 %v10352, %v10353
      %v10355 = vrot.slane %v10354, 1
      %v10356 = vadd.f32 %v10354, %v10355
      %v10357 = vrot.slane %v10338, 4
      %v10358 = vadd.f32 %v10338, %v10357
      %v10359 = vrot.slane %v10358, 2
      %v10360 = vadd.f32 %v10358, %v10359
      %v10361 = vrot.slane %v10360, 1
      %v10362 = vadd.f32 %v10360, %v10361
      %v10363 = vmul.f32 %v10344, %v7466
      %v10364 = vmul.f32 %v10350, %v7475
      %v10365 = vmul.f32 %v10356, %v7484
      %v10366 = vmul.f32 %v10362, %v7493
      %v10367 = vadd.f32 %v10331, %v10363
      %v10368 = vadd.f32 %v10332, %v10364
      %v10369 = vadd.f32 %v10333, %v10365
      %v10370 = vadd.f32 %v10334, %v10366
      %v10371 = vmul.f32 %v6706, %v7107
      %v10372 = vmul.f32 %v6712, %v7116
      %v10373 = vmul.f32 %v6718, %v7125
      %v10374 = vmul.f32 %v6724, %v7134
      %v10375 = vrot.slane %v10371, 4
      %v10376 = vadd.f32 %v10371, %v10375
      %v10377 = vrot.slane %v10376, 2
      %v10378 = vadd.f32 %v10376, %v10377
      %v10379 = vrot.slane %v10378, 1
      %v10380 = vadd.f32 %v10378, %v10379
      %v10381 = vrot.slane %v10372, 4
      %v10382 = vadd.f32 %v10372, %v10381
      %v10383 = vrot.slane %v10382, 2
      %v10384 = vadd.f32 %v10382, %v10383
      %v10385 = vrot.slane %v10384, 1
      %v10386 = vadd.f32 %v10384, %v10385
      %v10387 = vrot.slane %v10373, 4
      %v10388 = vadd.f32 %v10373, %v10387
      %v10389 = vrot.slane %v10388, 2
      %v10390 = vadd.f32 %v10388, %v10389
      %v10391 = vrot.slane %v10390, 1
      %v10392 = vadd.f32 %v10390, %v10391
      %v10393 = vrot.slane %v10374, 4
      %v10394 = vadd.f32 %v10374, %v10393
      %v10395 = vrot.slane %v10394, 2
      %v10396 = vadd.f32 %v10394, %v10395
      %v10397 = vrot.slane %v10396, 1
      %v10398 = vadd.f32 %v10396, %v10397
      %v10399 = vmul.f32 %v10380, %v7467
      %v10400 = vmul.f32 %v10386, %v7476
      %v10401 = vmul.f32 %v10392, %v7485
      %v10402 = vmul.f32 %v10398, %v7494
      %v10403 = vadd.f32 %v10367, %v10399
      %v10404 = vadd.f32 %v10368, %v10400
      %v10405 = vadd.f32 %v10369, %v10401
      %v10406 = vadd.f32 %v10370, %v10402
      %10407 = vst [vmem:[%s143 + $0x40] sm:$0xff] %v10403
      %10408 = vst [vmem:[%s143 + $0x88] sm:$0xff] %v10404
      %10409 = vst [vmem:[%s143 + $0xd0] sm:$0xff] %v10405
      %10410 = vst [vmem:[%s143 + $0x118] sm:$0xff] %v10406
      %p10411 = scmp.lt.s32.totalorder %s13, 3
      %s10412 = scalar_select %p10411, %s13, 3
      %s10413 = smul.addr %s10412, 36
      %s10414 = smul.addr %s10413, 8
      %s10415 = scalar_lea.vmem %s2, %s10414
      // Predicated region
      $region29: #{sim_attn.1} parent=27 // pred_check
        %p10416 = pneg %p78
      $region30: #{sim_attn.1} parent=27 // pred_check_branch
        %10418 = sbr.rel (%p10416) target = $region32
      $region31: #{sim_attn.1} parent=27 // pred_region
        _
      $region32: #{sim_attn.1} parent=27 // pred_fallthru
        _
    $region28: #{sim_attn.1} parent=5 // pred_fallthru
      _
    %p10419 = scmp.le.s32.totalorder 2, %s8
    // Predicated region
    $region33: #{sim_attn.1} parent=5 // pred_check
      %p10420 = pneg %p10419
    $region34: #{sim_attn.1} parent=5 // pred_check_branch
      %10422 = sbr.rel (%p10420) target = $region36
    $region35: #{sim_attn.1} parent=5 // pred_region
      %s10423 = ssub.s32 %s8, 2
      // Predicated region
      $region37: #{sim_attn.1} parent=35 // pred_check
        %p10424 = pneg %p84
      $region38: #{sim_attn.1} parent=35 // pred_check_branch
        %10426 = sbr.rel (%p10424) target = $region40
      $region39: #{sim_attn.1} parent=35 // pred_region
        %p10427 = scmp.lt.s32.totalorder %s14, 3
        %s10428 = scalar_select %p10427, %s14, 3
        %s10429 = smul.addr %s10428, 36
        %s10430 = smul.addr %s10429, 8
        %s10431 = scalar_lea.vmem %s2, %s10430
      $region40: #{sim_attn.1} parent=35 // pred_fallthru
        _
    $region36: #{sim_attn.1} parent=5 // pred_fallthru
      _
  $region6: #{sim_attn.1} parent=0 // loop_footer
    %s12 = sadd.s32 1, %s8
  $region7: #{sim_attn.1} parent=0 // loop_footer_branch
    %7 = sbr.rel target = $region3
  $region8: #{sim_attn.1} parent=0 // loop_exit
    _

</llo_original>
